<compile_context>
chip_gen: v5e
topology: v5e:2x2
jax: 0.10.0
libtpu: 0.0.40
codegen_flags: <defaults>
</compile_context>

<pallas_src>
import jax
import jax.numpy as jnp
from jax.experimental import pallas as pl
from jax.experimental.pallas import tpu as pltpu

_BF16 = jnp.bfloat16


# ============================================================================
# In-kernel compute helpers (all activations are flat (N*H*W, C) matrices)
# ============================================================================
def _mm(lhs, rhs):
    """bf16 x bf16 MXU matmul with f32 accumulation."""
    return jnp.dot(lhs.astype(_BF16), rhs.astype(_BF16),
                   preferred_element_type=jnp.float32)


def _hardswish(y):       # torch.nn.Hardswish: x * relu6(x + 3) / 6
    return y * jnp.clip(y + 3.0, 0.0, 6.0) * (1.0 / 6.0)


def _leaky(y):           # torch.nn.LeakyReLU(0.1)
    return jnp.where(y > 0.0, y, 0.1 * y)


def _conv1x1_bn_hswish(x, p):
    """yolov5 `Conv` with k=1: bias-free 1x1 conv + folded BN + Hardswish."""
    return _hardswish(_mm(x, p["w"]) * p["s"] + p["b"])


def _conv3x3_bn_hswish(x, p, nb, h, w):
    """yolov5 `Conv` with k=3 (stride 1, zero 'same' pad, no bias) + BN + Hardswish.

    Single im2col matmul: the (N*H*W, 9*Cin) patch matrix is built once (zero
    padding realised with two jnp.concatenate calls, taps gathered with static
    slices + one lane concat + one reshape) and contracted in one MXU matmul
    against the (9*Cin, Cout) weight.
    """
    c = x.shape[-1]
    xb = x.astype(_BF16).reshape(nb, h, w, c)
    zw = jnp.zeros((nb, h, 1, c), _BF16)
    xb = jnp.concatenate([zw, xb, zw], axis=2)             # pad W -> (nb, h, w+2, c)
    zh = jnp.zeros((nb, 1, w + 2, c), _BF16)
    xp = jnp.concatenate([zh, xb, zh], axis=1)             # pad H -> (nb, h+2, w+2, c)
    patches = jnp.concatenate(
        [xp[:, dy:dy + h, dx:dx + w, :] for dy in range(3) for dx in range(3)],
        axis=-1).reshape(nb * h * w, 9 * c)
    return _hardswish(_mm(patches, p["w"]) * p["s"] + p["b"])


def _csp(x, p, nb, h, w):
    """yolov5 BottleneckCSP(c1, c2, n, shortcut=False) on a flat activation."""
    y = _conv1x1_bn_hswish(x, p["cv1"])
    for blk in p["m"]:               # Bottleneck(c_, c_, shortcut=False, e=1.0)
        y = _conv1x1_bn_hswish(y, blk["cv1"])
        y = _conv3x3_bn_hswish(y, blk["cv2"], nb, h, w)
    # cv4(LeakyReLU(BN(cat(cv3(m(cv1(x))), cv2(x))))).  BN (eval) is a per-channel
    # affine, so its two channel halves + the elementwise LeakyReLU fold exactly
    # into the cv3 (y1) / cv2 (y2) matmul epilogues.
    y1 = _leaky(_mm(y, p["cv3_w"]) * p["bn_s1"] + p["bn_b1"])
    y2 = _leaky(_mm(x, p["cv2_w"]) * p["bn_s2"] + p["bn_b2"])
    cat = jnp.concatenate([y1, y2], axis=-1)       # lane concat, 2*c_ <= 32 lanes
    return _conv1x1_bn_hswish(cat, p["cv4"])


def _entry_conv(x_lo, skip, p):
    """Conv(ch_x + ch_skip, ch_out, k=1) on cat([upsample2x(x_lo), skip], channel).

    Concat is fused via the Cin-split weight (wa/wb); the nearest 2x upsample is a
    constant 0/1 row-duplication matrix `U` applied after the low-res x-side matmul.
    """
    up_x = _mm(p["U"], _mm(x_lo, p["wa"]))        # (M_hi, ch_out)
    sk = _mm(skip, p["wb"])                       # (M_hi, ch_out)
    return _hardswish((up_x + sk) * p["s"] + p["b"])


# ============================================================================
# Fused FPN forward: ONE pallas_call for all three levels
# ============================================================================
def fpn_forward(prepared, c3, c4, c5):
    """c3/c4/c5: NHWC float feature maps.  Returns [p3, p4, p5] in NHWC."""
    nb, h3, w3, ch3 = c3.shape
    _, h4, w4, ch4 = c4.shape
    _, h5, w5, ch5 = c5.shape
    assert (h3, w3) == (2 * h4, 2 * w4) and (h4, w4) == (2 * h5, 2 * w5)

    leaves, treedef = jax.tree_util.tree_flatten(prepared)
    n_leaves = len(leaves)

    # Fold batch into the matmul M dim and cast matmul operands to bf16 at the
    # boundary (halves HBM->VMEM traffic; accumulation / epilogue stay f32).
    flat = lambda x: x.astype(_BF16).reshape(-1, x.shape[-1])

    def kernel(*refs):
        x3 = refs[0][...]
        x4 = refs[1][...]
        x5 = refs[2][...]
        params = jax.tree_util.tree_unflatten(
            treedef, [r[...] for r in refs[3:3 + n_leaves]])
        p3_ref, p4_ref, p5_ref = refs[3 + n_leaves:]

        p5 = _csp(x5, params["p5_csp"], nb, h5, w5)                    # (nb*h5*w5, ch5)
        p4 = _csp(_entry_conv(p5, x4, params["p4_conv"]),
                  params["p4_csp"], nb, h4, w4)                        # (nb*h4*w4, ch4)
        p3 = _csp(_entry_conv(p4, x3, params["p3_conv"]),
                  params["p3_csp"], nb, h3, w3)                        # (nb*h3*w3, ch3)

        # Only 3 (tiny) stores remain in the whole FPN after fusion.
        # TODO(synk): if lane-density of these stores ever matters, emit a
        # transposed (C, N*H*W) layout instead.
        p3_ref[...] = p3
        p4_ref[...] = p4
        p5_ref[...] = p5

    vmem = pl.BlockSpec(memory_space=pltpu.MemorySpace.VMEM)  # whole array in VMEM
    outs = pl.pallas_call(
        kernel,
        out_shape=(
            jax.ShapeDtypeStruct((nb * h3 * w3, ch3), jnp.float32),
            jax.ShapeDtypeStruct((nb * h4 * w4, ch4), jnp.float32),
            jax.ShapeDtypeStruct((nb * h5 * w5, ch5), jnp.float32),
        ),
        in_specs=[vmem] * (3 + n_leaves),
        out_specs=(vmem, vmem, vmem),
        # grid=() single invocation: inputs + all weights + outputs total < 1 MiB.
        # TODO(synk): at real YOLO resolutions add a parallel spatial row-tiling grid
        # axis (also feeds v7x's 2 TensorCores) and an explicit
        # pltpu.CompilerParams(vmem_limit_bytes=...).
    )(flat(c3), flat(c4), flat(c5), *leaves)

    p3f, p4f, p5f = outs
    return [p3f.reshape(nb, h3, w3, ch3),
            p4f.reshape(nb, h4, w4, ch4),
            p5f.reshape(nb, h5, w5, ch5)]


# ============================================================================
# Parameter construction (synthetic, mirrors the torch module __init__) and
# one-time conversion to the kernel's matmul-ready layout.
# ============================================================================
def _fold_bn(gamma, beta, mean, var, eps=1e-5):
    s = gamma / jnp.sqrt(var + eps)
    return s, beta - mean * s


def _init_bn(key, c):
    k1, k2, k3, k4 = jax.random.split(key, 4)
    gamma = 1.0 + 0.1 * jax.random.normal(k1, (c,), jnp.float32)
    beta = 0.1 * jax.random.normal(k2, (c,), jnp.float32)
    mean = 0.1 * jax.random.normal(k3, (c,), jnp.float32)
    var = 1.0 + 0.1 * jnp.abs(jax.random.normal(k4, (c,), jnp.float32))
    return _fold_bn(gamma, beta, mean, var)


def _init_conv(key, c1, c2, k):
    """yolov5 `Conv` = Conv2d(c1, c2, k, s=1, p=k//2, bias=False) + BN + Hardswish."""
    kw, kb = jax.random.split(key)
    w = jax.random.normal(kw, (c2, c1, k, k), jnp.float32) / jnp.sqrt(c1 * k * k)
    s, b = _init_bn(kb, c2)
    return {"w": w, "s": s, "b": b}


def _init_csp(key, c1, c2, n_rep):
    """yolov5 BottleneckCSP(c1, c2, n=n_rep, shortcut=False), torch weight layouts."""
    c_ = int(c2 * 0.5)
    keys = jax.random.split(key, 5 + 2 * n_rep)
    bn_s, bn_b = _init_bn(keys[4], 2 * c_)
    return {
        "cv1": _init_conv(keys[0], c1, c_, 1),
        "cv2_w": jax.random.normal(keys[1], (c_, c1, 1, 1), jnp.float32) / jnp.sqrt(c1),
        "cv3_w": jax.random.normal(keys[2], (c_, c_, 1, 1), jnp.float32) / jnp.sqrt(c_),
        "cv4": _init_conv(keys[3], 2 * c_, c2, 1),
        "bn_s": bn_s, "bn_b": bn_b,
        "m": [{"cv1": _init_conv(keys[5 + 2 * i], c_, c_, 1),
               "cv2": _init_conv(keys[6 + 2 * i], c_, c_, 3)} for i in range(n_rep)],
    }


def init_fpn(key, ch3, ch4, ch5, n_rep):
    k = jax.random.split(key, 5)
    return {
        "to_p5": _init_csp(k[0], ch5, ch5, n_rep),
        "to_p4_conv": _init_conv(k[1], ch4 + ch5, ch4, 1),
        "to_p4_csp": _init_csp(k[2], ch4, ch4, n_rep),
        "to_p3_conv": _init_conv(k[3], ch3 + ch4, ch3, 1),
        "to_p3_csp": _init_csp(k[4], ch3, ch3, n_rep),
    }


def _prep_conv1x1(p):
    c2, c1 = p["w"].shape[:2]
    return {"w": p["w"].reshape(c2, c1).T.astype(_BF16),
            "s": p["s"].reshape(1, c2).astype(jnp.float32),
            "b": p["b"].reshape(1, c2).astype(jnp.float32)}


def _prep_conv3x3(p):
    c2, c1, kh, kw = p["w"].shape
    # (Cout, Cin, kH, kW) -> (kH, kW, Cin, Cout) -> (kH*kW*Cin, Cout); row order
    # [dy, dx, cin] matches the in-kernel im2col patch ordering.
    w = jnp.transpose(p["w"], (2, 3, 1, 0)).reshape(kh * kw * c1, c2)
    return {"w": w.astype(_BF16),
            "s": p["s"].reshape(1, c2).astype(jnp.float32),
            "b": p["b"].reshape(1, c2).astype(jnp.float32)}


def _prep_csp(p):
    c_, c1 = p["cv2_w"].shape[:2]
    return {
        "cv1": _prep_conv1x1(p["cv1"]),
        "cv4": _prep_conv1x1(p["cv4"]),
        "cv2_w": p["cv2_w"].reshape(c_, c1).T.astype(_BF16),
        "cv3_w": p["cv3_w"].reshape(c_, c_).T.astype(_BF16),
        # BN over cat([y1, y2]) splits per channel half: first c_ -> y1 (cv3 path),
        # second c_ -> y2 (cv2 path), matching the torch cat order.
        "bn_s1": p["bn_s"][:c_].reshape(1, c_).astype(jnp.float32),
        "bn_b1": p["bn_b"][:c_].reshape(1, c_).astype(jnp.float32),
        "bn_s2": p["bn_s"][c_:].reshape(1, c_).astype(jnp.float32),
        "bn_b2": p["bn_b"][c_:].reshape(1, c_).astype(jnp.float32),
        "m": [{"cv1": _prep_conv1x1(b["cv1"]), "cv2": _prep_conv3x3(b["cv2"])}
              for b in p["m"]],
    }


def _upsample2x_matrix(nb, h, w, dtype):
    """0/1 matrix U (nb*2h*2w, nb*h*w): U @ x_flat == nearest 2x upsample of x."""
    r = jnp.arange(nb * 2 * h * 2 * w)
    b_, rem = r // (4 * h * w), r % (4 * h * w)
    i, j = rem // (2 * w), rem % (2 * w)
    lo = (b_ * h + i // 2) * w + j // 2
    return (lo[:, None] == jnp.arange(nb * h * w)[None, :]).astype(dtype)


def _prep_entry_conv(p, ch_x, nb, h_lo, w_lo):
    """Split the cat([up2x(x), skip]) 1x1 conv weight along Cin (first ch_x input
    channels belong to the upsampled x, matching torch.cat order) and attach the
    constant nearest-upsample matrix."""
    c2, c1 = p["w"].shape[:2]
    w = p["w"].reshape(c2, c1)
    return {"wa": w[:, :ch_x].T.astype(_BF16),
            "wb": w[:, ch_x:].T.astype(_BF16),
            "U": _upsample2x_matrix(nb, h_lo, w_lo, _BF16),
            "s": p["s"].reshape(1, c2).astype(jnp.float32),
            "b": p["b"].reshape(1, c2).astype(jnp.float32)}


def prepare_params(torch_params, batch, h5, w5):
    h4, w4 = 2 * h5, 2 * w5
    ch5 = torch_params["to_p5"]["cv4"]["w"].shape[0]
    ch4 = torch_params["to_p4_csp"]["cv4"]["w"].shape[0]
    return {
        "p5_csp": _prep_csp(torch_params["to_p5"]),
        "p4_conv": _prep_entry_conv(torch_params["to_p4_conv"], ch5, batch, h5, w5),
        "p4_csp": _prep_csp(torch_params["to_p4_csp"]),
        "p3_conv": _prep_entry_conv(torch_params["to_p3_conv"], ch4, batch, h4, w4),
        "p3_csp": _prep_csp(torch_params["to_p3_csp"]),
    }


# ============================================================================
if __name__ == "__main__":
    key = jax.random.PRNGKey(0)
    kp, k3, k4, k5 = jax.random.split(key, 4)

    B = 2
    ch3, ch4, ch5 = 8, 16, 32            # model.backbone.out_channels
    H3 = W3 = 16                         # c3 (stride-8) map; c4 = /2; c5 = /4

    # PyTorch-convention NCHW features, moved to the kernel's NHWC layout.
    to_nhwc = lambda t: jnp.transpose(t, (0, 2, 3, 1))
    c3 = to_nhwc(jax.random.normal(k3, (B, ch3, H3, W3), jnp.float32))
    c4 = to_nhwc(jax.random.normal(k4, (B, ch4, H3 // 2, W3 // 2), jnp.float32))
    c5 = to_nhwc(jax.random.normal(k5, (B, ch5, H3 // 4, W3 // 4), jnp.float32))

    # model.ultralytics.channel_muliple = 1/3 -> n = max(round(3 * 1/3), 1) = 1
    torch_params = init_fpn(kp, ch3, ch4, ch5, n_rep=1)
    params = prepare_params(torch_params, batch=B, h5=H3 // 4, w5=W3 // 4)

    fpn = jax.jit(fpn_forward)
    p3, p4, p5 = fpn(params, c3, c4, c5)
    jax.block_until_ready((p3, p4, p5))

    assert p3.shape == (B, H3, W3, ch3)
    assert p4.shape == (B, H3 // 2, W3 // 2, ch4)
    assert p5.shape == (B, H3 // 4, W3 // 4, ch5)
    assert all(bool(jnp.isfinite(t).all()) for t in (p3, p4, p5))
    print("KERNEL_OK")
</pallas_src>

<mosaic_0001>
module attributes {stable_mosaic.version = 11 : i64} {
  func.func @kernel(%arg0: memref<512x8xbf16, #tpu.memory_space<vmem>>, %arg1: memref<128x16xbf16, #tpu.memory_space<vmem>>, %arg2: memref<32x32xbf16, #tpu.memory_space<vmem>>, %arg3: memref<512x128xbf16, #tpu.memory_space<vmem>>, %arg4: memref<1x8xf32, #tpu.memory_space<vmem>>, %arg5: memref<1x8xf32, #tpu.memory_space<vmem>>, %arg6: memref<16x8xbf16, #tpu.memory_space<vmem>>, %arg7: memref<8x8xbf16, #tpu.memory_space<vmem>>, %arg8: memref<1x4xf32, #tpu.memory_space<vmem>>, %arg9: memref<1x4xf32, #tpu.memory_space<vmem>>, %arg10: memref<1x4xf32, #tpu.memory_space<vmem>>, %arg11: memref<1x4xf32, #tpu.memory_space<vmem>>, %arg12: memref<1x4xf32, #tpu.memory_space<vmem>>, %arg13: memref<1x4xf32, #tpu.memory_space<vmem>>, %arg14: memref<8x4xbf16, #tpu.memory_space<vmem>>, %arg15: memref<8x4xbf16, #tpu.memory_space<vmem>>, %arg16: memref<4x4xbf16, #tpu.memory_space<vmem>>, %arg17: memref<1x8xf32, #tpu.memory_space<vmem>>, %arg18: memref<1x8xf32, #tpu.memory_space<vmem>>, %arg19: memref<8x8xbf16, #tpu.memory_space<vmem>>, %arg20: memref<1x4xf32, #tpu.memory_space<vmem>>, %arg21: memref<1x4xf32, #tpu.memory_space<vmem>>, %arg22: memref<4x4xbf16, #tpu.memory_space<vmem>>, %arg23: memref<1x4xf32, #tpu.memory_space<vmem>>, %arg24: memref<1x4xf32, #tpu.memory_space<vmem>>, %arg25: memref<36x4xbf16, #tpu.memory_space<vmem>>, %arg26: memref<128x32xbf16, #tpu.memory_space<vmem>>, %arg27: memref<1x16xf32, #tpu.memory_space<vmem>>, %arg28: memref<1x16xf32, #tpu.memory_space<vmem>>, %arg29: memref<32x16xbf16, #tpu.memory_space<vmem>>, %arg30: memref<16x16xbf16, #tpu.memory_space<vmem>>, %arg31: memref<1x8xf32, #tpu.memory_space<vmem>>, %arg32: memref<1x8xf32, #tpu.memory_space<vmem>>, %arg33: memref<1x8xf32, #tpu.memory_space<vmem>>, %arg34: memref<1x8xf32, #tpu.memory_space<vmem>>, %arg35: memref<1x8xf32, #tpu.memory_space<vmem>>, %arg36: memref<1x8xf32, #tpu.memory_space<vmem>>, %arg37: memref<16x8xbf16, #tpu.memory_space<vmem>>, %arg38: memref<16x8xbf16, #tpu.memory_space<vmem>>, %arg39: memref<8x8xbf16, #tpu.memory_space<vmem>>, %arg40: memref<1x16xf32, #tpu.memory_space<vmem>>, %arg41: memref<1x16xf32, #tpu.memory_space<vmem>>, %arg42: memref<16x16xbf16, #tpu.memory_space<vmem>>, %arg43: memref<1x8xf32, #tpu.memory_space<vmem>>, %arg44: memref<1x8xf32, #tpu.memory_space<vmem>>, %arg45: memref<8x8xbf16, #tpu.memory_space<vmem>>, %arg46: memref<1x8xf32, #tpu.memory_space<vmem>>, %arg47: memref<1x8xf32, #tpu.memory_space<vmem>>, %arg48: memref<72x8xbf16, #tpu.memory_space<vmem>>, %arg49: memref<1x16xf32, #tpu.memory_space<vmem>>, %arg50: memref<1x16xf32, #tpu.memory_space<vmem>>, %arg51: memref<1x16xf32, #tpu.memory_space<vmem>>, %arg52: memref<1x16xf32, #tpu.memory_space<vmem>>, %arg53: memref<1x16xf32, #tpu.memory_space<vmem>>, %arg54: memref<1x16xf32, #tpu.memory_space<vmem>>, %arg55: memref<32x16xbf16, #tpu.memory_space<vmem>>, %arg56: memref<32x16xbf16, #tpu.memory_space<vmem>>, %arg57: memref<16x16xbf16, #tpu.memory_space<vmem>>, %arg58: memref<1x32xf32, #tpu.memory_space<vmem>>, %arg59: memref<1x32xf32, #tpu.memory_space<vmem>>, %arg60: memref<32x32xbf16, #tpu.memory_space<vmem>>, %arg61: memref<1x16xf32, #tpu.memory_space<vmem>>, %arg62: memref<1x16xf32, #tpu.memory_space<vmem>>, %arg63: memref<16x16xbf16, #tpu.memory_space<vmem>>, %arg64: memref<1x16xf32, #tpu.memory_space<vmem>>, %arg65: memref<1x16xf32, #tpu.memory_space<vmem>>, %arg66: memref<144x16xbf16, #tpu.memory_space<vmem>>, %arg67: memref<512x8xf32, #tpu.memory_space<vmem>>, %arg68: memref<128x16xf32, #tpu.memory_space<vmem>>, %arg69: memref<32x32xf32, #tpu.memory_space<vmem>>) attributes {dimension_semantics = [], scalar_prefetch = 0 : i64, scratch_operands = 0 : i64, tpu.core_type = #tpu.core_type<tc>} {
    %c0 = arith.constant 0 : index
    %c0_0 = arith.constant 0 : index
    %0 = vector.load %arg0[%c0, %c0_0] : memref<512x8xbf16, #tpu.memory_space<vmem>>, vector<512x8xbf16>
    %c0_1 = arith.constant 0 : index
    %c0_2 = arith.constant 0 : index
    %1 = vector.load %arg1[%c0_1, %c0_2] : memref<128x16xbf16, #tpu.memory_space<vmem>>, vector<128x16xbf16>
    %c0_3 = arith.constant 0 : index
    %c0_4 = arith.constant 0 : index
    %2 = vector.load %arg2[%c0_3, %c0_4] : memref<32x32xbf16, #tpu.memory_space<vmem>>, vector<32x32xbf16>
    %c0_5 = arith.constant 0 : index
    %c0_6 = arith.constant 0 : index
    %3 = vector.load %arg3[%c0_5, %c0_6] : memref<512x128xbf16, #tpu.memory_space<vmem>>, vector<512x128xbf16>
    %c0_7 = arith.constant 0 : index
    %c0_8 = arith.constant 0 : index
    %4 = vector.load %arg4[%c0_7, %c0_8] : memref<1x8xf32, #tpu.memory_space<vmem>>, vector<1x8xf32>
    %c0_9 = arith.constant 0 : index
    %c0_10 = arith.constant 0 : index
    %5 = vector.load %arg5[%c0_9, %c0_10] : memref<1x8xf32, #tpu.memory_space<vmem>>, vector<1x8xf32>
    %c0_11 = arith.constant 0 : index
    %c0_12 = arith.constant 0 : index
    %6 = vector.load %arg6[%c0_11, %c0_12] : memref<16x8xbf16, #tpu.memory_space<vmem>>, vector<16x8xbf16>
    %c0_13 = arith.constant 0 : index
    %c0_14 = arith.constant 0 : index
    %7 = vector.load %arg7[%c0_13, %c0_14] : memref<8x8xbf16, #tpu.memory_space<vmem>>, vector<8x8xbf16>
    %c0_15 = arith.constant 0 : index
    %c0_16 = arith.constant 0 : index
    %8 = vector.load %arg8[%c0_15, %c0_16] : memref<1x4xf32, #tpu.memory_space<vmem>>, vector<1x4xf32>
    %c0_17 = arith.constant 0 : index
    %c0_18 = arith.constant 0 : index
    %9 = vector.load %arg9[%c0_17, %c0_18] : memref<1x4xf32, #tpu.memory_space<vmem>>, vector<1x4xf32>
    %c0_19 = arith.constant 0 : index
    %c0_20 = arith.constant 0 : index
    %10 = vector.load %arg10[%c0_19, %c0_20] : memref<1x4xf32, #tpu.memory_space<vmem>>, vector<1x4xf32>
    %c0_21 = arith.constant 0 : index
    %c0_22 = arith.constant 0 : index
    %11 = vector.load %arg11[%c0_21, %c0_22] : memref<1x4xf32, #tpu.memory_space<vmem>>, vector<1x4xf32>
    %c0_23 = arith.constant 0 : index
    %c0_24 = arith.constant 0 : index
    %12 = vector.load %arg12[%c0_23, %c0_24] : memref<1x4xf32, #tpu.memory_space<vmem>>, vector<1x4xf32>
    %c0_25 = arith.constant 0 : index
    %c0_26 = arith.constant 0 : index
    %13 = vector.load %arg13[%c0_25, %c0_26] : memref<1x4xf32, #tpu.memory_space<vmem>>, vector<1x4xf32>
    %c0_27 = arith.constant 0 : index
    %c0_28 = arith.constant 0 : index
    %14 = vector.load %arg14[%c0_27, %c0_28] : memref<8x4xbf16, #tpu.memory_space<vmem>>, vector<8x4xbf16>
    %c0_29 = arith.constant 0 : index
    %c0_30 = arith.constant 0 : index
    %15 = vector.load %arg15[%c0_29, %c0_30] : memref<8x4xbf16, #tpu.memory_space<vmem>>, vector<8x4xbf16>
    %c0_31 = arith.constant 0 : index
    %c0_32 = arith.constant 0 : index
    %16 = vector.load %arg16[%c0_31, %c0_32] : memref<4x4xbf16, #tpu.memory_space<vmem>>, vector<4x4xbf16>
    %c0_33 = arith.constant 0 : index
    %c0_34 = arith.constant 0 : index
    %17 = vector.load %arg17[%c0_33, %c0_34] : memref<1x8xf32, #tpu.memory_space<vmem>>, vector<1x8xf32>
    %c0_35 = arith.constant 0 : index
    %c0_36 = arith.constant 0 : index
    %18 = vector.load %arg18[%c0_35, %c0_36] : memref<1x8xf32, #tpu.memory_space<vmem>>, vector<1x8xf32>
    %c0_37 = arith.constant 0 : index
    %c0_38 = arith.constant 0 : index
    %19 = vector.load %arg19[%c0_37, %c0_38] : memref<8x8xbf16, #tpu.memory_space<vmem>>, vector<8x8xbf16>
    %c0_39 = arith.constant 0 : index
    %c0_40 = arith.constant 0 : index
    %20 = vector.load %arg20[%c0_39, %c0_40] : memref<1x4xf32, #tpu.memory_space<vmem>>, vector<1x4xf32>
    %c0_41 = arith.constant 0 : index
    %c0_42 = arith.constant 0 : index
    %21 = vector.load %arg21[%c0_41, %c0_42] : memref<1x4xf32, #tpu.memory_space<vmem>>, vector<1x4xf32>
    %c0_43 = arith.constant 0 : index
    %c0_44 = arith.constant 0 : index
    %22 = vector.load %arg22[%c0_43, %c0_44] : memref<4x4xbf16, #tpu.memory_space<vmem>>, vector<4x4xbf16>
    %c0_45 = arith.constant 0 : index
    %c0_46 = arith.constant 0 : index
    %23 = vector.load %arg23[%c0_45, %c0_46] : memref<1x4xf32, #tpu.memory_space<vmem>>, vector<1x4xf32>
    %c0_47 = arith.constant 0 : index
    %c0_48 = arith.constant 0 : index
    %24 = vector.load %arg24[%c0_47, %c0_48] : memref<1x4xf32, #tpu.memory_space<vmem>>, vector<1x4xf32>
    %c0_49 = arith.constant 0 : index
    %c0_50 = arith.constant 0 : index
    %25 = vector.load %arg25[%c0_49, %c0_50] : memref<36x4xbf16, #tpu.memory_space<vmem>>, vector<36x4xbf16>
    %c0_51 = arith.constant 0 : index
    %c0_52 = arith.constant 0 : index
    %26 = vector.load %arg26[%c0_51, %c0_52] : memref<128x32xbf16, #tpu.memory_space<vmem>>, vector<128x32xbf16>
    %c0_53 = arith.constant 0 : index
    %c0_54 = arith.constant 0 : index
    %27 = vector.load %arg27[%c0_53, %c0_54] : memref<1x16xf32, #tpu.memory_space<vmem>>, vector<1x16xf32>
    %c0_55 = arith.constant 0 : index
    %c0_56 = arith.constant 0 : index
    %28 = vector.load %arg28[%c0_55, %c0_56] : memref<1x16xf32, #tpu.memory_space<vmem>>, vector<1x16xf32>
    %c0_57 = arith.constant 0 : index
    %c0_58 = arith.constant 0 : index
    %29 = vector.load %arg29[%c0_57, %c0_58] : memref<32x16xbf16, #tpu.memory_space<vmem>>, vector<32x16xbf16>
    %c0_59 = arith.constant 0 : index
    %c0_60 = arith.constant 0 : index
    %30 = vector.load %arg30[%c0_59, %c0_60] : memref<16x16xbf16, #tpu.memory_space<vmem>>, vector<16x16xbf16>
    %c0_61 = arith.constant 0 : index
    %c0_62 = arith.constant 0 : index
    %31 = vector.load %arg31[%c0_61, %c0_62] : memref<1x8xf32, #tpu.memory_space<vmem>>, vector<1x8xf32>
    %c0_63 = arith.constant 0 : index
    %c0_64 = arith.constant 0 : index
    %32 = vector.load %arg32[%c0_63, %c0_64] : memref<1x8xf32, #tpu.memory_space<vmem>>, vector<1x8xf32>
    %c0_65 = arith.constant 0 : index
    %c0_66 = arith.constant 0 : index
    %33 = vector.load %arg33[%c0_65, %c0_66] : memref<1x8xf32, #tpu.memory_space<vmem>>, vector<1x8xf32>
    %c0_67 = arith.constant 0 : index
    %c0_68 = arith.constant 0 : index
    %34 = vector.load %arg34[%c0_67, %c0_68] : memref<1x8xf32, #tpu.memory_space<vmem>>, vector<1x8xf32>
    %c0_69 = arith.constant 0 : index
    %c0_70 = arith.constant 0 : index
    %35 = vector.load %arg35[%c0_69, %c0_70] : memref<1x8xf32, #tpu.memory_space<vmem>>, vector<1x8xf32>
    %c0_71 = arith.constant 0 : index
    %c0_72 = arith.constant 0 : index
    %36 = vector.load %arg36[%c0_71, %c0_72] : memref<1x8xf32, #tpu.memory_space<vmem>>, vector<1x8xf32>
    %c0_73 = arith.constant 0 : index
    %c0_74 = arith.constant 0 : index
    %37 = vector.load %arg37[%c0_73, %c0_74] : memref<16x8xbf16, #tpu.memory_space<vmem>>, vector<16x8xbf16>
    %c0_75 = arith.constant 0 : index
    %c0_76 = arith.constant 0 : index
    %38 = vector.load %arg38[%c0_75, %c0_76] : memref<16x8xbf16, #tpu.memory_space<vmem>>, vector<16x8xbf16>
    %c0_77 = arith.constant 0 : index
    %c0_78 = arith.constant 0 : index
    %39 = vector.load %arg39[%c0_77, %c0_78] : memref<8x8xbf16, #tpu.memory_space<vmem>>, vector<8x8xbf16>
    %c0_79 = arith.constant 0 : index
    %c0_80 = arith.constant 0 : index
    %40 = vector.load %arg40[%c0_79, %c0_80] : memref<1x16xf32, #tpu.memory_space<vmem>>, vector<1x16xf32>
    %c0_81 = arith.constant 0 : index
    %c0_82 = arith.constant 0 : index
    %41 = vector.load %arg41[%c0_81, %c0_82] : memref<1x16xf32, #tpu.memory_space<vmem>>, vector<1x16xf32>
    %c0_83 = arith.constant 0 : index
    %c0_84 = arith.constant 0 : index
    %42 = vector.load %arg42[%c0_83, %c0_84] : memref<16x16xbf16, #tpu.memory_space<vmem>>, vector<16x16xbf16>
    %c0_85 = arith.constant 0 : index
    %c0_86 = arith.constant 0 : index
    %43 = vector.load %arg43[%c0_85, %c0_86] : memref<1x8xf32, #tpu.memory_space<vmem>>, vector<1x8xf32>
    %c0_87 = arith.constant 0 : index
    %c0_88 = arith.constant 0 : index
    %44 = vector.load %arg44[%c0_87, %c0_88] : memref<1x8xf32, #tpu.memory_space<vmem>>, vector<1x8xf32>
    %c0_89 = arith.constant 0 : index
    %c0_90 = arith.constant 0 : index
    %45 = vector.load %arg45[%c0_89, %c0_90] : memref<8x8xbf16, #tpu.memory_space<vmem>>, vector<8x8xbf16>
    %c0_91 = arith.constant 0 : index
    %c0_92 = arith.constant 0 : index
    %46 = vector.load %arg46[%c0_91, %c0_92] : memref<1x8xf32, #tpu.memory_space<vmem>>, vector<1x8xf32>
    %c0_93 = arith.constant 0 : index
    %c0_94 = arith.constant 0 : index
    %47 = vector.load %arg47[%c0_93, %c0_94] : memref<1x8xf32, #tpu.memory_space<vmem>>, vector<1x8xf32>
    %c0_95 = arith.constant 0 : index
    %c0_96 = arith.constant 0 : index
    %48 = vector.load %arg48[%c0_95, %c0_96] : memref<72x8xbf16, #tpu.memory_space<vmem>>, vector<72x8xbf16>
    %c0_97 = arith.constant 0 : index
    %c0_98 = arith.constant 0 : index
    %49 = vector.load %arg49[%c0_97, %c0_98] : memref<1x16xf32, #tpu.memory_space<vmem>>, vector<1x16xf32>
    %c0_99 = arith.constant 0 : index
    %c0_100 = arith.constant 0 : index
    %50 = vector.load %arg50[%c0_99, %c0_100] : memref<1x16xf32, #tpu.memory_space<vmem>>, vector<1x16xf32>
    %c0_101 = arith.constant 0 : index
    %c0_102 = arith.constant 0 : index
    %51 = vector.load %arg51[%c0_101, %c0_102] : memref<1x16xf32, #tpu.memory_space<vmem>>, vector<1x16xf32>
    %c0_103 = arith.constant 0 : index
    %c0_104 = arith.constant 0 : index
    %52 = vector.load %arg52[%c0_103, %c0_104] : memref<1x16xf32, #tpu.memory_space<vmem>>, vector<1x16xf32>
    %c0_105 = arith.constant 0 : index
    %c0_106 = arith.constant 0 : index
    %53 = vector.load %arg53[%c0_105, %c0_106] : memref<1x16xf32, #tpu.memory_space<vmem>>, vector<1x16xf32>
    %c0_107 = arith.constant 0 : index
    %c0_108 = arith.constant 0 : index
    %54 = vector.load %arg54[%c0_107, %c0_108] : memref<1x16xf32, #tpu.memory_space<vmem>>, vector<1x16xf32>
    %c0_109 = arith.constant 0 : index
    %c0_110 = arith.constant 0 : index
    %55 = vector.load %arg55[%c0_109, %c0_110] : memref<32x16xbf16, #tpu.memory_space<vmem>>, vector<32x16xbf16>
    %c0_111 = arith.constant 0 : index
    %c0_112 = arith.constant 0 : index
    %56 = vector.load %arg56[%c0_111, %c0_112] : memref<32x16xbf16, #tpu.memory_space<vmem>>, vector<32x16xbf16>
    %c0_113 = arith.constant 0 : index
    %c0_114 = arith.constant 0 : index
    %57 = vector.load %arg57[%c0_113, %c0_114] : memref<16x16xbf16, #tpu.memory_space<vmem>>, vector<16x16xbf16>
    %c0_115 = arith.constant 0 : index
    %c0_116 = arith.constant 0 : index
    %58 = vector.load %arg58[%c0_115, %c0_116] : memref<1x32xf32, #tpu.memory_space<vmem>>, vector<1x32xf32>
    %c0_117 = arith.constant 0 : index
    %c0_118 = arith.constant 0 : index
    %59 = vector.load %arg59[%c0_117, %c0_118] : memref<1x32xf32, #tpu.memory_space<vmem>>, vector<1x32xf32>
    %c0_119 = arith.constant 0 : index
    %c0_120 = arith.constant 0 : index
    %60 = vector.load %arg60[%c0_119, %c0_120] : memref<32x32xbf16, #tpu.memory_space<vmem>>, vector<32x32xbf16>
    %c0_121 = arith.constant 0 : index
    %c0_122 = arith.constant 0 : index
    %61 = vector.load %arg61[%c0_121, %c0_122] : memref<1x16xf32, #tpu.memory_space<vmem>>, vector<1x16xf32>
    %c0_123 = arith.constant 0 : index
    %c0_124 = arith.constant 0 : index
    %62 = vector.load %arg62[%c0_123, %c0_124] : memref<1x16xf32, #tpu.memory_space<vmem>>, vector<1x16xf32>
    %c0_125 = arith.constant 0 : index
    %c0_126 = arith.constant 0 : index
    %63 = vector.load %arg63[%c0_125, %c0_126] : memref<16x16xbf16, #tpu.memory_space<vmem>>, vector<16x16xbf16>
    %c0_127 = arith.constant 0 : index
    %c0_128 = arith.constant 0 : index
    %64 = vector.load %arg64[%c0_127, %c0_128] : memref<1x16xf32, #tpu.memory_space<vmem>>, vector<1x16xf32>
    %c0_129 = arith.constant 0 : index
    %c0_130 = arith.constant 0 : index
    %65 = vector.load %arg65[%c0_129, %c0_130] : memref<1x16xf32, #tpu.memory_space<vmem>>, vector<1x16xf32>
    %c0_131 = arith.constant 0 : index
    %c0_132 = arith.constant 0 : index
    %66 = vector.load %arg66[%c0_131, %c0_132] : memref<144x16xbf16, #tpu.memory_space<vmem>>, vector<144x16xbf16>
    %cst = arith.constant dense<0.000000e+00> : vector<32x16xf32>
    %67 = tpu.matmul %2, %55, %cst {dimension_numbers = #tpu.dot_dimension_numbers<[1], [0], [0], [1], [0, 0, 1, 1], [], []>} : vector<32x32xbf16>, vector<32x16xbf16>, vector<32x16xf32> -> vector<32x16xf32>
    %68 = vector.broadcast %54 : vector<1x16xf32> to vector<32x16xf32>
    %69 = arith.mulf %67, %68 : vector<32x16xf32>
    %70 = vector.broadcast %53 : vector<1x16xf32> to vector<32x16xf32>
    %71 = arith.addf %69, %70 : vector<32x16xf32>
    %cst_133 = arith.constant 3.000000e+00 : f32
    %72 = vector.broadcast %cst_133 : f32 to vector<32x16xf32>
    %73 = arith.addf %71, %72 : vector<32x16xf32>
    %cst_134 = arith.constant 0.000000e+00 : f32
    %cst_135 = arith.constant 6.000000e+00 : f32
    %74 = vector.broadcast %cst_134 : f32 to vector<32x16xf32>
    %75 = arith.maximumf %74, %73 : vector<32x16xf32>
    %76 = vector.broadcast %cst_135 : f32 to vector<32x16xf32>
    %77 = arith.minimumf %76, %75 : vector<32x16xf32>
    %78 = arith.mulf %71, %77 : vector<32x16xf32>
    %cst_136 = arith.constant 0.166666672 : f32
    %79 = vector.broadcast %cst_136 : f32 to vector<32x16xf32>
    %80 = arith.mulf %78, %79 : vector<32x16xf32>
    %81 = arith.truncf %80 : vector<32x16xf32> to vector<32x16xbf16>
    %cst_137 = arith.constant dense<0.000000e+00> : vector<32x16xf32>
    %82 = tpu.matmul %81, %63, %cst_137 {dimension_numbers = #tpu.dot_dimension_numbers<[1], [0], [0], [1], [0, 0, 1, 1], [], []>} : vector<32x16xbf16>, vector<16x16xbf16>, vector<32x16xf32> -> vector<32x16xf32>
    %83 = vector.broadcast %62 : vector<1x16xf32> to vector<32x16xf32>
    %84 = arith.mulf %82, %83 : vector<32x16xf32>
    %85 = vector.broadcast %61 : vector<1x16xf32> to vector<32x16xf32>
    %86 = arith.addf %84, %85 : vector<32x16xf32>
    %cst_138 = arith.constant 3.000000e+00 : f32
    %87 = vector.broadcast %cst_138 : f32 to vector<32x16xf32>
    %88 = arith.addf %86, %87 : vector<32x16xf32>
    %cst_139 = arith.constant 0.000000e+00 : f32
    %cst_140 = arith.constant 6.000000e+00 : f32
    %89 = vector.broadcast %cst_139 : f32 to vector<32x16xf32>
    %90 = arith.maximumf %89, %88 : vector<32x16xf32>
    %91 = vector.broadcast %cst_140 : f32 to vector<32x16xf32>
    %92 = arith.minimumf %91, %90 : vector<32x16xf32>
    %93 = arith.mulf %86, %92 : vector<32x16xf32>
    %cst_141 = arith.constant 0.166666672 : f32
    %94 = vector.broadcast %cst_141 : f32 to vector<32x16xf32>
    %95 = arith.mulf %93, %94 : vector<32x16xf32>
    %96 = arith.truncf %95 : vector<32x16xf32> to vector<32x16xbf16>
    %97 = vector.shape_cast %96 : vector<32x16xbf16> to vector<2x4x4x16xbf16>
    %cst_142 = arith.constant 0.000000e+00 : bf16
    %98 = vector.broadcast %cst_142 : bf16 to vector<2x4x1x16xbf16>
    %99 = tpu.concatenate %98, %97, %98 in 2 : vector<2x4x1x16xbf16>, vector<2x4x4x16xbf16>, vector<2x4x1x16xbf16> -> vector<2x4x6x16xbf16>
    %cst_143 = arith.constant 0.000000e+00 : bf16
    %100 = vector.broadcast %cst_143 : bf16 to vector<2x1x6x16xbf16>
    %101 = tpu.concatenate %100, %99, %100 in 1 : vector<2x1x6x16xbf16>, vector<2x4x6x16xbf16>, vector<2x1x6x16xbf16> -> vector<2x6x6x16xbf16>
    %102 = vector.extract_strided_slice %101 {offsets = [0, 0, 0, 0], sizes = [2, 4, 4, 16], strides = [1, 1, 1, 1]} : vector<2x6x6x16xbf16> to vector<2x4x4x16xbf16>
    %103 = vector.extract_strided_slice %101 {offsets = [0, 0, 1, 0], sizes = [2, 4, 4, 16], strides = [1, 1, 1, 1]} : vector<2x6x6x16xbf16> to vector<2x4x4x16xbf16>
    %104 = vector.extract_strided_slice %101 {offsets = [0, 0, 2, 0], sizes = [2, 4, 4, 16], strides = [1, 1, 1, 1]} : vector<2x6x6x16xbf16> to vector<2x4x4x16xbf16>
    %105 = vector.extract_strided_slice %101 {offsets = [0, 1, 0, 0], sizes = [2, 4, 4, 16], strides = [1, 1, 1, 1]} : vector<2x6x6x16xbf16> to vector<2x4x4x16xbf16>
    %106 = vector.extract_strided_slice %101 {offsets = [0, 1, 1, 0], sizes = [2, 4, 4, 16], strides = [1, 1, 1, 1]} : vector<2x6x6x16xbf16> to vector<2x4x4x16xbf16>
    %107 = vector.extract_strided_slice %101 {offsets = [0, 1, 2, 0], sizes = [2, 4, 4, 16], strides = [1, 1, 1, 1]} : vector<2x6x6x16xbf16> to vector<2x4x4x16xbf16>
    %108 = vector.extract_strided_slice %101 {offsets = [0, 2, 0, 0], sizes = [2, 4, 4, 16], strides = [1, 1, 1, 1]} : vector<2x6x6x16xbf16> to vector<2x4x4x16xbf16>
    %109 = vector.extract_strided_slice %101 {offsets = [0, 2, 1, 0], sizes = [2, 4, 4, 16], strides = [1, 1, 1, 1]} : vector<2x6x6x16xbf16> to vector<2x4x4x16xbf16>
    %110 = vector.extract_strided_slice %101 {offsets = [0, 2, 2, 0], sizes = [2, 4, 4, 16], strides = [1, 1, 1, 1]} : vector<2x6x6x16xbf16> to vector<2x4x4x16xbf16>
    %111 = tpu.concatenate %102, %103, %104, %105, %106, %107, %108, %109, %110 in 3 : vector<2x4x4x16xbf16>, vector<2x4x4x16xbf16>, vector<2x4x4x16xbf16>, vector<2x4x4x16xbf16>, vector<2x4x4x16xbf16>, vector<2x4x4x16xbf16>, vector<2x4x4x16xbf16>, vector<2x4x4x16xbf16>, vector<2x4x4x16xbf16> -> vector<2x4x4x144xbf16>
    %112 = vector.shape_cast %111 : vector<2x4x4x144xbf16> to vector<32x144xbf16>
    %cst_144 = arith.constant dense<0.000000e+00> : vector<32x16xf32>
    %113 = tpu.matmul %112, %66, %cst_144 {dimension_numbers = #tpu.dot_dimension_numbers<[1], [0], [0], [1], [0, 0, 1, 1], [], []>} : vector<32x144xbf16>, vector<144x16xbf16>, vector<32x16xf32> -> vector<32x16xf32>
    %114 = vector.broadcast %65 : vector<1x16xf32> to vector<32x16xf32>
    %115 = arith.mulf %113, %114 : vector<32x16xf32>
    %116 = vector.broadcast %64 : vector<1x16xf32> to vector<32x16xf32>
    %117 = arith.addf %115, %116 : vector<32x16xf32>
    %cst_145 = arith.constant 3.000000e+00 : f32
    %118 = vector.broadcast %cst_145 : f32 to vector<32x16xf32>
    %119 = arith.addf %117, %118 : vector<32x16xf32>
    %cst_146 = arith.constant 0.000000e+00 : f32
    %cst_147 = arith.constant 6.000000e+00 : f32
    %120 = vector.broadcast %cst_146 : f32 to vector<32x16xf32>
    %121 = arith.maximumf %120, %119 : vector<32x16xf32>
    %122 = vector.broadcast %cst_147 : f32 to vector<32x16xf32>
    %123 = arith.minimumf %122, %121 : vector<32x16xf32>
    %124 = arith.mulf %117, %123 : vector<32x16xf32>
    %cst_148 = arith.constant 0.166666672 : f32
    %125 = vector.broadcast %cst_148 : f32 to vector<32x16xf32>
    %126 = arith.mulf %124, %125 : vector<32x16xf32>
    %127 = arith.truncf %126 : vector<32x16xf32> to vector<32x16xbf16>
    %cst_149 = arith.constant dense<0.000000e+00> : vector<32x16xf32>
    %128 = tpu.matmul %127, %57, %cst_149 {dimension_numbers = #tpu.dot_dimension_numbers<[1], [0], [0], [1], [0, 0, 1, 1], [], []>} : vector<32x16xbf16>, vector<16x16xbf16>, vector<32x16xf32> -> vector<32x16xf32>
    %129 = vector.broadcast %51 : vector<1x16xf32> to vector<32x16xf32>
    %130 = arith.mulf %128, %129 : vector<32x16xf32>
    %131 = vector.broadcast %49 : vector<1x16xf32> to vector<32x16xf32>
    %132 = arith.addf %130, %131 : vector<32x16xf32>
    %cst_150 = arith.constant 0.000000e+00 : f32
    %133 = vector.broadcast %cst_150 : f32 to vector<32x16xf32>
    %134 = arith.cmpf ogt, %132, %133 : vector<32x16xf32>
    %cst_151 = arith.constant 1.000000e-01 : f32
    %135 = vector.broadcast %cst_151 : f32 to vector<32x16xf32>
    %136 = arith.mulf %135, %132 : vector<32x16xf32>
    %137 = arith.select %134, %132, %136 : vector<32x16xi1>, vector<32x16xf32>
    %cst_152 = arith.constant dense<0.000000e+00> : vector<32x16xf32>
    %138 = tpu.matmul %2, %56, %cst_152 {dimension_numbers = #tpu.dot_dimension_numbers<[1], [0], [0], [1], [0, 0, 1, 1], [], []>} : vector<32x32xbf16>, vector<32x16xbf16>, vector<32x16xf32> -> vector<32x16xf32>
    %139 = vector.broadcast %52 : vector<1x16xf32> to vector<32x16xf32>
    %140 = arith.mulf %138, %139 : vector<32x16xf32>
    %141 = vector.broadcast %50 : vector<1x16xf32> to vector<32x16xf32>
    %142 = arith.addf %140, %141 : vector<32x16xf32>
    %cst_153 = arith.constant 0.000000e+00 : f32
    %143 = vector.broadcast %cst_153 : f32 to vector<32x16xf32>
    %144 = arith.cmpf ogt, %142, %143 : vector<32x16xf32>
    %cst_154 = arith.constant 1.000000e-01 : f32
    %145 = vector.broadcast %cst_154 : f32 to vector<32x16xf32>
    %146 = arith.mulf %145, %142 : vector<32x16xf32>
    %147 = arith.select %144, %142, %146 : vector<32x16xi1>, vector<32x16xf32>
    %148 = tpu.concatenate %137, %147 in 1 : vector<32x16xf32>, vector<32x16xf32> -> vector<32x32xf32>
    %149 = arith.truncf %148 : vector<32x32xf32> to vector<32x32xbf16>
    %cst_155 = arith.constant dense<0.000000e+00> : vector<32x32xf32>
    %150 = tpu.matmul %149, %60, %cst_155 {dimension_numbers = #tpu.dot_dimension_numbers<[1], [0], [0], [1], [0, 0, 1, 1], [], []>} : vector<32x32xbf16>, vector<32x32xbf16>, vector<32x32xf32> -> vector<32x32xf32>
    %151 = vector.broadcast %59 : vector<1x32xf32> to vector<32x32xf32>
    %152 = arith.mulf %150, %151 : vector<32x32xf32>
    %153 = vector.broadcast %58 : vector<1x32xf32> to vector<32x32xf32>
    %154 = arith.addf %152, %153 : vector<32x32xf32>
    %cst_156 = arith.constant 3.000000e+00 : f32
    %155 = vector.broadcast %cst_156 : f32 to vector<32x32xf32>
    %156 = arith.addf %154, %155 : vector<32x32xf32>
    %cst_157 = arith.constant 0.000000e+00 : f32
    %cst_158 = arith.constant 6.000000e+00 : f32
    %157 = vector.broadcast %cst_157 : f32 to vector<32x32xf32>
    %158 = arith.maximumf %157, %156 : vector<32x32xf32>
    %159 = vector.broadcast %cst_158 : f32 to vector<32x32xf32>
    %160 = arith.minimumf %159, %158 : vector<32x32xf32>
    %161 = arith.mulf %154, %160 : vector<32x32xf32>
    %cst_159 = arith.constant 0.166666672 : f32
    %162 = vector.broadcast %cst_159 : f32 to vector<32x32xf32>
    %163 = arith.mulf %161, %162 : vector<32x32xf32>
    %164 = arith.truncf %163 : vector<32x32xf32> to vector<32x32xbf16>
    %cst_160 = arith.constant dense<0.000000e+00> : vector<32x16xf32>
    %165 = tpu.matmul %164, %29, %cst_160 {dimension_numbers = #tpu.dot_dimension_numbers<[1], [0], [0], [1], [0, 0, 1, 1], [], []>} : vector<32x32xbf16>, vector<32x16xbf16>, vector<32x16xf32> -> vector<32x16xf32>
    %166 = arith.truncf %165 : vector<32x16xf32> to vector<32x16xbf16>
    %cst_161 = arith.constant dense<0.000000e+00> : vector<128x16xf32>
    %167 = tpu.matmul %26, %166, %cst_161 {dimension_numbers = #tpu.dot_dimension_numbers<[1], [0], [0], [1], [0, 0, 1, 1], [], []>} : vector<128x32xbf16>, vector<32x16xbf16>, vector<128x16xf32> -> vector<128x16xf32>
    %cst_162 = arith.constant dense<0.000000e+00> : vector<128x16xf32>
    %168 = tpu.matmul %1, %30, %cst_162 {dimension_numbers = #tpu.dot_dimension_numbers<[1], [0], [0], [1], [0, 0, 1, 1], [], []>} : vector<128x16xbf16>, vector<16x16xbf16>, vector<128x16xf32> -> vector<128x16xf32>
    %169 = arith.addf %167, %168 : vector<128x16xf32>
    %170 = vector.broadcast %28 : vector<1x16xf32> to vector<128x16xf32>
    %171 = arith.mulf %169, %170 : vector<128x16xf32>
    %172 = vector.broadcast %27 : vector<1x16xf32> to vector<128x16xf32>
    %173 = arith.addf %171, %172 : vector<128x16xf32>
    %cst_163 = arith.constant 3.000000e+00 : f32
    %174 = vector.broadcast %cst_163 : f32 to vector<128x16xf32>
    %175 = arith.addf %173, %174 : vector<128x16xf32>
    %cst_164 = arith.constant 0.000000e+00 : f32
    %cst_165 = arith.constant 6.000000e+00 : f32
    %176 = vector.broadcast %cst_164 : f32 to vector<128x16xf32>
    %177 = arith.maximumf %176, %175 : vector<128x16xf32>
    %178 = vector.broadcast %cst_165 : f32 to vector<128x16xf32>
    %179 = arith.minimumf %178, %177 : vector<128x16xf32>
    %180 = arith.mulf %173, %179 : vector<128x16xf32>
    %cst_166 = arith.constant 0.166666672 : f32
    %181 = vector.broadcast %cst_166 : f32 to vector<128x16xf32>
    %182 = arith.mulf %180, %181 : vector<128x16xf32>
    %183 = arith.truncf %182 : vector<128x16xf32> to vector<128x16xbf16>
    %cst_167 = arith.constant dense<0.000000e+00> : vector<128x8xf32>
    %184 = tpu.matmul %183, %37, %cst_167 {dimension_numbers = #tpu.dot_dimension_numbers<[1], [0], [0], [1], [0, 0, 1, 1], [], []>} : vector<128x16xbf16>, vector<16x8xbf16>, vector<128x8xf32> -> vector<128x8xf32>
    %185 = vector.broadcast %36 : vector<1x8xf32> to vector<128x8xf32>
    %186 = arith.mulf %184, %185 : vector<128x8xf32>
    %187 = vector.broadcast %35 : vector<1x8xf32> to vector<128x8xf32>
    %188 = arith.addf %186, %187 : vector<128x8xf32>
    %cst_168 = arith.constant 3.000000e+00 : f32
    %189 = vector.broadcast %cst_168 : f32 to vector<128x8xf32>
    %190 = arith.addf %188, %189 : vector<128x8xf32>
    %cst_169 = arith.constant 0.000000e+00 : f32
    %cst_170 = arith.constant 6.000000e+00 : f32
    %191 = vector.broadcast %cst_169 : f32 to vector<128x8xf32>
    %192 = arith.maximumf %191, %190 : vector<128x8xf32>
    %193 = vector.broadcast %cst_170 : f32 to vector<128x8xf32>
    %194 = arith.minimumf %193, %192 : vector<128x8xf32>
    %195 = arith.mulf %188, %194 : vector<128x8xf32>
    %cst_171 = arith.constant 0.166666672 : f32
    %196 = vector.broadcast %cst_171 : f32 to vector<128x8xf32>
    %197 = arith.mulf %195, %196 : vector<128x8xf32>
    %198 = arith.truncf %197 : vector<128x8xf32> to vector<128x8xbf16>
    %cst_172 = arith.constant dense<0.000000e+00> : vector<128x8xf32>
    %199 = tpu.matmul %198, %45, %cst_172 {dimension_numbers = #tpu.dot_dimension_numbers<[1], [0], [0], [1], [0, 0, 1, 1], [], []>} : vector<128x8xbf16>, vector<8x8xbf16>, vector<128x8xf32> -> vector<128x8xf32>
    %200 = vector.broadcast %44 : vector<1x8xf32> to vector<128x8xf32>
    %201 = arith.mulf %199, %200 : vector<128x8xf32>
    %202 = vector.broadcast %43 : vector<1x8xf32> to vector<128x8xf32>
    %203 = arith.addf %201, %202 : vector<128x8xf32>
    %cst_173 = arith.constant 3.000000e+00 : f32
    %204 = vector.broadcast %cst_173 : f32 to vector<128x8xf32>
    %205 = arith.addf %203, %204 : vector<128x8xf32>
    %cst_174 = arith.constant 0.000000e+00 : f32
    %cst_175 = arith.constant 6.000000e+00 : f32
    %206 = vector.broadcast %cst_174 : f32 to vector<128x8xf32>
    %207 = arith.maximumf %206, %205 : vector<128x8xf32>
    %208 = vector.broadcast %cst_175 : f32 to vector<128x8xf32>
    %209 = arith.minimumf %208, %207 : vector<128x8xf32>
    %210 = arith.mulf %203, %209 : vector<128x8xf32>
    %cst_176 = arith.constant 0.166666672 : f32
    %211 = vector.broadcast %cst_176 : f32 to vector<128x8xf32>
    %212 = arith.mulf %210, %211 : vector<128x8xf32>
    %213 = arith.truncf %212 : vector<128x8xf32> to vector<128x8xbf16>
    %214 = vector.shape_cast %213 : vector<128x8xbf16> to vector<2x8x8x8xbf16>
    %cst_177 = arith.constant 0.000000e+00 : bf16
    %215 = vector.broadcast %cst_177 : bf16 to vector<2x8x1x8xbf16>
    %216 = tpu.concatenate %215, %214, %215 in 2 : vector<2x8x1x8xbf16>, vector<2x8x8x8xbf16>, vector<2x8x1x8xbf16> -> vector<2x8x10x8xbf16>
    %cst_178 = arith.constant 0.000000e+00 : bf16
    %217 = vector.broadcast %cst_178 : bf16 to vector<2x1x10x8xbf16>
    %218 = tpu.concatenate %217, %216, %217 in 1 : vector<2x1x10x8xbf16>, vector<2x8x10x8xbf16>, vector<2x1x10x8xbf16> -> vector<2x10x10x8xbf16>
    %219 = vector.extract_strided_slice %218 {offsets = [0, 0, 0, 0], sizes = [2, 8, 8, 8], strides = [1, 1, 1, 1]} : vector<2x10x10x8xbf16> to vector<2x8x8x8xbf16>
    %220 = vector.extract_strided_slice %218 {offsets = [0, 0, 1, 0], sizes = [2, 8, 8, 8], strides = [1, 1, 1, 1]} : vector<2x10x10x8xbf16> to vector<2x8x8x8xbf16>
    %221 = vector.extract_strided_slice %218 {offsets = [0, 0, 2, 0], sizes = [2, 8, 8, 8], strides = [1, 1, 1, 1]} : vector<2x10x10x8xbf16> to vector<2x8x8x8xbf16>
    %222 = vector.extract_strided_slice %218 {offsets = [0, 1, 0, 0], sizes = [2, 8, 8, 8], strides = [1, 1, 1, 1]} : vector<2x10x10x8xbf16> to vector<2x8x8x8xbf16>
    %223 = vector.extract_strided_slice %218 {offsets = [0, 1, 1, 0], sizes = [2, 8, 8, 8], strides = [1, 1, 1, 1]} : vector<2x10x10x8xbf16> to vector<2x8x8x8xbf16>
    %224 = vector.extract_strided_slice %218 {offsets = [0, 1, 2, 0], sizes = [2, 8, 8, 8], strides = [1, 1, 1, 1]} : vector<2x10x10x8xbf16> to vector<2x8x8x8xbf16>
    %225 = vector.extract_strided_slice %218 {offsets = [0, 2, 0, 0], sizes = [2, 8, 8, 8], strides = [1, 1, 1, 1]} : vector<2x10x10x8xbf16> to vector<2x8x8x8xbf16>
    %226 = vector.extract_strided_slice %218 {offsets = [0, 2, 1, 0], sizes = [2, 8, 8, 8], strides = [1, 1, 1, 1]} : vector<2x10x10x8xbf16> to vector<2x8x8x8xbf16>
    %227 = vector.extract_strided_slice %218 {offsets = [0, 2, 2, 0], sizes = [2, 8, 8, 8], strides = [1, 1, 1, 1]} : vector<2x10x10x8xbf16> to vector<2x8x8x8xbf16>
    %228 = tpu.concatenate %219, %220, %221, %222, %223, %224, %225, %226, %227 in 3 : vector<2x8x8x8xbf16>, vector<2x8x8x8xbf16>, vector<2x8x8x8xbf16>, vector<2x8x8x8xbf16>, vector<2x8x8x8xbf16>, vector<2x8x8x8xbf16>, vector<2x8x8x8xbf16>, vector<2x8x8x8xbf16>, vector<2x8x8x8xbf16> -> vector<2x8x8x72xbf16>
    %229 = vector.shape_cast %228 : vector<2x8x8x72xbf16> to vector<128x72xbf16>
    %cst_179 = arith.constant dense<0.000000e+00> : vector<128x8xf32>
    %230 = tpu.matmul %229, %48, %cst_179 {dimension_numbers = #tpu.dot_dimension_numbers<[1], [0], [0], [1], [0, 0, 1, 1], [], []>} : vector<128x72xbf16>, vector<72x8xbf16>, vector<128x8xf32> -> vector<128x8xf32>
    %231 = vector.broadcast %47 : vector<1x8xf32> to vector<128x8xf32>
    %232 = arith.mulf %230, %231 : vector<128x8xf32>
    %233 = vector.broadcast %46 : vector<1x8xf32> to vector<128x8xf32>
    %234 = arith.addf %232, %233 : vector<128x8xf32>
    %cst_180 = arith.constant 3.000000e+00 : f32
    %235 = vector.broadcast %cst_180 : f32 to vector<128x8xf32>
    %236 = arith.addf %234, %235 : vector<128x8xf32>
    %cst_181 = arith.constant 0.000000e+00 : f32
    %cst_182 = arith.constant 6.000000e+00 : f32
    %237 = vector.broadcast %cst_181 : f32 to vector<128x8xf32>
    %238 = arith.maximumf %237, %236 : vector<128x8xf32>
    %239 = vector.broadcast %cst_182 : f32 to vector<128x8xf32>
    %240 = arith.minimumf %239, %238 : vector<128x8xf32>
    %241 = arith.mulf %234, %240 : vector<128x8xf32>
    %cst_183 = arith.constant 0.166666672 : f32
    %242 = vector.broadcast %cst_183 : f32 to vector<128x8xf32>
    %243 = arith.mulf %241, %242 : vector<128x8xf32>
    %244 = arith.truncf %243 : vector<128x8xf32> to vector<128x8xbf16>
    %cst_184 = arith.constant dense<0.000000e+00> : vector<128x8xf32>
    %245 = tpu.matmul %244, %39, %cst_184 {dimension_numbers = #tpu.dot_dimension_numbers<[1], [0], [0], [1], [0, 0, 1, 1], [], []>} : vector<128x8xbf16>, vector<8x8xbf16>, vector<128x8xf32> -> vector<128x8xf32>
    %246 = vector.broadcast %33 : vector<1x8xf32> to vector<128x8xf32>
    %247 = arith.mulf %245, %246 : vector<128x8xf32>
    %248 = vector.broadcast %31 : vector<1x8xf32> to vector<128x8xf32>
    %249 = arith.addf %247, %248 : vector<128x8xf32>
    %cst_185 = arith.constant 0.000000e+00 : f32
    %250 = vector.broadcast %cst_185 : f32 to vector<128x8xf32>
    %251 = arith.cmpf ogt, %249, %250 : vector<128x8xf32>
    %cst_186 = arith.constant 1.000000e-01 : f32
    %252 = vector.broadcast %cst_186 : f32 to vector<128x8xf32>
    %253 = arith.mulf %252, %249 : vector<128x8xf32>
    %254 = arith.select %251, %249, %253 : vector<128x8xi1>, vector<128x8xf32>
    %255 = arith.truncf %182 : vector<128x16xf32> to vector<128x16xbf16>
    %cst_187 = arith.constant dense<0.000000e+00> : vector<128x8xf32>
    %256 = tpu.matmul %255, %38, %cst_187 {dimension_numbers = #tpu.dot_dimension_numbers<[1], [0], [0], [1], [0, 0, 1, 1], [], []>} : vector<128x16xbf16>, vector<16x8xbf16>, vector<128x8xf32> -> vector<128x8xf32>
    %257 = vector.broadcast %34 : vector<1x8xf32> to vector<128x8xf32>
    %258 = arith.mulf %256, %257 : vector<128x8xf32>
    %259 = vector.broadcast %32 : vector<1x8xf32> to vector<128x8xf32>
    %260 = arith.addf %258, %259 : vector<128x8xf32>
    %cst_188 = arith.constant 0.000000e+00 : f32
    %261 = vector.broadcast %cst_188 : f32 to vector<128x8xf32>
    %262 = arith.cmpf ogt, %260, %261 : vector<128x8xf32>
    %cst_189 = arith.constant 1.000000e-01 : f32
    %263 = vector.broadcast %cst_189 : f32 to vector<128x8xf32>
    %264 = arith.mulf %263, %260 : vector<128x8xf32>
    %265 = arith.select %262, %260, %264 : vector<128x8xi1>, vector<128x8xf32>
    %266 = tpu.concatenate %254, %265 in 1 : vector<128x8xf32>, vector<128x8xf32> -> vector<128x16xf32>
    %267 = arith.truncf %266 : vector<128x16xf32> to vector<128x16xbf16>
    %cst_190 = arith.constant dense<0.000000e+00> : vector<128x16xf32>
    %268 = tpu.matmul %267, %42, %cst_190 {dimension_numbers = #tpu.dot_dimension_numbers<[1], [0], [0], [1], [0, 0, 1, 1], [], []>} : vector<128x16xbf16>, vector<16x16xbf16>, vector<128x16xf32> -> vector<128x16xf32>
    %269 = vector.broadcast %41 : vector<1x16xf32> to vector<128x16xf32>
    %270 = arith.mulf %268, %269 : vector<128x16xf32>
    %271 = vector.broadcast %40 : vector<1x16xf32> to vector<128x16xf32>
    %272 = arith.addf %270, %271 : vector<128x16xf32>
    %cst_191 = arith.constant 3.000000e+00 : f32
    %273 = vector.broadcast %cst_191 : f32 to vector<128x16xf32>
    %274 = arith.addf %272, %273 : vector<128x16xf32>
    %cst_192 = arith.constant 0.000000e+00 : f32
    %cst_193 = arith.constant 6.000000e+00 : f32
    %275 = vector.broadcast %cst_192 : f32 to vector<128x16xf32>
    %276 = arith.maximumf %275, %274 : vector<128x16xf32>
    %277 = vector.broadcast %cst_193 : f32 to vector<128x16xf32>
    %278 = arith.minimumf %277, %276 : vector<128x16xf32>
    %279 = arith.mulf %272, %278 : vector<128x16xf32>
    %cst_194 = arith.constant 0.166666672 : f32
    %280 = vector.broadcast %cst_194 : f32 to vector<128x16xf32>
    %281 = arith.mulf %279, %280 : vector<128x16xf32>
    %282 = arith.truncf %281 : vector<128x16xf32> to vector<128x16xbf16>
    %cst_195 = arith.constant dense<0.000000e+00> : vector<128x8xf32>
    %283 = tpu.matmul %282, %6, %cst_195 {dimension_numbers = #tpu.dot_dimension_numbers<[1], [0], [0], [1], [0, 0, 1, 1], [], []>} : vector<128x16xbf16>, vector<16x8xbf16>, vector<128x8xf32> -> vector<128x8xf32>
    %284 = arith.truncf %283 : vector<128x8xf32> to vector<128x8xbf16>
    %cst_196 = arith.constant dense<0.000000e+00> : vector<512x8xf32>
    %285 = tpu.matmul %3, %284, %cst_196 {dimension_numbers = #tpu.dot_dimension_numbers<[1], [0], [0], [1], [0, 0, 1, 1], [], []>} : vector<512x128xbf16>, vector<128x8xbf16>, vector<512x8xf32> -> vector<512x8xf32>
    %cst_197 = arith.constant dense<0.000000e+00> : vector<512x8xf32>
    %286 = tpu.matmul %0, %7, %cst_197 {dimension_numbers = #tpu.dot_dimension_numbers<[1], [0], [0], [1], [0, 0, 1, 1], [], []>} : vector<512x8xbf16>, vector<8x8xbf16>, vector<512x8xf32> -> vector<512x8xf32>
    %287 = arith.addf %285, %286 : vector<512x8xf32>
    %288 = vector.broadcast %5 : vector<1x8xf32> to vector<512x8xf32>
    %289 = arith.mulf %287, %288 : vector<512x8xf32>
    %290 = vector.broadcast %4 : vector<1x8xf32> to vector<512x8xf32>
    %291 = arith.addf %289, %290 : vector<512x8xf32>
    %cst_198 = arith.constant 3.000000e+00 : f32
    %292 = vector.broadcast %cst_198 : f32 to vector<512x8xf32>
    %293 = arith.addf %291, %292 : vector<512x8xf32>
    %cst_199 = arith.constant 0.000000e+00 : f32
    %cst_200 = arith.constant 6.000000e+00 : f32
    %294 = vector.broadcast %cst_199 : f32 to vector<512x8xf32>
    %295 = arith.maximumf %294, %293 : vector<512x8xf32>
    %296 = vector.broadcast %cst_200 : f32 to vector<512x8xf32>
    %297 = arith.minimumf %296, %295 : vector<512x8xf32>
    %298 = arith.mulf %291, %297 : vector<512x8xf32>
    %cst_201 = arith.constant 0.166666672 : f32
    %299 = vector.broadcast %cst_201 : f32 to vector<512x8xf32>
    %300 = arith.mulf %298, %299 : vector<512x8xf32>
    %301 = arith.truncf %300 : vector<512x8xf32> to vector<512x8xbf16>
    %cst_202 = arith.constant dense<0.000000e+00> : vector<512x4xf32>
    %302 = tpu.matmul %301, %14, %cst_202 {dimension_numbers = #tpu.dot_dimension_numbers<[1], [0], [0], [1], [0, 0, 1, 1], [], []>} : vector<512x8xbf16>, vector<8x4xbf16>, vector<512x4xf32> -> vector<512x4xf32>
    %303 = vector.broadcast %13 : vector<1x4xf32> to vector<512x4xf32>
    %304 = arith.mulf %302, %303 : vector<512x4xf32>
    %305 = vector.broadcast %12 : vector<1x4xf32> to vector<512x4xf32>
    %306 = arith.addf %304, %305 : vector<512x4xf32>
    %cst_203 = arith.constant 3.000000e+00 : f32
    %307 = vector.broadcast %cst_203 : f32 to vector<512x4xf32>
    %308 = arith.addf %306, %307 : vector<512x4xf32>
    %cst_204 = arith.constant 0.000000e+00 : f32
    %cst_205 = arith.constant 6.000000e+00 : f32
    %309 = vector.broadcast %cst_204 : f32 to vector<512x4xf32>
    %310 = arith.maximumf %309, %308 : vector<512x4xf32>
    %311 = vector.broadcast %cst_205 : f32 to vector<512x4xf32>
    %312 = arith.minimumf %311, %310 : vector<512x4xf32>
    %313 = arith.mulf %306, %312 : vector<512x4xf32>
    %cst_206 = arith.constant 0.166666672 : f32
    %314 = vector.broadcast %cst_206 : f32 to vector<512x4xf32>
    %315 = arith.mulf %313, %314 : vector<512x4xf32>
    %316 = arith.truncf %315 : vector<512x4xf32> to vector<512x4xbf16>
    %cst_207 = arith.constant dense<0.000000e+00> : vector<512x4xf32>
    %317 = tpu.matmul %316, %22, %cst_207 {dimension_numbers = #tpu.dot_dimension_numbers<[1], [0], [0], [1], [0, 0, 1, 1], [], []>} : vector<512x4xbf16>, vector<4x4xbf16>, vector<512x4xf32> -> vector<512x4xf32>
    %318 = vector.broadcast %21 : vector<1x4xf32> to vector<512x4xf32>
    %319 = arith.mulf %317, %318 : vector<512x4xf32>
    %320 = vector.broadcast %20 : vector<1x4xf32> to vector<512x4xf32>
    %321 = arith.addf %319, %320 : vector<512x4xf32>
    %cst_208 = arith.constant 3.000000e+00 : f32
    %322 = vector.broadcast %cst_208 : f32 to vector<512x4xf32>
    %323 = arith.addf %321, %322 : vector<512x4xf32>
    %cst_209 = arith.constant 0.000000e+00 : f32
    %cst_210 = arith.constant 6.000000e+00 : f32
    %324 = vector.broadcast %cst_209 : f32 to vector<512x4xf32>
    %325 = arith.maximumf %324, %323 : vector<512x4xf32>
    %326 = vector.broadcast %cst_210 : f32 to vector<512x4xf32>
    %327 = arith.minimumf %326, %325 : vector<512x4xf32>
    %328 = arith.mulf %321, %327 : vector<512x4xf32>
    %cst_211 = arith.constant 0.166666672 : f32
    %329 = vector.broadcast %cst_211 : f32 to vector<512x4xf32>
    %330 = arith.mulf %328, %329 : vector<512x4xf32>
    %331 = arith.truncf %330 : vector<512x4xf32> to vector<512x4xbf16>
    %332 = vector.shape_cast %331 : vector<512x4xbf16> to vector<2x16x16x4xbf16>
    %cst_212 = arith.constant 0.000000e+00 : bf16
    %333 = vector.broadcast %cst_212 : bf16 to vector<2x16x1x4xbf16>
    %334 = tpu.concatenate %333, %332, %333 in 2 : vector<2x16x1x4xbf16>, vector<2x16x16x4xbf16>, vector<2x16x1x4xbf16> -> vector<2x16x18x4xbf16>
    %cst_213 = arith.constant 0.000000e+00 : bf16
    %335 = vector.broadcast %cst_213 : bf16 to vector<2x1x18x4xbf16>
    %336 = tpu.concatenate %335, %334, %335 in 1 : vector<2x1x18x4xbf16>, vector<2x16x18x4xbf16>, vector<2x1x18x4xbf16> -> vector<2x18x18x4xbf16>
    %337 = vector.extract_strided_slice %336 {offsets = [0, 0, 0, 0], sizes = [2, 16, 16, 4], strides = [1, 1, 1, 1]} : vector<2x18x18x4xbf16> to vector<2x16x16x4xbf16>
    %338 = vector.extract_strided_slice %336 {offsets = [0, 0, 1, 0], sizes = [2, 16, 16, 4], strides = [1, 1, 1, 1]} : vector<2x18x18x4xbf16> to vector<2x16x16x4xbf16>
    %339 = vector.extract_strided_slice %336 {offsets = [0, 0, 2, 0], sizes = [2, 16, 16, 4], strides = [1, 1, 1, 1]} : vector<2x18x18x4xbf16> to vector<2x16x16x4xbf16>
    %340 = vector.extract_strided_slice %336 {offsets = [0, 1, 0, 0], sizes = [2, 16, 16, 4], strides = [1, 1, 1, 1]} : vector<2x18x18x4xbf16> to vector<2x16x16x4xbf16>
    %341 = vector.extract_strided_slice %336 {offsets = [0, 1, 1, 0], sizes = [2, 16, 16, 4], strides = [1, 1, 1, 1]} : vector<2x18x18x4xbf16> to vector<2x16x16x4xbf16>
    %342 = vector.extract_strided_slice %336 {offsets = [0, 1, 2, 0], sizes = [2, 16, 16, 4], strides = [1, 1, 1, 1]} : vector<2x18x18x4xbf16> to vector<2x16x16x4xbf16>
    %343 = vector.extract_strided_slice %336 {offsets = [0, 2, 0, 0], sizes = [2, 16, 16, 4], strides = [1, 1, 1, 1]} : vector<2x18x18x4xbf16> to vector<2x16x16x4xbf16>
    %344 = vector.extract_strided_slice %336 {offsets = [0, 2, 1, 0], sizes = [2, 16, 16, 4], strides = [1, 1, 1, 1]} : vector<2x18x18x4xbf16> to vector<2x16x16x4xbf16>
    %345 = vector.extract_strided_slice %336 {offsets = [0, 2, 2, 0], sizes = [2, 16, 16, 4], strides = [1, 1, 1, 1]} : vector<2x18x18x4xbf16> to vector<2x16x16x4xbf16>
    %346 = tpu.concatenate %337, %338, %339, %340, %341, %342, %343, %344, %345 in 3 : vector<2x16x16x4xbf16>, vector<2x16x16x4xbf16>, vector<2x16x16x4xbf16>, vector<2x16x16x4xbf16>, vector<2x16x16x4xbf16>, vector<2x16x16x4xbf16>, vector<2x16x16x4xbf16>, vector<2x16x16x4xbf16>, vector<2x16x16x4xbf16> -> vector<2x16x16x36xbf16>
    %347 = vector.shape_cast %346 : vector<2x16x16x36xbf16> to vector<512x36xbf16>
    %cst_214 = arith.constant dense<0.000000e+00> : vector<512x4xf32>
    %348 = tpu.matmul %347, %25, %cst_214 {dimension_numbers = #tpu.dot_dimension_numbers<[1], [0], [0], [1], [0, 0, 1, 1], [], []>} : vector<512x36xbf16>, vector<36x4xbf16>, vector<512x4xf32> -> vector<512x4xf32>
    %349 = vector.broadcast %24 : vector<1x4xf32> to vector<512x4xf32>
    %350 = arith.mulf %348, %349 : vector<512x4xf32>
    %351 = vector.broadcast %23 : vector<1x4xf32> to vector<512x4xf32>
    %352 = arith.addf %350, %351 : vector<512x4xf32>
    %cst_215 = arith.constant 3.000000e+00 : f32
    %353 = vector.broadcast %cst_215 : f32 to vector<512x4xf32>
    %354 = arith.addf %352, %353 : vector<512x4xf32>
    %cst_216 = arith.constant 0.000000e+00 : f32
    %cst_217 = arith.constant 6.000000e+00 : f32
    %355 = vector.broadcast %cst_216 : f32 to vector<512x4xf32>
    %356 = arith.maximumf %355, %354 : vector<512x4xf32>
    %357 = vector.broadcast %cst_217 : f32 to vector<512x4xf32>
    %358 = arith.minimumf %357, %356 : vector<512x4xf32>
    %359 = arith.mulf %352, %358 : vector<512x4xf32>
    %cst_218 = arith.constant 0.166666672 : f32
    %360 = vector.broadcast %cst_218 : f32 to vector<512x4xf32>
    %361 = arith.mulf %359, %360 : vector<512x4xf32>
    %362 = arith.truncf %361 : vector<512x4xf32> to vector<512x4xbf16>
    %cst_219 = arith.constant dense<0.000000e+00> : vector<512x4xf32>
    %363 = tpu.matmul %362, %16, %cst_219 {dimension_numbers = #tpu.dot_dimension_numbers<[1], [0], [0], [1], [0, 0, 1, 1], [], []>} : vector<512x4xbf16>, vector<4x4xbf16>, vector<512x4xf32> -> vector<512x4xf32>
    %364 = vector.broadcast %10 : vector<1x4xf32> to vector<512x4xf32>
    %365 = arith.mulf %363, %364 : vector<512x4xf32>
    %366 = vector.broadcast %8 : vector<1x4xf32> to vector<512x4xf32>
    %367 = arith.addf %365, %366 : vector<512x4xf32>
    %cst_220 = arith.constant 0.000000e+00 : f32
    %368 = vector.broadcast %cst_220 : f32 to vector<512x4xf32>
    %369 = arith.cmpf ogt, %367, %368 : vector<512x4xf32>
    %cst_221 = arith.constant 1.000000e-01 : f32
    %370 = vector.broadcast %cst_221 : f32 to vector<512x4xf32>
    %371 = arith.mulf %370, %367 : vector<512x4xf32>
    %372 = arith.select %369, %367, %371 : vector<512x4xi1>, vector<512x4xf32>
    %373 = arith.truncf %300 : vector<512x8xf32> to vector<512x8xbf16>
    %cst_222 = arith.constant dense<0.000000e+00> : vector<512x4xf32>
    %374 = tpu.matmul %373, %15, %cst_222 {dimension_numbers = #tpu.dot_dimension_numbers<[1], [0], [0], [1], [0, 0, 1, 1], [], []>} : vector<512x8xbf16>, vector<8x4xbf16>, vector<512x4xf32> -> vector<512x4xf32>
    %375 = vector.broadcast %11 : vector<1x4xf32> to vector<512x4xf32>
    %376 = arith.mulf %374, %375 : vector<512x4xf32>
    %377 = vector.broadcast %9 : vector<1x4xf32> to vector<512x4xf32>
    %378 = arith.addf %376, %377 : vector<512x4xf32>
    %cst_223 = arith.constant 0.000000e+00 : f32
    %379 = vector.broadcast %cst_223 : f32 to vector<512x4xf32>
    %380 = arith.cmpf ogt, %378, %379 : vector<512x4xf32>
    %cst_224 = arith.constant 1.000000e-01 : f32
    %381 = vector.broadcast %cst_224 : f32 to vector<512x4xf32>
    %382 = arith.mulf %381, %378 : vector<512x4xf32>
    %383 = arith.select %380, %378, %382 : vector<512x4xi1>, vector<512x4xf32>
    %384 = tpu.concatenate %372, %383 in 1 : vector<512x4xf32>, vector<512x4xf32> -> vector<512x8xf32>
    %385 = arith.truncf %384 : vector<512x8xf32> to vector<512x8xbf16>
    %cst_225 = arith.constant dense<0.000000e+00> : vector<512x8xf32>
    %386 = tpu.matmul %385, %19, %cst_225 {dimension_numbers = #tpu.dot_dimension_numbers<[1], [0], [0], [1], [0, 0, 1, 1], [], []>} : vector<512x8xbf16>, vector<8x8xbf16>, vector<512x8xf32> -> vector<512x8xf32>
    %387 = vector.broadcast %18 : vector<1x8xf32> to vector<512x8xf32>
    %388 = arith.mulf %386, %387 : vector<512x8xf32>
    %389 = vector.broadcast %17 : vector<1x8xf32> to vector<512x8xf32>
    %390 = arith.addf %388, %389 : vector<512x8xf32>
    %cst_226 = arith.constant 3.000000e+00 : f32
    %391 = vector.broadcast %cst_226 : f32 to vector<512x8xf32>
    %392 = arith.addf %390, %391 : vector<512x8xf32>
    %cst_227 = arith.constant 0.000000e+00 : f32
    %cst_228 = arith.constant 6.000000e+00 : f32
    %393 = vector.broadcast %cst_227 : f32 to vector<512x8xf32>
    %394 = arith.maximumf %393, %392 : vector<512x8xf32>
    %395 = vector.broadcast %cst_228 : f32 to vector<512x8xf32>
    %396 = arith.minimumf %395, %394 : vector<512x8xf32>
    %397 = arith.mulf %390, %396 : vector<512x8xf32>
    %cst_229 = arith.constant 0.166666672 : f32
    %398 = vector.broadcast %cst_229 : f32 to vector<512x8xf32>
    %399 = arith.mulf %397, %398 : vector<512x8xf32>
    %c0_230 = arith.constant 0 : index
    %c0_231 = arith.constant 0 : index
    %400 = vector.load %arg67[%c0_230, %c0_231] : memref<512x8xf32, #tpu.memory_space<vmem>>, vector<512x8xf32>
    tpu.vector_store %arg67[%c0_230, %c0_231], %399 {strides = array<i32>} : memref<512x8xf32, #tpu.memory_space<vmem>>, vector<512x8xf32>,
    %c0_232 = arith.constant 0 : index
    %c0_233 = arith.constant 0 : index
    %401 = vector.load %arg68[%c0_232, %c0_233] : memref<128x16xf32, #tpu.memory_space<vmem>>, vector<128x16xf32>
    tpu.vector_store %arg68[%c0_232, %c0_233], %281 {strides = array<i32>} : memref<128x16xf32, #tpu.memory_space<vmem>>, vector<128x16xf32>,
    %c0_234 = arith.constant 0 : index
    %c0_235 = arith.constant 0 : index
    %402 = vector.load %arg69[%c0_234, %c0_235] : memref<32x32xf32, #tpu.memory_space<vmem>>, vector<32x32xf32>
    tpu.vector_store %arg69[%c0_234, %c0_235], %163 {strides = array<i32>} : memref<32x32xf32, #tpu.memory_space<vmem>>, vector<32x32xf32>,
    return
  }
}

</mosaic_0001>

<llo_original>
// kernel: fpn_forward.1
$region0: #{fpn_forward.1}
  #allocation0 [shape = 'u32[]', space=smem, size = 0x4, offset = 0x4, fixed_abs, tag = 'smem constant byte address 0x4 - core index']
  #allocation1 [shape = 'u32[72,128]{1,0:T(1,128)}', space=vmem, size = 0x9000, scoped, tag = 'internal scratch']
  %s0 = inlined_call_operand.smem [shape: u32[70], index: -1, kind: input, shape index: {}]
  %s1 = sld [smem:[%s0]]
  %s2 = scalar_lea.smem %s0, 1
  %s3 = sld [smem:[%s2]]
  %s4 = scalar_lea.smem %s0, 2
  %s5 = sld [smem:[%s4]]
  %s6 = scalar_lea.smem %s0, 3
  %s7 = sld [smem:[%s6]]
  %s8 = scalar_lea.smem %s0, 4
  %s9 = sld [smem:[%s8]]
  %s10 = scalar_lea.smem %s0, 5
  %s11 = sld [smem:[%s10]]
  %s12 = scalar_lea.smem %s0, 6
  %s13 = sld [smem:[%s12]]
  %s14 = scalar_lea.smem %s0, 7
  %s15 = sld [smem:[%s14]]
  %s16 = scalar_lea.smem %s0, 8
  %s17 = sld [smem:[%s16]]
  %s18 = scalar_lea.smem %s0, 9
  %s19 = sld [smem:[%s18]]
  %s20 = scalar_lea.smem %s0, 10
  %s21 = sld [smem:[%s20]]
  %s22 = scalar_lea.smem %s0, 11
  %s23 = sld [smem:[%s22]]
  %s24 = scalar_lea.smem %s0, 12
  %s25 = sld [smem:[%s24]]
  %s26 = scalar_lea.smem %s0, 13
  %s27 = sld [smem:[%s26]]
  %s28 = scalar_lea.smem %s0, 14
  %s29 = sld [smem:[%s28]]
  %s30 = scalar_lea.smem %s0, 15
  %s31 = sld [smem:[%s30]]
  %s32 = scalar_lea.smem %s0, 16
  %s33 = sld [smem:[%s32]]
  %s34 = scalar_lea.smem %s0, 17
  %s35 = sld [smem:[%s34]]
  %s36 = scalar_lea.smem %s0, 18
  %s37 = sld [smem:[%s36]]
  %s38 = scalar_lea.smem %s0, 19
  %s39 = sld [smem:[%s38]]
  %s40 = scalar_lea.smem %s0, 20
  %s41 = sld [smem:[%s40]]
  %s42 = scalar_lea.smem %s0, 21
  %s43 = sld [smem:[%s42]]
  %s44 = scalar_lea.smem %s0, 22
  %s45 = sld [smem:[%s44]]
  %s46 = scalar_lea.smem %s0, 23
  %s47 = sld [smem:[%s46]]
  %s48 = scalar_lea.smem %s0, 24
  %s49 = sld [smem:[%s48]]
  %s50 = scalar_lea.smem %s0, 25
  %s51 = sld [smem:[%s50]]
  %s52 = scalar_lea.smem %s0, 26
  %s53 = sld [smem:[%s52]]
  %s54 = scalar_lea.smem %s0, 27
  %s55 = sld [smem:[%s54]]
  %s56 = scalar_lea.smem %s0, 28
  %s57 = sld [smem:[%s56]]
  %s58 = scalar_lea.smem %s0, 29
  %s59 = sld [smem:[%s58]]
  %s60 = scalar_lea.smem %s0, 30
  %s61 = sld [smem:[%s60]]
  %s62 = scalar_lea.smem %s0, 31
  %s63 = sld [smem:[%s62]]
  %s64 = scalar_lea.smem %s0, 32
  %s65 = sld [smem:[%s64]]
  %s66 = scalar_lea.smem %s0, 33
  %s67 = sld [smem:[%s66]]
  %s68 = scalar_lea.smem %s0, 34
  %s69 = sld [smem:[%s68]]
  %s70 = scalar_lea.smem %s0, 35
  %s71 = sld [smem:[%s70]]
  %s72 = scalar_lea.smem %s0, 36
  %s73 = sld [smem:[%s72]]
  %s74 = scalar_lea.smem %s0, 37
  %s75 = sld [smem:[%s74]]
  %s76 = scalar_lea.smem %s0, 38
  %s77 = sld [smem:[%s76]]
  %s78 = scalar_lea.smem %s0, 39
  %s79 = sld [smem:[%s78]]
  %s80 = scalar_lea.smem %s0, 40
  %s81 = sld [smem:[%s80]]
  %s82 = scalar_lea.smem %s0, 41
  %s83 = sld [smem:[%s82]]
  %s84 = scalar_lea.smem %s0, 42
  %s85 = sld [smem:[%s84]]
  %s86 = scalar_lea.smem %s0, 43
  %s87 = sld [smem:[%s86]]
  %s88 = scalar_lea.smem %s0, 44
  %s89 = sld [smem:[%s88]]
  %s90 = scalar_lea.smem %s0, 45
  %s91 = sld [smem:[%s90]]
  %s92 = scalar_lea.smem %s0, 46
  %s93 = sld [smem:[%s92]]
  %s94 = scalar_lea.smem %s0, 47
  %s95 = sld [smem:[%s94]]
  %s96 = scalar_lea.smem %s0, 48
  %s97 = sld [smem:[%s96]]
  %s98 = scalar_lea.smem %s0, 49
  %s99 = sld [smem:[%s98]]
  %s100 = scalar_lea.smem %s0, 50
  %s101 = sld [smem:[%s100]]
  %s102 = scalar_lea.smem %s0, 51
  %s103 = sld [smem:[%s102]]
  %s104 = scalar_lea.smem %s0, 52
  %s105 = sld [smem:[%s104]]
  %s106 = scalar_lea.smem %s0, 53
  %s107 = sld [smem:[%s106]]
  %s108 = scalar_lea.smem %s0, 54
  %s109 = sld [smem:[%s108]]
  %s110 = scalar_lea.smem %s0, 55
  %s111 = sld [smem:[%s110]]
  %s112 = scalar_lea.smem %s0, 56
  %s113 = sld [smem:[%s112]]
  %s114 = scalar_lea.smem %s0, 57
  %s115 = sld [smem:[%s114]]
  %s116 = scalar_lea.smem %s0, 58
  %s117 = sld [smem:[%s116]]
  %s118 = scalar_lea.smem %s0, 59
  %s119 = sld [smem:[%s118]]
  %s120 = scalar_lea.smem %s0, 60
  %s121 = sld [smem:[%s120]]
  %s122 = scalar_lea.smem %s0, 61
  %s123 = sld [smem:[%s122]]
  %s124 = scalar_lea.smem %s0, 62
  %s125 = sld [smem:[%s124]]
  %s126 = scalar_lea.smem %s0, 63
  %s127 = sld [smem:[%s126]]
  %s128 = scalar_lea.smem %s0, 64
  %s129 = sld [smem:[%s128]]
  %s130 = scalar_lea.smem %s0, 65
  %s131 = sld [smem:[%s130]]
  %s132 = scalar_lea.smem %s0, 66
  %s133 = sld [smem:[%s132]]
  %s134 = scalar_lea.smem %s0, 67
  %s135 = sld [smem:[%s134]]
  %s136 = scalar_lea.smem %s0, 68
  %s137 = sld [smem:[%s136]]
  %s138 = scalar_lea.smem %s0, 69
  %s139 = sld [smem:[%s138]]
  %140 = xla_tuple %s135, %s137, %s139
  %s141 = sld [smem:[#allocation0]]
  $region346: #{fpn_forward.1} parent=0
    _
  %s143 = ssub.s32 1, %s141
  %s144 = scalar_select 0, %s143, %s141
  $region1: #{fpn_forward.1} parent=0
    #allocation2 [shape = 'u8[512]{0}', space=vmem, size = 0x400, scoped, tag = 'input window, operand 47, single buffered']
    #allocation3 [shape = 's32[1]{0}', space=sflag, size = 0x4, scoped, tag = 'scoped memory for fpn_forward.1']
    #allocation4 [shape = 's32[1]{0}', space=sflag, size = 0x4, scoped, tag = 'scoped memory for fpn_forward.1']
    #allocation5 [shape = 'u8[512]{0}', space=vmem, size = 0x400, scoped, tag = 'input window, operand 49, single buffered']
    #allocation6 [shape = 's32[1]{0}', space=sflag, size = 0x4, scoped, tag = 'scoped memory for fpn_forward.1']
    #allocation7 [shape = 'u8[512]{0}', space=vmem, size = 0x400, scoped, tag = 'input window, operand 50, single buffered']
    #allocation8 [shape = 'u8[512]{0}', space=vmem, size = 0x400, scoped, tag = 'input window, operand 51, single buffered']
    #allocation9 [shape = 's32[1]{0}', space=sflag, size = 0x4, scoped, tag = 'scoped memory for fpn_forward.1']
    #allocation10 [shape = 'u8[512]{0}', space=vmem, size = 0x400, scoped, tag = 'input window, operand 52, single buffered']
    #allocation11 [shape = 'u8[512]{0}', space=vmem, size = 0x400, scoped, tag = 'input window, operand 53, single buffered']
    #allocation12 [shape = 's32[1]{0}', space=sflag, size = 0x4, scoped, tag = 'scoped memory for fpn_forward.1']
    #allocation13 [shape = 'u8[512]{0}', space=vmem, size = 0x400, scoped, tag = 'input window, operand 54, single buffered']
    #allocation14 [shape = 'u8[512]{0}', space=vmem, size = 0x400, scoped, tag = 'input window, operand 58, single buffered']
    #allocation15 [shape = 's32[1]{0}', space=sflag, size = 0x4, scoped, tag = 'scoped memory for fpn_forward.1']
    #allocation16 [shape = 'u8[512]{0}', space=vmem, size = 0x400, scoped, tag = 'input window, operand 59, single buffered']
    #allocation17 [shape = 'u8[512]{0}', space=vmem, size = 0x400, scoped, tag = 'input window, operand 61, single buffered']
    #allocation18 [shape = 's32[1]{0}', space=sflag, size = 0x4, scoped, tag = 'scoped memory for fpn_forward.1']
    #allocation19 [shape = 'u8[512]{0}', space=vmem, size = 0x400, scoped, tag = 'input window, operand 62, single buffered']
    #allocation20 [shape = 'u8[512]{0}', space=vmem, size = 0x400, scoped, tag = 'input window, operand 64, single buffered']
    #allocation21 [shape = 's32[1]{0}', space=sflag, size = 0x4, scoped, tag = 'scoped memory for fpn_forward.1']
    #allocation22 [shape = 'u8[512]{0}', space=vmem, size = 0x400, scoped, tag = 'input window, operand 65, single buffered']
    #allocation23 [shape = 'u8[65536]{0}', space=vmem, size = 0x10000, scoped, tag = 'output window, operand 1, single buffered']
    #allocation24 [shape = 'u8[16384]{0}', space=vmem, size = 0x4000, scoped, tag = 'output window, operand 2, single buffered']
    #allocation25 [shape = 's32[1]{0}', space=sflag, size = 0x4, scoped, tag = 'scoped memory for fpn_forward.1']
    %145 = vsyncpa [#allocation3], 0
    %146 = vsyncpa [#allocation6], 0
    %147 = vsyncpa [#allocation9], 0
    %148 = vsyncpa [#allocation12], 0
    %149 = vsyncpa [#allocation15], 0
    %150 = vsyncpa [#allocation18], 0
    %151 = vsyncpa [#allocation21], 0
    %152 = vsyncpa [#allocation4], 0
    %153 = vsyncpa [#allocation25], 0
    // Predicated region
    $region2: #{fpn_forward.1} parent=1 // pred_check
      _
    $region3: #{fpn_forward.1} parent=1 // pred_check_branch
      %155 = sbr.rel (0) target = $region5
    $region4: #{fpn_forward.1} parent=1 // pred_region
      _
    $region5: #{fpn_forward.1} parent=1 // pred_fallthru
      _
    // Predicated region
    $region6: #{fpn_forward.1} parent=1 // pred_check
      _
    $region7: #{fpn_forward.1} parent=1 // pred_check_branch
      %157 = sbr.rel (0) target = $region9
    $region8: #{fpn_forward.1} parent=1 // pred_region
      _
    $region9: #{fpn_forward.1} parent=1 // pred_fallthru
      _
    // Predicated region
    $region10: #{fpn_forward.1} parent=1 // pred_check
      _
    $region11: #{fpn_forward.1} parent=1 // pred_check_branch
      %159 = sbr.rel (0) target = $region13
    $region12: #{fpn_forward.1} parent=1 // pred_region
      _
    $region13: #{fpn_forward.1} parent=1 // pred_fallthru
      _
    // Predicated region
    $region14: #{fpn_forward.1} parent=1 // pred_check
      _
    $region15: #{fpn_forward.1} parent=1 // pred_check_branch
      %161 = sbr.rel (0) target = $region17
    $region16: #{fpn_forward.1} parent=1 // pred_region
      _
    $region17: #{fpn_forward.1} parent=1 // pred_fallthru
      _
    // Predicated region
    $region18: #{fpn_forward.1} parent=1 // pred_check
      _
    $region19: #{fpn_forward.1} parent=1 // pred_check_branch
      %163 = sbr.rel (0) target = $region21
    $region20: #{fpn_forward.1} parent=1 // pred_region
      _
    $region21: #{fpn_forward.1} parent=1 // pred_fallthru
      _
    // Predicated region
    $region22: #{fpn_forward.1} parent=1 // pred_check
      _
    $region23: #{fpn_forward.1} parent=1 // pred_check_branch
      %165 = sbr.rel (0) target = $region25
    $region24: #{fpn_forward.1} parent=1 // pred_region
      _
    $region25: #{fpn_forward.1} parent=1 // pred_fallthru
      _
    // Predicated region
    $region26: #{fpn_forward.1} parent=1 // pred_check
      _
    $region27: #{fpn_forward.1} parent=1 // pred_check_branch
      %167 = sbr.rel (0) target = $region29
    $region28: #{fpn_forward.1} parent=1 // pred_region
      _
    $region29: #{fpn_forward.1} parent=1 // pred_fallthru
      _
    // Predicated region
    $region30: #{fpn_forward.1} parent=1 // pred_check
      _
    $region31: #{fpn_forward.1} parent=1 // pred_check_branch
      %169 = sbr.rel (0) target = $region33
    $region32: #{fpn_forward.1} parent=1 // pred_region
      _
    $region33: #{fpn_forward.1} parent=1 // pred_fallthru
      _
    // Predicated region
    $region34: #{fpn_forward.1} parent=1 // pred_check
      _
    $region35: #{fpn_forward.1} parent=1 // pred_check_branch
      %171 = sbr.rel (0) target = $region37
    $region36: #{fpn_forward.1} parent=1 // pred_region
      _
    $region37: #{fpn_forward.1} parent=1 // pred_fallthru
      _
    // Predicated region
    $region38: #{fpn_forward.1} parent=1 // pred_check
      _
    $region39: #{fpn_forward.1} parent=1 // pred_check_branch
      %173 = sbr.rel (0) target = $region41
    $region40: #{fpn_forward.1} parent=1 // pred_region
      _
    $region41: #{fpn_forward.1} parent=1 // pred_fallthru
      _
    // Predicated region
    $region42: #{fpn_forward.1} parent=1 // pred_check
      _
    $region43: #{fpn_forward.1} parent=1 // pred_check_branch
      %175 = sbr.rel (0) target = $region45
    $region44: #{fpn_forward.1} parent=1 // pred_region
      _
    $region45: #{fpn_forward.1} parent=1 // pred_fallthru
      _
    // Predicated region
    $region46: #{fpn_forward.1} parent=1 // pred_check
      _
    $region47: #{fpn_forward.1} parent=1 // pred_check_branch
      %177 = sbr.rel (0) target = $region49
    $region48: #{fpn_forward.1} parent=1 // pred_region
      _
    $region49: #{fpn_forward.1} parent=1 // pred_fallthru
      _
    // Predicated region
    $region50: #{fpn_forward.1} parent=1 // pred_check
      _
    $region51: #{fpn_forward.1} parent=1 // pred_check_branch
      %179 = sbr.rel (0) target = $region53
    $region52: #{fpn_forward.1} parent=1 // pred_region
      _
    $region53: #{fpn_forward.1} parent=1 // pred_fallthru
      _
    // Predicated region
    $region54: #{fpn_forward.1} parent=1 // pred_check
      _
    $region55: #{fpn_forward.1} parent=1 // pred_check_branch
      %181 = sbr.rel (0) target = $region57
    $region56: #{fpn_forward.1} parent=1 // pred_region
      _
    $region57: #{fpn_forward.1} parent=1 // pred_fallthru
      _
    // Predicated region
    $region58: #{fpn_forward.1} parent=1 // pred_check
      _
    $region59: #{fpn_forward.1} parent=1 // pred_check_branch
      %183 = sbr.rel (0) target = $region61
    $region60: #{fpn_forward.1} parent=1 // pred_region
      _
    $region61: #{fpn_forward.1} parent=1 // pred_fallthru
      _
    // Predicated region
    $region62: #{fpn_forward.1} parent=1 // pred_check
      _
    $region63: #{fpn_forward.1} parent=1 // pred_check_branch
      %185 = sbr.rel (0) target = $region65
    $region64: #{fpn_forward.1} parent=1 // pred_region
      _
    $region65: #{fpn_forward.1} parent=1 // pred_fallthru
      _
    // Predicated region
    $region66: #{fpn_forward.1} parent=1 // pred_check
      _
    $region67: #{fpn_forward.1} parent=1 // pred_check_branch
      %187 = sbr.rel (0) target = $region69
    $region68: #{fpn_forward.1} parent=1 // pred_region
      _
    $region69: #{fpn_forward.1} parent=1 // pred_fallthru
      _
    // Predicated region
    $region70: #{fpn_forward.1} parent=1 // pred_check
      _
    $region71: #{fpn_forward.1} parent=1 // pred_check_branch
      %189 = sbr.rel (0) target = $region73
    $region72: #{fpn_forward.1} parent=1 // pred_region
      _
    $region73: #{fpn_forward.1} parent=1 // pred_fallthru
      _
    // Predicated region
    $region74: #{fpn_forward.1} parent=1 // pred_check
      _
    $region75: #{fpn_forward.1} parent=1 // pred_check_branch
      %191 = sbr.rel (0) target = $region77
    $region76: #{fpn_forward.1} parent=1 // pred_region
      _
    $region77: #{fpn_forward.1} parent=1 // pred_fallthru
      _
    // Predicated region
    $region78: #{fpn_forward.1} parent=1 // pred_check
      _
    $region79: #{fpn_forward.1} parent=1 // pred_check_branch
      %193 = sbr.rel (0) target = $region81
    $region80: #{fpn_forward.1} parent=1 // pred_region
      _
    $region81: #{fpn_forward.1} parent=1 // pred_fallthru
      _
    // Predicated region
    $region82: #{fpn_forward.1} parent=1 // pred_check
      _
    $region83: #{fpn_forward.1} parent=1 // pred_check_branch
      %195 = sbr.rel (0) target = $region85
    $region84: #{fpn_forward.1} parent=1 // pred_region
      _
    $region85: #{fpn_forward.1} parent=1 // pred_fallthru
      _
    // Predicated region
    $region86: #{fpn_forward.1} parent=1 // pred_check
      _
    $region87: #{fpn_forward.1} parent=1 // pred_check_branch
      %197 = sbr.rel (0) target = $region89
    $region88: #{fpn_forward.1} parent=1 // pred_region
      _
    $region89: #{fpn_forward.1} parent=1 // pred_fallthru
      _
    // Predicated region
    $region90: #{fpn_forward.1} parent=1 // pred_check
      _
    $region91: #{fpn_forward.1} parent=1 // pred_check_branch
      %199 = sbr.rel (0) target = $region93
    $region92: #{fpn_forward.1} parent=1 // pred_region
      _
    $region93: #{fpn_forward.1} parent=1 // pred_fallthru
      _
    // Predicated region
    $region94: #{fpn_forward.1} parent=1 // pred_check
      _
    $region95: #{fpn_forward.1} parent=1 // pred_check_branch
      %201 = sbr.rel (0) target = $region97
    $region96: #{fpn_forward.1} parent=1 // pred_region
      _
    $region97: #{fpn_forward.1} parent=1 // pred_fallthru
      _
    // Predicated region
    $region98: #{fpn_forward.1} parent=1 // pred_check
      _
    $region99: #{fpn_forward.1} parent=1 // pred_check_branch
      %203 = sbr.rel (0) target = $region101
    $region100: #{fpn_forward.1} parent=1 // pred_region
      _
    $region101: #{fpn_forward.1} parent=1 // pred_fallthru
      _
    // Predicated region
    $region102: #{fpn_forward.1} parent=1 // pred_check
      _
    $region103: #{fpn_forward.1} parent=1 // pred_check_branch
      %205 = sbr.rel (0) target = $region105
    $region104: #{fpn_forward.1} parent=1 // pred_region
      _
    $region105: #{fpn_forward.1} parent=1 // pred_fallthru
      _
    // Predicated region
    $region106: #{fpn_forward.1} parent=1 // pred_check
      _
    $region107: #{fpn_forward.1} parent=1 // pred_check_branch
      %207 = sbr.rel (0) target = $region109
    $region108: #{fpn_forward.1} parent=1 // pred_region
      _
    $region109: #{fpn_forward.1} parent=1 // pred_fallthru
      _
    // Predicated region
    $region110: #{fpn_forward.1} parent=1 // pred_check
      _
    $region111: #{fpn_forward.1} parent=1 // pred_check_branch
      %209 = sbr.rel (0) target = $region113
    $region112: #{fpn_forward.1} parent=1 // pred_region
      _
    $region113: #{fpn_forward.1} parent=1 // pred_fallthru
      _
    // Predicated region
    $region114: #{fpn_forward.1} parent=1 // pred_check
      _
    $region115: #{fpn_forward.1} parent=1 // pred_check_branch
      %211 = sbr.rel (0) target = $region117
    $region116: #{fpn_forward.1} parent=1 // pred_region
      _
    $region117: #{fpn_forward.1} parent=1 // pred_fallthru
      _
    // Predicated region
    $region118: #{fpn_forward.1} parent=1 // pred_check
      _
    $region119: #{fpn_forward.1} parent=1 // pred_check_branch
      %213 = sbr.rel (0) target = $region121
    $region120: #{fpn_forward.1} parent=1 // pred_region
      _
    $region121: #{fpn_forward.1} parent=1 // pred_fallthru
      _
    // Predicated region
    $region122: #{fpn_forward.1} parent=1 // pred_check
      _
    $region123: #{fpn_forward.1} parent=1 // pred_check_branch
      %215 = sbr.rel (0) target = $region125
    $region124: #{fpn_forward.1} parent=1 // pred_region
      _
    $region125: #{fpn_forward.1} parent=1 // pred_fallthru
      _
    // Predicated region
    $region126: #{fpn_forward.1} parent=1 // pred_check
      _
    $region127: #{fpn_forward.1} parent=1 // pred_check_branch
      %217 = sbr.rel (0) target = $region129
    $region128: #{fpn_forward.1} parent=1 // pred_region
      _
    $region129: #{fpn_forward.1} parent=1 // pred_fallthru
      _
    // Predicated region
    $region130: #{fpn_forward.1} parent=1 // pred_check
      _
    $region131: #{fpn_forward.1} parent=1 // pred_check_branch
      %219 = sbr.rel (0) target = $region133
    $region132: #{fpn_forward.1} parent=1 // pred_region
      _
    $region133: #{fpn_forward.1} parent=1 // pred_fallthru
      _
    // Predicated region
    $region134: #{fpn_forward.1} parent=1 // pred_check
      _
    $region135: #{fpn_forward.1} parent=1 // pred_check_branch
      %221 = sbr.rel (0) target = $region137
    $region136: #{fpn_forward.1} parent=1 // pred_region
      _
    $region137: #{fpn_forward.1} parent=1 // pred_fallthru
      _
    // Predicated region
    $region138: #{fpn_forward.1} parent=1 // pred_check
      _
    $region139: #{fpn_forward.1} parent=1 // pred_check_branch
      %223 = sbr.rel (0) target = $region141
    $region140: #{fpn_forward.1} parent=1 // pred_region
      _
    $region141: #{fpn_forward.1} parent=1 // pred_fallthru
      _
    // Predicated region
    $region142: #{fpn_forward.1} parent=1 // pred_check
      _
    $region143: #{fpn_forward.1} parent=1 // pred_check_branch
      %225 = sbr.rel (0) target = $region145
    $region144: #{fpn_forward.1} parent=1 // pred_region
      _
    $region145: #{fpn_forward.1} parent=1 // pred_fallthru
      _
    // Predicated region
    $region146: #{fpn_forward.1} parent=1 // pred_check
      _
    $region147: #{fpn_forward.1} parent=1 // pred_check_branch
      %227 = sbr.rel (0) target = $region149
    $region148: #{fpn_forward.1} parent=1 // pred_region
      _
    $region149: #{fpn_forward.1} parent=1 // pred_fallthru
      _
    // Predicated region
    $region150: #{fpn_forward.1} parent=1 // pred_check
      _
    $region151: #{fpn_forward.1} parent=1 // pred_check_branch
      %229 = sbr.rel (0) target = $region153
    $region152: #{fpn_forward.1} parent=1 // pred_region
      _
    $region153: #{fpn_forward.1} parent=1 // pred_fallthru
      _
    // Predicated region
    $region154: #{fpn_forward.1} parent=1 // pred_check
      _
    $region155: #{fpn_forward.1} parent=1 // pred_check_branch
      %231 = sbr.rel (0) target = $region157
    $region156: #{fpn_forward.1} parent=1 // pred_region
      _
    $region157: #{fpn_forward.1} parent=1 // pred_fallthru
      _
    // Predicated region
    $region158: #{fpn_forward.1} parent=1 // pred_check
      _
    $region159: #{fpn_forward.1} parent=1 // pred_check_branch
      %233 = sbr.rel (0) target = $region161
    $region160: #{fpn_forward.1} parent=1 // pred_region
      _
    $region161: #{fpn_forward.1} parent=1 // pred_fallthru
      _
    // Predicated region
    $region162: #{fpn_forward.1} parent=1 // pred_check
      _
    $region163: #{fpn_forward.1} parent=1 // pred_check_branch
      %235 = sbr.rel (0) target = $region165
    $region164: #{fpn_forward.1} parent=1 // pred_region
      _
    $region165: #{fpn_forward.1} parent=1 // pred_fallthru
      _
    // Predicated region
    $region166: #{fpn_forward.1} parent=1 // pred_check
      _
    $region167: #{fpn_forward.1} parent=1 // pred_check_branch
      %237 = sbr.rel (0) target = $region169
    $region168: #{fpn_forward.1} parent=1 // pred_region
      _
    $region169: #{fpn_forward.1} parent=1 // pred_fallthru
      _
    // Predicated region
    $region170: #{fpn_forward.1} parent=1 // pred_check
      _
    $region171: #{fpn_forward.1} parent=1 // pred_check_branch
      %239 = sbr.rel (0) target = $region173
    $region172: #{fpn_forward.1} parent=1 // pred_region
      _
    $region173: #{fpn_forward.1} parent=1 // pred_fallthru
      _
    // Predicated region
    $region174: #{fpn_forward.1} parent=1 // pred_check
      _
    $region175: #{fpn_forward.1} parent=1 // pred_check_branch
      %241 = sbr.rel (0) target = $region177
    $region176: #{fpn_forward.1} parent=1 // pred_region
      _
    $region177: #{fpn_forward.1} parent=1 // pred_fallthru
      _
    // Predicated region
    $region178: #{fpn_forward.1} parent=1 // pred_check
      _
    $region179: #{fpn_forward.1} parent=1 // pred_check_branch
      %243 = sbr.rel (0) target = $region181
    $region180: #{fpn_forward.1} parent=1 // pred_region
      _
    $region181: #{fpn_forward.1} parent=1 // pred_fallthru
      _
    // Predicated region
    $region182: #{fpn_forward.1} parent=1 // pred_check
      _
    $region183: #{fpn_forward.1} parent=1 // pred_check_branch
      %245 = sbr.rel (0) target = $region185
    $region184: #{fpn_forward.1} parent=1 // pred_region
      _
    $region185: #{fpn_forward.1} parent=1 // pred_fallthru
      _
    // Predicated region
    $region186: #{fpn_forward.1} parent=1 // pred_check
      _
    $region187: #{fpn_forward.1} parent=1 // pred_check_branch
      %247 = sbr.rel (0) target = $region189
    $region188: #{fpn_forward.1} parent=1 // pred_region
      _
    $region189: #{fpn_forward.1} parent=1 // pred_fallthru
      _
    // Predicated region
    $region190: #{fpn_forward.1} parent=1 // pred_check
      _
    $region191: #{fpn_forward.1} parent=1 // pred_check_branch
      %249 = sbr.rel (0) target = $region193
    $region192: #{fpn_forward.1} parent=1 // pred_region
      %251 = vsyncadd [#allocation3], 0
      %s253 = sshll.u32 %s95, 4
      %s254 = int_to_ptr.hbm [resolvable:$true] %s253
      %s255 = sshll.u32 [#allocation2], 4
      %s256 = int_to_ptr.vmem [resolvable:$true] %s255
      %258 = dma.hbm_to_vmem [thread:$0]  %s254, 16, %s256, [#allocation3]
    $region193: #{fpn_forward.1} parent=1 // pred_fallthru
      _
    // Predicated region
    $region194: #{fpn_forward.1} parent=1 // pred_check
      _
    $region195: #{fpn_forward.1} parent=1 // pred_check_branch
      %260 = sbr.rel (0) target = $region197
    $region196: #{fpn_forward.1} parent=1 // pred_region
      _
    $region197: #{fpn_forward.1} parent=1 // pred_fallthru
      _
    // Predicated region
    $region198: #{fpn_forward.1} parent=1 // pred_check
      _
    $region199: #{fpn_forward.1} parent=1 // pred_check_branch
      %262 = sbr.rel (0) target = $region201
    $region200: #{fpn_forward.1} parent=1 // pred_region
      %264 = vsyncadd [#allocation6], 0
      %s266 = sshll.u32 %s99, 4
      %s267 = int_to_ptr.hbm [resolvable:$true] %s266
      %s268 = sshll.u32 [#allocation5], 4
      %s269 = int_to_ptr.vmem [resolvable:$true] %s268
      %271 = dma.hbm_to_vmem [thread:$0]  %s267, 16, %s269, [#allocation6]
    $region201: #{fpn_forward.1} parent=1 // pred_fallthru
      _
    // Predicated region
    $region202: #{fpn_forward.1} parent=1 // pred_check
      _
    $region203: #{fpn_forward.1} parent=1 // pred_check_branch
      %273 = sbr.rel (0) target = $region205
    $region204: #{fpn_forward.1} parent=1 // pred_region
      %275 = vsyncadd [#allocation6], 0
      %s277 = sshll.u32 %s101, 4
      %s278 = int_to_ptr.hbm [resolvable:$true] %s277
      %s279 = sshll.u32 [#allocation7], 4
      %s280 = int_to_ptr.vmem [resolvable:$true] %s279
      %282 = dma.hbm_to_vmem [thread:$0]  %s278, 16, %s280, [#allocation6]
    $region205: #{fpn_forward.1} parent=1 // pred_fallthru
      _
    // Predicated region
    $region206: #{fpn_forward.1} parent=1 // pred_check
      _
    $region207: #{fpn_forward.1} parent=1 // pred_check_branch
      %284 = sbr.rel (0) target = $region209
    $region208: #{fpn_forward.1} parent=1 // pred_region
      %286 = vsyncadd [#allocation9], 0
      %s288 = sshll.u32 %s103, 4
      %s289 = int_to_ptr.hbm [resolvable:$true] %s288
      %s290 = sshll.u32 [#allocation8], 4
      %s291 = int_to_ptr.vmem [resolvable:$true] %s290
      %293 = dma.hbm_to_vmem [thread:$0]  %s289, 16, %s291, [#allocation9]
    $region209: #{fpn_forward.1} parent=1 // pred_fallthru
      _
    // Predicated region
    $region210: #{fpn_forward.1} parent=1 // pred_check
      _
    $region211: #{fpn_forward.1} parent=1 // pred_check_branch
      %295 = sbr.rel (0) target = $region213
    $region212: #{fpn_forward.1} parent=1 // pred_region
      %297 = vsyncadd [#allocation9], 0
      %s299 = sshll.u32 %s105, 4
      %s300 = int_to_ptr.hbm [resolvable:$true] %s299
      %s301 = sshll.u32 [#allocation10], 4
      %s302 = int_to_ptr.vmem [resolvable:$true] %s301
      %304 = dma.hbm_to_vmem [thread:$0]  %s300, 16, %s302, [#allocation9]
    $region213: #{fpn_forward.1} parent=1 // pred_fallthru
      _
    // Predicated region
    $region214: #{fpn_forward.1} parent=1 // pred_check
      _
    $region215: #{fpn_forward.1} parent=1 // pred_check_branch
      %306 = sbr.rel (0) target = $region217
    $region216: #{fpn_forward.1} parent=1 // pred_region
      %308 = vsyncadd [#allocation12], 0
      %s310 = sshll.u32 %s107, 4
      %s311 = int_to_ptr.hbm [resolvable:$true] %s310
      %s312 = sshll.u32 [#allocation11], 4
      %s313 = int_to_ptr.vmem [resolvable:$true] %s312
      %315 = dma.hbm_to_vmem [thread:$0]  %s311, 16, %s313, [#allocation12]
    $region217: #{fpn_forward.1} parent=1 // pred_fallthru
      _
    // Predicated region
    $region218: #{fpn_forward.1} parent=1 // pred_check
      _
    $region219: #{fpn_forward.1} parent=1 // pred_check_branch
      %317 = sbr.rel (0) target = $region221
    $region220: #{fpn_forward.1} parent=1 // pred_region
      %319 = vsyncadd [#allocation12], 0
      %s321 = sshll.u32 %s109, 4
      %s322 = int_to_ptr.hbm [resolvable:$true] %s321
      %s323 = sshll.u32 [#allocation13], 4
      %s324 = int_to_ptr.vmem [resolvable:$true] %s323
      %326 = dma.hbm_to_vmem [thread:$0]  %s322, 16, %s324, [#allocation12]
    $region221: #{fpn_forward.1} parent=1 // pred_fallthru
      _
    // Predicated region
    $region222: #{fpn_forward.1} parent=1 // pred_check
      _
    $region223: #{fpn_forward.1} parent=1 // pred_check_branch
      %328 = sbr.rel (0) target = $region225
    $region224: #{fpn_forward.1} parent=1 // pred_region
      _
    $region225: #{fpn_forward.1} parent=1 // pred_fallthru
      _
    // Predicated region
    $region226: #{fpn_forward.1} parent=1 // pred_check
      _
    $region227: #{fpn_forward.1} parent=1 // pred_check_branch
      %330 = sbr.rel (0) target = $region229
    $region228: #{fpn_forward.1} parent=1 // pred_region
      _
    $region229: #{fpn_forward.1} parent=1 // pred_fallthru
      _
    // Predicated region
    $region230: #{fpn_forward.1} parent=1 // pred_check
      _
    $region231: #{fpn_forward.1} parent=1 // pred_check_branch
      %332 = sbr.rel (0) target = $region233
    $region232: #{fpn_forward.1} parent=1 // pred_region
      _
    $region233: #{fpn_forward.1} parent=1 // pred_fallthru
      _
    // Predicated region
    $region234: #{fpn_forward.1} parent=1 // pred_check
      _
    $region235: #{fpn_forward.1} parent=1 // pred_check_branch
      %334 = sbr.rel (0) target = $region237
    $region236: #{fpn_forward.1} parent=1 // pred_region
      %336 = vsyncadd [#allocation15], 0
      %s338 = sshll.u32 %s117, 4
      %s339 = int_to_ptr.hbm [resolvable:$true] %s338
      %s340 = sshll.u32 [#allocation14], 4
      %s341 = int_to_ptr.vmem [resolvable:$true] %s340
      %343 = dma.hbm_to_vmem [thread:$0]  %s339, 16, %s341, [#allocation15]
    $region237: #{fpn_forward.1} parent=1 // pred_fallthru
      _
    // Predicated region
    $region238: #{fpn_forward.1} parent=1 // pred_check
      _
    $region239: #{fpn_forward.1} parent=1 // pred_check_branch
      %345 = sbr.rel (0) target = $region241
    $region240: #{fpn_forward.1} parent=1 // pred_region
      %347 = vsyncadd [#allocation15], 0
      %s349 = sshll.u32 %s119, 4
      %s350 = int_to_ptr.hbm [resolvable:$true] %s349
      %s351 = sshll.u32 [#allocation16], 4
      %s352 = int_to_ptr.vmem [resolvable:$true] %s351
      %354 = dma.hbm_to_vmem [thread:$0]  %s350, 16, %s352, [#allocation15]
    $region241: #{fpn_forward.1} parent=1 // pred_fallthru
      _
    // Predicated region
    $region242: #{fpn_forward.1} parent=1 // pred_check
      _
    $region243: #{fpn_forward.1} parent=1 // pred_check_branch
      %356 = sbr.rel (0) target = $region245
    $region244: #{fpn_forward.1} parent=1 // pred_region
      _
    $region245: #{fpn_forward.1} parent=1 // pred_fallthru
      _
    // Predicated region
    $region246: #{fpn_forward.1} parent=1 // pred_check
      _
    $region247: #{fpn_forward.1} parent=1 // pred_check_branch
      %358 = sbr.rel (0) target = $region249
    $region248: #{fpn_forward.1} parent=1 // pred_region
      %360 = vsyncadd [#allocation18], 0
      %s362 = sshll.u32 %s123, 4
      %s363 = int_to_ptr.hbm [resolvable:$true] %s362
      %s364 = sshll.u32 [#allocation17], 4
      %s365 = int_to_ptr.vmem [resolvable:$true] %s364
      %367 = dma.hbm_to_vmem [thread:$0]  %s363, 16, %s365, [#allocation18]
    $region249: #{fpn_forward.1} parent=1 // pred_fallthru
      _
    // Predicated region
    $region250: #{fpn_forward.1} parent=1 // pred_check
      _
    $region251: #{fpn_forward.1} parent=1 // pred_check_branch
      %369 = sbr.rel (0) target = $region253
    $region252: #{fpn_forward.1} parent=1 // pred_region
      %371 = vsyncadd [#allocation18], 0
      %s373 = sshll.u32 %s125, 4
      %s374 = int_to_ptr.hbm [resolvable:$true] %s373
      %s375 = sshll.u32 [#allocation19], 4
      %s376 = int_to_ptr.vmem [resolvable:$true] %s375
      %378 = dma.hbm_to_vmem [thread:$0]  %s374, 16, %s376, [#allocation18]
    $region253: #{fpn_forward.1} parent=1 // pred_fallthru
      _
    // Predicated region
    $region254: #{fpn_forward.1} parent=1 // pred_check
      _
    $region255: #{fpn_forward.1} parent=1 // pred_check_branch
      %380 = sbr.rel (0) target = $region257
    $region256: #{fpn_forward.1} parent=1 // pred_region
      _
    $region257: #{fpn_forward.1} parent=1 // pred_fallthru
      _
    // Predicated region
    $region258: #{fpn_forward.1} parent=1 // pred_check
      _
    $region259: #{fpn_forward.1} parent=1 // pred_check_branch
      %382 = sbr.rel (0) target = $region261
    $region260: #{fpn_forward.1} parent=1 // pred_region
      %384 = vsyncadd [#allocation21], 0
      %s386 = sshll.u32 %s129, 4
      %s387 = int_to_ptr.hbm [resolvable:$true] %s386
      %s388 = sshll.u32 [#allocation20], 4
      %s389 = int_to_ptr.vmem [resolvable:$true] %s388
      %391 = dma.hbm_to_vmem [thread:$0]  %s387, 16, %s389, [#allocation21]
    $region261: #{fpn_forward.1} parent=1 // pred_fallthru
      _
    // Predicated region
    $region262: #{fpn_forward.1} parent=1 // pred_check
      _
    $region263: #{fpn_forward.1} parent=1 // pred_check_branch
      %393 = sbr.rel (0) target = $region265
    $region264: #{fpn_forward.1} parent=1 // pred_region
      %395 = vsyncadd [#allocation21], 0
      %s397 = sshll.u32 %s131, 4
      %s398 = int_to_ptr.hbm [resolvable:$true] %s397
      %s399 = sshll.u32 [#allocation22], 4
      %s400 = int_to_ptr.vmem [resolvable:$true] %s399
      %402 = dma.hbm_to_vmem [thread:$0]  %s398, 16, %s400, [#allocation21]
    $region265: #{fpn_forward.1} parent=1 // pred_fallthru
      _
    // Predicated region
    $region266: #{fpn_forward.1} parent=1 // pred_check
      _
    $region267: #{fpn_forward.1} parent=1 // pred_check_branch
      %404 = sbr.rel (0) target = $region269
    $region268: #{fpn_forward.1} parent=1 // pred_region
      _
    $region269: #{fpn_forward.1} parent=1 // pred_fallthru
      _
    // Predicated region
    $region270: #{fpn_forward.1} parent=1 // pred_check
      _
    $region271: #{fpn_forward.1} parent=1 // pred_check_branch
      %406 = sbr.rel (0) target = $region273
    $region272: #{fpn_forward.1} parent=1 // pred_region
      %408 = dma.done [#allocation3], 16
    $region273: #{fpn_forward.1} parent=1 // pred_fallthru
      _
    // Predicated region
    $region274: #{fpn_forward.1} parent=1 // pred_check
      _
    $region275: #{fpn_forward.1} parent=1 // pred_check_branch
      %410 = sbr.rel (0) target = $region277
    $region276: #{fpn_forward.1} parent=1 // pred_region
      %412 = dma.done [#allocation6], 16
    $region277: #{fpn_forward.1} parent=1 // pred_fallthru
      _
    // Predicated region
    $region278: #{fpn_forward.1} parent=1 // pred_check
      _
    $region279: #{fpn_forward.1} parent=1 // pred_check_branch
      %414 = sbr.rel (0) target = $region281
    $region280: #{fpn_forward.1} parent=1 // pred_region
      %416 = dma.done [#allocation6], 16
    $region281: #{fpn_forward.1} parent=1 // pred_fallthru
      _
    // Predicated region
    $region282: #{fpn_forward.1} parent=1 // pred_check
      _
    $region283: #{fpn_forward.1} parent=1 // pred_check_branch
      %418 = sbr.rel (0) target = $region285
    $region284: #{fpn_forward.1} parent=1 // pred_region
      %420 = dma.done [#allocation9], 16
    $region285: #{fpn_forward.1} parent=1 // pred_fallthru
      _
    // Predicated region
    $region286: #{fpn_forward.1} parent=1 // pred_check
      _
    $region287: #{fpn_forward.1} parent=1 // pred_check_branch
      %422 = sbr.rel (0) target = $region289
    $region288: #{fpn_forward.1} parent=1 // pred_region
      %424 = dma.done [#allocation9], 16
    $region289: #{fpn_forward.1} parent=1 // pred_fallthru
      _
    // Predicated region
    $region290: #{fpn_forward.1} parent=1 // pred_check
      _
    $region291: #{fpn_forward.1} parent=1 // pred_check_branch
      %426 = sbr.rel (0) target = $region293
    $region292: #{fpn_forward.1} parent=1 // pred_region
      %428 = dma.done [#allocation12], 16
    $region293: #{fpn_forward.1} parent=1 // pred_fallthru
      _
    // Predicated region
    $region294: #{fpn_forward.1} parent=1 // pred_check
      _
    $region295: #{fpn_forward.1} parent=1 // pred_check_branch
      %430 = sbr.rel (0) target = $region297
    $region296: #{fpn_forward.1} parent=1 // pred_region
      %432 = dma.done [#allocation12], 16
    $region297: #{fpn_forward.1} parent=1 // pred_fallthru
      _
    // Predicated region
    $region298: #{fpn_forward.1} parent=1 // pred_check
      _
    $region299: #{fpn_forward.1} parent=1 // pred_check_branch
      %434 = sbr.rel (0) target = $region301
    $region300: #{fpn_forward.1} parent=1 // pred_region
      %436 = dma.done [#allocation15], 16
    $region301: #{fpn_forward.1} parent=1 // pred_fallthru
      _
    // Predicated region
    $region302: #{fpn_forward.1} parent=1 // pred_check
      _
    $region303: #{fpn_forward.1} parent=1 // pred_check_branch
      %438 = sbr.rel (0) target = $region305
    $region304: #{fpn_forward.1} parent=1 // pred_region
      %440 = dma.done [#allocation15], 16
    $region305: #{fpn_forward.1} parent=1 // pred_fallthru
      _
    // Predicated region
    $region306: #{fpn_forward.1} parent=1 // pred_check
      _
    $region307: #{fpn_forward.1} parent=1 // pred_check_branch
      %442 = sbr.rel (0) target = $region309
    $region308: #{fpn_forward.1} parent=1 // pred_region
      %444 = dma.done [#allocation18], 16
    $region309: #{fpn_forward.1} parent=1 // pred_fallthru
      _
    // Predicated region
    $region310: #{fpn_forward.1} parent=1 // pred_check
      _
    $region311: #{fpn_forward.1} parent=1 // pred_check_branch
      %446 = sbr.rel (0) target = $region313
    $region312: #{fpn_forward.1} parent=1 // pred_region
      %448 = dma.done [#allocation18], 16
    $region313: #{fpn_forward.1} parent=1 // pred_fallthru
      _
    // Predicated region
    $region314: #{fpn_forward.1} parent=1 // pred_check
      _
    $region315: #{fpn_forward.1} parent=1 // pred_check_branch
      %450 = sbr.rel (0) target = $region317
    $region316: #{fpn_forward.1} parent=1 // pred_region
      %452 = dma.done [#allocation21], 16
    $region317: #{fpn_forward.1} parent=1 // pred_fallthru
      _
    // Predicated region
    $region318: #{fpn_forward.1} parent=1 // pred_check
      _
    $region319: #{fpn_forward.1} parent=1 // pred_check_branch
      %454 = sbr.rel (0) target = $region321
    $region320: #{fpn_forward.1} parent=1 // pred_region
      %456 = dma.done [#allocation21], 16
    $region321: #{fpn_forward.1} parent=1 // pred_fallthru
      _
    %v458 = vld [vmem:[%s1] sm:$0xf]
    %v459 = vld [vmem:[%s1 + $0x4] sm:$0xf]
    %v460 = vld [vmem:[%s1 + $0x8] sm:$0xf]
    %v461 = vld [vmem:[%s1 + $0xc] sm:$0xf]
    %v462 = vld [vmem:[%s1 + $0x10] sm:$0xf]
    %v463 = vld [vmem:[%s1 + $0x14] sm:$0xf]
    %v464 = vld [vmem:[%s1 + $0x18] sm:$0xf]
    %v465 = vld [vmem:[%s1 + $0x1c] sm:$0xf]
    %v466 = vld [vmem:[%s1 + $0x20] sm:$0xf]
    %v467 = vld [vmem:[%s1 + $0x24] sm:$0xf]
    %v468 = vld [vmem:[%s1 + $0x28] sm:$0xf]
    %v469 = vld [vmem:[%s1 + $0x2c] sm:$0xf]
    %v470 = vld [vmem:[%s1 + $0x30] sm:$0xf]
    %v471 = vld [vmem:[%s1 + $0x34] sm:$0xf]
    %v472 = vld [vmem:[%s1 + $0x38] sm:$0xf]
    %v473 = vld [vmem:[%s1 + $0x3c] sm:$0xf]
    %v474 = vld [vmem:[%s1 + $0x40] sm:$0xf]
    %v475 = vld [vmem:[%s1 + $0x44] sm:$0xf]
    %v476 = vld [vmem:[%s1 + $0x48] sm:$0xf]
    %v477 = vld [vmem:[%s1 + $0x4c] sm:$0xf]
    %v478 = vld [vmem:[%s1 + $0x50] sm:$0xf]
    %v479 = vld [vmem:[%s1 + $0x54] sm:$0xf]
    %v480 = vld [vmem:[%s1 + $0x58] sm:$0xf]
    %v481 = vld [vmem:[%s1 + $0x5c] sm:$0xf]
    %v482 = vld [vmem:[%s1 + $0x60] sm:$0xf]
    %v483 = vld [vmem:[%s1 + $0x64] sm:$0xf]
    %v484 = vld [vmem:[%s1 + $0x68] sm:$0xf]
    %v485 = vld [vmem:[%s1 + $0x6c] sm:$0xf]
    %v486 = vld [vmem:[%s1 + $0x70] sm:$0xf]
    %v487 = vld [vmem:[%s1 + $0x74] sm:$0xf]
    %v488 = vld [vmem:[%s1 + $0x78] sm:$0xf]
    %v489 = vld [vmem:[%s1 + $0x7c] sm:$0xf]
    %v490 = vld [vmem:[%s1 + $0x80] sm:$0xf]
    %v491 = vld [vmem:[%s1 + $0x84] sm:$0xf]
    %v492 = vld [vmem:[%s1 + $0x88] sm:$0xf]
    %v493 = vld [vmem:[%s1 + $0x8c] sm:$0xf]
    %v494 = vld [vmem:[%s1 + $0x90] sm:$0xf]
    %v495 = vld [vmem:[%s1 + $0x94] sm:$0xf]
    %v496 = vld [vmem:[%s1 + $0x98] sm:$0xf]
    %v497 = vld [vmem:[%s1 + $0x9c] sm:$0xf]
    %v498 = vld [vmem:[%s1 + $0xa0] sm:$0xf]
    %v499 = vld [vmem:[%s1 + $0xa4] sm:$0xf]
    %v500 = vld [vmem:[%s1 + $0xa8] sm:$0xf]
    %v501 = vld [vmem:[%s1 + $0xac] sm:$0xf]
    %v502 = vld [vmem:[%s1 + $0xb0] sm:$0xf]
    %v503 = vld [vmem:[%s1 + $0xb4] sm:$0xf]
    %v504 = vld [vmem:[%s1 + $0xb8] sm:$0xf]
    %v505 = vld [vmem:[%s1 + $0xbc] sm:$0xf]
    %v506 = vld [vmem:[%s1 + $0xc0] sm:$0xf]
    %v507 = vld [vmem:[%s1 + $0xc4] sm:$0xf]
    %v508 = vld [vmem:[%s1 + $0xc8] sm:$0xf]
    %v509 = vld [vmem:[%s1 + $0xcc] sm:$0xf]
    %v510 = vld [vmem:[%s1 + $0xd0] sm:$0xf]
    %v511 = vld [vmem:[%s1 + $0xd4] sm:$0xf]
    %v512 = vld [vmem:[%s1 + $0xd8] sm:$0xf]
    %v513 = vld [vmem:[%s1 + $0xdc] sm:$0xf]
    %v514 = vld [vmem:[%s1 + $0xe0] sm:$0xf]
    %v515 = vld [vmem:[%s1 + $0xe4] sm:$0xf]
    %v516 = vld [vmem:[%s1 + $0xe8] sm:$0xf]
    %v517 = vld [vmem:[%s1 + $0xec] sm:$0xf]
    %v518 = vld [vmem:[%s1 + $0xf0] sm:$0xf]
    %v519 = vld [vmem:[%s1 + $0xf4] sm:$0xf]
    %v520 = vld [vmem:[%s1 + $0xf8] sm:$0xf]
    %v521 = vld [vmem:[%s1 + $0xfc] sm:$0xf]
    %v522 = vld [vmem:[%s3] sm:$0xf]
    %v523 = vld [vmem:[%s3 + $0x4] sm:$0xf]
    %v524 = vld [vmem:[%s3 + $0x8] sm:$0xf]
    %v525 = vld [vmem:[%s3 + $0xc] sm:$0xf]
    %v526 = vld [vmem:[%s3 + $0x10] sm:$0xf]
    %v527 = vld [vmem:[%s3 + $0x14] sm:$0xf]
    %v528 = vld [vmem:[%s3 + $0x18] sm:$0xf]
    %v529 = vld [vmem:[%s3 + $0x1c] sm:$0xf]
    %v530 = vld [vmem:[%s3 + $0x20] sm:$0xf]
    %v531 = vld [vmem:[%s3 + $0x24] sm:$0xf]
    %v532 = vld [vmem:[%s3 + $0x28] sm:$0xf]
    %v533 = vld [vmem:[%s3 + $0x2c] sm:$0xf]
    %v534 = vld [vmem:[%s3 + $0x30] sm:$0xf]
    %v535 = vld [vmem:[%s3 + $0x34] sm:$0xf]
    %v536 = vld [vmem:[%s3 + $0x38] sm:$0xf]
    %v537 = vld [vmem:[%s3 + $0x3c] sm:$0xf]
    %v538 = vld [vmem:[%s5] sm:$0xf]
    %v539 = vld [vmem:[%s5 + $0x4] sm:$0xf]
    %v540 = vld [vmem:[%s5 + $0x8] sm:$0xf]
    %v541 = vld [vmem:[%s5 + $0xc] sm:$0xf]
    %v542 = vld [vmem:[%s7] sm:$0xf]
    %v543 = vld [vmem:[%s7 + $0x4] sm:$0xf]
    %v544 = vld [vmem:[%s7 + $0x8] sm:$0xf]
    %v545 = vld [vmem:[%s7 + $0xc] sm:$0xf]
    %v546 = vld [vmem:[%s7 + $0x10] sm:$0xf]
    %v547 = vld [vmem:[%s7 + $0x14] sm:$0xf]
    %v548 = vld [vmem:[%s7 + $0x18] sm:$0xf]
    %v549 = vld [vmem:[%s7 + $0x1c] sm:$0xf]
    %v550 = vld [vmem:[%s7 + $0x20] sm:$0xf]
    %v551 = vld [vmem:[%s7 + $0x24] sm:$0xf]
    %v552 = vld [vmem:[%s7 + $0x28] sm:$0xf]
    %v553 = vld [vmem:[%s7 + $0x2c] sm:$0xf]
    %v554 = vld [vmem:[%s7 + $0x30] sm:$0xf]
    %v555 = vld [vmem:[%s7 + $0x34] sm:$0xf]
    %v556 = vld [vmem:[%s7 + $0x38] sm:$0xf]
    %v557 = vld [vmem:[%s7 + $0x3c] sm:$0xf]
    %v558 = vld [vmem:[%s7 + $0x40] sm:$0xf]
    %v559 = vld [vmem:[%s7 + $0x44] sm:$0xf]
    %v560 = vld [vmem:[%s7 + $0x48] sm:$0xf]
    %v561 = vld [vmem:[%s7 + $0x4c] sm:$0xf]
    %v562 = vld [vmem:[%s7 + $0x50] sm:$0xf]
    %v563 = vld [vmem:[%s7 + $0x54] sm:$0xf]
    %v564 = vld [vmem:[%s7 + $0x58] sm:$0xf]
    %v565 = vld [vmem:[%s7 + $0x5c] sm:$0xf]
    %v566 = vld [vmem:[%s7 + $0x60] sm:$0xf]
    %v567 = vld [vmem:[%s7 + $0x64] sm:$0xf]
    %v568 = vld [vmem:[%s7 + $0x68] sm:$0xf]
    %v569 = vld [vmem:[%s7 + $0x6c] sm:$0xf]
    %v570 = vld [vmem:[%s7 + $0x70] sm:$0xf]
    %v571 = vld [vmem:[%s7 + $0x74] sm:$0xf]
    %v572 = vld [vmem:[%s7 + $0x78] sm:$0xf]
    %v573 = vld [vmem:[%s7 + $0x7c] sm:$0xf]
    %v574 = vld [vmem:[%s7 + $0x80] sm:$0xf]
    %v575 = vld [vmem:[%s7 + $0x84] sm:$0xf]
    %v576 = vld [vmem:[%s7 + $0x88] sm:$0xf]
    %v577 = vld [vmem:[%s7 + $0x8c] sm:$0xf]
    %v578 = vld [vmem:[%s7 + $0x90] sm:$0xf]
    %v579 = vld [vmem:[%s7 + $0x94] sm:$0xf]
    %v580 = vld [vmem:[%s7 + $0x98] sm:$0xf]
    %v581 = vld [vmem:[%s7 + $0x9c] sm:$0xf]
    %v582 = vld [vmem:[%s7 + $0xa0] sm:$0xf]
    %v583 = vld [vmem:[%s7 + $0xa4] sm:$0xf]
    %v584 = vld [vmem:[%s7 + $0xa8] sm:$0xf]
    %v585 = vld [vmem:[%s7 + $0xac] sm:$0xf]
    %v586 = vld [vmem:[%s7 + $0xb0] sm:$0xf]
    %v587 = vld [vmem:[%s7 + $0xb4] sm:$0xf]
    %v588 = vld [vmem:[%s7 + $0xb8] sm:$0xf]
    %v589 = vld [vmem:[%s7 + $0xbc] sm:$0xf]
    %v590 = vld [vmem:[%s7 + $0xc0] sm:$0xf]
    %v591 = vld [vmem:[%s7 + $0xc4] sm:$0xf]
    %v592 = vld [vmem:[%s7 + $0xc8] sm:$0xf]
    %v593 = vld [vmem:[%s7 + $0xcc] sm:$0xf]
    %v594 = vld [vmem:[%s7 + $0xd0] sm:$0xf]
    %v595 = vld [vmem:[%s7 + $0xd4] sm:$0xf]
    %v596 = vld [vmem:[%s7 + $0xd8] sm:$0xf]
    %v597 = vld [vmem:[%s7 + $0xdc] sm:$0xf]
    %v598 = vld [vmem:[%s7 + $0xe0] sm:$0xf]
    %v599 = vld [vmem:[%s7 + $0xe4] sm:$0xf]
    %v600 = vld [vmem:[%s7 + $0xe8] sm:$0xf]
    %v601 = vld [vmem:[%s7 + $0xec] sm:$0xf]
    %v602 = vld [vmem:[%s7 + $0xf0] sm:$0xf]
    %v603 = vld [vmem:[%s7 + $0xf4] sm:$0xf]
    %v604 = vld [vmem:[%s7 + $0xf8] sm:$0xf]
    %v605 = vld [vmem:[%s7 + $0xfc] sm:$0xf]
    %v606 = vld [vmem:[%s9] sm:$0x1]
    %v607 = vld [vmem:[%s11] sm:$0x1]
    %v608 = vld [vmem:[%s13] sm:$0xf]
    %v609 = vld [vmem:[%s13 + $0x4] sm:$0xf]
    %v610 = vld [vmem:[%s15] sm:$0xf]
    %v611 = vld [vmem:[%s17] sm:$0x1]
    %v612 = vld [vmem:[%s19] sm:$0x1]
    %v613 = vld [vmem:[%s21] sm:$0x1]
    %v614 = vld [vmem:[%s23] sm:$0x1]
    %v615 = vld [vmem:[%s25] sm:$0x1]
    %v616 = vld [vmem:[%s27] sm:$0x1]
    %v617 = vld [vmem:[%s29] sm:$0xf]
    %v618 = vld [vmem:[%s31] sm:$0xf]
    %v619 = vld [vmem:[%s33] sm:$0x3]
    %v620 = vld [vmem:[%s35] sm:$0x1]
    %v621 = vld [vmem:[%s37] sm:$0x1]
    %v622 = vld [vmem:[%s39] sm:$0xf]
    %v623 = vld [vmem:[%s41] sm:$0x1]
    %v624 = vld [vmem:[%s43] sm:$0x1]
    %v625 = vld [vmem:[%s45] sm:$0x3]
    %v626 = vld [vmem:[%s47] sm:$0x1]
    %v627 = vld [vmem:[%s49] sm:$0x1]
    %v628 = vld [vmem:[%s51] sm:$0xf]
    %v629 = vld [vmem:[%s51 + $0x4] sm:$0xf]
    %v630 = vld [vmem:[%s51 + $0x8] sm:$0xf]
    %v631 = vld [vmem:[%s51 + $0xc] sm:$0xf]
    %v632 = vld [vmem:[%s51 + $0x10] sm:$0x3]
    %v633 = vld [vmem:[%s53] sm:$0xf]
    %v634 = vld [vmem:[%s53 + $0x4] sm:$0xf]
    %v635 = vld [vmem:[%s53 + $0x8] sm:$0xf]
    %v636 = vld [vmem:[%s53 + $0xc] sm:$0xf]
    %v637 = vld [vmem:[%s53 + $0x10] sm:$0xf]
    %v638 = vld [vmem:[%s53 + $0x14] sm:$0xf]
    %v639 = vld [vmem:[%s53 + $0x18] sm:$0xf]
    %v640 = vld [vmem:[%s53 + $0x1c] sm:$0xf]
    %v641 = vld [vmem:[%s53 + $0x20] sm:$0xf]
    %v642 = vld [vmem:[%s53 + $0x24] sm:$0xf]
    %v643 = vld [vmem:[%s53 + $0x28] sm:$0xf]
    %v644 = vld [vmem:[%s53 + $0x2c] sm:$0xf]
    %v645 = vld [vmem:[%s53 + $0x30] sm:$0xf]
    %v646 = vld [vmem:[%s53 + $0x34] sm:$0xf]
    %v647 = vld [vmem:[%s53 + $0x38] sm:$0xf]
    %v648 = vld [vmem:[%s53 + $0x3c] sm:$0xf]
    %v649 = vld [vmem:[%s55] sm:$0x1]
    %v650 = vld [vmem:[%s57] sm:$0x1]
    %v651 = vld [vmem:[%s59] sm:$0xf]
    %v652 = vld [vmem:[%s59 + $0x4] sm:$0xf]
    %v653 = vld [vmem:[%s59 + $0x8] sm:$0xf]
    %v654 = vld [vmem:[%s59 + $0xc] sm:$0xf]
    %v655 = vld [vmem:[%s61] sm:$0xf]
    %v656 = vld [vmem:[%s61 + $0x4] sm:$0xf]
    %v657 = vld [vmem:[%s63] sm:$0x1]
    %v658 = vld [vmem:[%s65] sm:$0x1]
    %v659 = vld [vmem:[%s67] sm:$0x1]
    %v660 = vld [vmem:[%s69] sm:$0x1]
    %v661 = vld [vmem:[%s71] sm:$0x1]
    %v662 = vld [vmem:[%s73] sm:$0x1]
    %v663 = vld [vmem:[%s75] sm:$0xf]
    %v664 = vld [vmem:[%s75 + $0x4] sm:$0xf]
    %v665 = vld [vmem:[%s77] sm:$0xf]
    %v666 = vld [vmem:[%s77 + $0x4] sm:$0xf]
    %v667 = vld [vmem:[%s79] sm:$0xf]
    %v668 = vld [vmem:[%s81] sm:$0x1]
    %v669 = vld [vmem:[%s83] sm:$0x1]
    %v670 = vld [vmem:[%s85] sm:$0xf]
    %v671 = vld [vmem:[%s85 + $0x4] sm:$0xf]
    %v672 = vld [vmem:[%s87] sm:$0x1]
    %v673 = vld [vmem:[%s89] sm:$0x1]
    %v674 = vld [vmem:[%s91] sm:$0xf]
    %v675 = vld [vmem:[%s93] sm:$0x1]
    %v676 = vld [vmem:[#allocation2] sm:$0x1]
    %v677 = vld [vmem:[%s97] sm:$0xf]
    %v678 = vld [vmem:[%s97 + $0x4] sm:$0xf]
    %v679 = vld [vmem:[%s97 + $0x8] sm:$0xf]
    %v680 = vld [vmem:[%s97 + $0xc] sm:$0xf]
    %v681 = vld [vmem:[%s97 + $0x10] sm:$0xf]
    %v682 = vld [vmem:[%s97 + $0x14] sm:$0xf]
    %v683 = vld [vmem:[%s97 + $0x18] sm:$0xf]
    %v684 = vld [vmem:[%s97 + $0x1c] sm:$0xf]
    %v685 = vld [vmem:[%s97 + $0x20] sm:$0xf]
    %v686 = vld [vmem:[#allocation5] sm:$0x1]
    %v687 = vld [vmem:[#allocation7] sm:$0x1]
    %v688 = vld [vmem:[#allocation8] sm:$0x1]
    %v689 = vld [vmem:[#allocation10] sm:$0x1]
    %v690 = vld [vmem:[#allocation11] sm:$0x1]
    %v691 = vld [vmem:[#allocation13] sm:$0x1]
    %v692 = vld [vmem:[%s111] sm:$0xf]
    %v693 = vld [vmem:[%s111 + $0x4] sm:$0xf]
    %v694 = vld [vmem:[%s111 + $0x8] sm:$0xf]
    %v695 = vld [vmem:[%s111 + $0xc] sm:$0xf]
    %v696 = vld [vmem:[%s113] sm:$0xf]
    %v697 = vld [vmem:[%s113 + $0x4] sm:$0xf]
    %v698 = vld [vmem:[%s113 + $0x8] sm:$0xf]
    %v699 = vld [vmem:[%s113 + $0xc] sm:$0xf]
    %v700 = vld [vmem:[%s115] sm:$0xf]
    %v701 = vld [vmem:[%s115 + $0x4] sm:$0xf]
    %v702 = vld [vmem:[#allocation14] sm:$0x1]
    %v703 = vld [vmem:[#allocation16] sm:$0x1]
    %v704 = vld [vmem:[%s121] sm:$0xf]
    %v705 = vld [vmem:[%s121 + $0x4] sm:$0xf]
    %v706 = vld [vmem:[%s121 + $0x8] sm:$0xf]
    %v707 = vld [vmem:[%s121 + $0xc] sm:$0xf]
    %v708 = vld [vmem:[#allocation17] sm:$0x1]
    %v709 = vld [vmem:[#allocation19] sm:$0x1]
    %v710 = vld [vmem:[%s127] sm:$0xf]
    %v711 = vld [vmem:[%s127 + $0x4] sm:$0xf]
    %v712 = vld [vmem:[#allocation20] sm:$0x1]
    %v713 = vld [vmem:[#allocation22] sm:$0x1]
    %v714 = vld [vmem:[%s133] sm:$0xf]
    %v715 = vld [vmem:[%s133 + $0x4] sm:$0xf]
    %v716 = vld [vmem:[%s133 + $0x8] sm:$0xf]
    %v717 = vld [vmem:[%s133 + $0xc] sm:$0xf]
    %v718 = vld [vmem:[%s133 + $0x10] sm:$0xf]
    %v719 = vld [vmem:[%s133 + $0x14] sm:$0xf]
    %v720 = vld [vmem:[%s133 + $0x18] sm:$0xf]
    %v721 = vld [vmem:[%s133 + $0x1c] sm:$0xf]
    %v722 = vld [vmem:[%s133 + $0x20] sm:$0xf]
    %v723 = vld [vmem:[%s133 + $0x24] sm:$0xf]
    %v724 = vld [vmem:[%s133 + $0x28] sm:$0xf]
    %v725 = vld [vmem:[%s133 + $0x2c] sm:$0xf]
    %v726 = vld [vmem:[%s133 + $0x30] sm:$0xf]
    %v727 = vld [vmem:[%s133 + $0x34] sm:$0xf]
    %v728 = vld [vmem:[%s133 + $0x38] sm:$0xf]
    %v729 = vld [vmem:[%s133 + $0x3c] sm:$0xf]
    %v730 = vld [vmem:[%s133 + $0x40] sm:$0xf]
    %v731 = vld [vmem:[%s133 + $0x44] sm:$0xf]
    %v736 = vunpack.c.l.b16 %v538
    %v737 = vunpack.c.l.b16 %v539
    %v738 = vunpack.c.l.b16 %v540
    %v739 = vunpack.c.l.b16 %v541
    %v740 = vpack.c.b16 %v737, %v736
    %v741 = vpack.c.b16 %v739, %v738
    %v746 = vunpack.c.l.b16 %v692
    %v747 = vunpack.c.l.b16 %v693
    %v748 = vunpack.c.l.b16 %v694
    %v749 = vunpack.c.l.b16 %v695
    %v750 = vpack.c.b16 %v747, %v746
    %v751 = vpack.c.b16 %v749, %v748
    %vm754 = vcmask 261120
    %v756 = vsel %vm754, %v740, 0
    %v759 = vsel %vm754, %v741, 0
    %761 = vmatpush.bf16.msra.mxu0 0
    %762 = vmatpush.bf16.msra.mxu0 0
    %763 = vmatpush.bf16.msra.mxu0 0
    %764 = vmatpush.bf16.msra.mxu0 0
    %765 = vmatpush.bf16.msra.mxu0 0
    %766 = vmatpush.bf16.msra.mxu0 0
    %767 = vmatpush.bf16.msra.mxu0 %v751
    %768 = vmatpush.bf16.msra.mxu0 %v750
    %769 = vmatmul.bf16.gmra.mxu0 %v756
    %v770 = vpop.f32.mrf.mxu0
    %v771 = vadd.f32 0.0, %v770
    %v772 = vpop.f32.mrf.mxu0
    %v773 = vadd.f32 0.0, %v772
    %774 = vmatmul.bf16.gmra.mxu0 %v759
    %v775 = vpop.f32.mrf.mxu0
    %v776 = vadd.f32 0.0, %v775
    %v777 = vpop.f32.mrf.mxu0
    %v778 = vadd.f32 0.0, %v777
    %779 = vdwg.mxu0
    %v781 = vperm.slane %v691, 0
    %v783 = vmul.f32 %v771, %v781
    %v784 = vmul.f32 %v773, %v781
    %v785 = vmul.f32 %v776, %v781
    %v786 = vmul.f32 %v778, %v781
    %v788 = vperm.slane %v690, 0
    %v790 = vadd.f32 %v783, %v788
    %v791 = vadd.f32 %v784, %v788
    %v792 = vadd.f32 %v785, %v788
    %v793 = vadd.f32 %v786, %v788
    %v794 = vadd.f32 %v790, 3.0
    %v795 = vadd.f32 %v791, 3.0
    %v796 = vadd.f32 %v792, 3.0
    %v797 = vadd.f32 %v793, 3.0
    %v798 = vmax.f32 %v794, 0.0
    %v799 = vmax.f32 %v795, 0.0
    %v800 = vmax.f32 %v796, 0.0
    %v801 = vmax.f32 %v797, 0.0
    %v802 = vmin.f32 %v798, 6.0
    %v803 = vmin.f32 %v799, 6.0
    %v804 = vmin.f32 %v800, 6.0
    %v805 = vmin.f32 %v801, 6.0
    %v806 = vmul.f32 %v790, %v802
    %v807 = vmul.f32 %v791, %v803
    %v808 = vmul.f32 %v792, %v804
    %v809 = vmul.f32 %v793, %v805
    %v810 = vmul.f32 %v806, 0.16666667
    %v811 = vmul.f32 %v807, 0.16666667
    %v812 = vmul.f32 %v808, 0.16666667
    %v813 = vmul.f32 %v809, 0.16666667
    %v814 = vpack.c.bf16 %v811, %v810
    %v815 = vpack.c.bf16 %v813, %v812
    %v818 = vunpack.c.l.b16 %v710
    %v819 = vunpack.c.l.b16 %v711
    %v820 = vpack.c.b16 %v819, %v818
    %vm822 = vcmask 130048
    %v824 = vsel %vm822, %v814, 0
    %v827 = vsel %vm822, %v815, 0
    %829 = vmatpush.bf16.msra.mxu0 0
    %830 = vmatpush.bf16.msra.mxu0 0
    %831 = vmatpush.bf16.msra.mxu0 0
    %832 = vmatpush.bf16.msra.mxu0 0
    %833 = vmatpush.bf16.msra.mxu0 0
    %834 = vmatpush.bf16.msra.mxu0 0
    %835 = vmatpush.bf16.msra.mxu0 0
    %836 = vmatpush.bf16.msra.mxu0 %v820
    %837 = vmatmul.bf16.gmra.mxu0 %v824
    %v838 = vpop.f32.mrf.mxu0
    %v839 = vadd.f32 0.0, %v838
    %v840 = vpop.f32.mrf.mxu0
    %v841 = vadd.f32 0.0, %v840
    %842 = vmatmul.bf16.gmra.mxu0 %v827
    %v843 = vpop.f32.mrf.mxu0
    %v844 = vadd.f32 0.0, %v843
    %v845 = vpop.f32.mrf.mxu0
    %v846 = vadd.f32 0.0, %v845
    %847 = vdwg.mxu0
    %v849 = vperm.slane %v709, 0
    %v851 = vmul.f32 %v839, %v849
    %v852 = vmul.f32 %v841, %v849
    %v853 = vmul.f32 %v844, %v849
    %v854 = vmul.f32 %v846, %v849
    %v856 = vperm.slane %v708, 0
    %v858 = vadd.f32 %v851, %v856
    %v859 = vadd.f32 %v852, %v856
    %v860 = vadd.f32 %v853, %v856
    %v861 = vadd.f32 %v854, %v856
    %v862 = vadd.f32 %v858, 3.0
    %v863 = vadd.f32 %v859, 3.0
    %v864 = vadd.f32 %v860, 3.0
    %v865 = vadd.f32 %v861, 3.0
    %v866 = vmax.f32 %v862, 0.0
    %v867 = vmax.f32 %v863, 0.0
    %v868 = vmax.f32 %v864, 0.0
    %v869 = vmax.f32 %v865, 0.0
    %v870 = vmin.f32 %v866, 6.0
    %v871 = vmin.f32 %v867, 6.0
    %v872 = vmin.f32 %v868, 6.0
    %v873 = vmin.f32 %v869, 6.0
    %v874 = vmul.f32 %v858, %v870
    %v875 = vmul.f32 %v859, %v871
    %v876 = vmul.f32 %v860, %v872
    %v877 = vmul.f32 %v861, %v873
    %v878 = vmul.f32 %v874, 0.16666667
    %v879 = vmul.f32 %v875, 0.16666667
    %v880 = vmul.f32 %v876, 0.16666667
    %v881 = vmul.f32 %v877, 0.16666667
    %v882 = vpack.c.bf16 %v878, %v878
    %v883 = vpack.c.bf16 %v879, %v879
    %v884 = vpack.c.bf16 %v880, %v880
    %v885 = vpack.c.bf16 %v881, %v881
    %v890 = vrot.slane %v882, 2
    %v891 = vrot.slane %v883, 2
    %v892 = vrot.slane %v884, 2
    %v893 = vrot.slane %v885, 2
    %vm894 = vcmask 1041408
    %v897 = vsel %vm894, %v882, %v890
    %vm898 = vcmask 1043458
    %v899 = vsel %vm898, %v882, %v890
    %v901 = vrot.slane %v899, 2
    %v904 = vsel %vm894, %v883, %v891
    %v905 = vsel %vm898, %v883, %v891
    %v907 = vrot.slane %v905, 2
    %v910 = vsel %vm894, %v884, %v892
    %v911 = vsel %vm898, %v884, %v892
    %v913 = vrot.slane %v911, 2
    %v916 = vsel %vm894, %v885, %v893
    %v917 = vsel %vm898, %v885, %v893
    %v919 = vrot.slane %v917, 2
    %920 = vst [vmem:[#allocation1] ss:$4 sm:$0xff] %v897
    %v921 = vld.sshfl [vmem:[#allocation1] sm:$0xff pattern:$0x73625140]
    %s923 = scalar_lea.vmem [#allocation1], 32
    %924 = vst [vmem:[%s923] ss:$4 sm:$0xff] %v901
    %v925 = vld.sshfl [vmem:[#allocation1 + $0x20] sm:$0xff pattern:$0x73625140]
    %926 = vst [vmem:[#allocation1] ss:$4 sm:$0xff] %v904
    %v927 = vld.sshfl [vmem:[#allocation1] sm:$0xff pattern:$0x73625140]
    %929 = vst [vmem:[%s923] ss:$4 sm:$0xff] %v907
    %v930 = vld.sshfl [vmem:[#allocation1 + $0x20] sm:$0xff pattern:$0x73625140]
    %931 = vst [vmem:[#allocation1] ss:$4 sm:$0xff] %v910
    %v932 = vld.sshfl [vmem:[#allocation1] sm:$0xff pattern:$0x73625140]
    %934 = vst [vmem:[%s923] ss:$4 sm:$0xff] %v913
    %v935 = vld.sshfl [vmem:[#allocation1 + $0x20] sm:$0xff pattern:$0x73625140]
    %936 = vst [vmem:[#allocation1] ss:$4 sm:$0xff] %v916
    %v937 = vld.sshfl [vmem:[#allocation1] sm:$0xff pattern:$0x73625140]
    %939 = vst [vmem:[%s923] ss:$4 sm:$0xff] %v919
    %v940 = vld.sshfl [vmem:[#allocation1 + $0x20] sm:$0xff pattern:$0x73625140]
    %v941 = vshrl.u32 %v921, 16
    %v943 = vrot.slane %v941, 7
    %v944 = vshll.u32 %v921, 16
    %v946 = vor.u32 %v943, %v944
    %v947 = vshrl.u32 %v925, 16
    %v949 = vrot.slane %v947, 7
    %v950 = vshll.u32 %v925, 16
    %v952 = vor.u32 %v949, %v950
    %v953 = vshrl.u32 %v927, 16
    %v955 = vrot.slane %v953, 7
    %v956 = vshll.u32 %v927, 16
    %v958 = vor.u32 %v955, %v956
    %v959 = vshrl.u32 %v930, 16
    %v961 = vrot.slane %v959, 7
    %v962 = vshll.u32 %v930, 16
    %v964 = vor.u32 %v961, %v962
    %v965 = vshrl.u32 %v932, 16
    %v967 = vrot.slane %v965, 7
    %v968 = vshll.u32 %v932, 16
    %v970 = vor.u32 %v967, %v968
    %v971 = vshrl.u32 %v935, 16
    %v973 = vrot.slane %v971, 7
    %v974 = vshll.u32 %v935, 16
    %v976 = vor.u32 %v973, %v974
    %v977 = vshrl.u32 %v937, 16
    %v979 = vrot.slane %v977, 7
    %v980 = vshll.u32 %v937, 16
    %v982 = vor.u32 %v979, %v980
    %v983 = vshrl.u32 %v940, 16
    %v985 = vrot.slane %v983, 7
    %v986 = vshll.u32 %v940, 16
    %v988 = vor.u32 %v985, %v986
    %vm997 = vcmask 1040384
    %vm998 = vsmask.f32 256
    %vm999 = vmand %vm997, %vm998
    %v1000 = vsel %vm999, 0, %v946
    %v1001 = vsel %vm999, 0, %v952
    %v1002 = vsel %vm999, 0, %v958
    %v1003 = vsel %vm999, 0, %v964
    %v1004 = vsel %vm999, 0, %v970
    %v1005 = vsel %vm999, 0, %v976
    %v1006 = vsel %vm999, 0, %v982
    %v1007 = vsel %vm999, 0, %v988
    %vm1008 = vcmask 1042432
    %vm1009 = vsmask.f32 2304
    %vm1010 = vmand %vm1008, %vm1009
    %v1011 = vsel %vm1010, %v1000, 0
    %v1012 = vsel %vm1010, %v1001, 0
    %v1013 = vsel %vm1010, %v1002, 0
    %v1014 = vsel %vm1010, %v1003, 0
    %v1015 = vsel %vm1010, %v1004, 0
    %v1016 = vsel %vm1010, %v1005, 0
    %v1017 = vsel %vm1010, %v1006, 0
    %v1018 = vsel %vm1010, %v1007, 0
    %v1020 = vshrl.u32 0, 16
    %v1022 = vshll.u32 0, 16
    %v1024 = vrot.slane %v1022, 1
    %v1025 = vor.u32 %v1020, %v1024
    %v1027 = vshrl.u32 %v1011, 16
    %v1029 = vshll.u32 %v1011, 16
    %v1031 = vrot.slane %v1029, 1
    %v1032 = vor.u32 %v1027, %v1031
    %v1034 = vshrl.u32 %v1012, 16
    %v1036 = vshll.u32 %v1012, 16
    %v1038 = vrot.slane %v1036, 1
    %v1039 = vor.u32 %v1034, %v1038
    %v1041 = vshrl.u32 %v1013, 16
    %v1043 = vshll.u32 %v1013, 16
    %v1045 = vrot.slane %v1043, 1
    %v1046 = vor.u32 %v1041, %v1045
    %v1048 = vshrl.u32 %v1015, 16
    %v1050 = vshll.u32 %v1015, 16
    %v1052 = vrot.slane %v1050, 1
    %v1053 = vor.u32 %v1048, %v1052
    %v1055 = vshrl.u32 %v1016, 16
    %v1057 = vshll.u32 %v1016, 16
    %v1059 = vrot.slane %v1057, 1
    %v1060 = vor.u32 %v1055, %v1059
    %v1062 = vshrl.u32 %v1017, 16
    %v1064 = vshll.u32 %v1017, 16
    %v1066 = vrot.slane %v1064, 1
    %v1067 = vor.u32 %v1062, %v1066
    %1068 = vrot.lane.b32.xlu0 %v1025, 16
    %v1069 = vpop.permute.xlu0 %1068
    %1070 = vrot.lane.b32.xlu0 %v1032, 16
    %v1071 = vpop.permute.xlu0 %1070
    %1072 = vrot.lane.b32.xlu0 %v1039, 16
    %v1073 = vpop.permute.xlu0 %1072
    %1074 = vrot.lane.b32.xlu0 %v1046, 16
    %v1075 = vpop.permute.xlu0 %1074
    %1076 = vrot.lane.b32.xlu0 %v1053, 16
    %v1077 = vpop.permute.xlu0 %1076
    %1078 = vrot.lane.b32.xlu0 %v1060, 16
    %v1079 = vpop.permute.xlu0 %1078
    %1080 = vrot.lane.b32.xlu0 %v1067, 16
    %v1081 = vpop.permute.xlu0 %1080
    %v1089 = vrot.slane 0, 1
    %v1090 = vrot.slane %v1011, 1
    %v1091 = vrot.slane %v1012, 1
    %v1092 = vrot.slane %v1013, 1
    %v1093 = vrot.slane %v1015, 1
    %v1094 = vrot.slane %v1016, 1
    %v1095 = vrot.slane %v1017, 1
    %1096 = vrot.lane.b32.xlu0 %v1089, 32
    %v1097 = vpop.permute.xlu0 %1096
    %1098 = vrot.lane.b32.xlu0 %v1090, 32
    %v1099 = vpop.permute.xlu0 %1098
    %1100 = vrot.lane.b32.xlu0 %v1091, 32
    %v1101 = vpop.permute.xlu0 %1100
    %1102 = vrot.lane.b32.xlu0 %v1092, 32
    %v1103 = vpop.permute.xlu0 %1102
    %1104 = vrot.lane.b32.xlu0 %v1093, 32
    %v1105 = vpop.permute.xlu0 %1104
    %1106 = vrot.lane.b32.xlu0 %v1094, 32
    %v1107 = vpop.permute.xlu0 %1106
    %1108 = vrot.lane.b32.xlu0 %v1095, 32
    %v1109 = vpop.permute.xlu0 %1108
    %1112 = vrot.lane.b32.xlu0 %v1011, 48
    %v1113 = vpop.permute.xlu0 %1112
    %1114 = vrot.lane.b32.xlu0 %v1012, 48
    %v1115 = vpop.permute.xlu0 %1114
    %1116 = vrot.lane.b32.xlu0 %v1013, 48
    %v1117 = vpop.permute.xlu0 %1116
    %1118 = vrot.lane.b32.xlu0 %v1014, 48
    %v1119 = vpop.permute.xlu0 %1118
    %1120 = vrot.lane.b32.xlu0 %v1015, 48
    %v1121 = vpop.permute.xlu0 %1120
    %1122 = vrot.lane.b32.xlu0 %v1016, 48
    %v1123 = vpop.permute.xlu0 %1122
    %1124 = vrot.lane.b32.xlu0 %v1017, 48
    %v1125 = vpop.permute.xlu0 %1124
    %1126 = vrot.lane.b32.xlu0 %v1018, 48
    %v1127 = vpop.permute.xlu0 %1126
    %v1129 = vshrl.u32 %v1014, 16
    %v1131 = vshll.u32 %v1014, 16
    %v1133 = vrot.slane %v1131, 1
    %v1134 = vor.u32 %v1129, %v1133
    %v1136 = vshrl.u32 %v1018, 16
    %v1138 = vshll.u32 %v1018, 16
    %v1140 = vrot.slane %v1138, 1
    %v1141 = vor.u32 %v1136, %v1140
    %1142 = vrot.lane.b32.xlu0 %v1032, 64
    %v1143 = vpop.permute.xlu0 %1142
    %1144 = vrot.lane.b32.xlu0 %v1039, 64
    %v1145 = vpop.permute.xlu0 %1144
    %1146 = vrot.lane.b32.xlu0 %v1046, 64
    %v1147 = vpop.permute.xlu0 %1146
    %1148 = vrot.lane.b32.xlu0 %v1134, 64
    %v1149 = vpop.permute.xlu0 %1148
    %1150 = vrot.lane.b32.xlu0 %v1053, 64
    %v1151 = vpop.permute.xlu0 %1150
    %1152 = vrot.lane.b32.xlu0 %v1060, 64
    %v1153 = vpop.permute.xlu0 %1152
    %1154 = vrot.lane.b32.xlu0 %v1067, 64
    %v1155 = vpop.permute.xlu0 %1154
    %1156 = vrot.lane.b32.xlu0 %v1141, 64
    %v1157 = vpop.permute.xlu0 %1156
    %v1158 = vrot.slane %v1014, 1
    %v1159 = vrot.slane %v1018, 1
    %1160 = vrot.lane.b32.xlu0 %v1090, 80
    %v1161 = vpop.permute.xlu0 %1160
    %1162 = vrot.lane.b32.xlu0 %v1091, 80
    %v1163 = vpop.permute.xlu0 %1162
    %1164 = vrot.lane.b32.xlu0 %v1092, 80
    %v1165 = vpop.permute.xlu0 %1164
    %1166 = vrot.lane.b32.xlu0 %v1158, 80
    %v1167 = vpop.permute.xlu0 %1166
    %1168 = vrot.lane.b32.xlu0 %v1093, 80
    %v1169 = vpop.permute.xlu0 %1168
    %1170 = vrot.lane.b32.xlu0 %v1094, 80
    %v1171 = vpop.permute.xlu0 %1170
    %1172 = vrot.lane.b32.xlu0 %v1095, 80
    %v1173 = vpop.permute.xlu0 %1172
    %1174 = vrot.lane.b32.xlu0 %v1159, 80
    %v1175 = vpop.permute.xlu0 %1174
    %1176 = vrot.lane.b32.xlu0 %v1012, 96
    %v1177 = vpop.permute.xlu0 %1176
    %1178 = vrot.lane.b32.xlu0 %v1013, 96
    %v1179 = vpop.permute.xlu0 %1178
    %1180 = vrot.lane.b32.xlu0 %v1014, 96
    %v1181 = vpop.permute.xlu0 %1180
    %1182 = vrot.lane.b32.xlu0 0, 96
    %v1183 = vpop.permute.xlu0 %1182
    %1184 = vrot.lane.b32.xlu0 %v1016, 96
    %v1185 = vpop.permute.xlu0 %1184
    %1186 = vrot.lane.b32.xlu0 %v1017, 96
    %v1187 = vpop.permute.xlu0 %1186
    %1188 = vrot.lane.b32.xlu0 %v1018, 96
    %v1189 = vpop.permute.xlu0 %1188
    %1190 = vrot.lane.b32.xlu0 %v1039, 112
    %v1191 = vpop.permute.xlu0 %1190
    %1192 = vrot.lane.b32.xlu0 %v1046, 112
    %v1193 = vpop.permute.xlu0 %1192
    %1194 = vrot.lane.b32.xlu0 %v1134, 112
    %v1195 = vpop.permute.xlu0 %1194
    %1196 = vrot.lane.b32.xlu0 %v1025, 112
    %v1197 = vpop.permute.xlu0 %1196
    %1198 = vrot.lane.b32.xlu0 %v1060, 112
    %v1199 = vpop.permute.xlu0 %1198
    %1200 = vrot.lane.b32.xlu0 %v1067, 112
    %v1201 = vpop.permute.xlu0 %1200
    %1202 = vrot.lane.b32.xlu0 %v1141, 112
    %v1203 = vpop.permute.xlu0 %1202
    %v1205 = vsel %vm822, 0, %v1069
    %v1207 = vsel %vm822, %v1011, %v1071
    %v1209 = vsel %vm822, %v1012, %v1073
    %v1211 = vsel %vm822, %v1013, %v1075
    %v1213 = vsel %vm822, %v1015, %v1077
    %v1215 = vsel %vm822, %v1016, %v1079
    %v1217 = vsel %vm822, %v1017, %v1081
    %v1219 = vsel %vm754, %v1205, %v1097
    %v1221 = vsel %vm754, %v1207, %v1099
    %v1223 = vsel %vm754, %v1209, %v1101
    %v1225 = vsel %vm754, %v1211, %v1103
    %v1227 = vsel %vm754, %v1213, %v1105
    %v1229 = vsel %vm754, %v1215, %v1107
    %v1231 = vsel %vm754, %v1217, %v1109
    %vm1232 = vcmask 392192
    %v1234 = vsel %vm1232, %v1219, %v1113
    %v1236 = vsel %vm1232, %v1221, %v1115
    %v1238 = vsel %vm1232, %v1223, %v1117
    %v1240 = vsel %vm1232, %v1225, %v1119
    %v1242 = vsel %vm1232, %v1219, %v1121
    %v1244 = vsel %vm1232, %v1227, %v1123
    %v1246 = vsel %vm1232, %v1229, %v1125
    %v1248 = vsel %vm1232, %v1231, %v1127
    %vm1249 = vcmask 523264
    %v1251 = vsel %vm1249, %v1234, %v1143
    %v1253 = vsel %vm1249, %v1236, %v1145
    %v1255 = vsel %vm1249, %v1238, %v1147
    %v1257 = vsel %vm1249, %v1240, %v1149
    %v1259 = vsel %vm1249, %v1242, %v1151
    %v1261 = vsel %vm1249, %v1244, %v1153
    %v1263 = vsel %vm1249, %v1246, %v1155
    %v1265 = vsel %vm1249, %v1248, %v1157
    %vm1266 = vcmask 654336
    %v1268 = vsel %vm1266, %v1251, %v1161
    %v1270 = vsel %vm1266, %v1253, %v1163
    %v1272 = vsel %vm1266, %v1255, %v1165
    %v1274 = vsel %vm1266, %v1257, %v1167
    %v1276 = vsel %vm1266, %v1259, %v1169
    %v1278 = vsel %vm1266, %v1261, %v1171
    %v1280 = vsel %vm1266, %v1263, %v1173
    %v1282 = vsel %vm1266, %v1265, %v1175
    %vm1283 = vcmask 785408
    %v1285 = vsel %vm1283, %v1268, %v1177
    %v1287 = vsel %vm1283, %v1270, %v1179
    %v1289 = vsel %vm1283, %v1272, %v1181
    %v1291 = vsel %vm1283, %v1274, %v1183
    %v1293 = vsel %vm1283, %v1276, %v1185
    %v1295 = vsel %vm1283, %v1278, %v1187
    %v1297 = vsel %vm1283, %v1280, %v1189
    %v1298 = vsel %vm1283, %v1282, %v1183
    %vm1299 = vcmask 916480
    %v1301 = vsel %vm1299, %v1285, %v1191
    %v1303 = vsel %vm1299, %v1287, %v1193
    %v1305 = vsel %vm1299, %v1289, %v1195
    %v1307 = vsel %vm1299, %v1291, %v1197
    %v1309 = vsel %vm1299, %v1293, %v1199
    %v1311 = vsel %vm1299, %v1295, %v1201
    %v1313 = vsel %vm1299, %v1297, %v1203
    %v1314 = vsel %vm1299, %v1298, %v1197
    %v1315 = vrot.slane %v1091, 6
    %v1316 = vrot.slane %v1092, 6
    %v1317 = vrot.slane %v1158, 6
    %v1318 = vrot.slane %v1089, 6
    %v1319 = vrot.slane %v1094, 6
    %v1320 = vrot.slane %v1095, 6
    %v1321 = vrot.slane %v1159, 6
    %v1323 = vsel %vm894, %v1301, %v1315
    %v1325 = vsel %vm894, %v1303, %v1316
    %v1327 = vsel %vm894, %v1305, %v1317
    %v1329 = vsel %vm894, %v1307, %v1318
    %v1331 = vsel %vm894, %v1309, %v1319
    %v1333 = vsel %vm894, %v1311, %v1320
    %v1335 = vsel %vm894, %v1313, %v1321
    %v1336 = vsel %vm894, %v1314, %v1318
    %1337 = vst [vmem:[#allocation1] ss:$4 sm:$0xff] %v1323
    %s1338 = scalar_lea.vmem [#allocation1], 1
    %1339 = vst [vmem:[%s1338] ss:$4 sm:$0xff] %v1325
    %s1340 = scalar_lea.vmem [#allocation1], 2
    %1341 = vst [vmem:[%s1340] ss:$4 sm:$0xff] %v1327
    %s1342 = scalar_lea.vmem [#allocation1], 3
    %1343 = vst [vmem:[%s1342] ss:$4 sm:$0xff] %v1329
    %s1344 = scalar_lea.vmem [#allocation1], 32
    %1345 = vst [vmem:[%s1344] ss:$4 sm:$0xff] %v1331
    %s1346 = scalar_lea.vmem [#allocation1], 33
    %1347 = vst [vmem:[%s1346] ss:$4 sm:$0xff] %v1333
    %s1348 = scalar_lea.vmem [#allocation1], 34
    %1349 = vst [vmem:[%s1348] ss:$4 sm:$0xff] %v1335
    %s1350 = scalar_lea.vmem [#allocation1], 35
    %1351 = vst [vmem:[%s1350] ss:$4 sm:$0xff] %v1336
    %v1352 = vld.sshfl [vmem:[#allocation1] sm:$0xff pattern:$0x73625140]
    %v1353 = vld.sshfl [vmem:[#allocation1 + $0x8] sm:$0xff pattern:$0x73625140]
    %v1354 = vld.sshfl [vmem:[#allocation1 + $0x20] sm:$0xff pattern:$0x73625140]
    %v1355 = vld.sshfl [vmem:[#allocation1 + $0x28] sm:$0xff pattern:$0x73625140]
    %v1376 = vunpack.c.l.b16 %v714
    %v1377 = vunpack.c.l.b16 %v715
    %v1378 = vunpack.c.l.b16 %v716
    %v1379 = vunpack.c.l.b16 %v717
    %v1380 = vunpack.c.l.b16 %v718
    %v1381 = vunpack.c.l.b16 %v719
    %v1382 = vunpack.c.l.b16 %v720
    %v1383 = vunpack.c.l.b16 %v721
    %v1384 = vunpack.c.l.b16 %v722
    %v1385 = vunpack.c.l.b16 %v723
    %v1386 = vunpack.c.l.b16 %v724
    %v1387 = vunpack.c.l.b16 %v725
    %v1388 = vunpack.c.l.b16 %v726
    %v1389 = vunpack.c.l.b16 %v727
    %v1390 = vunpack.c.l.b16 %v728
    %v1391 = vunpack.c.l.b16 %v729
    %v1392 = vunpack.c.l.b16 %v730
    %v1393 = vunpack.c.l.b16 %v731
    %v1394 = vpack.c.b16 %v1377, %v1376
    %v1395 = vpack.c.b16 %v1379, %v1378
    %v1396 = vpack.c.b16 %v1381, %v1380
    %v1397 = vpack.c.b16 %v1383, %v1382
    %v1398 = vpack.c.b16 %v1385, %v1384
    %v1399 = vpack.c.b16 %v1387, %v1386
    %v1400 = vpack.c.b16 %v1389, %v1388
    %v1401 = vpack.c.b16 %v1391, %v1390
    %v1402 = vpack.c.b16 %v1393, %v1392
    %v1412 = vsel %vm822, %v1353, 0
    %v1414 = vsel %vm822, %v1355, 0
    %1416 = vmatpush.bf16.msra.mxu0 %v1401
    %1417 = vmatpush.bf16.msra.mxu0 %v1400
    %1418 = vmatpush.bf16.msra.mxu0 %v1399
    %1419 = vmatpush.bf16.msra.mxu0 %v1398
    %1420 = vmatpush.bf16.msra.mxu0 %v1397
    %1421 = vmatpush.bf16.msra.mxu0 %v1396
    %1422 = vmatpush.bf16.msra.mxu0 %v1395
    %1423 = vmatpush.bf16.msra.mxu0 %v1394
    %1424 = vmatmul.bf16.gmra.mxu0 %v1352
    %v1425 = vpop.f32.mrf.mxu0
    %v1426 = vadd.f32 0.0, %v1425
    %v1427 = vpop.f32.mrf.mxu0
    %v1428 = vadd.f32 0.0, %v1427
    %1429 = vmatmul.bf16.gmra.mxu0 %v1354
    %v1430 = vpop.f32.mrf.mxu0
    %v1431 = vadd.f32 0.0, %v1430
    %v1432 = vpop.f32.mrf.mxu0
    %v1433 = vadd.f32 0.0, %v1432
    %1434 = vdwg.mxu0
    %1435 = vmatpush.bf16.msra.mxu0 0
    %1436 = vmatpush.bf16.msra.mxu0 0
    %1437 = vmatpush.bf16.msra.mxu0 0
    %1438 = vmatpush.bf16.msra.mxu0 0
    %1439 = vmatpush.bf16.msra.mxu0 0
    %1440 = vmatpush.bf16.msra.mxu0 0
    %1441 = vmatpush.bf16.msra.mxu0 0
    %1442 = vmatpush.bf16.msra.mxu0 %v1402
    %1443 = vmatmul.bf16.gmra.mxu0 %v1412
    %v1444 = vpop.f32.mrf.mxu0
    %v1445 = vadd.f32 %v1426, %v1444
    %v1446 = vpop.f32.mrf.mxu0
    %v1447 = vadd.f32 %v1428, %v1446
    %1448 = vmatmul.bf16.gmra.mxu0 %v1414
    %v1449 = vpop.f32.mrf.mxu0
    %v1450 = vadd.f32 %v1431, %v1449
    %v1451 = vpop.f32.mrf.mxu0
    %v1452 = vadd.f32 %v1433, %v1451
    %1453 = vdwg.mxu0
    %v1455 = vperm.slane %v713, 0
    %v1457 = vmul.f32 %v1445, %v1455
    %v1458 = vmul.f32 %v1447, %v1455
    %v1459 = vmul.f32 %v1450, %v1455
    %v1460 = vmul.f32 %v1452, %v1455
    %v1462 = vperm.slane %v712, 0
    %v1464 = vadd.f32 %v1457, %v1462
    %v1465 = vadd.f32 %v1458, %v1462
    %v1466 = vadd.f32 %v1459, %v1462
    %v1467 = vadd.f32 %v1460, %v1462
    %v1468 = vadd.f32 %v1464, 3.0
    %v1469 = vadd.f32 %v1465, 3.0
    %v1470 = vadd.f32 %v1466, 3.0
    %v1471 = vadd.f32 %v1467, 3.0
    %v1472 = vmax.f32 %v1468, 0.0
    %v1473 = vmax.f32 %v1469, 0.0
    %v1474 = vmax.f32 %v1470, 0.0
    %v1475 = vmax.f32 %v1471, 0.0
    %v1476 = vmin.f32 %v1472, 6.0
    %v1477 = vmin.f32 %v1473, 6.0
    %v1478 = vmin.f32 %v1474, 6.0
    %v1479 = vmin.f32 %v1475, 6.0
    %v1480 = vmul.f32 %v1464, %v1476
    %v1481 = vmul.f32 %v1465, %v1477
    %v1482 = vmul.f32 %v1466, %v1478
    %v1483 = vmul.f32 %v1467, %v1479
    %v1484 = vmul.f32 %v1480, 0.16666667
    %v1485 = vmul.f32 %v1481, 0.16666667
    %v1486 = vmul.f32 %v1482, 0.16666667
    %v1487 = vmul.f32 %v1483, 0.16666667
    %v1488 = vpack.c.bf16 %v1485, %v1484
    %v1489 = vpack.c.bf16 %v1487, %v1486
    %v1492 = vunpack.c.l.b16 %v700
    %v1493 = vunpack.c.l.b16 %v701
    %v1494 = vpack.c.b16 %v1493, %v1492
    %v1497 = vsel %vm822, %v1488, 0
    %v1500 = vsel %vm822, %v1489, 0
    %1502 = vmatpush.bf16.msra.mxu0 0
    %1503 = vmatpush.bf16.msra.mxu0 0
    %1504 = vmatpush.bf16.msra.mxu0 0
    %1505 = vmatpush.bf16.msra.mxu0 0
    %1506 = vmatpush.bf16.msra.mxu0 0
    %1507 = vmatpush.bf16.msra.mxu0 0
    %1508 = vmatpush.bf16.msra.mxu0 0
    %1509 = vmatpush.bf16.msra.mxu0 %v1494
    %1510 = vmatmul.bf16.gmra.mxu0 %v1497
    %v1511 = vpop.f32.mrf.mxu0
    %v1512 = vadd.f32 0.0, %v1511
    %v1513 = vpop.f32.mrf.mxu0
    %v1514 = vadd.f32 0.0, %v1513
    %1515 = vmatmul.bf16.gmra.mxu0 %v1500
    %v1516 = vpop.f32.mrf.mxu0
    %v1517 = vadd.f32 0.0, %v1516
    %v1518 = vpop.f32.mrf.mxu0
    %v1519 = vadd.f32 0.0, %v1518
    %1520 = vdwg.mxu0
    %v1522 = vperm.slane %v688, 0
    %v1524 = vmul.f32 %v1512, %v1522
    %v1525 = vmul.f32 %v1514, %v1522
    %v1526 = vmul.f32 %v1517, %v1522
    %v1527 = vmul.f32 %v1519, %v1522
    %v1529 = vperm.slane %v686, 0
    %v1531 = vadd.f32 %v1524, %v1529
    %v1532 = vadd.f32 %v1525, %v1529
    %v1533 = vadd.f32 %v1526, %v1529
    %v1534 = vadd.f32 %v1527, %v1529
    %vm1535 = vcmp.gt.f32.partialorder %v1531, 0.0
    %vm1536 = vcmp.gt.f32.partialorder %v1532, 0.0
    %vm1537 = vcmp.gt.f32.partialorder %v1533, 0.0
    %vm1538 = vcmp.gt.f32.partialorder %v1534, 0.0
    %v1539 = vmul.f32 %v1531, 0.1
    %v1540 = vmul.f32 %v1532, 0.1
    %v1541 = vmul.f32 %v1533, 0.1
    %v1542 = vmul.f32 %v1534, 0.1
    %v1543 = vsel %vm1535, %v1531, %v1539
    %v1544 = vsel %vm1536, %v1532, %v1540
    %v1545 = vsel %vm1537, %v1533, %v1541
    %v1546 = vsel %vm1538, %v1534, %v1542
    %v1551 = vunpack.c.l.b16 %v696
    %v1552 = vunpack.c.l.b16 %v697
    %v1553 = vunpack.c.l.b16 %v698
    %v1554 = vunpack.c.l.b16 %v699
    %v1555 = vpack.c.b16 %v1552, %v1551
    %v1556 = vpack.c.b16 %v1554, %v1553
    %1559 = vmatpush.bf16.msra.mxu0 0
    %1560 = vmatpush.bf16.msra.mxu0 0
    %1561 = vmatpush.bf16.msra.mxu0 0
    %1562 = vmatpush.bf16.msra.mxu0 0
    %1563 = vmatpush.bf16.msra.mxu0 0
    %1564 = vmatpush.bf16.msra.mxu0 0
    %1565 = vmatpush.bf16.msra.mxu0 %v1556
    %1566 = vmatpush.bf16.msra.mxu0 %v1555
    %1567 = vmatmul.bf16.gmra.mxu0 %v756
    %v1568 = vpop.f32.mrf.mxu0
    %v1569 = vadd.f32 0.0, %v1568
    %v1570 = vpop.f32.mrf.mxu0
    %v1571 = vadd.f32 0.0, %v1570
    %1572 = vmatmul.bf16.gmra.mxu0 %v759
    %v1573 = vpop.f32.mrf.mxu0
    %v1574 = vadd.f32 0.0, %v1573
    %v1575 = vpop.f32.mrf.mxu0
    %v1576 = vadd.f32 0.0, %v1575
    %1577 = vdwg.mxu0
    %v1579 = vperm.slane %v689, 0
    %v1581 = vmul.f32 %v1569, %v1579
    %v1582 = vmul.f32 %v1571, %v1579
    %v1583 = vmul.f32 %v1574, %v1579
    %v1584 = vmul.f32 %v1576, %v1579
    %v1586 = vperm.slane %v687, 0
    %v1588 = vadd.f32 %v1581, %v1586
    %v1589 = vadd.f32 %v1582, %v1586
    %v1590 = vadd.f32 %v1583, %v1586
    %v1591 = vadd.f32 %v1584, %v1586
    %vm1592 = vcmp.gt.f32.partialorder %v1588, 0.0
    %vm1593 = vcmp.gt.f32.partialorder %v1589, 0.0
    %vm1594 = vcmp.gt.f32.partialorder %v1590, 0.0
    %vm1595 = vcmp.gt.f32.partialorder %v1591, 0.0
    %v1596 = vmul.f32 %v1588, 0.1
    %v1597 = vmul.f32 %v1589, 0.1
    %v1598 = vmul.f32 %v1590, 0.1
    %v1599 = vmul.f32 %v1591, 0.1
    %v1600 = vsel %vm1592, %v1588, %v1596
    %v1601 = vsel %vm1593, %v1589, %v1597
    %v1602 = vsel %vm1594, %v1590, %v1598
    %v1603 = vsel %vm1595, %v1591, %v1599
    %1608 = vrot.lane.b32.xlu0 %v1600, 16
    %v1609 = vpop.permute.xlu0 %1608
    %1610 = vrot.lane.b32.xlu0 %v1601, 16
    %v1611 = vpop.permute.xlu0 %1610
    %1612 = vrot.lane.b32.xlu0 %v1602, 16
    %v1613 = vpop.permute.xlu0 %1612
    %1614 = vrot.lane.b32.xlu0 %v1603, 16
    %v1615 = vpop.permute.xlu0 %1614
    %v1620 = vsel %vm822, %v1543, %v1609
    %v1621 = vsel %vm822, %v1544, %v1611
    %v1622 = vsel %vm822, %v1545, %v1613
    %v1623 = vsel %vm822, %v1546, %v1615
    %v1624 = vpack.c.bf16 %v1621, %v1620
    %v1625 = vpack.c.bf16 %v1623, %v1622
    %v1630 = vunpack.c.l.b16 %v704
    %v1631 = vunpack.c.l.b16 %v705
    %v1632 = vunpack.c.l.b16 %v706
    %v1633 = vunpack.c.l.b16 %v707
    %v1634 = vpack.c.b16 %v1631, %v1630
    %v1635 = vpack.c.b16 %v1633, %v1632
    %v1639 = vsel %vm754, %v1624, 0
    %v1642 = vsel %vm754, %v1625, 0
    %1644 = vmatpush.bf16.msra.mxu0 0
    %1645 = vmatpush.bf16.msra.mxu0 0
    %1646 = vmatpush.bf16.msra.mxu0 0
    %1647 = vmatpush.bf16.msra.mxu0 0
    %1648 = vmatpush.bf16.msra.mxu0 0
    %1649 = vmatpush.bf16.msra.mxu0 0
    %1650 = vmatpush.bf16.msra.mxu0 %v1635
    %1651 = vmatpush.bf16.msra.mxu0 %v1634
    %1652 = vmatmul.bf16.gmra.mxu0 %v1639
    %v1653 = vpop.f32.mrf.mxu0
    %v1654 = vadd.f32 0.0, %v1653
    %v1655 = vpop.f32.mrf.mxu0
    %v1656 = vadd.f32 0.0, %v1655
    %1657 = vmatmul.bf16.gmra.mxu0 %v1642
    %v1658 = vpop.f32.mrf.mxu0
    %v1659 = vadd.f32 0.0, %v1658
    %v1660 = vpop.f32.mrf.mxu0
    %v1661 = vadd.f32 0.0, %v1660
    %1662 = vdwg.mxu0
    %v1664 = vperm.slane %v703, 0
    %v1666 = vmul.f32 %v1654, %v1664
    %v1667 = vmul.f32 %v1656, %v1664
    %v1668 = vmul.f32 %v1659, %v1664
    %v1669 = vmul.f32 %v1661, %v1664
    %v1671 = vperm.slane %v702, 0
    %v1673 = vadd.f32 %v1666, %v1671
    %v1674 = vadd.f32 %v1667, %v1671
    %v1675 = vadd.f32 %v1668, %v1671
    %v1676 = vadd.f32 %v1669, %v1671
    %v1677 = vadd.f32 %v1673, 3.0
    %v1678 = vadd.f32 %v1674, 3.0
    %v1679 = vadd.f32 %v1675, 3.0
    %v1680 = vadd.f32 %v1676, 3.0
    %v1681 = vmax.f32 %v1677, 0.0
    %v1682 = vmax.f32 %v1678, 0.0
    %v1683 = vmax.f32 %v1679, 0.0
    %v1684 = vmax.f32 %v1680, 0.0
    %v1685 = vmin.f32 %v1681, 6.0
    %v1686 = vmin.f32 %v1682, 6.0
    %v1687 = vmin.f32 %v1683, 6.0
    %v1688 = vmin.f32 %v1684, 6.0
    %v1689 = vmul.f32 %v1673, %v1685
    %v1690 = vmul.f32 %v1674, %v1686
    %v1691 = vmul.f32 %v1675, %v1687
    %v1692 = vmul.f32 %v1676, %v1688
    %v1693 = vmul.f32 %v1689, 0.16666667
    %v1694 = vmul.f32 %v1690, 0.16666667
    %v1695 = vmul.f32 %v1691, 0.16666667
    %v1696 = vmul.f32 %v1692, 0.16666667
    %v1697 = vpack.c.bf16 %v1694, %v1693
    %v1698 = vpack.c.bf16 %v1696, %v1695
    %v1703 = vunpack.c.l.b16 %v651
    %v1704 = vunpack.c.l.b16 %v652
    %v1705 = vunpack.c.l.b16 %v653
    %v1706 = vunpack.c.l.b16 %v654
    %v1707 = vpack.c.b16 %v1704, %v1703
    %v1708 = vpack.c.b16 %v1706, %v1705
    %v1712 = vsel %vm754, %v1697, 0
    %v1715 = vsel %vm754, %v1698, 0
    %1717 = vmatpush.bf16.msra.mxu0 0
    %1718 = vmatpush.bf16.msra.mxu0 0
    %1719 = vmatpush.bf16.msra.mxu0 0
    %1720 = vmatpush.bf16.msra.mxu0 0
    %1721 = vmatpush.bf16.msra.mxu0 0
    %1722 = vmatpush.bf16.msra.mxu0 0
    %1723 = vmatpush.bf16.msra.mxu0 %v1708
    %1724 = vmatpush.bf16.msra.mxu0 %v1707
    %1725 = vmatmul.bf16.gmra.mxu0 %v1712
    %v1726 = vpop.f32.mrf.mxu0
    %v1727 = vadd.f32 0.0, %v1726
    %v1728 = vpop.f32.mrf.mxu0
    %v1729 = vadd.f32 0.0, %v1728
    %1730 = vmatmul.bf16.gmra.mxu0 %v1715
    %v1731 = vpop.f32.mrf.mxu0
    %v1732 = vadd.f32 0.0, %v1731
    %v1733 = vpop.f32.mrf.mxu0
    %v1734 = vadd.f32 0.0, %v1733
    %1735 = vdwg.mxu0
    %v1736 = vpack.c.bf16 %v1729, %v1727
    %v1737 = vpack.c.bf16 %v1734, %v1732
    %v1754 = vunpack.c.l.b16 %v522
    %v1755 = vunpack.c.l.b16 %v523
    %v1756 = vunpack.c.l.b16 %v524
    %v1757 = vunpack.c.l.b16 %v525
    %v1758 = vunpack.c.l.b16 %v526
    %v1759 = vunpack.c.l.b16 %v527
    %v1760 = vunpack.c.l.b16 %v528
    %v1761 = vunpack.c.l.b16 %v529
    %v1762 = vunpack.c.l.b16 %v530
    %v1763 = vunpack.c.l.b16 %v531
    %v1764 = vunpack.c.l.b16 %v532
    %v1765 = vunpack.c.l.b16 %v533
    %v1766 = vunpack.c.l.b16 %v534
    %v1767 = vunpack.c.l.b16 %v535
    %v1768 = vunpack.c.l.b16 %v536
    %v1769 = vunpack.c.l.b16 %v537
    %v1770 = vpack.c.b16 %v1755, %v1754
    %v1771 = vpack.c.b16 %v1757, %v1756
    %v1772 = vpack.c.b16 %v1759, %v1758
    %v1773 = vpack.c.b16 %v1761, %v1760
    %v1774 = vpack.c.b16 %v1763, %v1762
    %v1775 = vpack.c.b16 %v1765, %v1764
    %v1776 = vpack.c.b16 %v1767, %v1766
    %v1777 = vpack.c.b16 %v1769, %v1768
    %v1780 = vunpack.c.l.b16 %v655
    %v1781 = vunpack.c.l.b16 %v656
    %v1782 = vpack.c.b16 %v1781, %v1780
    %v1785 = vsel %vm822, %v1770, 0
    %v1788 = vsel %vm822, %v1771, 0
    %v1791 = vsel %vm822, %v1772, 0
    %v1794 = vsel %vm822, %v1773, 0
    %v1797 = vsel %vm822, %v1774, 0
    %v1800 = vsel %vm822, %v1775, 0
    %v1803 = vsel %vm822, %v1776, 0
    %v1806 = vsel %vm822, %v1777, 0
    %1808 = vmatpush.bf16.msra.mxu0 0
    %1809 = vmatpush.bf16.msra.mxu0 0
    %1810 = vmatpush.bf16.msra.mxu0 0
    %1811 = vmatpush.bf16.msra.mxu0 0
    %1812 = vmatpush.bf16.msra.mxu0 0
    %1813 = vmatpush.bf16.msra.mxu0 0
    %1814 = vmatpush.bf16.msra.mxu0 0
    %1815 = vmatpush.bf16.msra.mxu0 %v1782
    %1816 = vmatmul.bf16.gmra.mxu0 %v1785
    %v1817 = vpop.f32.mrf.mxu0
    %v1818 = vadd.f32 0.0, %v1817
    %v1819 = vpop.f32.mrf.mxu0
    %v1820 = vadd.f32 0.0, %v1819
    %1821 = vmatmul.bf16.gmra.mxu0 %v1788
    %v1822 = vpop.f32.mrf.mxu0
    %v1823 = vadd.f32 0.0, %v1822
    %v1824 = vpop.f32.mrf.mxu0
    %v1825 = vadd.f32 0.0, %v1824
    %1826 = vmatmul.bf16.gmra.mxu0 %v1791
    %v1827 = vpop.f32.mrf.mxu0
    %v1828 = vadd.f32 0.0, %v1827
    %v1829 = vpop.f32.mrf.mxu0
    %v1830 = vadd.f32 0.0, %v1829
    %1831 = vmatmul.bf16.gmra.mxu0 %v1794
    %v1832 = vpop.f32.mrf.mxu0
    %v1833 = vadd.f32 0.0, %v1832
    %v1834 = vpop.f32.mrf.mxu0
    %v1835 = vadd.f32 0.0, %v1834
    %1836 = vmatmul.bf16.gmra.mxu0 %v1797
    %v1837 = vpop.f32.mrf.mxu0
    %v1838 = vadd.f32 0.0, %v1837
    %v1839 = vpop.f32.mrf.mxu0
    %v1840 = vadd.f32 0.0, %v1839
    %1841 = vmatmul.bf16.gmra.mxu0 %v1800
    %v1842 = vpop.f32.mrf.mxu0
    %v1843 = vadd.f32 0.0, %v1842
    %v1844 = vpop.f32.mrf.mxu0
    %v1845 = vadd.f32 0.0, %v1844
    %1846 = vmatmul.bf16.gmra.mxu0 %v1803
    %v1847 = vpop.f32.mrf.mxu0
    %v1848 = vadd.f32 0.0, %v1847
    %v1849 = vpop.f32.mrf.mxu0
    %v1850 = vadd.f32 0.0, %v1849
    %1851 = vmatmul.bf16.gmra.mxu0 %v1806
    %v1852 = vpop.f32.mrf.mxu0
    %v1853 = vadd.f32 0.0, %v1852
    %v1854 = vpop.f32.mrf.mxu0
    %v1855 = vadd.f32 0.0, %v1854
    %1856 = vdwg.mxu0
    %v1873 = vunpack.c.l.b16 %v633
    %v1874 = vunpack.c.l.b16 %v634
    %v1875 = vunpack.c.l.b16 %v635
    %v1876 = vunpack.c.l.b16 %v636
    %v1877 = vunpack.c.l.b16 %v637
    %v1878 = vunpack.c.l.b16 %v638
    %v1879 = vunpack.c.l.b16 %v639
    %v1880 = vunpack.c.l.b16 %v640
    %v1881 = vunpack.c.l.b16 %v641
    %v1882 = vunpack.c.l.b16 %v642
    %v1883 = vunpack.c.l.b16 %v643
    %v1884 = vunpack.c.l.b16 %v644
    %v1885 = vunpack.c.l.b16 %v645
    %v1886 = vunpack.c.l.b16 %v646
    %v1887 = vunpack.c.l.b16 %v647
    %v1888 = vunpack.c.l.b16 %v648
    %v1889 = vpack.c.b16 %v1874, %v1873
    %v1890 = vpack.c.b16 %v1876, %v1875
    %v1891 = vpack.c.b16 %v1878, %v1877
    %v1892 = vpack.c.b16 %v1880, %v1879
    %v1893 = vpack.c.b16 %v1882, %v1881
    %v1894 = vpack.c.b16 %v1884, %v1883
    %v1895 = vpack.c.b16 %v1886, %v1885
    %v1896 = vpack.c.b16 %v1888, %v1887
    %v1898 = vsel %vm754, %v1889, 0
    %v1901 = vsel %vm754, %v1890, 0
    %v1904 = vsel %vm754, %v1891, 0
    %v1907 = vsel %vm754, %v1892, 0
    %v1910 = vsel %vm754, %v1893, 0
    %v1913 = vsel %vm754, %v1894, 0
    %v1916 = vsel %vm754, %v1895, 0
    %v1919 = vsel %vm754, %v1896, 0
    %1921 = vmatpush.bf16.msra.mxu0 0
    %1922 = vmatpush.bf16.msra.mxu0 0
    %1923 = vmatpush.bf16.msra.mxu0 0
    %1924 = vmatpush.bf16.msra.mxu0 0
    %1925 = vmatpush.bf16.msra.mxu0 0
    %1926 = vmatpush.bf16.msra.mxu0 0
    %1927 = vmatpush.bf16.msra.mxu0 %v1737
    %1928 = vmatpush.bf16.msra.mxu0 %v1736
    %1929 = vmatmul.bf16.gmra.mxu0 %v1898
    %v1930 = vpop.f32.mrf.mxu0
    %v1931 = vadd.f32 %v1818, %v1930
    %v1932 = vpop.f32.mrf.mxu0
    %v1933 = vadd.f32 %v1820, %v1932
    %1934 = vmatmul.bf16.gmra.mxu0 %v1901
    %v1935 = vpop.f32.mrf.mxu0
    %v1936 = vadd.f32 %v1823, %v1935
    %v1937 = vpop.f32.mrf.mxu0
    %v1938 = vadd.f32 %v1825, %v1937
    %1939 = vmatmul.bf16.gmra.mxu0 %v1904
    %v1940 = vpop.f32.mrf.mxu0
    %v1941 = vadd.f32 %v1828, %v1940
    %v1942 = vpop.f32.mrf.mxu0
    %v1943 = vadd.f32 %v1830, %v1942
    %1944 = vmatmul.bf16.gmra.mxu0 %v1907
    %v1945 = vpop.f32.mrf.mxu0
    %v1946 = vadd.f32 %v1833, %v1945
    %v1947 = vpop.f32.mrf.mxu0
    %v1948 = vadd.f32 %v1835, %v1947
    %1949 = vmatmul.bf16.gmra.mxu0 %v1910
    %v1950 = vpop.f32.mrf.mxu0
    %v1951 = vadd.f32 %v1838, %v1950
    %v1952 = vpop.f32.mrf.mxu0
    %v1953 = vadd.f32 %v1840, %v1952
    %1954 = vmatmul.bf16.gmra.mxu0 %v1913
    %v1955 = vpop.f32.mrf.mxu0
    %v1956 = vadd.f32 %v1843, %v1955
    %v1957 = vpop.f32.mrf.mxu0
    %v1958 = vadd.f32 %v1845, %v1957
    %1959 = vmatmul.bf16.gmra.mxu0 %v1916
    %v1960 = vpop.f32.mrf.mxu0
    %v1961 = vadd.f32 %v1848, %v1960
    %v1962 = vpop.f32.mrf.mxu0
    %v1963 = vadd.f32 %v1850, %v1962
    %1964 = vmatmul.bf16.gmra.mxu0 %v1919
    %v1965 = vpop.f32.mrf.mxu0
    %v1966 = vadd.f32 %v1853, %v1965
    %v1967 = vpop.f32.mrf.mxu0
    %v1968 = vadd.f32 %v1855, %v1967
    %1969 = vdwg.mxu0
    %v1971 = vperm.slane %v650, 0
    %v1973 = vmul.f32 %v1931, %v1971
    %v1974 = vmul.f32 %v1933, %v1971
    %v1975 = vmul.f32 %v1936, %v1971
    %v1976 = vmul.f32 %v1938, %v1971
    %v1977 = vmul.f32 %v1941, %v1971
    %v1978 = vmul.f32 %v1943, %v1971
    %v1979 = vmul.f32 %v1946, %v1971
    %v1980 = vmul.f32 %v1948, %v1971
    %v1981 = vmul.f32 %v1951, %v1971
    %v1982 = vmul.f32 %v1953, %v1971
    %v1983 = vmul.f32 %v1956, %v1971
    %v1984 = vmul.f32 %v1958, %v1971
    %v1985 = vmul.f32 %v1961, %v1971
    %v1986 = vmul.f32 %v1963, %v1971
    %v1987 = vmul.f32 %v1966, %v1971
    %v1988 = vmul.f32 %v1968, %v1971
    %v1990 = vperm.slane %v649, 0
    %v1992 = vadd.f32 %v1973, %v1990
    %v1993 = vadd.f32 %v1974, %v1990
    %v1994 = vadd.f32 %v1975, %v1990
    %v1995 = vadd.f32 %v1976, %v1990
    %v1996 = vadd.f32 %v1977, %v1990
    %v1997 = vadd.f32 %v1978, %v1990
    %v1998 = vadd.f32 %v1979, %v1990
    %v1999 = vadd.f32 %v1980, %v1990
    %v2000 = vadd.f32 %v1981, %v1990
    %v2001 = vadd.f32 %v1982, %v1990
    %v2002 = vadd.f32 %v1983, %v1990
    %v2003 = vadd.f32 %v1984, %v1990
    %v2004 = vadd.f32 %v1985, %v1990
    %v2005 = vadd.f32 %v1986, %v1990
    %v2006 = vadd.f32 %v1987, %v1990
    %v2007 = vadd.f32 %v1988, %v1990
    %v2008 = vadd.f32 %v1992, 3.0
    %v2009 = vadd.f32 %v1993, 3.0
    %v2010 = vadd.f32 %v1994, 3.0
    %v2011 = vadd.f32 %v1995, 3.0
    %v2012 = vadd.f32 %v1996, 3.0
    %v2013 = vadd.f32 %v1997, 3.0
    %v2014 = vadd.f32 %v1998, 3.0
    %v2015 = vadd.f32 %v1999, 3.0
    %v2016 = vadd.f32 %v2000, 3.0
    %v2017 = vadd.f32 %v2001, 3.0
    %v2018 = vadd.f32 %v2002, 3.0
    %v2019 = vadd.f32 %v2003, 3.0
    %v2020 = vadd.f32 %v2004, 3.0
    %v2021 = vadd.f32 %v2005, 3.0
    %v2022 = vadd.f32 %v2006, 3.0
    %v2023 = vadd.f32 %v2007, 3.0
    %v2024 = vmax.f32 %v2008, 0.0
    %v2025 = vmax.f32 %v2009, 0.0
    %v2026 = vmax.f32 %v2010, 0.0
    %v2027 = vmax.f32 %v2011, 0.0
    %v2028 = vmax.f32 %v2012, 0.0
    %v2029 = vmax.f32 %v2013, 0.0
    %v2030 = vmax.f32 %v2014, 0.0
    %v2031 = vmax.f32 %v2015, 0.0
    %v2032 = vmax.f32 %v2016, 0.0
    %v2033 = vmax.f32 %v2017, 0.0
    %v2034 = vmax.f32 %v2018, 0.0
    %v2035 = vmax.f32 %v2019, 0.0
    %v2036 = vmax.f32 %v2020, 0.0
    %v2037 = vmax.f32 %v2021, 0.0
    %v2038 = vmax.f32 %v2022, 0.0
    %v2039 = vmax.f32 %v2023, 0.0
    %v2040 = vmin.f32 %v2024, 6.0
    %v2041 = vmin.f32 %v2025, 6.0
    %v2042 = vmin.f32 %v2026, 6.0
    %v2043 = vmin.f32 %v2027, 6.0
    %v2044 = vmin.f32 %v2028, 6.0
    %v2045 = vmin.f32 %v2029, 6.0
    %v2046 = vmin.f32 %v2030, 6.0
    %v2047 = vmin.f32 %v2031, 6.0
    %v2048 = vmin.f32 %v2032, 6.0
    %v2049 = vmin.f32 %v2033, 6.0
    %v2050 = vmin.f32 %v2034, 6.0
    %v2051 = vmin.f32 %v2035, 6.0
    %v2052 = vmin.f32 %v2036, 6.0
    %v2053 = vmin.f32 %v2037, 6.0
    %v2054 = vmin.f32 %v2038, 6.0
    %v2055 = vmin.f32 %v2039, 6.0
    %v2056 = vmul.f32 %v1992, %v2040
    %v2057 = vmul.f32 %v1993, %v2041
    %v2058 = vmul.f32 %v1994, %v2042
    %v2059 = vmul.f32 %v1995, %v2043
    %v2060 = vmul.f32 %v1996, %v2044
    %v2061 = vmul.f32 %v1997, %v2045
    %v2062 = vmul.f32 %v1998, %v2046
    %v2063 = vmul.f32 %v1999, %v2047
    %v2064 = vmul.f32 %v2000, %v2048
    %v2065 = vmul.f32 %v2001, %v2049
    %v2066 = vmul.f32 %v2002, %v2050
    %v2067 = vmul.f32 %v2003, %v2051
    %v2068 = vmul.f32 %v2004, %v2052
    %v2069 = vmul.f32 %v2005, %v2053
    %v2070 = vmul.f32 %v2006, %v2054
    %v2071 = vmul.f32 %v2007, %v2055
    %v2072 = vmul.f32 %v2056, 0.16666667
    %v2073 = vmul.f32 %v2057, 0.16666667
    %v2074 = vmul.f32 %v2058, 0.16666667
    %v2075 = vmul.f32 %v2059, 0.16666667
    %v2076 = vmul.f32 %v2060, 0.16666667
    %v2077 = vmul.f32 %v2061, 0.16666667
    %v2078 = vmul.f32 %v2062, 0.16666667
    %v2079 = vmul.f32 %v2063, 0.16666667
    %v2080 = vmul.f32 %v2064, 0.16666667
    %v2081 = vmul.f32 %v2065, 0.16666667
    %v2082 = vmul.f32 %v2066, 0.16666667
    %v2083 = vmul.f32 %v2067, 0.16666667
    %v2084 = vmul.f32 %v2068, 0.16666667
    %v2085 = vmul.f32 %v2069, 0.16666667
    %v2086 = vmul.f32 %v2070, 0.16666667
    %v2087 = vmul.f32 %v2071, 0.16666667
    %v2088 = vpack.c.bf16 %v2073, %v2072
    %v2089 = vpack.c.bf16 %v2075, %v2074
    %v2090 = vpack.c.bf16 %v2077, %v2076
    %v2091 = vpack.c.bf16 %v2079, %v2078
    %v2092 = vpack.c.bf16 %v2081, %v2080
    %v2093 = vpack.c.bf16 %v2083, %v2082
    %v2094 = vpack.c.bf16 %v2085, %v2084
    %v2095 = vpack.c.bf16 %v2087, %v2086
    %v2098 = vunpack.c.l.b16 %v663
    %v2099 = vunpack.c.l.b16 %v664
    %v2100 = vpack.c.b16 %v2099, %v2098
    %v2103 = vsel %vm822, %v2088, 0
    %v2106 = vsel %vm822, %v2089, 0
    %v2109 = vsel %vm822, %v2090, 0
    %v2112 = vsel %vm822, %v2091, 0
    %v2115 = vsel %vm822, %v2092, 0
    %v2118 = vsel %vm822, %v2093, 0
    %v2121 = vsel %vm822, %v2094, 0
    %v2124 = vsel %vm822, %v2095, 0
    %2126 = vmatpush.bf16.msra.mxu0 0
    %2127 = vmatpush.bf16.msra.mxu0 0
    %2128 = vmatpush.bf16.msra.mxu0 0
    %2129 = vmatpush.bf16.msra.mxu0 0
    %2130 = vmatpush.bf16.msra.mxu0 0
    %2131 = vmatpush.bf16.msra.mxu0 0
    %2132 = vmatpush.bf16.msra.mxu0 0
    %2133 = vmatpush.bf16.msra.mxu0 %v2100
    %2134 = vmatmul.bf16.gmra.mxu0 %v2103
    %v2135 = vpop.f32.mrf.mxu0
    %v2136 = vadd.f32 0.0, %v2135
    %v2137 = vpop.f32.mrf.mxu0
    %v2138 = vadd.f32 0.0, %v2137
    %2139 = vmatmul.bf16.gmra.mxu0 %v2106
    %v2140 = vpop.f32.mrf.mxu0
    %v2141 = vadd.f32 0.0, %v2140
    %v2142 = vpop.f32.mrf.mxu0
    %v2143 = vadd.f32 0.0, %v2142
    %2144 = vmatmul.bf16.gmra.mxu0 %v2109
    %v2145 = vpop.f32.mrf.mxu0
    %v2146 = vadd.f32 0.0, %v2145
    %v2147 = vpop.f32.mrf.mxu0
    %v2148 = vadd.f32 0.0, %v2147
    %2149 = vmatmul.bf16.gmra.mxu0 %v2112
    %v2150 = vpop.f32.mrf.mxu0
    %v2151 = vadd.f32 0.0, %v2150
    %v2152 = vpop.f32.mrf.mxu0
    %v2153 = vadd.f32 0.0, %v2152
    %2154 = vmatmul.bf16.gmra.mxu0 %v2115
    %v2155 = vpop.f32.mrf.mxu0
    %v2156 = vadd.f32 0.0, %v2155
    %v2157 = vpop.f32.mrf.mxu0
    %v2158 = vadd.f32 0.0, %v2157
    %2159 = vmatmul.bf16.gmra.mxu0 %v2118
    %v2160 = vpop.f32.mrf.mxu0
    %v2161 = vadd.f32 0.0, %v2160
    %v2162 = vpop.f32.mrf.mxu0
    %v2163 = vadd.f32 0.0, %v2162
    %2164 = vmatmul.bf16.gmra.mxu0 %v2121
    %v2165 = vpop.f32.mrf.mxu0
    %v2166 = vadd.f32 0.0, %v2165
    %v2167 = vpop.f32.mrf.mxu0
    %v2168 = vadd.f32 0.0, %v2167
    %2169 = vmatmul.bf16.gmra.mxu0 %v2124
    %v2170 = vpop.f32.mrf.mxu0
    %v2171 = vadd.f32 0.0, %v2170
    %v2172 = vpop.f32.mrf.mxu0
    %v2173 = vadd.f32 0.0, %v2172
    %2174 = vdwg.mxu0
    %v2176 = vperm.slane %v662, 0
    %v2178 = vmul.f32 %v2136, %v2176
    %v2179 = vmul.f32 %v2138, %v2176
    %v2180 = vmul.f32 %v2141, %v2176
    %v2181 = vmul.f32 %v2143, %v2176
    %v2182 = vmul.f32 %v2146, %v2176
    %v2183 = vmul.f32 %v2148, %v2176
    %v2184 = vmul.f32 %v2151, %v2176
    %v2185 = vmul.f32 %v2153, %v2176
    %v2186 = vmul.f32 %v2156, %v2176
    %v2187 = vmul.f32 %v2158, %v2176
    %v2188 = vmul.f32 %v2161, %v2176
    %v2189 = vmul.f32 %v2163, %v2176
    %v2190 = vmul.f32 %v2166, %v2176
    %v2191 = vmul.f32 %v2168, %v2176
    %v2192 = vmul.f32 %v2171, %v2176
    %v2193 = vmul.f32 %v2173, %v2176
    %v2195 = vperm.slane %v661, 0
    %v2197 = vadd.f32 %v2178, %v2195
    %v2198 = vadd.f32 %v2179, %v2195
    %v2199 = vadd.f32 %v2180, %v2195
    %v2200 = vadd.f32 %v2181, %v2195
    %v2201 = vadd.f32 %v2182, %v2195
    %v2202 = vadd.f32 %v2183, %v2195
    %v2203 = vadd.f32 %v2184, %v2195
    %v2204 = vadd.f32 %v2185, %v2195
    %v2205 = vadd.f32 %v2186, %v2195
    %v2206 = vadd.f32 %v2187, %v2195
    %v2207 = vadd.f32 %v2188, %v2195
    %v2208 = vadd.f32 %v2189, %v2195
    %v2209 = vadd.f32 %v2190, %v2195
    %v2210 = vadd.f32 %v2191, %v2195
    %v2211 = vadd.f32 %v2192, %v2195
    %v2212 = vadd.f32 %v2193, %v2195
    %v2213 = vadd.f32 %v2197, 3.0
    %v2214 = vadd.f32 %v2198, 3.0
    %v2215 = vadd.f32 %v2199, 3.0
    %v2216 = vadd.f32 %v2200, 3.0
    %v2217 = vadd.f32 %v2201, 3.0
    %v2218 = vadd.f32 %v2202, 3.0
    %v2219 = vadd.f32 %v2203, 3.0
    %v2220 = vadd.f32 %v2204, 3.0
    %v2221 = vadd.f32 %v2205, 3.0
    %v2222 = vadd.f32 %v2206, 3.0
    %v2223 = vadd.f32 %v2207, 3.0
    %v2224 = vadd.f32 %v2208, 3.0
    %v2225 = vadd.f32 %v2209, 3.0
    %v2226 = vadd.f32 %v2210, 3.0
    %v2227 = vadd.f32 %v2211, 3.0
    %v2228 = vadd.f32 %v2212, 3.0
    %v2229 = vmax.f32 %v2213, 0.0
    %v2230 = vmax.f32 %v2214, 0.0
    %v2231 = vmax.f32 %v2215, 0.0
    %v2232 = vmax.f32 %v2216, 0.0
    %v2233 = vmax.f32 %v2217, 0.0
    %v2234 = vmax.f32 %v2218, 0.0
    %v2235 = vmax.f32 %v2219, 0.0
    %v2236 = vmax.f32 %v2220, 0.0
    %v2237 = vmax.f32 %v2221, 0.0
    %v2238 = vmax.f32 %v2222, 0.0
    %v2239 = vmax.f32 %v2223, 0.0
    %v2240 = vmax.f32 %v2224, 0.0
    %v2241 = vmax.f32 %v2225, 0.0
    %v2242 = vmax.f32 %v2226, 0.0
    %v2243 = vmax.f32 %v2227, 0.0
    %v2244 = vmax.f32 %v2228, 0.0
    %v2245 = vmin.f32 %v2229, 6.0
    %v2246 = vmin.f32 %v2230, 6.0
    %v2247 = vmin.f32 %v2231, 6.0
    %v2248 = vmin.f32 %v2232, 6.0
    %v2249 = vmin.f32 %v2233, 6.0
    %v2250 = vmin.f32 %v2234, 6.0
    %v2251 = vmin.f32 %v2235, 6.0
    %v2252 = vmin.f32 %v2236, 6.0
    %v2253 = vmin.f32 %v2237, 6.0
    %v2254 = vmin.f32 %v2238, 6.0
    %v2255 = vmin.f32 %v2239, 6.0
    %v2256 = vmin.f32 %v2240, 6.0
    %v2257 = vmin.f32 %v2241, 6.0
    %v2258 = vmin.f32 %v2242, 6.0
    %v2259 = vmin.f32 %v2243, 6.0
    %v2260 = vmin.f32 %v2244, 6.0
    %v2261 = vmul.f32 %v2197, %v2245
    %v2262 = vmul.f32 %v2198, %v2246
    %v2263 = vmul.f32 %v2199, %v2247
    %v2264 = vmul.f32 %v2200, %v2248
    %v2265 = vmul.f32 %v2201, %v2249
    %v2266 = vmul.f32 %v2202, %v2250
    %v2267 = vmul.f32 %v2203, %v2251
    %v2268 = vmul.f32 %v2204, %v2252
    %v2269 = vmul.f32 %v2205, %v2253
    %v2270 = vmul.f32 %v2206, %v2254
    %v2271 = vmul.f32 %v2207, %v2255
    %v2272 = vmul.f32 %v2208, %v2256
    %v2273 = vmul.f32 %v2209, %v2257
    %v2274 = vmul.f32 %v2210, %v2258
    %v2275 = vmul.f32 %v2211, %v2259
    %v2276 = vmul.f32 %v2212, %v2260
    %v2277 = vmul.f32 %v2261, 0.16666667
    %v2278 = vmul.f32 %v2262, 0.16666667
    %v2279 = vmul.f32 %v2263, 0.16666667
    %v2280 = vmul.f32 %v2264, 0.16666667
    %v2281 = vmul.f32 %v2265, 0.16666667
    %v2282 = vmul.f32 %v2266, 0.16666667
    %v2283 = vmul.f32 %v2267, 0.16666667
    %v2284 = vmul.f32 %v2268, 0.16666667
    %v2285 = vmul.f32 %v2269, 0.16666667
    %v2286 = vmul.f32 %v2270, 0.16666667
    %v2287 = vmul.f32 %v2271, 0.16666667
    %v2288 = vmul.f32 %v2272, 0.16666667
    %v2289 = vmul.f32 %v2273, 0.16666667
    %v2290 = vmul.f32 %v2274, 0.16666667
    %v2291 = vmul.f32 %v2275, 0.16666667
    %v2292 = vmul.f32 %v2276, 0.16666667
    %v2293 = vpack.c.bf16 %v2278, %v2277
    %v2294 = vpack.c.bf16 %v2280, %v2279
    %v2295 = vpack.c.bf16 %v2282, %v2281
    %v2296 = vpack.c.bf16 %v2284, %v2283
    %v2297 = vpack.c.bf16 %v2286, %v2285
    %v2298 = vpack.c.bf16 %v2288, %v2287
    %v2299 = vpack.c.bf16 %v2290, %v2289
    %v2300 = vpack.c.bf16 %v2292, %v2291
    %vm2301 = vcmask 64512
    %v2303 = vsel %vm2301, %v2293, 0
    %v2306 = vsel %vm2301, %v2294, 0
    %v2309 = vsel %vm2301, %v2295, 0
    %v2312 = vsel %vm2301, %v2296, 0
    %v2315 = vsel %vm2301, %v2297, 0
    %v2318 = vsel %vm2301, %v2298, 0
    %v2321 = vsel %vm2301, %v2299, 0
    %v2324 = vsel %vm2301, %v2300, 0
    %vm2326 = vcmask 1043456
    %v2328 = vsel %vm2326, %v674, 0
    %2330 = vmatpush.bf16.msra.mxu0 0
    %2331 = vmatpush.bf16.msra.mxu0 0
    %2332 = vmatpush.bf16.msra.mxu0 0
    %2333 = vmatpush.bf16.msra.mxu0 0
    %2334 = vmatpush.bf16.msra.mxu0 0
    %2335 = vmatpush.bf16.msra.mxu0 0
    %2336 = vmatpush.bf16.msra.mxu0 0
    %2337 = vmatpush.bf16.msra.mxu0 %v2328
    %2338 = vmatmul.bf16.gmra.mxu0 %v2303
    %v2339 = vpop.f32.mrf.mxu0
    %v2340 = vadd.f32 0.0, %v2339
    %v2341 = vpop.f32.mrf.mxu0
    %v2342 = vadd.f32 0.0, %v2341
    %2343 = vmatmul.bf16.gmra.mxu0 %v2306
    %v2344 = vpop.f32.mrf.mxu0
    %v2345 = vadd.f32 0.0, %v2344
    %v2346 = vpop.f32.mrf.mxu0
    %v2347 = vadd.f32 0.0, %v2346
    %2348 = vmatmul.bf16.gmra.mxu0 %v2309
    %v2349 = vpop.f32.mrf.mxu0
    %v2350 = vadd.f32 0.0, %v2349
    %v2351 = vpop.f32.mrf.mxu0
    %v2352 = vadd.f32 0.0, %v2351
    %2353 = vmatmul.bf16.gmra.mxu0 %v2312
    %v2354 = vpop.f32.mrf.mxu0
    %v2355 = vadd.f32 0.0, %v2354
    %v2356 = vpop.f32.mrf.mxu0
    %v2357 = vadd.f32 0.0, %v2356
    %2358 = vmatmul.bf16.gmra.mxu0 %v2315
    %v2359 = vpop.f32.mrf.mxu0
    %v2360 = vadd.f32 0.0, %v2359
    %v2361 = vpop.f32.mrf.mxu0
    %v2362 = vadd.f32 0.0, %v2361
    %2363 = vmatmul.bf16.gmra.mxu0 %v2318
    %v2364 = vpop.f32.mrf.mxu0
    %v2365 = vadd.f32 0.0, %v2364
    %v2366 = vpop.f32.mrf.mxu0
    %v2367 = vadd.f32 0.0, %v2366
    %2368 = vmatmul.bf16.gmra.mxu0 %v2321
    %v2369 = vpop.f32.mrf.mxu0
    %v2370 = vadd.f32 0.0, %v2369
    %v2371 = vpop.f32.mrf.mxu0
    %v2372 = vadd.f32 0.0, %v2371
    %2373 = vmatmul.bf16.gmra.mxu0 %v2324
    %v2374 = vpop.f32.mrf.mxu0
    %v2375 = vadd.f32 0.0, %v2374
    %v2376 = vpop.f32.mrf.mxu0
    %v2377 = vadd.f32 0.0, %v2376
    %2378 = vdwg.mxu0
    %v2380 = vperm.slane %v673, 0
    %v2382 = vmul.f32 %v2340, %v2380
    %v2383 = vmul.f32 %v2342, %v2380
    %v2384 = vmul.f32 %v2345, %v2380
    %v2385 = vmul.f32 %v2347, %v2380
    %v2386 = vmul.f32 %v2350, %v2380
    %v2387 = vmul.f32 %v2352, %v2380
    %v2388 = vmul.f32 %v2355, %v2380
    %v2389 = vmul.f32 %v2357, %v2380
    %v2390 = vmul.f32 %v2360, %v2380
    %v2391 = vmul.f32 %v2362, %v2380
    %v2392 = vmul.f32 %v2365, %v2380
    %v2393 = vmul.f32 %v2367, %v2380
    %v2394 = vmul.f32 %v2370, %v2380
    %v2395 = vmul.f32 %v2372, %v2380
    %v2396 = vmul.f32 %v2375, %v2380
    %v2397 = vmul.f32 %v2377, %v2380
    %v2399 = vperm.slane %v672, 0
    %v2401 = vadd.f32 %v2382, %v2399
    %v2402 = vadd.f32 %v2383, %v2399
    %v2403 = vadd.f32 %v2384, %v2399
    %v2404 = vadd.f32 %v2385, %v2399
    %v2405 = vadd.f32 %v2386, %v2399
    %v2406 = vadd.f32 %v2387, %v2399
    %v2407 = vadd.f32 %v2388, %v2399
    %v2408 = vadd.f32 %v2389, %v2399
    %v2409 = vadd.f32 %v2390, %v2399
    %v2410 = vadd.f32 %v2391, %v2399
    %v2411 = vadd.f32 %v2392, %v2399
    %v2412 = vadd.f32 %v2393, %v2399
    %v2413 = vadd.f32 %v2394, %v2399
    %v2414 = vadd.f32 %v2395, %v2399
    %v2415 = vadd.f32 %v2396, %v2399
    %v2416 = vadd.f32 %v2397, %v2399
    %v2417 = vadd.f32 %v2401, 3.0
    %v2418 = vadd.f32 %v2402, 3.0
    %v2419 = vadd.f32 %v2403, 3.0
    %v2420 = vadd.f32 %v2404, 3.0
    %v2421 = vadd.f32 %v2405, 3.0
    %v2422 = vadd.f32 %v2406, 3.0
    %v2423 = vadd.f32 %v2407, 3.0
    %v2424 = vadd.f32 %v2408, 3.0
    %v2425 = vadd.f32 %v2409, 3.0
    %v2426 = vadd.f32 %v2410, 3.0
    %v2427 = vadd.f32 %v2411, 3.0
    %v2428 = vadd.f32 %v2412, 3.0
    %v2429 = vadd.f32 %v2413, 3.0
    %v2430 = vadd.f32 %v2414, 3.0
    %v2431 = vadd.f32 %v2415, 3.0
    %v2432 = vadd.f32 %v2416, 3.0
    %v2433 = vmax.f32 %v2417, 0.0
    %v2434 = vmax.f32 %v2418, 0.0
    %v2435 = vmax.f32 %v2419, 0.0
    %v2436 = vmax.f32 %v2420, 0.0
    %v2437 = vmax.f32 %v2421, 0.0
    %v2438 = vmax.f32 %v2422, 0.0
    %v2439 = vmax.f32 %v2423, 0.0
    %v2440 = vmax.f32 %v2424, 0.0
    %v2441 = vmax.f32 %v2425, 0.0
    %v2442 = vmax.f32 %v2426, 0.0
    %v2443 = vmax.f32 %v2427, 0.0
    %v2444 = vmax.f32 %v2428, 0.0
    %v2445 = vmax.f32 %v2429, 0.0
    %v2446 = vmax.f32 %v2430, 0.0
    %v2447 = vmax.f32 %v2431, 0.0
    %v2448 = vmax.f32 %v2432, 0.0
    %v2449 = vmin.f32 %v2433, 6.0
    %v2450 = vmin.f32 %v2434, 6.0
    %v2451 = vmin.f32 %v2435, 6.0
    %v2452 = vmin.f32 %v2436, 6.0
    %v2453 = vmin.f32 %v2437, 6.0
    %v2454 = vmin.f32 %v2438, 6.0
    %v2455 = vmin.f32 %v2439, 6.0
    %v2456 = vmin.f32 %v2440, 6.0
    %v2457 = vmin.f32 %v2441, 6.0
    %v2458 = vmin.f32 %v2442, 6.0
    %v2459 = vmin.f32 %v2443, 6.0
    %v2460 = vmin.f32 %v2444, 6.0
    %v2461 = vmin.f32 %v2445, 6.0
    %v2462 = vmin.f32 %v2446, 6.0
    %v2463 = vmin.f32 %v2447, 6.0
    %v2464 = vmin.f32 %v2448, 6.0
    %v2465 = vmul.f32 %v2401, %v2449
    %v2466 = vmul.f32 %v2402, %v2450
    %v2467 = vmul.f32 %v2403, %v2451
    %v2468 = vmul.f32 %v2404, %v2452
    %v2469 = vmul.f32 %v2405, %v2453
    %v2470 = vmul.f32 %v2406, %v2454
    %v2471 = vmul.f32 %v2407, %v2455
    %v2472 = vmul.f32 %v2408, %v2456
    %v2473 = vmul.f32 %v2409, %v2457
    %v2474 = vmul.f32 %v2410, %v2458
    %v2475 = vmul.f32 %v2411, %v2459
    %v2476 = vmul.f32 %v2412, %v2460
    %v2477 = vmul.f32 %v2413, %v2461
    %v2478 = vmul.f32 %v2414, %v2462
    %v2479 = vmul.f32 %v2415, %v2463
    %v2480 = vmul.f32 %v2416, %v2464
    %v2481 = vmul.f32 %v2465, 0.16666667
    %v2482 = vmul.f32 %v2466, 0.16666667
    %v2483 = vmul.f32 %v2467, 0.16666667
    %v2484 = vmul.f32 %v2468, 0.16666667
    %v2485 = vmul.f32 %v2469, 0.16666667
    %v2486 = vmul.f32 %v2470, 0.16666667
    %v2487 = vmul.f32 %v2471, 0.16666667
    %v2488 = vmul.f32 %v2472, 0.16666667
    %v2489 = vmul.f32 %v2473, 0.16666667
    %v2490 = vmul.f32 %v2474, 0.16666667
    %v2491 = vmul.f32 %v2475, 0.16666667
    %v2492 = vmul.f32 %v2476, 0.16666667
    %v2493 = vmul.f32 %v2477, 0.16666667
    %v2494 = vmul.f32 %v2478, 0.16666667
    %v2495 = vmul.f32 %v2479, 0.16666667
    %v2496 = vmul.f32 %v2480, 0.16666667
    %v2497 = vpack.c.bf16 %v2481, %v2481
    %v2498 = vpack.c.bf16 %v2482, %v2482
    %v2499 = vpack.c.bf16 %v2483, %v2483
    %v2500 = vpack.c.bf16 %v2484, %v2484
    %v2501 = vpack.c.bf16 %v2485, %v2485
    %v2502 = vpack.c.bf16 %v2486, %v2486
    %v2503 = vpack.c.bf16 %v2487, %v2487
    %v2504 = vpack.c.bf16 %v2488, %v2488
    %v2505 = vpack.c.bf16 %v2489, %v2489
    %v2506 = vpack.c.bf16 %v2490, %v2490
    %v2507 = vpack.c.bf16 %v2491, %v2491
    %v2508 = vpack.c.bf16 %v2492, %v2492
    %v2509 = vpack.c.bf16 %v2493, %v2493
    %v2510 = vpack.c.bf16 %v2494, %v2494
    %v2511 = vpack.c.bf16 %v2495, %v2495
    %v2512 = vpack.c.bf16 %v2496, %v2496
    %v2529 = vunpack.c.l.b16 %v2497
    %v2530 = vunpack.c.l.b16 %v2498
    %v2531 = vunpack.c.l.b16 %v2499
    %v2532 = vunpack.c.l.b16 %v2500
    %v2533 = vunpack.c.l.b16 %v2501
    %v2534 = vunpack.c.l.b16 %v2502
    %v2535 = vunpack.c.l.b16 %v2503
    %v2536 = vunpack.c.l.b16 %v2504
    %v2537 = vunpack.c.l.b16 %v2505
    %v2538 = vunpack.c.l.b16 %v2506
    %v2539 = vunpack.c.l.b16 %v2507
    %v2540 = vunpack.c.l.b16 %v2508
    %v2541 = vunpack.c.l.b16 %v2509
    %v2542 = vunpack.c.l.b16 %v2510
    %v2543 = vunpack.c.l.b16 %v2511
    %v2544 = vunpack.c.l.b16 %v2512
    %v2545 = vpack.c.b16 %v2529, %v2529
    %v2546 = vpack.c.b16 %v2530, %v2530
    %v2547 = vpack.c.b16 %v2531, %v2531
    %v2548 = vpack.c.b16 %v2532, %v2532
    %v2549 = vpack.c.b16 %v2533, %v2533
    %v2550 = vpack.c.b16 %v2534, %v2534
    %v2551 = vpack.c.b16 %v2535, %v2535
    %v2552 = vpack.c.b16 %v2536, %v2536
    %v2553 = vpack.c.b16 %v2537, %v2537
    %v2554 = vpack.c.b16 %v2538, %v2538
    %v2555 = vpack.c.b16 %v2539, %v2539
    %v2556 = vpack.c.b16 %v2540, %v2540
    %v2557 = vpack.c.b16 %v2541, %v2541
    %v2558 = vpack.c.b16 %v2542, %v2542
    %v2559 = vpack.c.b16 %v2543, %v2543
    %v2560 = vpack.c.b16 %v2544, %v2544
    %v2562 = vshrl.u32 %v2545, 16
    %v2564 = vrot.slane %v2562, 7
    %v2565 = vshll.u32 %v2545, 16
    %v2567 = vor.u32 %v2564, %v2565
    %v2569 = vshrl.u32 %v2546, 16
    %v2571 = vrot.slane %v2569, 7
    %v2572 = vshll.u32 %v2546, 16
    %v2574 = vor.u32 %v2571, %v2572
    %v2576 = vshrl.u32 %v2547, 16
    %v2578 = vrot.slane %v2576, 7
    %v2579 = vshll.u32 %v2547, 16
    %v2581 = vor.u32 %v2578, %v2579
    %v2583 = vshrl.u32 %v2548, 16
    %v2585 = vrot.slane %v2583, 7
    %v2586 = vshll.u32 %v2548, 16
    %v2588 = vor.u32 %v2585, %v2586
    %v2590 = vshrl.u32 %v2549, 16
    %v2592 = vrot.slane %v2590, 7
    %v2593 = vshll.u32 %v2549, 16
    %v2595 = vor.u32 %v2592, %v2593
    %v2597 = vshrl.u32 %v2550, 16
    %v2599 = vrot.slane %v2597, 7
    %v2600 = vshll.u32 %v2550, 16
    %v2602 = vor.u32 %v2599, %v2600
    %v2604 = vshrl.u32 %v2551, 16
    %v2606 = vrot.slane %v2604, 7
    %v2607 = vshll.u32 %v2551, 16
    %v2609 = vor.u32 %v2606, %v2607
    %v2611 = vshrl.u32 %v2552, 16
    %v2613 = vrot.slane %v2611, 7
    %v2614 = vshll.u32 %v2552, 16
    %v2616 = vor.u32 %v2613, %v2614
    %v2618 = vshrl.u32 %v2553, 16
    %v2620 = vrot.slane %v2618, 7
    %v2621 = vshll.u32 %v2553, 16
    %v2623 = vor.u32 %v2620, %v2621
    %v2625 = vshrl.u32 %v2554, 16
    %v2627 = vrot.slane %v2625, 7
    %v2628 = vshll.u32 %v2554, 16
    %v2630 = vor.u32 %v2627, %v2628
    %v2632 = vshrl.u32 %v2555, 16
    %v2634 = vrot.slane %v2632, 7
    %v2635 = vshll.u32 %v2555, 16
    %v2637 = vor.u32 %v2634, %v2635
    %v2639 = vshrl.u32 %v2556, 16
    %v2641 = vrot.slane %v2639, 7
    %v2642 = vshll.u32 %v2556, 16
    %v2644 = vor.u32 %v2641, %v2642
    %v2646 = vshrl.u32 %v2557, 16
    %v2648 = vrot.slane %v2646, 7
    %v2649 = vshll.u32 %v2557, 16
    %v2651 = vor.u32 %v2648, %v2649
    %v2653 = vshrl.u32 %v2558, 16
    %v2655 = vrot.slane %v2653, 7
    %v2656 = vshll.u32 %v2558, 16
    %v2658 = vor.u32 %v2655, %v2656
    %v2660 = vshrl.u32 %v2559, 16
    %v2662 = vrot.slane %v2660, 7
    %v2663 = vshll.u32 %v2559, 16
    %v2665 = vor.u32 %v2662, %v2663
    %v2667 = vshrl.u32 %v2560, 16
    %v2669 = vrot.slane %v2667, 7
    %v2670 = vshll.u32 %v2560, 16
    %v2672 = vor.u32 %v2669, %v2670
    %v2689 = vsel %vm999, 0, %v2567
    %v2690 = vsel %vm999, 0, %v2574
    %v2691 = vsel %vm999, 0, %v2581
    %v2692 = vsel %vm999, 0, %v2588
    %v2693 = vsel %vm999, 0, %v2595
    %v2694 = vsel %vm999, 0, %v2602
    %v2695 = vsel %vm999, 0, %v2609
    %v2696 = vsel %vm999, 0, %v2616
    %v2697 = vsel %vm999, 0, %v2623
    %v2698 = vsel %vm999, 0, %v2630
    %v2699 = vsel %vm999, 0, %v2637
    %v2700 = vsel %vm999, 0, %v2644
    %v2701 = vsel %vm999, 0, %v2651
    %v2702 = vsel %vm999, 0, %v2658
    %v2703 = vsel %vm999, 0, %v2665
    %v2704 = vsel %vm999, 0, %v2672
    %vm2705 = vcmask 1044480
    %vm2706 = vsmask.f32 4352
    %vm2707 = vmand %vm2705, %vm2706
    %v2708 = vsel %vm2707, %v2689, 0
    %v2709 = vsel %vm2707, %v2690, 0
    %v2710 = vsel %vm2707, %v2691, 0
    %v2711 = vsel %vm2707, %v2692, 0
    %v2712 = vsel %vm2707, %v2693, 0
    %v2713 = vsel %vm2707, %v2694, 0
    %v2714 = vsel %vm2707, %v2695, 0
    %v2715 = vsel %vm2707, %v2696, 0
    %v2716 = vsel %vm2707, %v2697, 0
    %v2717 = vsel %vm2707, %v2698, 0
    %v2718 = vsel %vm2707, %v2699, 0
    %v2719 = vsel %vm2707, %v2700, 0
    %v2720 = vsel %vm2707, %v2701, 0
    %v2721 = vsel %vm2707, %v2702, 0
    %v2722 = vsel %vm2707, %v2703, 0
    %v2723 = vsel %vm2707, %v2704, 0
    %v2725 = vshrl.u32 %v2708, 16
    %v2727 = vshll.u32 %v2708, 16
    %v2729 = vrot.slane %v2727, 1
    %v2730 = vor.u32 %v2725, %v2729
    %v2732 = vshrl.u32 %v2709, 16
    %v2734 = vshll.u32 %v2709, 16
    %v2736 = vrot.slane %v2734, 1
    %v2737 = vor.u32 %v2732, %v2736
    %v2739 = vshrl.u32 %v2710, 16
    %v2741 = vshll.u32 %v2710, 16
    %v2743 = vrot.slane %v2741, 1
    %v2744 = vor.u32 %v2739, %v2743
    %v2746 = vshrl.u32 %v2711, 16
    %v2748 = vshll.u32 %v2711, 16
    %v2750 = vrot.slane %v2748, 1
    %v2751 = vor.u32 %v2746, %v2750
    %v2753 = vshrl.u32 %v2712, 16
    %v2755 = vshll.u32 %v2712, 16
    %v2757 = vrot.slane %v2755, 1
    %v2758 = vor.u32 %v2753, %v2757
    %v2760 = vshrl.u32 %v2713, 16
    %v2762 = vshll.u32 %v2713, 16
    %v2764 = vrot.slane %v2762, 1
    %v2765 = vor.u32 %v2760, %v2764
    %v2767 = vshrl.u32 %v2714, 16
    %v2769 = vshll.u32 %v2714, 16
    %v2771 = vrot.slane %v2769, 1
    %v2772 = vor.u32 %v2767, %v2771
    %v2774 = vshrl.u32 %v2716, 16
    %v2776 = vshll.u32 %v2716, 16
    %v2778 = vrot.slane %v2776, 1
    %v2779 = vor.u32 %v2774, %v2778
    %v2781 = vshrl.u32 %v2717, 16
    %v2783 = vshll.u32 %v2717, 16
    %v2785 = vrot.slane %v2783, 1
    %v2786 = vor.u32 %v2781, %v2785
    %v2788 = vshrl.u32 %v2718, 16
    %v2790 = vshll.u32 %v2718, 16
    %v2792 = vrot.slane %v2790, 1
    %v2793 = vor.u32 %v2788, %v2792
    %v2795 = vshrl.u32 %v2719, 16
    %v2797 = vshll.u32 %v2719, 16
    %v2799 = vrot.slane %v2797, 1
    %v2800 = vor.u32 %v2795, %v2799
    %v2802 = vshrl.u32 %v2720, 16
    %v2804 = vshll.u32 %v2720, 16
    %v2806 = vrot.slane %v2804, 1
    %v2807 = vor.u32 %v2802, %v2806
    %v2809 = vshrl.u32 %v2721, 16
    %v2811 = vshll.u32 %v2721, 16
    %v2813 = vrot.slane %v2811, 1
    %v2814 = vor.u32 %v2809, %v2813
    %v2816 = vshrl.u32 %v2722, 16
    %v2818 = vshll.u32 %v2722, 16
    %v2820 = vrot.slane %v2818, 1
    %v2821 = vor.u32 %v2816, %v2820
    %2822 = vrot.lane.b32.xlu0 %v1025, 8
    %v2823 = vpop.permute.xlu0 %2822
    %2824 = vrot.lane.b32.xlu0 %v2730, 8
    %v2825 = vpop.permute.xlu0 %2824
    %2826 = vrot.lane.b32.xlu0 %v2737, 8
    %v2827 = vpop.permute.xlu0 %2826
    %2828 = vrot.lane.b32.xlu0 %v2744, 8
    %v2829 = vpop.permute.xlu0 %2828
    %2830 = vrot.lane.b32.xlu0 %v2751, 8
    %v2831 = vpop.permute.xlu0 %2830
    %2832 = vrot.lane.b32.xlu0 %v2758, 8
    %v2833 = vpop.permute.xlu0 %2832
    %2834 = vrot.lane.b32.xlu0 %v2765, 8
    %v2835 = vpop.permute.xlu0 %2834
    %2836 = vrot.lane.b32.xlu0 %v2772, 8
    %v2837 = vpop.permute.xlu0 %2836
    %2838 = vrot.lane.b32.xlu0 %v2779, 8
    %v2839 = vpop.permute.xlu0 %2838
    %2840 = vrot.lane.b32.xlu0 %v2786, 8
    %v2841 = vpop.permute.xlu0 %2840
    %2842 = vrot.lane.b32.xlu0 %v2793, 8
    %v2843 = vpop.permute.xlu0 %2842
    %2844 = vrot.lane.b32.xlu0 %v2800, 8
    %v2845 = vpop.permute.xlu0 %2844
    %2846 = vrot.lane.b32.xlu0 %v2807, 8
    %v2847 = vpop.permute.xlu0 %2846
    %2848 = vrot.lane.b32.xlu0 %v2814, 8
    %v2849 = vpop.permute.xlu0 %2848
    %2850 = vrot.lane.b32.xlu0 %v2821, 8
    %v2851 = vpop.permute.xlu0 %2850
    %v2866 = vrot.slane %v2708, 1
    %v2867 = vrot.slane %v2709, 1
    %v2868 = vrot.slane %v2710, 1
    %v2869 = vrot.slane %v2711, 1
    %v2870 = vrot.slane %v2712, 1
    %v2871 = vrot.slane %v2713, 1
    %v2872 = vrot.slane %v2714, 1
    %v2873 = vrot.slane %v2716, 1
    %v2874 = vrot.slane %v2717, 1
    %v2875 = vrot.slane %v2718, 1
    %v2876 = vrot.slane %v2719, 1
    %v2877 = vrot.slane %v2720, 1
    %v2878 = vrot.slane %v2721, 1
    %v2879 = vrot.slane %v2722, 1
    %2880 = vrot.lane.b32.xlu0 %v1089, 16
    %v2881 = vpop.permute.xlu0 %2880
    %2882 = vrot.lane.b32.xlu0 %v2866, 16
    %v2883 = vpop.permute.xlu0 %2882
    %2884 = vrot.lane.b32.xlu0 %v2867, 16
    %v2885 = vpop.permute.xlu0 %2884
    %2886 = vrot.lane.b32.xlu0 %v2868, 16
    %v2887 = vpop.permute.xlu0 %2886
    %2888 = vrot.lane.b32.xlu0 %v2869, 16
    %v2889 = vpop.permute.xlu0 %2888
    %2890 = vrot.lane.b32.xlu0 %v2870, 16
    %v2891 = vpop.permute.xlu0 %2890
    %2892 = vrot.lane.b32.xlu0 %v2871, 16
    %v2893 = vpop.permute.xlu0 %2892
    %2894 = vrot.lane.b32.xlu0 %v2872, 16
    %v2895 = vpop.permute.xlu0 %2894
    %2896 = vrot.lane.b32.xlu0 %v2873, 16
    %v2897 = vpop.permute.xlu0 %2896
    %2898 = vrot.lane.b32.xlu0 %v2874, 16
    %v2899 = vpop.permute.xlu0 %2898
    %2900 = vrot.lane.b32.xlu0 %v2875, 16
    %v2901 = vpop.permute.xlu0 %2900
    %2902 = vrot.lane.b32.xlu0 %v2876, 16
    %v2903 = vpop.permute.xlu0 %2902
    %2904 = vrot.lane.b32.xlu0 %v2877, 16
    %v2905 = vpop.permute.xlu0 %2904
    %2906 = vrot.lane.b32.xlu0 %v2878, 16
    %v2907 = vpop.permute.xlu0 %2906
    %2908 = vrot.lane.b32.xlu0 %v2879, 16
    %v2909 = vpop.permute.xlu0 %2908
    %2912 = vrot.lane.b32.xlu0 %v2708, 24
    %v2913 = vpop.permute.xlu0 %2912
    %2914 = vrot.lane.b32.xlu0 %v2709, 24
    %v2915 = vpop.permute.xlu0 %2914
    %2916 = vrot.lane.b32.xlu0 %v2710, 24
    %v2917 = vpop.permute.xlu0 %2916
    %2918 = vrot.lane.b32.xlu0 %v2711, 24
    %v2919 = vpop.permute.xlu0 %2918
    %2920 = vrot.lane.b32.xlu0 %v2712, 24
    %v2921 = vpop.permute.xlu0 %2920
    %2922 = vrot.lane.b32.xlu0 %v2713, 24
    %v2923 = vpop.permute.xlu0 %2922
    %2924 = vrot.lane.b32.xlu0 %v2714, 24
    %v2925 = vpop.permute.xlu0 %2924
    %2926 = vrot.lane.b32.xlu0 %v2715, 24
    %v2927 = vpop.permute.xlu0 %2926
    %2928 = vrot.lane.b32.xlu0 %v2716, 24
    %v2929 = vpop.permute.xlu0 %2928
    %2930 = vrot.lane.b32.xlu0 %v2717, 24
    %v2931 = vpop.permute.xlu0 %2930
    %2932 = vrot.lane.b32.xlu0 %v2718, 24
    %v2933 = vpop.permute.xlu0 %2932
    %2934 = vrot.lane.b32.xlu0 %v2719, 24
    %v2935 = vpop.permute.xlu0 %2934
    %2936 = vrot.lane.b32.xlu0 %v2720, 24
    %v2937 = vpop.permute.xlu0 %2936
    %2938 = vrot.lane.b32.xlu0 %v2721, 24
    %v2939 = vpop.permute.xlu0 %2938
    %2940 = vrot.lane.b32.xlu0 %v2722, 24
    %v2941 = vpop.permute.xlu0 %2940
    %2942 = vrot.lane.b32.xlu0 %v2723, 24
    %v2943 = vpop.permute.xlu0 %2942
    %v2945 = vshrl.u32 %v2715, 16
    %v2947 = vshll.u32 %v2715, 16
    %v2949 = vrot.slane %v2947, 1
    %v2950 = vor.u32 %v2945, %v2949
    %v2952 = vshrl.u32 %v2723, 16
    %v2954 = vshll.u32 %v2723, 16
    %v2956 = vrot.slane %v2954, 1
    %v2957 = vor.u32 %v2952, %v2956
    %2958 = vrot.lane.b32.xlu0 %v2730, 32
    %v2959 = vpop.permute.xlu0 %2958
    %2960 = vrot.lane.b32.xlu0 %v2737, 32
    %v2961 = vpop.permute.xlu0 %2960
    %2962 = vrot.lane.b32.xlu0 %v2744, 32
    %v2963 = vpop.permute.xlu0 %2962
    %2964 = vrot.lane.b32.xlu0 %v2751, 32
    %v2965 = vpop.permute.xlu0 %2964
    %2966 = vrot.lane.b32.xlu0 %v2758, 32
    %v2967 = vpop.permute.xlu0 %2966
    %2968 = vrot.lane.b32.xlu0 %v2765, 32
    %v2969 = vpop.permute.xlu0 %2968
    %2970 = vrot.lane.b32.xlu0 %v2772, 32
    %v2971 = vpop.permute.xlu0 %2970
    %2972 = vrot.lane.b32.xlu0 %v2950, 32
    %v2973 = vpop.permute.xlu0 %2972
    %2974 = vrot.lane.b32.xlu0 %v2779, 32
    %v2975 = vpop.permute.xlu0 %2974
    %2976 = vrot.lane.b32.xlu0 %v2786, 32
    %v2977 = vpop.permute.xlu0 %2976
    %2978 = vrot.lane.b32.xlu0 %v2793, 32
    %v2979 = vpop.permute.xlu0 %2978
    %2980 = vrot.lane.b32.xlu0 %v2800, 32
    %v2981 = vpop.permute.xlu0 %2980
    %2982 = vrot.lane.b32.xlu0 %v2807, 32
    %v2983 = vpop.permute.xlu0 %2982
    %2984 = vrot.lane.b32.xlu0 %v2814, 32
    %v2985 = vpop.permute.xlu0 %2984
    %2986 = vrot.lane.b32.xlu0 %v2821, 32
    %v2987 = vpop.permute.xlu0 %2986
    %2988 = vrot.lane.b32.xlu0 %v2957, 32
    %v2989 = vpop.permute.xlu0 %2988
    %v2990 = vrot.slane %v2715, 1
    %v2991 = vrot.slane %v2723, 1
    %2992 = vrot.lane.b32.xlu0 %v2866, 40
    %v2993 = vpop.permute.xlu0 %2992
    %2994 = vrot.lane.b32.xlu0 %v2867, 40
    %v2995 = vpop.permute.xlu0 %2994
    %2996 = vrot.lane.b32.xlu0 %v2868, 40
    %v2997 = vpop.permute.xlu0 %2996
    %2998 = vrot.lane.b32.xlu0 %v2869, 40
    %v2999 = vpop.permute.xlu0 %2998
    %3000 = vrot.lane.b32.xlu0 %v2870, 40
    %v3001 = vpop.permute.xlu0 %3000
    %3002 = vrot.lane.b32.xlu0 %v2871, 40
    %v3003 = vpop.permute.xlu0 %3002
    %3004 = vrot.lane.b32.xlu0 %v2872, 40
    %v3005 = vpop.permute.xlu0 %3004
    %3006 = vrot.lane.b32.xlu0 %v2990, 40
    %v3007 = vpop.permute.xlu0 %3006
    %3008 = vrot.lane.b32.xlu0 %v2873, 40
    %v3009 = vpop.permute.xlu0 %3008
    %3010 = vrot.lane.b32.xlu0 %v2874, 40
    %v3011 = vpop.permute.xlu0 %3010
    %3012 = vrot.lane.b32.xlu0 %v2875, 40
    %v3013 = vpop.permute.xlu0 %3012
    %3014 = vrot.lane.b32.xlu0 %v2876, 40
    %v3015 = vpop.permute.xlu0 %3014
    %3016 = vrot.lane.b32.xlu0 %v2877, 40
    %v3017 = vpop.permute.xlu0 %3016
    %3018 = vrot.lane.b32.xlu0 %v2878, 40
    %v3019 = vpop.permute.xlu0 %3018
    %3020 = vrot.lane.b32.xlu0 %v2879, 40
    %v3021 = vpop.permute.xlu0 %3020
    %3022 = vrot.lane.b32.xlu0 %v2991, 40
    %v3023 = vpop.permute.xlu0 %3022
    %3024 = vrot.lane.b32.xlu0 %v2709, 48
    %v3025 = vpop.permute.xlu0 %3024
    %3026 = vrot.lane.b32.xlu0 %v2710, 48
    %v3027 = vpop.permute.xlu0 %3026
    %3028 = vrot.lane.b32.xlu0 %v2711, 48
    %v3029 = vpop.permute.xlu0 %3028
    %3030 = vrot.lane.b32.xlu0 %v2712, 48
    %v3031 = vpop.permute.xlu0 %3030
    %3032 = vrot.lane.b32.xlu0 %v2713, 48
    %v3033 = vpop.permute.xlu0 %3032
    %3034 = vrot.lane.b32.xlu0 %v2714, 48
    %v3035 = vpop.permute.xlu0 %3034
    %3036 = vrot.lane.b32.xlu0 %v2715, 48
    %v3037 = vpop.permute.xlu0 %3036
    %3038 = vrot.lane.b32.xlu0 0, 48
    %v3039 = vpop.permute.xlu0 %3038
    %3040 = vrot.lane.b32.xlu0 %v2717, 48
    %v3041 = vpop.permute.xlu0 %3040
    %3042 = vrot.lane.b32.xlu0 %v2718, 48
    %v3043 = vpop.permute.xlu0 %3042
    %3044 = vrot.lane.b32.xlu0 %v2719, 48
    %v3045 = vpop.permute.xlu0 %3044
    %3046 = vrot.lane.b32.xlu0 %v2720, 48
    %v3047 = vpop.permute.xlu0 %3046
    %3048 = vrot.lane.b32.xlu0 %v2721, 48
    %v3049 = vpop.permute.xlu0 %3048
    %3050 = vrot.lane.b32.xlu0 %v2722, 48
    %v3051 = vpop.permute.xlu0 %3050
    %3052 = vrot.lane.b32.xlu0 %v2723, 48
    %v3053 = vpop.permute.xlu0 %3052
    %3054 = vrot.lane.b32.xlu0 %v2737, 56
    %v3055 = vpop.permute.xlu0 %3054
    %3056 = vrot.lane.b32.xlu0 %v2744, 56
    %v3057 = vpop.permute.xlu0 %3056
    %3058 = vrot.lane.b32.xlu0 %v2751, 56
    %v3059 = vpop.permute.xlu0 %3058
    %3060 = vrot.lane.b32.xlu0 %v2758, 56
    %v3061 = vpop.permute.xlu0 %3060
    %3062 = vrot.lane.b32.xlu0 %v2765, 56
    %v3063 = vpop.permute.xlu0 %3062
    %3064 = vrot.lane.b32.xlu0 %v2772, 56
    %v3065 = vpop.permute.xlu0 %3064
    %3066 = vrot.lane.b32.xlu0 %v2950, 56
    %v3067 = vpop.permute.xlu0 %3066
    %3068 = vrot.lane.b32.xlu0 %v1025, 56
    %v3069 = vpop.permute.xlu0 %3068
    %3070 = vrot.lane.b32.xlu0 %v2786, 56
    %v3071 = vpop.permute.xlu0 %3070
    %3072 = vrot.lane.b32.xlu0 %v2793, 56
    %v3073 = vpop.permute.xlu0 %3072
    %3074 = vrot.lane.b32.xlu0 %v2800, 56
    %v3075 = vpop.permute.xlu0 %3074
    %3076 = vrot.lane.b32.xlu0 %v2807, 56
    %v3077 = vpop.permute.xlu0 %3076
    %3078 = vrot.lane.b32.xlu0 %v2814, 56
    %v3079 = vpop.permute.xlu0 %3078
    %3080 = vrot.lane.b32.xlu0 %v2821, 56
    %v3081 = vpop.permute.xlu0 %3080
    %3082 = vrot.lane.b32.xlu0 %v2957, 56
    %v3083 = vpop.permute.xlu0 %3082
    %3084 = vrot.lane.b32.xlu0 %v2867, 64
    %v3085 = vpop.permute.xlu0 %3084
    %3086 = vrot.lane.b32.xlu0 %v2868, 64
    %v3087 = vpop.permute.xlu0 %3086
    %3088 = vrot.lane.b32.xlu0 %v2869, 64
    %v3089 = vpop.permute.xlu0 %3088
    %3090 = vrot.lane.b32.xlu0 %v2870, 64
    %v3091 = vpop.permute.xlu0 %3090
    %3092 = vrot.lane.b32.xlu0 %v2871, 64
    %v3093 = vpop.permute.xlu0 %3092
    %3094 = vrot.lane.b32.xlu0 %v2872, 64
    %v3095 = vpop.permute.xlu0 %3094
    %3096 = vrot.lane.b32.xlu0 %v2990, 64
    %v3097 = vpop.permute.xlu0 %3096
    %3098 = vrot.lane.b32.xlu0 %v1089, 64
    %v3099 = vpop.permute.xlu0 %3098
    %3100 = vrot.lane.b32.xlu0 %v2874, 64
    %v3101 = vpop.permute.xlu0 %3100
    %3102 = vrot.lane.b32.xlu0 %v2875, 64
    %v3103 = vpop.permute.xlu0 %3102
    %3104 = vrot.lane.b32.xlu0 %v2876, 64
    %v3105 = vpop.permute.xlu0 %3104
    %3106 = vrot.lane.b32.xlu0 %v2877, 64
    %v3107 = vpop.permute.xlu0 %3106
    %3108 = vrot.lane.b32.xlu0 %v2878, 64
    %v3109 = vpop.permute.xlu0 %3108
    %3110 = vrot.lane.b32.xlu0 %v2879, 64
    %v3111 = vpop.permute.xlu0 %3110
    %3112 = vrot.lane.b32.xlu0 %v2991, 64
    %v3113 = vpop.permute.xlu0 %3112
    %v3115 = vsel %vm2301, 0, %v2823
    %v3117 = vsel %vm2301, %v2708, %v2825
    %v3119 = vsel %vm2301, %v2709, %v2827
    %v3121 = vsel %vm2301, %v2710, %v2829
    %v3123 = vsel %vm2301, %v2711, %v2831
    %v3125 = vsel %vm2301, %v2712, %v2833
    %v3127 = vsel %vm2301, %v2713, %v2835
    %v3129 = vsel %vm2301, %v2714, %v2837
    %v3131 = vsel %vm2301, %v2716, %v2839
    %v3133 = vsel %vm2301, %v2717, %v2841
    %v3135 = vsel %vm2301, %v2718, %v2843
    %v3137 = vsel %vm2301, %v2719, %v2845
    %v3139 = vsel %vm2301, %v2720, %v2847
    %v3141 = vsel %vm2301, %v2721, %v2849
    %v3143 = vsel %vm2301, %v2722, %v2851
    %v3145 = vsel %vm822, %v3115, %v2881
    %v3147 = vsel %vm822, %v3117, %v2883
    %v3149 = vsel %vm822, %v3119, %v2885
    %v3151 = vsel %vm822, %v3121, %v2887
    %v3153 = vsel %vm822, %v3123, %v2889
    %v3155 = vsel %vm822, %v3125, %v2891
    %v3157 = vsel %vm822, %v3127, %v2893
    %v3159 = vsel %vm822, %v3129, %v2895
    %v3161 = vsel %vm822, %v3131, %v2897
    %v3163 = vsel %vm822, %v3133, %v2899
    %v3165 = vsel %vm822, %v3135, %v2901
    %v3167 = vsel %vm822, %v3137, %v2903
    %v3169 = vsel %vm822, %v3139, %v2905
    %v3171 = vsel %vm822, %v3141, %v2907
    %v3173 = vsel %vm822, %v3143, %v2909
    %vm3174 = vcmask 195584
    %v3176 = vsel %vm3174, %v3145, %v2913
    %v3178 = vsel %vm3174, %v3147, %v2915
    %v3180 = vsel %vm3174, %v3149, %v2917
    %v3182 = vsel %vm3174, %v3151, %v2919
    %v3184 = vsel %vm3174, %v3153, %v2921
    %v3186 = vsel %vm3174, %v3155, %v2923
    %v3188 = vsel %vm3174, %v3157, %v2925
    %v3190 = vsel %vm3174, %v3159, %v2927
    %v3192 = vsel %vm3174, %v3145, %v2929
    %v3194 = vsel %vm3174, %v3161, %v2931
    %v3196 = vsel %vm3174, %v3163, %v2933
    %v3198 = vsel %vm3174, %v3165, %v2935
    %v3200 = vsel %vm3174, %v3167, %v2937
    %v3202 = vsel %vm3174, %v3169, %v2939
    %v3204 = vsel %vm3174, %v3171, %v2941
    %v3206 = vsel %vm3174, %v3173, %v2943
    %v3208 = vsel %vm754, %v3176, %v2959
    %v3210 = vsel %vm754, %v3178, %v2961
    %v3212 = vsel %vm754, %v3180, %v2963
    %v3214 = vsel %vm754, %v3182, %v2965
    %v3216 = vsel %vm754, %v3184, %v2967
    %v3218 = vsel %vm754, %v3186, %v2969
    %v3220 = vsel %vm754, %v3188, %v2971
    %v3222 = vsel %vm754, %v3190, %v2973
    %v3224 = vsel %vm754, %v3192, %v2975
    %v3226 = vsel %vm754, %v3194, %v2977
    %v3228 = vsel %vm754, %v3196, %v2979
    %v3230 = vsel %vm754, %v3198, %v2981
    %v3232 = vsel %vm754, %v3200, %v2983
    %v3234 = vsel %vm754, %v3202, %v2985
    %v3236 = vsel %vm754, %v3204, %v2987
    %v3238 = vsel %vm754, %v3206, %v2989
    %vm3239 = vcmask 326656
    %v3241 = vsel %vm3239, %v3208, %v2993
    %v3243 = vsel %vm3239, %v3210, %v2995
    %v3245 = vsel %vm3239, %v3212, %v2997
    %v3247 = vsel %vm3239, %v3214, %v2999
    %v3249 = vsel %vm3239, %v3216, %v3001
    %v3251 = vsel %vm3239, %v3218, %v3003
    %v3253 = vsel %vm3239, %v3220, %v3005
    %v3255 = vsel %vm3239, %v3222, %v3007
    %v3257 = vsel %vm3239, %v3224, %v3009
    %v3259 = vsel %vm3239, %v3226, %v3011
    %v3261 = vsel %vm3239, %v3228, %v3013
    %v3263 = vsel %vm3239, %v3230, %v3015
    %v3265 = vsel %vm3239, %v3232, %v3017
    %v3267 = vsel %vm3239, %v3234, %v3019
    %v3269 = vsel %vm3239, %v3236, %v3021
    %v3271 = vsel %vm3239, %v3238, %v3023
    %v3273 = vsel %vm1232, %v3241, %v3025
    %v3275 = vsel %vm1232, %v3243, %v3027
    %v3277 = vsel %vm1232, %v3245, %v3029
    %v3279 = vsel %vm1232, %v3247, %v3031
    %v3281 = vsel %vm1232, %v3249, %v3033
    %v3283 = vsel %vm1232, %v3251, %v3035
    %v3285 = vsel %vm1232, %v3253, %v3037
    %v3287 = vsel %vm1232, %v3255, %v3039
    %v3289 = vsel %vm1232, %v3257, %v3041
    %v3291 = vsel %vm1232, %v3259, %v3043
    %v3293 = vsel %vm1232, %v3261, %v3045
    %v3295 = vsel %vm1232, %v3263, %v3047
    %v3297 = vsel %vm1232, %v3265, %v3049
    %v3299 = vsel %vm1232, %v3267, %v3051
    %v3301 = vsel %vm1232, %v3269, %v3053
    %v3302 = vsel %vm1232, %v3271, %v3039
    %vm3303 = vcmask 457728
    %v3305 = vsel %vm3303, %v3273, %v3055
    %v3307 = vsel %vm3303, %v3275, %v3057
    %v3309 = vsel %vm3303, %v3277, %v3059
    %v3311 = vsel %vm3303, %v3279, %v3061
    %v3313 = vsel %vm3303, %v3281, %v3063
    %v3315 = vsel %vm3303, %v3283, %v3065
    %v3317 = vsel %vm3303, %v3285, %v3067
    %v3319 = vsel %vm3303, %v3287, %v3069
    %v3321 = vsel %vm3303, %v3289, %v3071
    %v3323 = vsel %vm3303, %v3291, %v3073
    %v3325 = vsel %vm3303, %v3293, %v3075
    %v3327 = vsel %vm3303, %v3295, %v3077
    %v3329 = vsel %vm3303, %v3297, %v3079
    %v3331 = vsel %vm3303, %v3299, %v3081
    %v3333 = vsel %vm3303, %v3301, %v3083
    %v3334 = vsel %vm3303, %v3302, %v3069
    %v3336 = vsel %vm1249, %v3305, %v3085
    %v3338 = vsel %vm1249, %v3307, %v3087
    %v3340 = vsel %vm1249, %v3309, %v3089
    %v3342 = vsel %vm1249, %v3311, %v3091
    %v3344 = vsel %vm1249, %v3313, %v3093
    %v3346 = vsel %vm1249, %v3315, %v3095
    %v3348 = vsel %vm1249, %v3317, %v3097
    %v3350 = vsel %vm1249, %v3319, %v3099
    %v3352 = vsel %vm1249, %v3321, %v3101
    %v3354 = vsel %vm1249, %v3323, %v3103
    %v3356 = vsel %vm1249, %v3325, %v3105
    %v3358 = vsel %vm1249, %v3327, %v3107
    %v3360 = vsel %vm1249, %v3329, %v3109
    %v3362 = vsel %vm1249, %v3331, %v3111
    %v3364 = vsel %vm1249, %v3333, %v3113
    %v3365 = vsel %vm1249, %v3334, %v3099
    %v3382 = vunpack.c.l.b16 %v3336
    %v3383 = vunpack.c.l.b16 %v3338
    %v3384 = vunpack.c.l.b16 %v3340
    %v3385 = vunpack.c.l.b16 %v3342
    %v3386 = vunpack.c.l.b16 %v3344
    %v3387 = vunpack.c.l.b16 %v3346
    %v3388 = vunpack.c.l.b16 %v3348
    %v3389 = vunpack.c.l.b16 %v3350
    %v3390 = vunpack.c.l.b16 %v3352
    %v3391 = vunpack.c.l.b16 %v3354
    %v3392 = vunpack.c.l.b16 %v3356
    %v3393 = vunpack.c.l.b16 %v3358
    %v3394 = vunpack.c.l.b16 %v3360
    %v3395 = vunpack.c.l.b16 %v3362
    %v3396 = vunpack.c.l.b16 %v3364
    %v3397 = vunpack.c.l.b16 %v3365
    %v3398 = vpack.c.b16 %v3383, %v3382
    %v3399 = vpack.c.b16 %v3385, %v3384
    %v3400 = vpack.c.b16 %v3387, %v3386
    %v3401 = vpack.c.b16 %v3389, %v3388
    %v3402 = vpack.c.b16 %v3391, %v3390
    %v3403 = vpack.c.b16 %v3393, %v3392
    %v3404 = vpack.c.b16 %v3395, %v3394
    %v3405 = vpack.c.b16 %v3397, %v3396
    %v3415 = vunpack.c.l.b16 %v677
    %v3416 = vunpack.c.l.b16 %v678
    %v3417 = vunpack.c.l.b16 %v679
    %v3418 = vunpack.c.l.b16 %v680
    %v3419 = vunpack.c.l.b16 %v681
    %v3420 = vunpack.c.l.b16 %v682
    %v3421 = vunpack.c.l.b16 %v683
    %v3422 = vunpack.c.l.b16 %v684
    %v3423 = vunpack.c.l.b16 %v685
    %v3424 = vpack.c.b16 %v3416, %v3415
    %v3425 = vpack.c.b16 %v3418, %v3417
    %v3426 = vpack.c.b16 %v3420, %v3419
    %v3427 = vpack.c.b16 %v3422, %v3421
    %v3428 = vpack.c.b16 %v3423, %v3423
    %vm3433 = vcmask 588800
    %v3435 = vsel %vm3433, %v3398, 0
    %v3438 = vsel %vm3433, %v3399, 0
    %v3441 = vsel %vm3433, %v3400, 0
    %v3444 = vsel %vm3433, %v3401, 0
    %v3447 = vsel %vm3433, %v3402, 0
    %v3450 = vsel %vm3433, %v3403, 0
    %v3453 = vsel %vm3433, %v3404, 0
    %v3456 = vsel %vm3433, %v3405, 0
    %v3459 = vsel %vm2326, %v3428, 0
    %3461 = vmatpush.bf16.msra.mxu0 0
    %3462 = vmatpush.bf16.msra.mxu0 0
    %3463 = vmatpush.bf16.msra.mxu0 0
    %3464 = vmatpush.bf16.msra.mxu0 %v3459
    %3465 = vmatpush.bf16.msra.mxu0 %v3427
    %3466 = vmatpush.bf16.msra.mxu0 %v3426
    %3467 = vmatpush.bf16.msra.mxu0 %v3425
    %3468 = vmatpush.bf16.msra.mxu0 %v3424
    %3469 = vmatmul.bf16.gmra.mxu0 %v3435
    %v3470 = vpop.f32.mrf.mxu0
    %v3471 = vadd.f32 0.0, %v3470
    %v3472 = vpop.f32.mrf.mxu0
    %v3473 = vadd.f32 0.0, %v3472
    %3474 = vmatmul.bf16.gmra.mxu0 %v3438
    %v3475 = vpop.f32.mrf.mxu0
    %v3476 = vadd.f32 0.0, %v3475
    %v3477 = vpop.f32.mrf.mxu0
    %v3478 = vadd.f32 0.0, %v3477
    %3479 = vmatmul.bf16.gmra.mxu0 %v3441
    %v3480 = vpop.f32.mrf.mxu0
    %v3481 = vadd.f32 0.0, %v3480
    %v3482 = vpop.f32.mrf.mxu0
    %v3483 = vadd.f32 0.0, %v3482
    %3484 = vmatmul.bf16.gmra.mxu0 %v3444
    %v3485 = vpop.f32.mrf.mxu0
    %v3486 = vadd.f32 0.0, %v3485
    %v3487 = vpop.f32.mrf.mxu0
    %v3488 = vadd.f32 0.0, %v3487
    %3489 = vmatmul.bf16.gmra.mxu0 %v3447
    %v3490 = vpop.f32.mrf.mxu0
    %v3491 = vadd.f32 0.0, %v3490
    %v3492 = vpop.f32.mrf.mxu0
    %v3493 = vadd.f32 0.0, %v3492
    %3494 = vmatmul.bf16.gmra.mxu0 %v3450
    %v3495 = vpop.f32.mrf.mxu0
    %v3496 = vadd.f32 0.0, %v3495
    %v3497 = vpop.f32.mrf.mxu0
    %v3498 = vadd.f32 0.0, %v3497
    %3499 = vmatmul.bf16.gmra.mxu0 %v3453
    %v3500 = vpop.f32.mrf.mxu0
    %v3501 = vadd.f32 0.0, %v3500
    %v3502 = vpop.f32.mrf.mxu0
    %v3503 = vadd.f32 0.0, %v3502
    %3504 = vmatmul.bf16.gmra.mxu0 %v3456
    %v3505 = vpop.f32.mrf.mxu0
    %v3506 = vadd.f32 0.0, %v3505
    %v3507 = vpop.f32.mrf.mxu0
    %v3508 = vadd.f32 0.0, %v3507
    %3509 = vdwg.mxu0
    %v3511 = vperm.slane %v676, 0
    %v3513 = vmul.f32 %v3471, %v3511
    %v3514 = vmul.f32 %v3473, %v3511
    %v3515 = vmul.f32 %v3476, %v3511
    %v3516 = vmul.f32 %v3478, %v3511
    %v3517 = vmul.f32 %v3481, %v3511
    %v3518 = vmul.f32 %v3483, %v3511
    %v3519 = vmul.f32 %v3486, %v3511
    %v3520 = vmul.f32 %v3488, %v3511
    %v3521 = vmul.f32 %v3491, %v3511
    %v3522 = vmul.f32 %v3493, %v3511
    %v3523 = vmul.f32 %v3496, %v3511
    %v3524 = vmul.f32 %v3498, %v3511
    %v3525 = vmul.f32 %v3501, %v3511
    %v3526 = vmul.f32 %v3503, %v3511
    %v3527 = vmul.f32 %v3506, %v3511
    %v3528 = vmul.f32 %v3508, %v3511
    %v3530 = vperm.slane %v675, 0
    %v3532 = vadd.f32 %v3513, %v3530
    %v3533 = vadd.f32 %v3514, %v3530
    %v3534 = vadd.f32 %v3515, %v3530
    %v3535 = vadd.f32 %v3516, %v3530
    %v3536 = vadd.f32 %v3517, %v3530
    %v3537 = vadd.f32 %v3518, %v3530
    %v3538 = vadd.f32 %v3519, %v3530
    %v3539 = vadd.f32 %v3520, %v3530
    %v3540 = vadd.f32 %v3521, %v3530
    %v3541 = vadd.f32 %v3522, %v3530
    %v3542 = vadd.f32 %v3523, %v3530
    %v3543 = vadd.f32 %v3524, %v3530
    %v3544 = vadd.f32 %v3525, %v3530
    %v3545 = vadd.f32 %v3526, %v3530
    %v3546 = vadd.f32 %v3527, %v3530
    %v3547 = vadd.f32 %v3528, %v3530
    %v3548 = vadd.f32 %v3532, 3.0
    %v3549 = vadd.f32 %v3533, 3.0
    %v3550 = vadd.f32 %v3534, 3.0
    %v3551 = vadd.f32 %v3535, 3.0
    %v3552 = vadd.f32 %v3536, 3.0
    %v3553 = vadd.f32 %v3537, 3.0
    %v3554 = vadd.f32 %v3538, 3.0
    %v3555 = vadd.f32 %v3539, 3.0
    %v3556 = vadd.f32 %v3540, 3.0
    %v3557 = vadd.f32 %v3541, 3.0
    %v3558 = vadd.f32 %v3542, 3.0
    %v3559 = vadd.f32 %v3543, 3.0
    %v3560 = vadd.f32 %v3544, 3.0
    %v3561 = vadd.f32 %v3545, 3.0
    %v3562 = vadd.f32 %v3546, 3.0
    %v3563 = vadd.f32 %v3547, 3.0
    %v3564 = vmax.f32 %v3548, 0.0
    %v3565 = vmax.f32 %v3549, 0.0
    %v3566 = vmax.f32 %v3550, 0.0
    %v3567 = vmax.f32 %v3551, 0.0
    %v3568 = vmax.f32 %v3552, 0.0
    %v3569 = vmax.f32 %v3553, 0.0
    %v3570 = vmax.f32 %v3554, 0.0
    %v3571 = vmax.f32 %v3555, 0.0
    %v3572 = vmax.f32 %v3556, 0.0
    %v3573 = vmax.f32 %v3557, 0.0
    %v3574 = vmax.f32 %v3558, 0.0
    %v3575 = vmax.f32 %v3559, 0.0
    %v3576 = vmax.f32 %v3560, 0.0
    %v3577 = vmax.f32 %v3561, 0.0
    %v3578 = vmax.f32 %v3562, 0.0
    %v3579 = vmax.f32 %v3563, 0.0
    %v3580 = vmin.f32 %v3564, 6.0
    %v3581 = vmin.f32 %v3565, 6.0
    %v3582 = vmin.f32 %v3566, 6.0
    %v3583 = vmin.f32 %v3567, 6.0
    %v3584 = vmin.f32 %v3568, 6.0
    %v3585 = vmin.f32 %v3569, 6.0
    %v3586 = vmin.f32 %v3570, 6.0
    %v3587 = vmin.f32 %v3571, 6.0
    %v3588 = vmin.f32 %v3572, 6.0
    %v3589 = vmin.f32 %v3573, 6.0
    %v3590 = vmin.f32 %v3574, 6.0
    %v3591 = vmin.f32 %v3575, 6.0
    %v3592 = vmin.f32 %v3576, 6.0
    %v3593 = vmin.f32 %v3577, 6.0
    %v3594 = vmin.f32 %v3578, 6.0
    %v3595 = vmin.f32 %v3579, 6.0
    %v3596 = vmul.f32 %v3532, %v3580
    %v3597 = vmul.f32 %v3533, %v3581
    %v3598 = vmul.f32 %v3534, %v3582
    %v3599 = vmul.f32 %v3535, %v3583
    %v3600 = vmul.f32 %v3536, %v3584
    %v3601 = vmul.f32 %v3537, %v3585
    %v3602 = vmul.f32 %v3538, %v3586
    %v3603 = vmul.f32 %v3539, %v3587
    %v3604 = vmul.f32 %v3540, %v3588
    %v3605 = vmul.f32 %v3541, %v3589
    %v3606 = vmul.f32 %v3542, %v3590
    %v3607 = vmul.f32 %v3543, %v3591
    %v3608 = vmul.f32 %v3544, %v3592
    %v3609 = vmul.f32 %v3545, %v3593
    %v3610 = vmul.f32 %v3546, %v3594
    %v3611 = vmul.f32 %v3547, %v3595
    %v3612 = vmul.f32 %v3596, 0.16666667
    %v3613 = vmul.f32 %v3597, 0.16666667
    %v3614 = vmul.f32 %v3598, 0.16666667
    %v3615 = vmul.f32 %v3599, 0.16666667
    %v3616 = vmul.f32 %v3600, 0.16666667
    %v3617 = vmul.f32 %v3601, 0.16666667
    %v3618 = vmul.f32 %v3602, 0.16666667
    %v3619 = vmul.f32 %v3603, 0.16666667
    %v3620 = vmul.f32 %v3604, 0.16666667
    %v3621 = vmul.f32 %v3605, 0.16666667
    %v3622 = vmul.f32 %v3606, 0.16666667
    %v3623 = vmul.f32 %v3607, 0.16666667
    %v3624 = vmul.f32 %v3608, 0.16666667
    %v3625 = vmul.f32 %v3609, 0.16666667
    %v3626 = vmul.f32 %v3610, 0.16666667
    %v3627 = vmul.f32 %v3611, 0.16666667
    %v3628 = vpack.c.bf16 %v3613, %v3612
    %v3629 = vpack.c.bf16 %v3615, %v3614
    %v3630 = vpack.c.bf16 %v3617, %v3616
    %v3631 = vpack.c.bf16 %v3619, %v3618
    %v3632 = vpack.c.bf16 %v3621, %v3620
    %v3633 = vpack.c.bf16 %v3623, %v3622
    %v3634 = vpack.c.bf16 %v3625, %v3624
    %v3635 = vpack.c.bf16 %v3627, %v3626
    %v3637 = vsel %vm2301, %v3628, 0
    %v3640 = vsel %vm2301, %v3629, 0
    %v3643 = vsel %vm2301, %v3630, 0
    %v3646 = vsel %vm2301, %v3631, 0
    %v3649 = vsel %vm2301, %v3632, 0
    %v3652 = vsel %vm2301, %v3633, 0
    %v3655 = vsel %vm2301, %v3634, 0
    %v3658 = vsel %vm2301, %v3635, 0
    %v3661 = vsel %vm2326, %v667, 0
    %3663 = vmatpush.bf16.msra.mxu0 0
    %3664 = vmatpush.bf16.msra.mxu0 0
    %3665 = vmatpush.bf16.msra.mxu0 0
    %3666 = vmatpush.bf16.msra.mxu0 0
    %3667 = vmatpush.bf16.msra.mxu0 0
    %3668 = vmatpush.bf16.msra.mxu0 0
    %3669 = vmatpush.bf16.msra.mxu0 0
    %3670 = vmatpush.bf16.msra.mxu0 %v3661
    %3671 = vmatmul.bf16.gmra.mxu0 %v3637
    %v3672 = vpop.f32.mrf.mxu0
    %v3673 = vadd.f32 0.0, %v3672
    %v3674 = vpop.f32.mrf.mxu0
    %v3675 = vadd.f32 0.0, %v3674
    %3676 = vmatmul.bf16.gmra.mxu0 %v3640
    %v3677 = vpop.f32.mrf.mxu0
    %v3678 = vadd.f32 0.0, %v3677
    %v3679 = vpop.f32.mrf.mxu0
    %v3680 = vadd.f32 0.0, %v3679
    %3681 = vmatmul.bf16.gmra.mxu0 %v3643
    %v3682 = vpop.f32.mrf.mxu0
    %v3683 = vadd.f32 0.0, %v3682
    %v3684 = vpop.f32.mrf.mxu0
    %v3685 = vadd.f32 0.0, %v3684
    %3686 = vmatmul.bf16.gmra.mxu0 %v3646
    %v3687 = vpop.f32.mrf.mxu0
    %v3688 = vadd.f32 0.0, %v3687
    %v3689 = vpop.f32.mrf.mxu0
    %v3690 = vadd.f32 0.0, %v3689
    %3691 = vmatmul.bf16.gmra.mxu0 %v3649
    %v3692 = vpop.f32.mrf.mxu0
    %v3693 = vadd.f32 0.0, %v3692
    %v3694 = vpop.f32.mrf.mxu0
    %v3695 = vadd.f32 0.0, %v3694
    %3696 = vmatmul.bf16.gmra.mxu0 %v3652
    %v3697 = vpop.f32.mrf.mxu0
    %v3698 = vadd.f32 0.0, %v3697
    %v3699 = vpop.f32.mrf.mxu0
    %v3700 = vadd.f32 0.0, %v3699
    %3701 = vmatmul.bf16.gmra.mxu0 %v3655
    %v3702 = vpop.f32.mrf.mxu0
    %v3703 = vadd.f32 0.0, %v3702
    %v3704 = vpop.f32.mrf.mxu0
    %v3705 = vadd.f32 0.0, %v3704
    %3706 = vmatmul.bf16.gmra.mxu0 %v3658
    %v3707 = vpop.f32.mrf.mxu0
    %v3708 = vadd.f32 0.0, %v3707
    %v3709 = vpop.f32.mrf.mxu0
    %v3710 = vadd.f32 0.0, %v3709
    %3711 = vdwg.mxu0
    %v3713 = vperm.slane %v659, 0
    %v3715 = vmul.f32 %v3673, %v3713
    %v3716 = vmul.f32 %v3675, %v3713
    %v3717 = vmul.f32 %v3678, %v3713
    %v3718 = vmul.f32 %v3680, %v3713
    %v3719 = vmul.f32 %v3683, %v3713
    %v3720 = vmul.f32 %v3685, %v3713
    %v3721 = vmul.f32 %v3688, %v3713
    %v3722 = vmul.f32 %v3690, %v3713
    %v3723 = vmul.f32 %v3693, %v3713
    %v3724 = vmul.f32 %v3695, %v3713
    %v3725 = vmul.f32 %v3698, %v3713
    %v3726 = vmul.f32 %v3700, %v3713
    %v3727 = vmul.f32 %v3703, %v3713
    %v3728 = vmul.f32 %v3705, %v3713
    %v3729 = vmul.f32 %v3708, %v3713
    %v3730 = vmul.f32 %v3710, %v3713
    %v3732 = vperm.slane %v657, 0
    %v3734 = vadd.f32 %v3715, %v3732
    %v3735 = vadd.f32 %v3716, %v3732
    %v3736 = vadd.f32 %v3717, %v3732
    %v3737 = vadd.f32 %v3718, %v3732
    %v3738 = vadd.f32 %v3719, %v3732
    %v3739 = vadd.f32 %v3720, %v3732
    %v3740 = vadd.f32 %v3721, %v3732
    %v3741 = vadd.f32 %v3722, %v3732
    %v3742 = vadd.f32 %v3723, %v3732
    %v3743 = vadd.f32 %v3724, %v3732
    %v3744 = vadd.f32 %v3725, %v3732
    %v3745 = vadd.f32 %v3726, %v3732
    %v3746 = vadd.f32 %v3727, %v3732
    %v3747 = vadd.f32 %v3728, %v3732
    %v3748 = vadd.f32 %v3729, %v3732
    %v3749 = vadd.f32 %v3730, %v3732
    %vm3750 = vcmp.gt.f32.partialorder %v3734, 0.0
    %vm3751 = vcmp.gt.f32.partialorder %v3735, 0.0
    %vm3752 = vcmp.gt.f32.partialorder %v3736, 0.0
    %vm3753 = vcmp.gt.f32.partialorder %v3737, 0.0
    %vm3754 = vcmp.gt.f32.partialorder %v3738, 0.0
    %vm3755 = vcmp.gt.f32.partialorder %v3739, 0.0
    %vm3756 = vcmp.gt.f32.partialorder %v3740, 0.0
    %vm3757 = vcmp.gt.f32.partialorder %v3741, 0.0
    %vm3758 = vcmp.gt.f32.partialorder %v3742, 0.0
    %vm3759 = vcmp.gt.f32.partialorder %v3743, 0.0
    %vm3760 = vcmp.gt.f32.partialorder %v3744, 0.0
    %vm3761 = vcmp.gt.f32.partialorder %v3745, 0.0
    %vm3762 = vcmp.gt.f32.partialorder %v3746, 0.0
    %vm3763 = vcmp.gt.f32.partialorder %v3747, 0.0
    %vm3764 = vcmp.gt.f32.partialorder %v3748, 0.0
    %vm3765 = vcmp.gt.f32.partialorder %v3749, 0.0
    %v3766 = vmul.f32 %v3734, 0.1
    %v3767 = vmul.f32 %v3735, 0.1
    %v3768 = vmul.f32 %v3736, 0.1
    %v3769 = vmul.f32 %v3737, 0.1
    %v3770 = vmul.f32 %v3738, 0.1
    %v3771 = vmul.f32 %v3739, 0.1
    %v3772 = vmul.f32 %v3740, 0.1
    %v3773 = vmul.f32 %v3741, 0.1
    %v3774 = vmul.f32 %v3742, 0.1
    %v3775 = vmul.f32 %v3743, 0.1
    %v3776 = vmul.f32 %v3744, 0.1
    %v3777 = vmul.f32 %v3745, 0.1
    %v3778 = vmul.f32 %v3746, 0.1
    %v3779 = vmul.f32 %v3747, 0.1
    %v3780 = vmul.f32 %v3748, 0.1
    %v3781 = vmul.f32 %v3749, 0.1
    %v3782 = vsel %vm3750, %v3734, %v3766
    %v3783 = vsel %vm3751, %v3735, %v3767
    %v3784 = vsel %vm3752, %v3736, %v3768
    %v3785 = vsel %vm3753, %v3737, %v3769
    %v3786 = vsel %vm3754, %v3738, %v3770
    %v3787 = vsel %vm3755, %v3739, %v3771
    %v3788 = vsel %vm3756, %v3740, %v3772
    %v3789 = vsel %vm3757, %v3741, %v3773
    %v3790 = vsel %vm3758, %v3742, %v3774
    %v3791 = vsel %vm3759, %v3743, %v3775
    %v3792 = vsel %vm3760, %v3744, %v3776
    %v3793 = vsel %vm3761, %v3745, %v3777
    %v3794 = vsel %vm3762, %v3746, %v3778
    %v3795 = vsel %vm3763, %v3747, %v3779
    %v3796 = vsel %vm3764, %v3748, %v3780
    %v3797 = vsel %vm3765, %v3749, %v3781
    %v3800 = vunpack.c.l.b16 %v665
    %v3801 = vunpack.c.l.b16 %v666
    %v3802 = vpack.c.b16 %v3801, %v3800
    %3804 = vmatpush.bf16.msra.mxu0 0
    %3805 = vmatpush.bf16.msra.mxu0 0
    %3806 = vmatpush.bf16.msra.mxu0 0
    %3807 = vmatpush.bf16.msra.mxu0 0
    %3808 = vmatpush.bf16.msra.mxu0 0
    %3809 = vmatpush.bf16.msra.mxu0 0
    %3810 = vmatpush.bf16.msra.mxu0 0
    %3811 = vmatpush.bf16.msra.mxu0 %v3802
    %3812 = vmatmul.bf16.gmra.mxu0 %v2103
    %v3813 = vpop.f32.mrf.mxu0
    %v3814 = vadd.f32 0.0, %v3813
    %v3815 = vpop.f32.mrf.mxu0
    %v3816 = vadd.f32 0.0, %v3815
    %3817 = vmatmul.bf16.gmra.mxu0 %v2106
    %v3818 = vpop.f32.mrf.mxu0
    %v3819 = vadd.f32 0.0, %v3818
    %v3820 = vpop.f32.mrf.mxu0
    %v3821 = vadd.f32 0.0, %v3820
    %3822 = vmatmul.bf16.gmra.mxu0 %v2109
    %v3823 = vpop.f32.mrf.mxu0
    %v3824 = vadd.f32 0.0, %v3823
    %v3825 = vpop.f32.mrf.mxu0
    %v3826 = vadd.f32 0.0, %v3825
    %3827 = vmatmul.bf16.gmra.mxu0 %v2112
    %v3828 = vpop.f32.mrf.mxu0
    %v3829 = vadd.f32 0.0, %v3828
    %v3830 = vpop.f32.mrf.mxu0
    %v3831 = vadd.f32 0.0, %v3830
    %3832 = vmatmul.bf16.gmra.mxu0 %v2115
    %v3833 = vpop.f32.mrf.mxu0
    %v3834 = vadd.f32 0.0, %v3833
    %v3835 = vpop.f32.mrf.mxu0
    %v3836 = vadd.f32 0.0, %v3835
    %3837 = vmatmul.bf16.gmra.mxu0 %v2118
    %v3838 = vpop.f32.mrf.mxu0
    %v3839 = vadd.f32 0.0, %v3838
    %v3840 = vpop.f32.mrf.mxu0
    %v3841 = vadd.f32 0.0, %v3840
    %3842 = vmatmul.bf16.gmra.mxu0 %v2121
    %v3843 = vpop.f32.mrf.mxu0
    %v3844 = vadd.f32 0.0, %v3843
    %v3845 = vpop.f32.mrf.mxu0
    %v3846 = vadd.f32 0.0, %v3845
    %3847 = vmatmul.bf16.gmra.mxu0 %v2124
    %v3848 = vpop.f32.mrf.mxu0
    %v3849 = vadd.f32 0.0, %v3848
    %v3850 = vpop.f32.mrf.mxu0
    %v3851 = vadd.f32 0.0, %v3850
    %3852 = vdwg.mxu0
    %v3854 = vperm.slane %v660, 0
    %v3856 = vmul.f32 %v3814, %v3854
    %v3857 = vmul.f32 %v3816, %v3854
    %v3858 = vmul.f32 %v3819, %v3854
    %v3859 = vmul.f32 %v3821, %v3854
    %v3860 = vmul.f32 %v3824, %v3854
    %v3861 = vmul.f32 %v3826, %v3854
    %v3862 = vmul.f32 %v3829, %v3854
    %v3863 = vmul.f32 %v3831, %v3854
    %v3864 = vmul.f32 %v3834, %v3854
    %v3865 = vmul.f32 %v3836, %v3854
    %v3866 = vmul.f32 %v3839, %v3854
    %v3867 = vmul.f32 %v3841, %v3854
    %v3868 = vmul.f32 %v3844, %v3854
    %v3869 = vmul.f32 %v3846, %v3854
    %v3870 = vmul.f32 %v3849, %v3854
    %v3871 = vmul.f32 %v3851, %v3854
    %v3873 = vperm.slane %v658, 0
    %v3875 = vadd.f32 %v3856, %v3873
    %v3876 = vadd.f32 %v3857, %v3873
    %v3877 = vadd.f32 %v3858, %v3873
    %v3878 = vadd.f32 %v3859, %v3873
    %v3879 = vadd.f32 %v3860, %v3873
    %v3880 = vadd.f32 %v3861, %v3873
    %v3881 = vadd.f32 %v3862, %v3873
    %v3882 = vadd.f32 %v3863, %v3873
    %v3883 = vadd.f32 %v3864, %v3873
    %v3884 = vadd.f32 %v3865, %v3873
    %v3885 = vadd.f32 %v3866, %v3873
    %v3886 = vadd.f32 %v3867, %v3873
    %v3887 = vadd.f32 %v3868, %v3873
    %v3888 = vadd.f32 %v3869, %v3873
    %v3889 = vadd.f32 %v3870, %v3873
    %v3890 = vadd.f32 %v3871, %v3873
    %vm3891 = vcmp.gt.f32.partialorder %v3875, 0.0
    %vm3892 = vcmp.gt.f32.partialorder %v3876, 0.0
    %vm3893 = vcmp.gt.f32.partialorder %v3877, 0.0
    %vm3894 = vcmp.gt.f32.partialorder %v3878, 0.0
    %vm3895 = vcmp.gt.f32.partialorder %v3879, 0.0
    %vm3896 = vcmp.gt.f32.partialorder %v3880, 0.0
    %vm3897 = vcmp.gt.f32.partialorder %v3881, 0.0
    %vm3898 = vcmp.gt.f32.partialorder %v3882, 0.0
    %vm3899 = vcmp.gt.f32.partialorder %v3883, 0.0
    %vm3900 = vcmp.gt.f32.partialorder %v3884, 0.0
    %vm3901 = vcmp.gt.f32.partialorder %v3885, 0.0
    %vm3902 = vcmp.gt.f32.partialorder %v3886, 0.0
    %vm3903 = vcmp.gt.f32.partialorder %v3887, 0.0
    %vm3904 = vcmp.gt.f32.partialorder %v3888, 0.0
    %vm3905 = vcmp.gt.f32.partialorder %v3889, 0.0
    %vm3906 = vcmp.gt.f32.partialorder %v3890, 0.0
    %v3907 = vmul.f32 %v3875, 0.1
    %v3908 = vmul.f32 %v3876, 0.1
    %v3909 = vmul.f32 %v3877, 0.1
    %v3910 = vmul.f32 %v3878, 0.1
    %v3911 = vmul.f32 %v3879, 0.1
    %v3912 = vmul.f32 %v3880, 0.1
    %v3913 = vmul.f32 %v3881, 0.1
    %v3914 = vmul.f32 %v3882, 0.1
    %v3915 = vmul.f32 %v3883, 0.1
    %v3916 = vmul.f32 %v3884, 0.1
    %v3917 = vmul.f32 %v3885, 0.1
    %v3918 = vmul.f32 %v3886, 0.1
    %v3919 = vmul.f32 %v3887, 0.1
    %v3920 = vmul.f32 %v3888, 0.1
    %v3921 = vmul.f32 %v3889, 0.1
    %v3922 = vmul.f32 %v3890, 0.1
    %v3923 = vsel %vm3891, %v3875, %v3907
    %v3924 = vsel %vm3892, %v3876, %v3908
    %v3925 = vsel %vm3893, %v3877, %v3909
    %v3926 = vsel %vm3894, %v3878, %v3910
    %v3927 = vsel %vm3895, %v3879, %v3911
    %v3928 = vsel %vm3896, %v3880, %v3912
    %v3929 = vsel %vm3897, %v3881, %v3913
    %v3930 = vsel %vm3898, %v3882, %v3914
    %v3931 = vsel %vm3899, %v3883, %v3915
    %v3932 = vsel %vm3900, %v3884, %v3916
    %v3933 = vsel %vm3901, %v3885, %v3917
    %v3934 = vsel %vm3902, %v3886, %v3918
    %v3935 = vsel %vm3903, %v3887, %v3919
    %v3936 = vsel %vm3904, %v3888, %v3920
    %v3937 = vsel %vm3905, %v3889, %v3921
    %v3938 = vsel %vm3906, %v3890, %v3922
    %3955 = vrot.lane.b32.xlu0 %v3923, 8
    %v3956 = vpop.permute.xlu0 %3955
    %3957 = vrot.lane.b32.xlu0 %v3924, 8
    %v3958 = vpop.permute.xlu0 %3957
    %3959 = vrot.lane.b32.xlu0 %v3925, 8
    %v3960 = vpop.permute.xlu0 %3959
    %3961 = vrot.lane.b32.xlu0 %v3926, 8
    %v3962 = vpop.permute.xlu0 %3961
    %3963 = vrot.lane.b32.xlu0 %v3927, 8
    %v3964 = vpop.permute.xlu0 %3963
    %3965 = vrot.lane.b32.xlu0 %v3928, 8
    %v3966 = vpop.permute.xlu0 %3965
    %3967 = vrot.lane.b32.xlu0 %v3929, 8
    %v3968 = vpop.permute.xlu0 %3967
    %3969 = vrot.lane.b32.xlu0 %v3930, 8
    %v3970 = vpop.permute.xlu0 %3969
    %3971 = vrot.lane.b32.xlu0 %v3931, 8
    %v3972 = vpop.permute.xlu0 %3971
    %3973 = vrot.lane.b32.xlu0 %v3932, 8
    %v3974 = vpop.permute.xlu0 %3973
    %3975 = vrot.lane.b32.xlu0 %v3933, 8
    %v3976 = vpop.permute.xlu0 %3975
    %3977 = vrot.lane.b32.xlu0 %v3934, 8
    %v3978 = vpop.permute.xlu0 %3977
    %3979 = vrot.lane.b32.xlu0 %v3935, 8
    %v3980 = vpop.permute.xlu0 %3979
    %3981 = vrot.lane.b32.xlu0 %v3936, 8
    %v3982 = vpop.permute.xlu0 %3981
    %3983 = vrot.lane.b32.xlu0 %v3937, 8
    %v3984 = vpop.permute.xlu0 %3983
    %3985 = vrot.lane.b32.xlu0 %v3938, 8
    %v3986 = vpop.permute.xlu0 %3985
    %v4003 = vsel %vm2301, %v3782, %v3956
    %v4004 = vsel %vm2301, %v3783, %v3958
    %v4005 = vsel %vm2301, %v3784, %v3960
    %v4006 = vsel %vm2301, %v3785, %v3962
    %v4007 = vsel %vm2301, %v3786, %v3964
    %v4008 = vsel %vm2301, %v3787, %v3966
    %v4009 = vsel %vm2301, %v3788, %v3968
    %v4010 = vsel %vm2301, %v3789, %v3970
    %v4011 = vsel %vm2301, %v3790, %v3972
    %v4012 = vsel %vm2301, %v3791, %v3974
    %v4013 = vsel %vm2301, %v3792, %v3976
    %v4014 = vsel %vm2301, %v3793, %v3978
    %v4015 = vsel %vm2301, %v3794, %v3980
    %v4016 = vsel %vm2301, %v3795, %v3982
    %v4017 = vsel %vm2301, %v3796, %v3984
    %v4018 = vsel %vm2301, %v3797, %v3986
    %v4019 = vpack.c.bf16 %v4004, %v4003
    %v4020 = vpack.c.bf16 %v4006, %v4005
    %v4021 = vpack.c.bf16 %v4008, %v4007
    %v4022 = vpack.c.bf16 %v4010, %v4009
    %v4023 = vpack.c.bf16 %v4012, %v4011
    %v4024 = vpack.c.bf16 %v4014, %v4013
    %v4025 = vpack.c.bf16 %v4016, %v4015
    %v4026 = vpack.c.bf16 %v4018, %v4017
    %v4029 = vunpack.c.l.b16 %v670
    %v4030 = vunpack.c.l.b16 %v671
    %v4031 = vpack.c.b16 %v4030, %v4029
    %v4034 = vsel %vm822, %v4019, 0
    %v4037 = vsel %vm822, %v4020, 0
    %v4040 = vsel %vm822, %v4021, 0
    %v4043 = vsel %vm822, %v4022, 0
    %v4046 = vsel %vm822, %v4023, 0
    %v4049 = vsel %vm822, %v4024, 0
    %v4052 = vsel %vm822, %v4025, 0
    %v4055 = vsel %vm822, %v4026, 0
    %4057 = vmatpush.bf16.msra.mxu0 0
    %4058 = vmatpush.bf16.msra.mxu0 0
    %4059 = vmatpush.bf16.msra.mxu0 0
    %4060 = vmatpush.bf16.msra.mxu0 0
    %4061 = vmatpush.bf16.msra.mxu0 0
    %4062 = vmatpush.bf16.msra.mxu0 0
    %4063 = vmatpush.bf16.msra.mxu0 0
    %4064 = vmatpush.bf16.msra.mxu0 %v4031
    %4065 = vmatmul.bf16.gmra.mxu0 %v4034
    %v4066 = vpop.f32.mrf.mxu0
    %v4067 = vadd.f32 0.0, %v4066
    %v4068 = vpop.f32.mrf.mxu0
    %v4069 = vadd.f32 0.0, %v4068
    %4070 = vmatmul.bf16.gmra.mxu0 %v4037
    %v4071 = vpop.f32.mrf.mxu0
    %v4072 = vadd.f32 0.0, %v4071
    %v4073 = vpop.f32.mrf.mxu0
    %v4074 = vadd.f32 0.0, %v4073
    %4075 = vmatmul.bf16.gmra.mxu0 %v4040
    %v4076 = vpop.f32.mrf.mxu0
    %v4077 = vadd.f32 0.0, %v4076
    %v4078 = vpop.f32.mrf.mxu0
    %v4079 = vadd.f32 0.0, %v4078
    %4080 = vmatmul.bf16.gmra.mxu0 %v4043
    %v4081 = vpop.f32.mrf.mxu0
    %v4082 = vadd.f32 0.0, %v4081
    %v4083 = vpop.f32.mrf.mxu0
    %v4084 = vadd.f32 0.0, %v4083
    %4085 = vmatmul.bf16.gmra.mxu0 %v4046
    %v4086 = vpop.f32.mrf.mxu0
    %v4087 = vadd.f32 0.0, %v4086
    %v4088 = vpop.f32.mrf.mxu0
    %v4089 = vadd.f32 0.0, %v4088
    %4090 = vmatmul.bf16.gmra.mxu0 %v4049
    %v4091 = vpop.f32.mrf.mxu0
    %v4092 = vadd.f32 0.0, %v4091
    %v4093 = vpop.f32.mrf.mxu0
    %v4094 = vadd.f32 0.0, %v4093
    %4095 = vmatmul.bf16.gmra.mxu0 %v4052
    %v4096 = vpop.f32.mrf.mxu0
    %v4097 = vadd.f32 0.0, %v4096
    %v4098 = vpop.f32.mrf.mxu0
    %v4099 = vadd.f32 0.0, %v4098
    %4100 = vmatmul.bf16.gmra.mxu0 %v4055
    %v4101 = vpop.f32.mrf.mxu0
    %v4102 = vadd.f32 0.0, %v4101
    %v4103 = vpop.f32.mrf.mxu0
    %v4104 = vadd.f32 0.0, %v4103
    %4105 = vdwg.mxu0
    %v4107 = vperm.slane %v669, 0
    %v4109 = vmul.f32 %v4067, %v4107
    %v4110 = vmul.f32 %v4069, %v4107
    %v4111 = vmul.f32 %v4072, %v4107
    %v4112 = vmul.f32 %v4074, %v4107
    %v4113 = vmul.f32 %v4077, %v4107
    %v4114 = vmul.f32 %v4079, %v4107
    %v4115 = vmul.f32 %v4082, %v4107
    %v4116 = vmul.f32 %v4084, %v4107
    %v4117 = vmul.f32 %v4087, %v4107
    %v4118 = vmul.f32 %v4089, %v4107
    %v4119 = vmul.f32 %v4092, %v4107
    %v4120 = vmul.f32 %v4094, %v4107
    %v4121 = vmul.f32 %v4097, %v4107
    %v4122 = vmul.f32 %v4099, %v4107
    %v4123 = vmul.f32 %v4102, %v4107
    %v4124 = vmul.f32 %v4104, %v4107
    %v4126 = vperm.slane %v668, 0
    %v4128 = vadd.f32 %v4109, %v4126
    %v4129 = vadd.f32 %v4110, %v4126
    %v4130 = vadd.f32 %v4111, %v4126
    %v4131 = vadd.f32 %v4112, %v4126
    %v4132 = vadd.f32 %v4113, %v4126
    %v4133 = vadd.f32 %v4114, %v4126
    %v4134 = vadd.f32 %v4115, %v4126
    %v4135 = vadd.f32 %v4116, %v4126
    %v4136 = vadd.f32 %v4117, %v4126
    %v4137 = vadd.f32 %v4118, %v4126
    %v4138 = vadd.f32 %v4119, %v4126
    %v4139 = vadd.f32 %v4120, %v4126
    %v4140 = vadd.f32 %v4121, %v4126
    %v4141 = vadd.f32 %v4122, %v4126
    %v4142 = vadd.f32 %v4123, %v4126
    %v4143 = vadd.f32 %v4124, %v4126
    %v4144 = vadd.f32 %v4128, 3.0
    %v4145 = vadd.f32 %v4129, 3.0
    %v4146 = vadd.f32 %v4130, 3.0
    %v4147 = vadd.f32 %v4131, 3.0
    %v4148 = vadd.f32 %v4132, 3.0
    %v4149 = vadd.f32 %v4133, 3.0
    %v4150 = vadd.f32 %v4134, 3.0
    %v4151 = vadd.f32 %v4135, 3.0
    %v4152 = vadd.f32 %v4136, 3.0
    %v4153 = vadd.f32 %v4137, 3.0
    %v4154 = vadd.f32 %v4138, 3.0
    %v4155 = vadd.f32 %v4139, 3.0
    %v4156 = vadd.f32 %v4140, 3.0
    %v4157 = vadd.f32 %v4141, 3.0
    %v4158 = vadd.f32 %v4142, 3.0
    %v4159 = vadd.f32 %v4143, 3.0
    %v4160 = vmax.f32 %v4144, 0.0
    %v4161 = vmax.f32 %v4145, 0.0
    %v4162 = vmax.f32 %v4146, 0.0
    %v4163 = vmax.f32 %v4147, 0.0
    %v4164 = vmax.f32 %v4148, 0.0
    %v4165 = vmax.f32 %v4149, 0.0
    %v4166 = vmax.f32 %v4150, 0.0
    %v4167 = vmax.f32 %v4151, 0.0
    %v4168 = vmax.f32 %v4152, 0.0
    %v4169 = vmax.f32 %v4153, 0.0
    %v4170 = vmax.f32 %v4154, 0.0
    %v4171 = vmax.f32 %v4155, 0.0
    %v4172 = vmax.f32 %v4156, 0.0
    %v4173 = vmax.f32 %v4157, 0.0
    %v4174 = vmax.f32 %v4158, 0.0
    %v4175 = vmax.f32 %v4159, 0.0
    %v4176 = vmin.f32 %v4160, 6.0
    %v4177 = vmin.f32 %v4161, 6.0
    %v4178 = vmin.f32 %v4162, 6.0
    %v4179 = vmin.f32 %v4163, 6.0
    %v4180 = vmin.f32 %v4164, 6.0
    %v4181 = vmin.f32 %v4165, 6.0
    %v4182 = vmin.f32 %v4166, 6.0
    %v4183 = vmin.f32 %v4167, 6.0
    %v4184 = vmin.f32 %v4168, 6.0
    %v4185 = vmin.f32 %v4169, 6.0
    %v4186 = vmin.f32 %v4170, 6.0
    %v4187 = vmin.f32 %v4171, 6.0
    %v4188 = vmin.f32 %v4172, 6.0
    %v4189 = vmin.f32 %v4173, 6.0
    %v4190 = vmin.f32 %v4174, 6.0
    %v4191 = vmin.f32 %v4175, 6.0
    %v4192 = vmul.f32 %v4128, %v4176
    %v4193 = vmul.f32 %v4129, %v4177
    %v4194 = vmul.f32 %v4130, %v4178
    %v4195 = vmul.f32 %v4131, %v4179
    %v4196 = vmul.f32 %v4132, %v4180
    %v4197 = vmul.f32 %v4133, %v4181
    %v4198 = vmul.f32 %v4134, %v4182
    %v4199 = vmul.f32 %v4135, %v4183
    %v4200 = vmul.f32 %v4136, %v4184
    %v4201 = vmul.f32 %v4137, %v4185
    %v4202 = vmul.f32 %v4138, %v4186
    %v4203 = vmul.f32 %v4139, %v4187
    %v4204 = vmul.f32 %v4140, %v4188
    %v4205 = vmul.f32 %v4141, %v4189
    %v4206 = vmul.f32 %v4142, %v4190
    %v4207 = vmul.f32 %v4143, %v4191
    %v4208 = vmul.f32 %v4192, 0.16666667
    %v4209 = vmul.f32 %v4193, 0.16666667
    %v4210 = vmul.f32 %v4194, 0.16666667
    %v4211 = vmul.f32 %v4195, 0.16666667
    %v4212 = vmul.f32 %v4196, 0.16666667
    %v4213 = vmul.f32 %v4197, 0.16666667
    %v4214 = vmul.f32 %v4198, 0.16666667
    %v4215 = vmul.f32 %v4199, 0.16666667
    %v4216 = vmul.f32 %v4200, 0.16666667
    %v4217 = vmul.f32 %v4201, 0.16666667
    %v4218 = vmul.f32 %v4202, 0.16666667
    %v4219 = vmul.f32 %v4203, 0.16666667
    %v4220 = vmul.f32 %v4204, 0.16666667
    %v4221 = vmul.f32 %v4205, 0.16666667
    %v4222 = vmul.f32 %v4206, 0.16666667
    %v4223 = vmul.f32 %v4207, 0.16666667
    %v4224 = vpack.c.bf16 %v4209, %v4208
    %v4225 = vpack.c.bf16 %v4211, %v4210
    %v4226 = vpack.c.bf16 %v4213, %v4212
    %v4227 = vpack.c.bf16 %v4215, %v4214
    %v4228 = vpack.c.bf16 %v4217, %v4216
    %v4229 = vpack.c.bf16 %v4219, %v4218
    %v4230 = vpack.c.bf16 %v4221, %v4220
    %v4231 = vpack.c.bf16 %v4223, %v4222
    %v4234 = vunpack.c.l.b16 %v608
    %v4235 = vunpack.c.l.b16 %v609
    %v4236 = vpack.c.b16 %v4235, %v4234
    %v4239 = vsel %vm822, %v4224, 0
    %v4242 = vsel %vm822, %v4225, 0
    %v4245 = vsel %vm822, %v4226, 0
    %v4248 = vsel %vm822, %v4227, 0
    %v4251 = vsel %vm822, %v4228, 0
    %v4254 = vsel %vm822, %v4229, 0
    %v4257 = vsel %vm822, %v4230, 0
    %v4260 = vsel %vm822, %v4231, 0
    %4262 = vmatpush.bf16.msra.mxu0 0
    %4263 = vmatpush.bf16.msra.mxu0 0
    %4264 = vmatpush.bf16.msra.mxu0 0
    %4265 = vmatpush.bf16.msra.mxu0 0
    %4266 = vmatpush.bf16.msra.mxu0 0
    %4267 = vmatpush.bf16.msra.mxu0 0
    %4268 = vmatpush.bf16.msra.mxu0 0
    %4269 = vmatpush.bf16.msra.mxu0 %v4236
    %4270 = vmatmul.bf16.gmra.mxu0 %v4239
    %v4271 = vpop.f32.mrf.mxu0
    %v4272 = vadd.f32 0.0, %v4271
    %v4273 = vpop.f32.mrf.mxu0
    %v4274 = vadd.f32 0.0, %v4273
    %4275 = vmatmul.bf16.gmra.mxu0 %v4242
    %v4276 = vpop.f32.mrf.mxu0
    %v4277 = vadd.f32 0.0, %v4276
    %v4278 = vpop.f32.mrf.mxu0
    %v4279 = vadd.f32 0.0, %v4278
    %4280 = vmatmul.bf16.gmra.mxu0 %v4245
    %v4281 = vpop.f32.mrf.mxu0
    %v4282 = vadd.f32 0.0, %v4281
    %v4283 = vpop.f32.mrf.mxu0
    %v4284 = vadd.f32 0.0, %v4283
    %4285 = vmatmul.bf16.gmra.mxu0 %v4248
    %v4286 = vpop.f32.mrf.mxu0
    %v4287 = vadd.f32 0.0, %v4286
    %v4288 = vpop.f32.mrf.mxu0
    %v4289 = vadd.f32 0.0, %v4288
    %4290 = vmatmul.bf16.gmra.mxu0 %v4251
    %v4291 = vpop.f32.mrf.mxu0
    %v4292 = vadd.f32 0.0, %v4291
    %v4293 = vpop.f32.mrf.mxu0
    %v4294 = vadd.f32 0.0, %v4293
    %4295 = vmatmul.bf16.gmra.mxu0 %v4254
    %v4296 = vpop.f32.mrf.mxu0
    %v4297 = vadd.f32 0.0, %v4296
    %v4298 = vpop.f32.mrf.mxu0
    %v4299 = vadd.f32 0.0, %v4298
    %4300 = vmatmul.bf16.gmra.mxu0 %v4257
    %v4301 = vpop.f32.mrf.mxu0
    %v4302 = vadd.f32 0.0, %v4301
    %v4303 = vpop.f32.mrf.mxu0
    %v4304 = vadd.f32 0.0, %v4303
    %4305 = vmatmul.bf16.gmra.mxu0 %v4260
    %v4306 = vpop.f32.mrf.mxu0
    %v4307 = vadd.f32 0.0, %v4306
    %v4308 = vpop.f32.mrf.mxu0
    %v4309 = vadd.f32 0.0, %v4308
    %4310 = vdwg.mxu0
    %v4311 = vpack.c.bf16 %v4274, %v4272
    %v4312 = vpack.c.bf16 %v4279, %v4277
    %v4313 = vpack.c.bf16 %v4284, %v4282
    %v4314 = vpack.c.bf16 %v4289, %v4287
    %v4315 = vpack.c.bf16 %v4294, %v4292
    %v4316 = vpack.c.bf16 %v4299, %v4297
    %v4317 = vpack.c.bf16 %v4304, %v4302
    %v4318 = vpack.c.bf16 %v4309, %v4307
    %v4383 = vunpack.c.l.b16 %v458
    %v4384 = vunpack.c.l.b16 %v459
    %v4385 = vunpack.c.l.b16 %v460
    %v4386 = vunpack.c.l.b16 %v461
    %v4387 = vunpack.c.l.b16 %v462
    %v4388 = vunpack.c.l.b16 %v463
    %v4389 = vunpack.c.l.b16 %v464
    %v4390 = vunpack.c.l.b16 %v465
    %v4391 = vunpack.c.l.b16 %v466
    %v4392 = vunpack.c.l.b16 %v467
    %v4393 = vunpack.c.l.b16 %v468
    %v4394 = vunpack.c.l.b16 %v469
    %v4395 = vunpack.c.l.b16 %v470
    %v4396 = vunpack.c.l.b16 %v471
    %v4397 = vunpack.c.l.b16 %v472
    %v4398 = vunpack.c.l.b16 %v473
    %v4399 = vunpack.c.l.b16 %v474
    %v4400 = vunpack.c.l.b16 %v475
    %v4401 = vunpack.c.l.b16 %v476
    %v4402 = vunpack.c.l.b16 %v477
    %v4403 = vunpack.c.l.b16 %v478
    %v4404 = vunpack.c.l.b16 %v479
    %v4405 = vunpack.c.l.b16 %v480
    %v4406 = vunpack.c.l.b16 %v481
    %v4407 = vunpack.c.l.b16 %v482
    %v4408 = vunpack.c.l.b16 %v483
    %v4409 = vunpack.c.l.b16 %v484
    %v4410 = vunpack.c.l.b16 %v485
    %v4411 = vunpack.c.l.b16 %v486
    %v4412 = vunpack.c.l.b16 %v487
    %v4413 = vunpack.c.l.b16 %v488
    %v4414 = vunpack.c.l.b16 %v489
    %v4415 = vunpack.c.l.b16 %v490
    %v4416 = vunpack.c.l.b16 %v491
    %v4417 = vunpack.c.l.b16 %v492
    %v4418 = vunpack.c.l.b16 %v493
    %v4419 = vunpack.c.l.b16 %v494
    %v4420 = vunpack.c.l.b16 %v495
    %v4421 = vunpack.c.l.b16 %v496
    %v4422 = vunpack.c.l.b16 %v497
    %v4423 = vunpack.c.l.b16 %v498
    %v4424 = vunpack.c.l.b16 %v499
    %v4425 = vunpack.c.l.b16 %v500
    %v4426 = vunpack.c.l.b16 %v501
    %v4427 = vunpack.c.l.b16 %v502
    %v4428 = vunpack.c.l.b16 %v503
    %v4429 = vunpack.c.l.b16 %v504
    %v4430 = vunpack.c.l.b16 %v505
    %v4431 = vunpack.c.l.b16 %v506
    %v4432 = vunpack.c.l.b16 %v507
    %v4433 = vunpack.c.l.b16 %v508
    %v4434 = vunpack.c.l.b16 %v509
    %v4435 = vunpack.c.l.b16 %v510
    %v4436 = vunpack.c.l.b16 %v511
    %v4437 = vunpack.c.l.b16 %v512
    %v4438 = vunpack.c.l.b16 %v513
    %v4439 = vunpack.c.l.b16 %v514
    %v4440 = vunpack.c.l.b16 %v515
    %v4441 = vunpack.c.l.b16 %v516
    %v4442 = vunpack.c.l.b16 %v517
    %v4443 = vunpack.c.l.b16 %v518
    %v4444 = vunpack.c.l.b16 %v519
    %v4445 = vunpack.c.l.b16 %v520
    %v4446 = vunpack.c.l.b16 %v521
    %v4447 = vpack.c.b16 %v4384, %v4383
    %v4448 = vpack.c.b16 %v4386, %v4385
    %v4449 = vpack.c.b16 %v4388, %v4387
    %v4450 = vpack.c.b16 %v4390, %v4389
    %v4451 = vpack.c.b16 %v4392, %v4391
    %v4452 = vpack.c.b16 %v4394, %v4393
    %v4453 = vpack.c.b16 %v4396, %v4395
    %v4454 = vpack.c.b16 %v4398, %v4397
    %v4455 = vpack.c.b16 %v4400, %v4399
    %v4456 = vpack.c.b16 %v4402, %v4401
    %v4457 = vpack.c.b16 %v4404, %v4403
    %v4458 = vpack.c.b16 %v4406, %v4405
    %v4459 = vpack.c.b16 %v4408, %v4407
    %v4460 = vpack.c.b16 %v4410, %v4409
    %v4461 = vpack.c.b16 %v4412, %v4411
    %v4462 = vpack.c.b16 %v4414, %v4413
    %v4463 = vpack.c.b16 %v4416, %v4415
    %v4464 = vpack.c.b16 %v4418, %v4417
    %v4465 = vpack.c.b16 %v4420, %v4419
    %v4466 = vpack.c.b16 %v4422, %v4421
    %v4467 = vpack.c.b16 %v4424, %v4423
    %v4468 = vpack.c.b16 %v4426, %v4425
    %v4469 = vpack.c.b16 %v4428, %v4427
    %v4470 = vpack.c.b16 %v4430, %v4429
    %v4471 = vpack.c.b16 %v4432, %v4431
    %v4472 = vpack.c.b16 %v4434, %v4433
    %v4473 = vpack.c.b16 %v4436, %v4435
    %v4474 = vpack.c.b16 %v4438, %v4437
    %v4475 = vpack.c.b16 %v4440, %v4439
    %v4476 = vpack.c.b16 %v4442, %v4441
    %v4477 = vpack.c.b16 %v4444, %v4443
    %v4478 = vpack.c.b16 %v4446, %v4445
    %v4480 = vsel %vm2301, %v4447, 0
    %v4483 = vsel %vm2301, %v4448, 0
    %v4486 = vsel %vm2301, %v4449, 0
    %v4489 = vsel %vm2301, %v4450, 0
    %v4492 = vsel %vm2301, %v4451, 0
    %v4495 = vsel %vm2301, %v4452, 0
    %v4498 = vsel %vm2301, %v4453, 0
    %v4501 = vsel %vm2301, %v4454, 0
    %v4504 = vsel %vm2301, %v4455, 0
    %v4507 = vsel %vm2301, %v4456, 0
    %v4510 = vsel %vm2301, %v4457, 0
    %v4513 = vsel %vm2301, %v4458, 0
    %v4516 = vsel %vm2301, %v4459, 0
    %v4519 = vsel %vm2301, %v4460, 0
    %v4522 = vsel %vm2301, %v4461, 0
    %v4525 = vsel %vm2301, %v4462, 0
    %v4528 = vsel %vm2301, %v4463, 0
    %v4531 = vsel %vm2301, %v4464, 0
    %v4534 = vsel %vm2301, %v4465, 0
    %v4537 = vsel %vm2301, %v4466, 0
    %v4540 = vsel %vm2301, %v4467, 0
    %v4543 = vsel %vm2301, %v4468, 0
    %v4546 = vsel %vm2301, %v4469, 0
    %v4549 = vsel %vm2301, %v4470, 0
    %v4552 = vsel %vm2301, %v4471, 0
    %v4555 = vsel %vm2301, %v4472, 0
    %v4558 = vsel %vm2301, %v4473, 0
    %v4561 = vsel %vm2301, %v4474, 0
    %v4564 = vsel %vm2301, %v4475, 0
    %v4567 = vsel %vm2301, %v4476, 0
    %v4570 = vsel %vm2301, %v4477, 0
    %v4573 = vsel %vm2301, %v4478, 0
    %v4576 = vsel %vm2326, %v610, 0
    %4578 = vmatpush.bf16.msra.mxu0 0
    %4579 = vmatpush.bf16.msra.mxu0 0
    %4580 = vmatpush.bf16.msra.mxu0 0
    %4581 = vmatpush.bf16.msra.mxu0 0
    %4582 = vmatpush.bf16.msra.mxu0 0
    %4583 = vmatpush.bf16.msra.mxu0 0
    %4584 = vmatpush.bf16.msra.mxu0 0
    %4585 = vmatpush.bf16.msra.mxu0 %v4576
    %4586 = vmatmul.bf16.gmra.mxu0 %v4480
    %v4587 = vpop.f32.mrf.mxu0
    %v4588 = vadd.f32 0.0, %v4587
    %v4589 = vpop.f32.mrf.mxu0
    %v4590 = vadd.f32 0.0, %v4589
    %4591 = vmatmul.bf16.gmra.mxu0 %v4483
    %v4592 = vpop.f32.mrf.mxu0
    %v4593 = vadd.f32 0.0, %v4592
    %v4594 = vpop.f32.mrf.mxu0
    %v4595 = vadd.f32 0.0, %v4594
    %4596 = vmatmul.bf16.gmra.mxu0 %v4486
    %v4597 = vpop.f32.mrf.mxu0
    %v4598 = vadd.f32 0.0, %v4597
    %v4599 = vpop.f32.mrf.mxu0
    %v4600 = vadd.f32 0.0, %v4599
    %4601 = vmatmul.bf16.gmra.mxu0 %v4489
    %v4602 = vpop.f32.mrf.mxu0
    %v4603 = vadd.f32 0.0, %v4602
    %v4604 = vpop.f32.mrf.mxu0
    %v4605 = vadd.f32 0.0, %v4604
    %4606 = vmatmul.bf16.gmra.mxu0 %v4492
    %v4607 = vpop.f32.mrf.mxu0
    %v4608 = vadd.f32 0.0, %v4607
    %v4609 = vpop.f32.mrf.mxu0
    %v4610 = vadd.f32 0.0, %v4609
    %4611 = vmatmul.bf16.gmra.mxu0 %v4495
    %v4612 = vpop.f32.mrf.mxu0
    %v4613 = vadd.f32 0.0, %v4612
    %v4614 = vpop.f32.mrf.mxu0
    %v4615 = vadd.f32 0.0, %v4614
    %4616 = vmatmul.bf16.gmra.mxu0 %v4498
    %v4617 = vpop.f32.mrf.mxu0
    %v4618 = vadd.f32 0.0, %v4617
    %v4619 = vpop.f32.mrf.mxu0
    %v4620 = vadd.f32 0.0, %v4619
    %4621 = vmatmul.bf16.gmra.mxu0 %v4501
    %v4622 = vpop.f32.mrf.mxu0
    %v4623 = vadd.f32 0.0, %v4622
    %v4624 = vpop.f32.mrf.mxu0
    %v4625 = vadd.f32 0.0, %v4624
    %4626 = vmatmul.bf16.gmra.mxu0 %v4504
    %v4627 = vpop.f32.mrf.mxu0
    %v4628 = vadd.f32 0.0, %v4627
    %v4629 = vpop.f32.mrf.mxu0
    %v4630 = vadd.f32 0.0, %v4629
    %4631 = vmatmul.bf16.gmra.mxu0 %v4507
    %v4632 = vpop.f32.mrf.mxu0
    %v4633 = vadd.f32 0.0, %v4632
    %v4634 = vpop.f32.mrf.mxu0
    %v4635 = vadd.f32 0.0, %v4634
    %4636 = vmatmul.bf16.gmra.mxu0 %v4510
    %v4637 = vpop.f32.mrf.mxu0
    %v4638 = vadd.f32 0.0, %v4637
    %v4639 = vpop.f32.mrf.mxu0
    %v4640 = vadd.f32 0.0, %v4639
    %4641 = vmatmul.bf16.gmra.mxu0 %v4513
    %v4642 = vpop.f32.mrf.mxu0
    %v4643 = vadd.f32 0.0, %v4642
    %v4644 = vpop.f32.mrf.mxu0
    %v4645 = vadd.f32 0.0, %v4644
    %4646 = vmatmul.bf16.gmra.mxu0 %v4516
    %v4647 = vpop.f32.mrf.mxu0
    %v4648 = vadd.f32 0.0, %v4647
    %v4649 = vpop.f32.mrf.mxu0
    %v4650 = vadd.f32 0.0, %v4649
    %4651 = vmatmul.bf16.gmra.mxu0 %v4519
    %v4652 = vpop.f32.mrf.mxu0
    %v4653 = vadd.f32 0.0, %v4652
    %v4654 = vpop.f32.mrf.mxu0
    %v4655 = vadd.f32 0.0, %v4654
    %4656 = vmatmul.bf16.gmra.mxu0 %v4522
    %v4657 = vpop.f32.mrf.mxu0
    %v4658 = vadd.f32 0.0, %v4657
    %v4659 = vpop.f32.mrf.mxu0
    %v4660 = vadd.f32 0.0, %v4659
    %4661 = vmatmul.bf16.gmra.mxu0 %v4525
    %v4662 = vpop.f32.mrf.mxu0
    %v4663 = vadd.f32 0.0, %v4662
    %v4664 = vpop.f32.mrf.mxu0
    %v4665 = vadd.f32 0.0, %v4664
    %4666 = vmatmul.bf16.gmra.mxu0 %v4528
    %v4667 = vpop.f32.mrf.mxu0
    %v4668 = vadd.f32 0.0, %v4667
    %v4669 = vpop.f32.mrf.mxu0
    %v4670 = vadd.f32 0.0, %v4669
    %4671 = vmatmul.bf16.gmra.mxu0 %v4531
    %v4672 = vpop.f32.mrf.mxu0
    %v4673 = vadd.f32 0.0, %v4672
    %v4674 = vpop.f32.mrf.mxu0
    %v4675 = vadd.f32 0.0, %v4674
    %4676 = vmatmul.bf16.gmra.mxu0 %v4534
    %v4677 = vpop.f32.mrf.mxu0
    %v4678 = vadd.f32 0.0, %v4677
    %v4679 = vpop.f32.mrf.mxu0
    %v4680 = vadd.f32 0.0, %v4679
    %4681 = vmatmul.bf16.gmra.mxu0 %v4537
    %v4682 = vpop.f32.mrf.mxu0
    %v4683 = vadd.f32 0.0, %v4682
    %v4684 = vpop.f32.mrf.mxu0
    %v4685 = vadd.f32 0.0, %v4684
    %4686 = vmatmul.bf16.gmra.mxu0 %v4540
    %v4687 = vpop.f32.mrf.mxu0
    %v4688 = vadd.f32 0.0, %v4687
    %v4689 = vpop.f32.mrf.mxu0
    %v4690 = vadd.f32 0.0, %v4689
    %4691 = vmatmul.bf16.gmra.mxu0 %v4543
    %v4692 = vpop.f32.mrf.mxu0
    %v4693 = vadd.f32 0.0, %v4692
    %v4694 = vpop.f32.mrf.mxu0
    %v4695 = vadd.f32 0.0, %v4694
    %4696 = vmatmul.bf16.gmra.mxu0 %v4546
    %v4697 = vpop.f32.mrf.mxu0
    %v4698 = vadd.f32 0.0, %v4697
    %v4699 = vpop.f32.mrf.mxu0
    %v4700 = vadd.f32 0.0, %v4699
    %4701 = vmatmul.bf16.gmra.mxu0 %v4549
    %v4702 = vpop.f32.mrf.mxu0
    %v4703 = vadd.f32 0.0, %v4702
    %v4704 = vpop.f32.mrf.mxu0
    %v4705 = vadd.f32 0.0, %v4704
    %4706 = vmatmul.bf16.gmra.mxu0 %v4552
    %v4707 = vpop.f32.mrf.mxu0
    %v4708 = vadd.f32 0.0, %v4707
    %v4709 = vpop.f32.mrf.mxu0
    %v4710 = vadd.f32 0.0, %v4709
    %4711 = vmatmul.bf16.gmra.mxu0 %v4555
    %v4712 = vpop.f32.mrf.mxu0
    %v4713 = vadd.f32 0.0, %v4712
    %v4714 = vpop.f32.mrf.mxu0
    %v4715 = vadd.f32 0.0, %v4714
    %4716 = vmatmul.bf16.gmra.mxu0 %v4558
    %v4717 = vpop.f32.mrf.mxu0
    %v4718 = vadd.f32 0.0, %v4717
    %v4719 = vpop.f32.mrf.mxu0
    %v4720 = vadd.f32 0.0, %v4719
    %4721 = vmatmul.bf16.gmra.mxu0 %v4561
    %v4722 = vpop.f32.mrf.mxu0
    %v4723 = vadd.f32 0.0, %v4722
    %v4724 = vpop.f32.mrf.mxu0
    %v4725 = vadd.f32 0.0, %v4724
    %4726 = vmatmul.bf16.gmra.mxu0 %v4564
    %v4727 = vpop.f32.mrf.mxu0
    %v4728 = vadd.f32 0.0, %v4727
    %v4729 = vpop.f32.mrf.mxu0
    %v4730 = vadd.f32 0.0, %v4729
    %4731 = vmatmul.bf16.gmra.mxu0 %v4567
    %v4732 = vpop.f32.mrf.mxu0
    %v4733 = vadd.f32 0.0, %v4732
    %v4734 = vpop.f32.mrf.mxu0
    %v4735 = vadd.f32 0.0, %v4734
    %4736 = vmatmul.bf16.gmra.mxu0 %v4570
    %v4737 = vpop.f32.mrf.mxu0
    %v4738 = vadd.f32 0.0, %v4737
    %v4739 = vpop.f32.mrf.mxu0
    %v4740 = vadd.f32 0.0, %v4739
    %4741 = vmatmul.bf16.gmra.mxu0 %v4573
    %v4742 = vpop.f32.mrf.mxu0
    %v4743 = vadd.f32 0.0, %v4742
    %v4744 = vpop.f32.mrf.mxu0
    %v4745 = vadd.f32 0.0, %v4744
    %4746 = vdwg.mxu0
    %v4811 = vunpack.c.l.b16 %v542
    %v4812 = vunpack.c.l.b16 %v543
    %v4813 = vunpack.c.l.b16 %v544
    %v4814 = vunpack.c.l.b16 %v545
    %v4815 = vunpack.c.l.b16 %v546
    %v4816 = vunpack.c.l.b16 %v547
    %v4817 = vunpack.c.l.b16 %v548
    %v4818 = vunpack.c.l.b16 %v549
    %v4819 = vunpack.c.l.b16 %v550
    %v4820 = vunpack.c.l.b16 %v551
    %v4821 = vunpack.c.l.b16 %v552
    %v4822 = vunpack.c.l.b16 %v553
    %v4823 = vunpack.c.l.b16 %v554
    %v4824 = vunpack.c.l.b16 %v555
    %v4825 = vunpack.c.l.b16 %v556
    %v4826 = vunpack.c.l.b16 %v557
    %v4827 = vunpack.c.l.b16 %v558
    %v4828 = vunpack.c.l.b16 %v559
    %v4829 = vunpack.c.l.b16 %v560
    %v4830 = vunpack.c.l.b16 %v561
    %v4831 = vunpack.c.l.b16 %v562
    %v4832 = vunpack.c.l.b16 %v563
    %v4833 = vunpack.c.l.b16 %v564
    %v4834 = vunpack.c.l.b16 %v565
    %v4835 = vunpack.c.l.b16 %v566
    %v4836 = vunpack.c.l.b16 %v567
    %v4837 = vunpack.c.l.b16 %v568
    %v4838 = vunpack.c.l.b16 %v569
    %v4839 = vunpack.c.l.b16 %v570
    %v4840 = vunpack.c.l.b16 %v571
    %v4841 = vunpack.c.l.b16 %v572
    %v4842 = vunpack.c.l.b16 %v573
    %v4843 = vunpack.c.l.b16 %v574
    %v4844 = vunpack.c.l.b16 %v575
    %v4845 = vunpack.c.l.b16 %v576
    %v4846 = vunpack.c.l.b16 %v577
    %v4847 = vunpack.c.l.b16 %v578
    %v4848 = vunpack.c.l.b16 %v579
    %v4849 = vunpack.c.l.b16 %v580
    %v4850 = vunpack.c.l.b16 %v581
    %v4851 = vunpack.c.l.b16 %v582
    %v4852 = vunpack.c.l.b16 %v583
    %v4853 = vunpack.c.l.b16 %v584
    %v4854 = vunpack.c.l.b16 %v585
    %v4855 = vunpack.c.l.b16 %v586
    %v4856 = vunpack.c.l.b16 %v587
    %v4857 = vunpack.c.l.b16 %v588
    %v4858 = vunpack.c.l.b16 %v589
    %v4859 = vunpack.c.l.b16 %v590
    %v4860 = vunpack.c.l.b16 %v591
    %v4861 = vunpack.c.l.b16 %v592
    %v4862 = vunpack.c.l.b16 %v593
    %v4863 = vunpack.c.l.b16 %v594
    %v4864 = vunpack.c.l.b16 %v595
    %v4865 = vunpack.c.l.b16 %v596
    %v4866 = vunpack.c.l.b16 %v597
    %v4867 = vunpack.c.l.b16 %v598
    %v4868 = vunpack.c.l.b16 %v599
    %v4869 = vunpack.c.l.b16 %v600
    %v4870 = vunpack.c.l.b16 %v601
    %v4871 = vunpack.c.l.b16 %v602
    %v4872 = vunpack.c.l.b16 %v603
    %v4873 = vunpack.c.l.b16 %v604
    %v4874 = vunpack.c.l.b16 %v605
    %v4875 = vpack.c.b16 %v4812, %v4811
    %v4876 = vpack.c.b16 %v4814, %v4813
    %v4877 = vpack.c.b16 %v4816, %v4815
    %v4878 = vpack.c.b16 %v4818, %v4817
    %v4879 = vpack.c.b16 %v4820, %v4819
    %v4880 = vpack.c.b16 %v4822, %v4821
    %v4881 = vpack.c.b16 %v4824, %v4823
    %v4882 = vpack.c.b16 %v4826, %v4825
    %v4883 = vpack.c.b16 %v4828, %v4827
    %v4884 = vpack.c.b16 %v4830, %v4829
    %v4885 = vpack.c.b16 %v4832, %v4831
    %v4886 = vpack.c.b16 %v4834, %v4833
    %v4887 = vpack.c.b16 %v4836, %v4835
    %v4888 = vpack.c.b16 %v4838, %v4837
    %v4889 = vpack.c.b16 %v4840, %v4839
    %v4890 = vpack.c.b16 %v4842, %v4841
    %v4891 = vpack.c.b16 %v4844, %v4843
    %v4892 = vpack.c.b16 %v4846, %v4845
    %v4893 = vpack.c.b16 %v4848, %v4847
    %v4894 = vpack.c.b16 %v4850, %v4849
    %v4895 = vpack.c.b16 %v4852, %v4851
    %v4896 = vpack.c.b16 %v4854, %v4853
    %v4897 = vpack.c.b16 %v4856, %v4855
    %v4898 = vpack.c.b16 %v4858, %v4857
    %v4899 = vpack.c.b16 %v4860, %v4859
    %v4900 = vpack.c.b16 %v4862, %v4861
    %v4901 = vpack.c.b16 %v4864, %v4863
    %v4902 = vpack.c.b16 %v4866, %v4865
    %v4903 = vpack.c.b16 %v4868, %v4867
    %v4904 = vpack.c.b16 %v4870, %v4869
    %v4905 = vpack.c.b16 %v4872, %v4871
    %v4906 = vpack.c.b16 %v4874, %v4873
    %4939 = vmatpush.bf16.msra.mxu0 %v4318
    %4940 = vmatpush.bf16.msra.mxu0 %v4317
    %4941 = vmatpush.bf16.msra.mxu0 %v4316
    %4942 = vmatpush.bf16.msra.mxu0 %v4315
    %4943 = vmatpush.bf16.msra.mxu0 %v4314
    %4944 = vmatpush.bf16.msra.mxu0 %v4313
    %4945 = vmatpush.bf16.msra.mxu0 %v4312
    %4946 = vmatpush.bf16.msra.mxu0 %v4311
    %4947 = vmatmul.bf16.gmra.mxu0 %v4875
    %v4948 = vpop.f32.mrf.mxu0
    %v4949 = vadd.f32 %v4588, %v4948
    %v4950 = vpop.f32.mrf.mxu0
    %v4951 = vadd.f32 %v4590, %v4950
    %4952 = vmatmul.bf16.gmra.mxu0 %v4876
    %v4953 = vpop.f32.mrf.mxu0
    %v4954 = vadd.f32 %v4593, %v4953
    %v4955 = vpop.f32.mrf.mxu0
    %v4956 = vadd.f32 %v4595, %v4955
    %4957 = vmatmul.bf16.gmra.mxu0 %v4877
    %v4958 = vpop.f32.mrf.mxu0
    %v4959 = vadd.f32 %v4598, %v4958
    %v4960 = vpop.f32.mrf.mxu0
    %v4961 = vadd.f32 %v4600, %v4960
    %4962 = vmatmul.bf16.gmra.mxu0 %v4878
    %v4963 = vpop.f32.mrf.mxu0
    %v4964 = vadd.f32 %v4603, %v4963
    %v4965 = vpop.f32.mrf.mxu0
    %v4966 = vadd.f32 %v4605, %v4965
    %4967 = vmatmul.bf16.gmra.mxu0 %v4879
    %v4968 = vpop.f32.mrf.mxu0
    %v4969 = vadd.f32 %v4608, %v4968
    %v4970 = vpop.f32.mrf.mxu0
    %v4971 = vadd.f32 %v4610, %v4970
    %4972 = vmatmul.bf16.gmra.mxu0 %v4880
    %v4973 = vpop.f32.mrf.mxu0
    %v4974 = vadd.f32 %v4613, %v4973
    %v4975 = vpop.f32.mrf.mxu0
    %v4976 = vadd.f32 %v4615, %v4975
    %4977 = vmatmul.bf16.gmra.mxu0 %v4881
    %v4978 = vpop.f32.mrf.mxu0
    %v4979 = vadd.f32 %v4618, %v4978
    %v4980 = vpop.f32.mrf.mxu0
    %v4981 = vadd.f32 %v4620, %v4980
    %4982 = vmatmul.bf16.gmra.mxu0 %v4882
    %v4983 = vpop.f32.mrf.mxu0
    %v4984 = vadd.f32 %v4623, %v4983
    %v4985 = vpop.f32.mrf.mxu0
    %v4986 = vadd.f32 %v4625, %v4985
    %4987 = vmatmul.bf16.gmra.mxu0 %v4883
    %v4988 = vpop.f32.mrf.mxu0
    %v4989 = vadd.f32 %v4628, %v4988
    %v4990 = vpop.f32.mrf.mxu0
    %v4991 = vadd.f32 %v4630, %v4990
    %4992 = vmatmul.bf16.gmra.mxu0 %v4884
    %v4993 = vpop.f32.mrf.mxu0
    %v4994 = vadd.f32 %v4633, %v4993
    %v4995 = vpop.f32.mrf.mxu0
    %v4996 = vadd.f32 %v4635, %v4995
    %4997 = vmatmul.bf16.gmra.mxu0 %v4885
    %v4998 = vpop.f32.mrf.mxu0
    %v4999 = vadd.f32 %v4638, %v4998
    %v5000 = vpop.f32.mrf.mxu0
    %v5001 = vadd.f32 %v4640, %v5000
    %5002 = vmatmul.bf16.gmra.mxu0 %v4886
    %v5003 = vpop.f32.mrf.mxu0
    %v5004 = vadd.f32 %v4643, %v5003
    %v5005 = vpop.f32.mrf.mxu0
    %v5006 = vadd.f32 %v4645, %v5005
    %5007 = vmatmul.bf16.gmra.mxu0 %v4887
    %v5008 = vpop.f32.mrf.mxu0
    %v5009 = vadd.f32 %v4648, %v5008
    %v5010 = vpop.f32.mrf.mxu0
    %v5011 = vadd.f32 %v4650, %v5010
    %5012 = vmatmul.bf16.gmra.mxu0 %v4888
    %v5013 = vpop.f32.mrf.mxu0
    %v5014 = vadd.f32 %v4653, %v5013
    %v5015 = vpop.f32.mrf.mxu0
    %v5016 = vadd.f32 %v4655, %v5015
    %5017 = vmatmul.bf16.gmra.mxu0 %v4889
    %v5018 = vpop.f32.mrf.mxu0
    %v5019 = vadd.f32 %v4658, %v5018
    %v5020 = vpop.f32.mrf.mxu0
    %v5021 = vadd.f32 %v4660, %v5020
    %5022 = vmatmul.bf16.gmra.mxu0 %v4890
    %v5023 = vpop.f32.mrf.mxu0
    %v5024 = vadd.f32 %v4663, %v5023
    %v5025 = vpop.f32.mrf.mxu0
    %v5026 = vadd.f32 %v4665, %v5025
    %5027 = vmatmul.bf16.gmra.mxu0 %v4891
    %v5028 = vpop.f32.mrf.mxu0
    %v5029 = vadd.f32 %v4668, %v5028
    %v5030 = vpop.f32.mrf.mxu0
    %v5031 = vadd.f32 %v4670, %v5030
    %5032 = vmatmul.bf16.gmra.mxu0 %v4892
    %v5033 = vpop.f32.mrf.mxu0
    %v5034 = vadd.f32 %v4673, %v5033
    %v5035 = vpop.f32.mrf.mxu0
    %v5036 = vadd.f32 %v4675, %v5035
    %5037 = vmatmul.bf16.gmra.mxu0 %v4893
    %v5038 = vpop.f32.mrf.mxu0
    %v5039 = vadd.f32 %v4678, %v5038
    %v5040 = vpop.f32.mrf.mxu0
    %v5041 = vadd.f32 %v4680, %v5040
    %5042 = vmatmul.bf16.gmra.mxu0 %v4894
    %v5043 = vpop.f32.mrf.mxu0
    %v5044 = vadd.f32 %v4683, %v5043
    %v5045 = vpop.f32.mrf.mxu0
    %v5046 = vadd.f32 %v4685, %v5045
    %5047 = vmatmul.bf16.gmra.mxu0 %v4895
    %v5048 = vpop.f32.mrf.mxu0
    %v5049 = vadd.f32 %v4688, %v5048
    %v5050 = vpop.f32.mrf.mxu0
    %v5051 = vadd.f32 %v4690, %v5050
    %5052 = vmatmul.bf16.gmra.mxu0 %v4896
    %v5053 = vpop.f32.mrf.mxu0
    %v5054 = vadd.f32 %v4693, %v5053
    %v5055 = vpop.f32.mrf.mxu0
    %v5056 = vadd.f32 %v4695, %v5055
    %5057 = vmatmul.bf16.gmra.mxu0 %v4897
    %v5058 = vpop.f32.mrf.mxu0
    %v5059 = vadd.f32 %v4698, %v5058
    %v5060 = vpop.f32.mrf.mxu0
    %v5061 = vadd.f32 %v4700, %v5060
    %5062 = vmatmul.bf16.gmra.mxu0 %v4898
    %v5063 = vpop.f32.mrf.mxu0
    %v5064 = vadd.f32 %v4703, %v5063
    %v5065 = vpop.f32.mrf.mxu0
    %v5066 = vadd.f32 %v4705, %v5065
    %5067 = vmatmul.bf16.gmra.mxu0 %v4899
    %v5068 = vpop.f32.mrf.mxu0
    %v5069 = vadd.f32 %v4708, %v5068
    %v5070 = vpop.f32.mrf.mxu0
    %v5071 = vadd.f32 %v4710, %v5070
    %5072 = vmatmul.bf16.gmra.mxu0 %v4900
    %v5073 = vpop.f32.mrf.mxu0
    %v5074 = vadd.f32 %v4713, %v5073
    %v5075 = vpop.f32.mrf.mxu0
    %v5076 = vadd.f32 %v4715, %v5075
    %5077 = vmatmul.bf16.gmra.mxu0 %v4901
    %v5078 = vpop.f32.mrf.mxu0
    %v5079 = vadd.f32 %v4718, %v5078
    %v5080 = vpop.f32.mrf.mxu0
    %v5081 = vadd.f32 %v4720, %v5080
    %5082 = vmatmul.bf16.gmra.mxu0 %v4902
    %v5083 = vpop.f32.mrf.mxu0
    %v5084 = vadd.f32 %v4723, %v5083
    %v5085 = vpop.f32.mrf.mxu0
    %v5086 = vadd.f32 %v4725, %v5085
    %5087 = vmatmul.bf16.gmra.mxu0 %v4903
    %v5088 = vpop.f32.mrf.mxu0
    %v5089 = vadd.f32 %v4728, %v5088
    %v5090 = vpop.f32.mrf.mxu0
    %v5091 = vadd.f32 %v4730, %v5090
    %5092 = vmatmul.bf16.gmra.mxu0 %v4904
    %v5093 = vpop.f32.mrf.mxu0
    %v5094 = vadd.f32 %v4733, %v5093
    %v5095 = vpop.f32.mrf.mxu0
    %v5096 = vadd.f32 %v4735, %v5095
    %5097 = vmatmul.bf16.gmra.mxu0 %v4905
    %v5098 = vpop.f32.mrf.mxu0
    %v5099 = vadd.f32 %v4738, %v5098
    %v5100 = vpop.f32.mrf.mxu0
    %v5101 = vadd.f32 %v4740, %v5100
    %5102 = vmatmul.bf16.gmra.mxu0 %v4906
    %v5103 = vpop.f32.mrf.mxu0
    %v5104 = vadd.f32 %v4743, %v5103
    %v5105 = vpop.f32.mrf.mxu0
    %v5106 = vadd.f32 %v4745, %v5105
    %5107 = vdwg.mxu0
    %v5109 = vperm.slane %v607, 0
    %v5111 = vmul.f32 %v4949, %v5109
    %v5112 = vmul.f32 %v4951, %v5109
    %v5113 = vmul.f32 %v4954, %v5109
    %v5114 = vmul.f32 %v4956, %v5109
    %v5115 = vmul.f32 %v4959, %v5109
    %v5116 = vmul.f32 %v4961, %v5109
    %v5117 = vmul.f32 %v4964, %v5109
    %v5118 = vmul.f32 %v4966, %v5109
    %v5119 = vmul.f32 %v4969, %v5109
    %v5120 = vmul.f32 %v4971, %v5109
    %v5121 = vmul.f32 %v4974, %v5109
    %v5122 = vmul.f32 %v4976, %v5109
    %v5123 = vmul.f32 %v4979, %v5109
    %v5124 = vmul.f32 %v4981, %v5109
    %v5125 = vmul.f32 %v4984, %v5109
    %v5126 = vmul.f32 %v4986, %v5109
    %v5127 = vmul.f32 %v4989, %v5109
    %v5128 = vmul.f32 %v4991, %v5109
    %v5129 = vmul.f32 %v4994, %v5109
    %v5130 = vmul.f32 %v4996, %v5109
    %v5131 = vmul.f32 %v4999, %v5109
    %v5132 = vmul.f32 %v5001, %v5109
    %v5133 = vmul.f32 %v5004, %v5109
    %v5134 = vmul.f32 %v5006, %v5109
    %v5135 = vmul.f32 %v5009, %v5109
    %v5136 = vmul.f32 %v5011, %v5109
    %v5137 = vmul.f32 %v5014, %v5109
    %v5138 = vmul.f32 %v5016, %v5109
    %v5139 = vmul.f32 %v5019, %v5109
    %v5140 = vmul.f32 %v5021, %v5109
    %v5141 = vmul.f32 %v5024, %v5109
    %v5142 = vmul.f32 %v5026, %v5109
    %v5143 = vmul.f32 %v5029, %v5109
    %v5144 = vmul.f32 %v5031, %v5109
    %v5145 = vmul.f32 %v5034, %v5109
    %v5146 = vmul.f32 %v5036, %v5109
    %v5147 = vmul.f32 %v5039, %v5109
    %v5148 = vmul.f32 %v5041, %v5109
    %v5149 = vmul.f32 %v5044, %v5109
    %v5150 = vmul.f32 %v5046, %v5109
    %v5151 = vmul.f32 %v5049, %v5109
    %v5152 = vmul.f32 %v5051, %v5109
    %v5153 = vmul.f32 %v5054, %v5109
    %v5154 = vmul.f32 %v5056, %v5109
    %v5155 = vmul.f32 %v5059, %v5109
    %v5156 = vmul.f32 %v5061, %v5109
    %v5157 = vmul.f32 %v5064, %v5109
    %v5158 = vmul.f32 %v5066, %v5109
    %v5159 = vmul.f32 %v5069, %v5109
    %v5160 = vmul.f32 %v5071, %v5109
    %v5161 = vmul.f32 %v5074, %v5109
    %v5162 = vmul.f32 %v5076, %v5109
    %v5163 = vmul.f32 %v5079, %v5109
    %v5164 = vmul.f32 %v5081, %v5109
    %v5165 = vmul.f32 %v5084, %v5109
    %v5166 = vmul.f32 %v5086, %v5109
    %v5167 = vmul.f32 %v5089, %v5109
    %v5168 = vmul.f32 %v5091, %v5109
    %v5169 = vmul.f32 %v5094, %v5109
    %v5170 = vmul.f32 %v5096, %v5109
    %v5171 = vmul.f32 %v5099, %v5109
    %v5172 = vmul.f32 %v5101, %v5109
    %v5173 = vmul.f32 %v5104, %v5109
    %v5174 = vmul.f32 %v5106, %v5109
    %v5176 = vperm.slane %v606, 0
    %v5178 = vadd.f32 %v5111, %v5176
    %v5179 = vadd.f32 %v5112, %v5176
    %v5180 = vadd.f32 %v5113, %v5176
    %v5181 = vadd.f32 %v5114, %v5176
    %v5182 = vadd.f32 %v5115, %v5176
    %v5183 = vadd.f32 %v5116, %v5176
    %v5184 = vadd.f32 %v5117, %v5176
    %v5185 = vadd.f32 %v5118, %v5176
    %v5186 = vadd.f32 %v5119, %v5176
    %v5187 = vadd.f32 %v5120, %v5176
    %v5188 = vadd.f32 %v5121, %v5176
    %v5189 = vadd.f32 %v5122, %v5176
    %v5190 = vadd.f32 %v5123, %v5176
    %v5191 = vadd.f32 %v5124, %v5176
    %v5192 = vadd.f32 %v5125, %v5176
    %v5193 = vadd.f32 %v5126, %v5176
    %v5194 = vadd.f32 %v5127, %v5176
    %v5195 = vadd.f32 %v5128, %v5176
    %v5196 = vadd.f32 %v5129, %v5176
    %v5197 = vadd.f32 %v5130, %v5176
    %v5198 = vadd.f32 %v5131, %v5176
    %v5199 = vadd.f32 %v5132, %v5176
    %v5200 = vadd.f32 %v5133, %v5176
    %v5201 = vadd.f32 %v5134, %v5176
    %v5202 = vadd.f32 %v5135, %v5176
    %v5203 = vadd.f32 %v5136, %v5176
    %v5204 = vadd.f32 %v5137, %v5176
    %v5205 = vadd.f32 %v5138, %v5176
    %v5206 = vadd.f32 %v5139, %v5176
    %v5207 = vadd.f32 %v5140, %v5176
    %v5208 = vadd.f32 %v5141, %v5176
    %v5209 = vadd.f32 %v5142, %v5176
    %v5210 = vadd.f32 %v5143, %v5176
    %v5211 = vadd.f32 %v5144, %v5176
    %v5212 = vadd.f32 %v5145, %v5176
    %v5213 = vadd.f32 %v5146, %v5176
    %v5214 = vadd.f32 %v5147, %v5176
    %v5215 = vadd.f32 %v5148, %v5176
    %v5216 = vadd.f32 %v5149, %v5176
    %v5217 = vadd.f32 %v5150, %v5176
    %v5218 = vadd.f32 %v5151, %v5176
    %v5219 = vadd.f32 %v5152, %v5176
    %v5220 = vadd.f32 %v5153, %v5176
    %v5221 = vadd.f32 %v5154, %v5176
    %v5222 = vadd.f32 %v5155, %v5176
    %v5223 = vadd.f32 %v5156, %v5176
    %v5224 = vadd.f32 %v5157, %v5176
    %v5225 = vadd.f32 %v5158, %v5176
    %v5226 = vadd.f32 %v5159, %v5176
    %v5227 = vadd.f32 %v5160, %v5176
    %v5228 = vadd.f32 %v5161, %v5176
    %v5229 = vadd.f32 %v5162, %v5176
    %v5230 = vadd.f32 %v5163, %v5176
    %v5231 = vadd.f32 %v5164, %v5176
    %v5232 = vadd.f32 %v5165, %v5176
    %v5233 = vadd.f32 %v5166, %v5176
    %v5234 = vadd.f32 %v5167, %v5176
    %v5235 = vadd.f32 %v5168, %v5176
    %v5236 = vadd.f32 %v5169, %v5176
    %v5237 = vadd.f32 %v5170, %v5176
    %v5238 = vadd.f32 %v5171, %v5176
    %v5239 = vadd.f32 %v5172, %v5176
    %v5240 = vadd.f32 %v5173, %v5176
    %v5241 = vadd.f32 %v5174, %v5176
    %v5242 = vadd.f32 %v5178, 3.0
    %v5243 = vadd.f32 %v5179, 3.0
    %v5244 = vadd.f32 %v5180, 3.0
    %v5245 = vadd.f32 %v5181, 3.0
    %v5246 = vadd.f32 %v5182, 3.0
    %v5247 = vadd.f32 %v5183, 3.0
    %v5248 = vadd.f32 %v5184, 3.0
    %v5249 = vadd.f32 %v5185, 3.0
    %v5250 = vadd.f32 %v5186, 3.0
    %v5251 = vadd.f32 %v5187, 3.0
    %v5252 = vadd.f32 %v5188, 3.0
    %v5253 = vadd.f32 %v5189, 3.0
    %v5254 = vadd.f32 %v5190, 3.0
    %v5255 = vadd.f32 %v5191, 3.0
    %v5256 = vadd.f32 %v5192, 3.0
    %v5257 = vadd.f32 %v5193, 3.0
    %v5258 = vadd.f32 %v5194, 3.0
    %v5259 = vadd.f32 %v5195, 3.0
    %v5260 = vadd.f32 %v5196, 3.0
    %v5261 = vadd.f32 %v5197, 3.0
    %v5262 = vadd.f32 %v5198, 3.0
    %v5263 = vadd.f32 %v5199, 3.0
    %v5264 = vadd.f32 %v5200, 3.0
    %v5265 = vadd.f32 %v5201, 3.0
    %v5266 = vadd.f32 %v5202, 3.0
    %v5267 = vadd.f32 %v5203, 3.0
    %v5268 = vadd.f32 %v5204, 3.0
    %v5269 = vadd.f32 %v5205, 3.0
    %v5270 = vadd.f32 %v5206, 3.0
    %v5271 = vadd.f32 %v5207, 3.0
    %v5272 = vadd.f32 %v5208, 3.0
    %v5273 = vadd.f32 %v5209, 3.0
    %v5274 = vadd.f32 %v5210, 3.0
    %v5275 = vadd.f32 %v5211, 3.0
    %v5276 = vadd.f32 %v5212, 3.0
    %v5277 = vadd.f32 %v5213, 3.0
    %v5278 = vadd.f32 %v5214, 3.0
    %v5279 = vadd.f32 %v5215, 3.0
    %v5280 = vadd.f32 %v5216, 3.0
    %v5281 = vadd.f32 %v5217, 3.0
    %v5282 = vadd.f32 %v5218, 3.0
    %v5283 = vadd.f32 %v5219, 3.0
    %v5284 = vadd.f32 %v5220, 3.0
    %v5285 = vadd.f32 %v5221, 3.0
    %v5286 = vadd.f32 %v5222, 3.0
    %v5287 = vadd.f32 %v5223, 3.0
    %v5288 = vadd.f32 %v5224, 3.0
    %v5289 = vadd.f32 %v5225, 3.0
    %v5290 = vadd.f32 %v5226, 3.0
    %v5291 = vadd.f32 %v5227, 3.0
    %v5292 = vadd.f32 %v5228, 3.0
    %v5293 = vadd.f32 %v5229, 3.0
    %v5294 = vadd.f32 %v5230, 3.0
    %v5295 = vadd.f32 %v5231, 3.0
    %v5296 = vadd.f32 %v5232, 3.0
    %v5297 = vadd.f32 %v5233, 3.0
    %v5298 = vadd.f32 %v5234, 3.0
    %v5299 = vadd.f32 %v5235, 3.0
    %v5300 = vadd.f32 %v5236, 3.0
    %v5301 = vadd.f32 %v5237, 3.0
    %v5302 = vadd.f32 %v5238, 3.0
    %v5303 = vadd.f32 %v5239, 3.0
    %v5304 = vadd.f32 %v5240, 3.0
    %v5305 = vadd.f32 %v5241, 3.0
    %v5306 = vmax.f32 %v5242, 0.0
    %v5307 = vmax.f32 %v5243, 0.0
    %v5308 = vmax.f32 %v5244, 0.0
    %v5309 = vmax.f32 %v5245, 0.0
    %v5310 = vmax.f32 %v5246, 0.0
    %v5311 = vmax.f32 %v5247, 0.0
    %v5312 = vmax.f32 %v5248, 0.0
    %v5313 = vmax.f32 %v5249, 0.0
    %v5314 = vmax.f32 %v5250, 0.0
    %v5315 = vmax.f32 %v5251, 0.0
    %v5316 = vmax.f32 %v5252, 0.0
    %v5317 = vmax.f32 %v5253, 0.0
    %v5318 = vmax.f32 %v5254, 0.0
    %v5319 = vmax.f32 %v5255, 0.0
    %v5320 = vmax.f32 %v5256, 0.0
    %v5321 = vmax.f32 %v5257, 0.0
    %v5322 = vmax.f32 %v5258, 0.0
    %v5323 = vmax.f32 %v5259, 0.0
    %v5324 = vmax.f32 %v5260, 0.0
    %v5325 = vmax.f32 %v5261, 0.0
    %v5326 = vmax.f32 %v5262, 0.0
    %v5327 = vmax.f32 %v5263, 0.0
    %v5328 = vmax.f32 %v5264, 0.0
    %v5329 = vmax.f32 %v5265, 0.0
    %v5330 = vmax.f32 %v5266, 0.0
    %v5331 = vmax.f32 %v5267, 0.0
    %v5332 = vmax.f32 %v5268, 0.0
    %v5333 = vmax.f32 %v5269, 0.0
    %v5334 = vmax.f32 %v5270, 0.0
    %v5335 = vmax.f32 %v5271, 0.0
    %v5336 = vmax.f32 %v5272, 0.0
    %v5337 = vmax.f32 %v5273, 0.0
    %v5338 = vmax.f32 %v5274, 0.0
    %v5339 = vmax.f32 %v5275, 0.0
    %v5340 = vmax.f32 %v5276, 0.0
    %v5341 = vmax.f32 %v5277, 0.0
    %v5342 = vmax.f32 %v5278, 0.0
    %v5343 = vmax.f32 %v5279, 0.0
    %v5344 = vmax.f32 %v5280, 0.0
    %v5345 = vmax.f32 %v5281, 0.0
    %v5346 = vmax.f32 %v5282, 0.0
    %v5347 = vmax.f32 %v5283, 0.0
    %v5348 = vmax.f32 %v5284, 0.0
    %v5349 = vmax.f32 %v5285, 0.0
    %v5350 = vmax.f32 %v5286, 0.0
    %v5351 = vmax.f32 %v5287, 0.0
    %v5352 = vmax.f32 %v5288, 0.0
    %v5353 = vmax.f32 %v5289, 0.0
    %v5354 = vmax.f32 %v5290, 0.0
    %v5355 = vmax.f32 %v5291, 0.0
    %v5356 = vmax.f32 %v5292, 0.0
    %v5357 = vmax.f32 %v5293, 0.0
    %v5358 = vmax.f32 %v5294, 0.0
    %v5359 = vmax.f32 %v5295, 0.0
    %v5360 = vmax.f32 %v5296, 0.0
    %v5361 = vmax.f32 %v5297, 0.0
    %v5362 = vmax.f32 %v5298, 0.0
    %v5363 = vmax.f32 %v5299, 0.0
    %v5364 = vmax.f32 %v5300, 0.0
    %v5365 = vmax.f32 %v5301, 0.0
    %v5366 = vmax.f32 %v5302, 0.0
    %v5367 = vmax.f32 %v5303, 0.0
    %v5368 = vmax.f32 %v5304, 0.0
    %v5369 = vmax.f32 %v5305, 0.0
    %v5370 = vmin.f32 %v5306, 6.0
    %v5371 = vmin.f32 %v5307, 6.0
    %v5372 = vmin.f32 %v5308, 6.0
    %v5373 = vmin.f32 %v5309, 6.0
    %v5374 = vmin.f32 %v5310, 6.0
    %v5375 = vmin.f32 %v5311, 6.0
    %v5376 = vmin.f32 %v5312, 6.0
    %v5377 = vmin.f32 %v5313, 6.0
    %v5378 = vmin.f32 %v5314, 6.0
    %v5379 = vmin.f32 %v5315, 6.0
    %v5380 = vmin.f32 %v5316, 6.0
    %v5381 = vmin.f32 %v5317, 6.0
    %v5382 = vmin.f32 %v5318, 6.0
    %v5383 = vmin.f32 %v5319, 6.0
    %v5384 = vmin.f32 %v5320, 6.0
    %v5385 = vmin.f32 %v5321, 6.0
    %v5386 = vmin.f32 %v5322, 6.0
    %v5387 = vmin.f32 %v5323, 6.0
    %v5388 = vmin.f32 %v5324, 6.0
    %v5389 = vmin.f32 %v5325, 6.0
    %v5390 = vmin.f32 %v5326, 6.0
    %v5391 = vmin.f32 %v5327, 6.0
    %v5392 = vmin.f32 %v5328, 6.0
    %v5393 = vmin.f32 %v5329, 6.0
    %v5394 = vmin.f32 %v5330, 6.0
    %v5395 = vmin.f32 %v5331, 6.0
    %v5396 = vmin.f32 %v5332, 6.0
    %v5397 = vmin.f32 %v5333, 6.0
    %v5398 = vmin.f32 %v5334, 6.0
    %v5399 = vmin.f32 %v5335, 6.0
    %v5400 = vmin.f32 %v5336, 6.0
    %v5401 = vmin.f32 %v5337, 6.0
    %v5402 = vmin.f32 %v5338, 6.0
    %v5403 = vmin.f32 %v5339, 6.0
    %v5404 = vmin.f32 %v5340, 6.0
    %v5405 = vmin.f32 %v5341, 6.0
    %v5406 = vmin.f32 %v5342, 6.0
    %v5407 = vmin.f32 %v5343, 6.0
    %v5408 = vmin.f32 %v5344, 6.0
    %v5409 = vmin.f32 %v5345, 6.0
    %v5410 = vmin.f32 %v5346, 6.0
    %v5411 = vmin.f32 %v5347, 6.0
    %v5412 = vmin.f32 %v5348, 6.0
    %v5413 = vmin.f32 %v5349, 6.0
    %v5414 = vmin.f32 %v5350, 6.0
    %v5415 = vmin.f32 %v5351, 6.0
    %v5416 = vmin.f32 %v5352, 6.0
    %v5417 = vmin.f32 %v5353, 6.0
    %v5418 = vmin.f32 %v5354, 6.0
    %v5419 = vmin.f32 %v5355, 6.0
    %v5420 = vmin.f32 %v5356, 6.0
    %v5421 = vmin.f32 %v5357, 6.0
    %v5422 = vmin.f32 %v5358, 6.0
    %v5423 = vmin.f32 %v5359, 6.0
    %v5424 = vmin.f32 %v5360, 6.0
    %v5425 = vmin.f32 %v5361, 6.0
    %v5426 = vmin.f32 %v5362, 6.0
    %v5427 = vmin.f32 %v5363, 6.0
    %v5428 = vmin.f32 %v5364, 6.0
    %v5429 = vmin.f32 %v5365, 6.0
    %v5430 = vmin.f32 %v5366, 6.0
    %v5431 = vmin.f32 %v5367, 6.0
    %v5432 = vmin.f32 %v5368, 6.0
    %v5433 = vmin.f32 %v5369, 6.0
    %v5434 = vmul.f32 %v5178, %v5370
    %v5435 = vmul.f32 %v5179, %v5371
    %v5436 = vmul.f32 %v5180, %v5372
    %v5437 = vmul.f32 %v5181, %v5373
    %v5438 = vmul.f32 %v5182, %v5374
    %v5439 = vmul.f32 %v5183, %v5375
    %v5440 = vmul.f32 %v5184, %v5376
    %v5441 = vmul.f32 %v5185, %v5377
    %v5442 = vmul.f32 %v5186, %v5378
    %v5443 = vmul.f32 %v5187, %v5379
    %v5444 = vmul.f32 %v5188, %v5380
    %v5445 = vmul.f32 %v5189, %v5381
    %v5446 = vmul.f32 %v5190, %v5382
    %v5447 = vmul.f32 %v5191, %v5383
    %v5448 = vmul.f32 %v5192, %v5384
    %v5449 = vmul.f32 %v5193, %v5385
    %v5450 = vmul.f32 %v5194, %v5386
    %v5451 = vmul.f32 %v5195, %v5387
    %v5452 = vmul.f32 %v5196, %v5388
    %v5453 = vmul.f32 %v5197, %v5389
    %v5454 = vmul.f32 %v5198, %v5390
    %v5455 = vmul.f32 %v5199, %v5391
    %v5456 = vmul.f32 %v5200, %v5392
    %v5457 = vmul.f32 %v5201, %v5393
    %v5458 = vmul.f32 %v5202, %v5394
    %v5459 = vmul.f32 %v5203, %v5395
    %v5460 = vmul.f32 %v5204, %v5396
    %v5461 = vmul.f32 %v5205, %v5397
    %v5462 = vmul.f32 %v5206, %v5398
    %v5463 = vmul.f32 %v5207, %v5399
    %v5464 = vmul.f32 %v5208, %v5400
    %v5465 = vmul.f32 %v5209, %v5401
    %v5466 = vmul.f32 %v5210, %v5402
    %v5467 = vmul.f32 %v5211, %v5403
    %v5468 = vmul.f32 %v5212, %v5404
    %v5469 = vmul.f32 %v5213, %v5405
    %v5470 = vmul.f32 %v5214, %v5406
    %v5471 = vmul.f32 %v5215, %v5407
    %v5472 = vmul.f32 %v5216, %v5408
    %v5473 = vmul.f32 %v5217, %v5409
    %v5474 = vmul.f32 %v5218, %v5410
    %v5475 = vmul.f32 %v5219, %v5411
    %v5476 = vmul.f32 %v5220, %v5412
    %v5477 = vmul.f32 %v5221, %v5413
    %v5478 = vmul.f32 %v5222, %v5414
    %v5479 = vmul.f32 %v5223, %v5415
    %v5480 = vmul.f32 %v5224, %v5416
    %v5481 = vmul.f32 %v5225, %v5417
    %v5482 = vmul.f32 %v5226, %v5418
    %v5483 = vmul.f32 %v5227, %v5419
    %v5484 = vmul.f32 %v5228, %v5420
    %v5485 = vmul.f32 %v5229, %v5421
    %v5486 = vmul.f32 %v5230, %v5422
    %v5487 = vmul.f32 %v5231, %v5423
    %v5488 = vmul.f32 %v5232, %v5424
    %v5489 = vmul.f32 %v5233, %v5425
    %v5490 = vmul.f32 %v5234, %v5426
    %v5491 = vmul.f32 %v5235, %v5427
    %v5492 = vmul.f32 %v5236, %v5428
    %v5493 = vmul.f32 %v5237, %v5429
    %v5494 = vmul.f32 %v5238, %v5430
    %v5495 = vmul.f32 %v5239, %v5431
    %v5496 = vmul.f32 %v5240, %v5432
    %v5497 = vmul.f32 %v5241, %v5433
    %v5498 = vmul.f32 %v5434, 0.16666667
    %v5499 = vmul.f32 %v5435, 0.16666667
    %v5500 = vmul.f32 %v5436, 0.16666667
    %v5501 = vmul.f32 %v5437, 0.16666667
    %v5502 = vmul.f32 %v5438, 0.16666667
    %v5503 = vmul.f32 %v5439, 0.16666667
    %v5504 = vmul.f32 %v5440, 0.16666667
    %v5505 = vmul.f32 %v5441, 0.16666667
    %v5506 = vmul.f32 %v5442, 0.16666667
    %v5507 = vmul.f32 %v5443, 0.16666667
    %v5508 = vmul.f32 %v5444, 0.16666667
    %v5509 = vmul.f32 %v5445, 0.16666667
    %v5510 = vmul.f32 %v5446, 0.16666667
    %v5511 = vmul.f32 %v5447, 0.16666667
    %v5512 = vmul.f32 %v5448, 0.16666667
    %v5513 = vmul.f32 %v5449, 0.16666667
    %v5514 = vmul.f32 %v5450, 0.16666667
    %v5515 = vmul.f32 %v5451, 0.16666667
    %v5516 = vmul.f32 %v5452, 0.16666667
    %v5517 = vmul.f32 %v5453, 0.16666667
    %v5518 = vmul.f32 %v5454, 0.16666667
    %v5519 = vmul.f32 %v5455, 0.16666667
    %v5520 = vmul.f32 %v5456, 0.16666667
    %v5521 = vmul.f32 %v5457, 0.16666667
    %v5522 = vmul.f32 %v5458, 0.16666667
    %v5523 = vmul.f32 %v5459, 0.16666667
    %v5524 = vmul.f32 %v5460, 0.16666667
    %v5525 = vmul.f32 %v5461, 0.16666667
    %v5526 = vmul.f32 %v5462, 0.16666667
    %v5527 = vmul.f32 %v5463, 0.16666667
    %v5528 = vmul.f32 %v5464, 0.16666667
    %v5529 = vmul.f32 %v5465, 0.16666667
    %v5530 = vmul.f32 %v5466, 0.16666667
    %v5531 = vmul.f32 %v5467, 0.16666667
    %v5532 = vmul.f32 %v5468, 0.16666667
    %v5533 = vmul.f32 %v5469, 0.16666667
    %v5534 = vmul.f32 %v5470, 0.16666667
    %v5535 = vmul.f32 %v5471, 0.16666667
    %v5536 = vmul.f32 %v5472, 0.16666667
    %v5537 = vmul.f32 %v5473, 0.16666667
    %v5538 = vmul.f32 %v5474, 0.16666667
    %v5539 = vmul.f32 %v5475, 0.16666667
    %v5540 = vmul.f32 %v5476, 0.16666667
    %v5541 = vmul.f32 %v5477, 0.16666667
    %v5542 = vmul.f32 %v5478, 0.16666667
    %v5543 = vmul.f32 %v5479, 0.16666667
    %v5544 = vmul.f32 %v5480, 0.16666667
    %v5545 = vmul.f32 %v5481, 0.16666667
    %v5546 = vmul.f32 %v5482, 0.16666667
    %v5547 = vmul.f32 %v5483, 0.16666667
    %v5548 = vmul.f32 %v5484, 0.16666667
    %v5549 = vmul.f32 %v5485, 0.16666667
    %v5550 = vmul.f32 %v5486, 0.16666667
    %v5551 = vmul.f32 %v5487, 0.16666667
    %v5552 = vmul.f32 %v5488, 0.16666667
    %v5553 = vmul.f32 %v5489, 0.16666667
    %v5554 = vmul.f32 %v5490, 0.16666667
    %v5555 = vmul.f32 %v5491, 0.16666667
    %v5556 = vmul.f32 %v5492, 0.16666667
    %v5557 = vmul.f32 %v5493, 0.16666667
    %v5558 = vmul.f32 %v5494, 0.16666667
    %v5559 = vmul.f32 %v5495, 0.16666667
    %v5560 = vmul.f32 %v5496, 0.16666667
    %v5561 = vmul.f32 %v5497, 0.16666667
    %v5562 = vpack.c.bf16 %v5499, %v5498
    %v5563 = vpack.c.bf16 %v5501, %v5500
    %v5564 = vpack.c.bf16 %v5503, %v5502
    %v5565 = vpack.c.bf16 %v5505, %v5504
    %v5566 = vpack.c.bf16 %v5507, %v5506
    %v5567 = vpack.c.bf16 %v5509, %v5508
    %v5568 = vpack.c.bf16 %v5511, %v5510
    %v5569 = vpack.c.bf16 %v5513, %v5512
    %v5570 = vpack.c.bf16 %v5515, %v5514
    %v5571 = vpack.c.bf16 %v5517, %v5516
    %v5572 = vpack.c.bf16 %v5519, %v5518
    %v5573 = vpack.c.bf16 %v5521, %v5520
    %v5574 = vpack.c.bf16 %v5523, %v5522
    %v5575 = vpack.c.bf16 %v5525, %v5524
    %v5576 = vpack.c.bf16 %v5527, %v5526
    %v5577 = vpack.c.bf16 %v5529, %v5528
    %v5578 = vpack.c.bf16 %v5531, %v5530
    %v5579 = vpack.c.bf16 %v5533, %v5532
    %v5580 = vpack.c.bf16 %v5535, %v5534
    %v5581 = vpack.c.bf16 %v5537, %v5536
    %v5582 = vpack.c.bf16 %v5539, %v5538
    %v5583 = vpack.c.bf16 %v5541, %v5540
    %v5584 = vpack.c.bf16 %v5543, %v5542
    %v5585 = vpack.c.bf16 %v5545, %v5544
    %v5586 = vpack.c.bf16 %v5547, %v5546
    %v5587 = vpack.c.bf16 %v5549, %v5548
    %v5588 = vpack.c.bf16 %v5551, %v5550
    %v5589 = vpack.c.bf16 %v5553, %v5552
    %v5590 = vpack.c.bf16 %v5555, %v5554
    %v5591 = vpack.c.bf16 %v5557, %v5556
    %v5592 = vpack.c.bf16 %v5559, %v5558
    %v5593 = vpack.c.bf16 %v5561, %v5560
    %v5595 = vsel %vm2301, %v5562, 0
    %v5598 = vsel %vm2301, %v5563, 0
    %v5601 = vsel %vm2301, %v5564, 0
    %v5604 = vsel %vm2301, %v5565, 0
    %v5607 = vsel %vm2301, %v5566, 0
    %v5610 = vsel %vm2301, %v5567, 0
    %v5613 = vsel %vm2301, %v5568, 0
    %v5616 = vsel %vm2301, %v5569, 0
    %v5619 = vsel %vm2301, %v5570, 0
    %v5622 = vsel %vm2301, %v5571, 0
    %v5625 = vsel %vm2301, %v5572, 0
    %v5628 = vsel %vm2301, %v5573, 0
    %v5631 = vsel %vm2301, %v5574, 0
    %v5634 = vsel %vm2301, %v5575, 0
    %v5637 = vsel %vm2301, %v5576, 0
    %v5640 = vsel %vm2301, %v5577, 0
    %v5643 = vsel %vm2301, %v5578, 0
    %v5646 = vsel %vm2301, %v5579, 0
    %v5649 = vsel %vm2301, %v5580, 0
    %v5652 = vsel %vm2301, %v5581, 0
    %v5655 = vsel %vm2301, %v5582, 0
    %v5658 = vsel %vm2301, %v5583, 0
    %v5661 = vsel %vm2301, %v5584, 0
    %v5664 = vsel %vm2301, %v5585, 0
    %v5667 = vsel %vm2301, %v5586, 0
    %v5670 = vsel %vm2301, %v5587, 0
    %v5673 = vsel %vm2301, %v5588, 0
    %v5676 = vsel %vm2301, %v5589, 0
    %v5679 = vsel %vm2301, %v5590, 0
    %v5682 = vsel %vm2301, %v5591, 0
    %v5685 = vsel %vm2301, %v5592, 0
    %v5688 = vsel %vm2301, %v5593, 0
    %v5691 = vsel %vm2326, %v617, 0
    %5693 = vmatpush.bf16.msra.mxu0 0
    %5694 = vmatpush.bf16.msra.mxu0 0
    %5695 = vmatpush.bf16.msra.mxu0 0
    %5696 = vmatpush.bf16.msra.mxu0 0
    %5697 = vmatpush.bf16.msra.mxu0 0
    %5698 = vmatpush.bf16.msra.mxu0 0
    %5699 = vmatpush.bf16.msra.mxu0 0
    %5700 = vmatpush.bf16.msra.mxu0 %v5691
    %5701 = vmatmul.bf16.gmra.mxu0 %v5595
    %v5702 = vpop.f32.mrf.mxu0
    %v5703 = vadd.f32 0.0, %v5702
    %v5704 = vpop.f32.mrf.mxu0
    %v5705 = vadd.f32 0.0, %v5704
    %5706 = vmatmul.bf16.gmra.mxu0 %v5598
    %v5707 = vpop.f32.mrf.mxu0
    %v5708 = vadd.f32 0.0, %v5707
    %v5709 = vpop.f32.mrf.mxu0
    %v5710 = vadd.f32 0.0, %v5709
    %5711 = vmatmul.bf16.gmra.mxu0 %v5601
    %v5712 = vpop.f32.mrf.mxu0
    %v5713 = vadd.f32 0.0, %v5712
    %v5714 = vpop.f32.mrf.mxu0
    %v5715 = vadd.f32 0.0, %v5714
    %5716 = vmatmul.bf16.gmra.mxu0 %v5604
    %v5717 = vpop.f32.mrf.mxu0
    %v5718 = vadd.f32 0.0, %v5717
    %v5719 = vpop.f32.mrf.mxu0
    %v5720 = vadd.f32 0.0, %v5719
    %5721 = vmatmul.bf16.gmra.mxu0 %v5607
    %v5722 = vpop.f32.mrf.mxu0
    %v5723 = vadd.f32 0.0, %v5722
    %v5724 = vpop.f32.mrf.mxu0
    %v5725 = vadd.f32 0.0, %v5724
    %5726 = vmatmul.bf16.gmra.mxu0 %v5610
    %v5727 = vpop.f32.mrf.mxu0
    %v5728 = vadd.f32 0.0, %v5727
    %v5729 = vpop.f32.mrf.mxu0
    %v5730 = vadd.f32 0.0, %v5729
    %5731 = vmatmul.bf16.gmra.mxu0 %v5613
    %v5732 = vpop.f32.mrf.mxu0
    %v5733 = vadd.f32 0.0, %v5732
    %v5734 = vpop.f32.mrf.mxu0
    %v5735 = vadd.f32 0.0, %v5734
    %5736 = vmatmul.bf16.gmra.mxu0 %v5616
    %v5737 = vpop.f32.mrf.mxu0
    %v5738 = vadd.f32 0.0, %v5737
    %v5739 = vpop.f32.mrf.mxu0
    %v5740 = vadd.f32 0.0, %v5739
    %5741 = vmatmul.bf16.gmra.mxu0 %v5619
    %v5742 = vpop.f32.mrf.mxu0
    %v5743 = vadd.f32 0.0, %v5742
    %v5744 = vpop.f32.mrf.mxu0
    %v5745 = vadd.f32 0.0, %v5744
    %5746 = vmatmul.bf16.gmra.mxu0 %v5622
    %v5747 = vpop.f32.mrf.mxu0
    %v5748 = vadd.f32 0.0, %v5747
    %v5749 = vpop.f32.mrf.mxu0
    %v5750 = vadd.f32 0.0, %v5749
    %5751 = vmatmul.bf16.gmra.mxu0 %v5625
    %v5752 = vpop.f32.mrf.mxu0
    %v5753 = vadd.f32 0.0, %v5752
    %v5754 = vpop.f32.mrf.mxu0
    %v5755 = vadd.f32 0.0, %v5754
    %5756 = vmatmul.bf16.gmra.mxu0 %v5628
    %v5757 = vpop.f32.mrf.mxu0
    %v5758 = vadd.f32 0.0, %v5757
    %v5759 = vpop.f32.mrf.mxu0
    %v5760 = vadd.f32 0.0, %v5759
    %5761 = vmatmul.bf16.gmra.mxu0 %v5631
    %v5762 = vpop.f32.mrf.mxu0
    %v5763 = vadd.f32 0.0, %v5762
    %v5764 = vpop.f32.mrf.mxu0
    %v5765 = vadd.f32 0.0, %v5764
    %5766 = vmatmul.bf16.gmra.mxu0 %v5634
    %v5767 = vpop.f32.mrf.mxu0
    %v5768 = vadd.f32 0.0, %v5767
    %v5769 = vpop.f32.mrf.mxu0
    %v5770 = vadd.f32 0.0, %v5769
    %5771 = vmatmul.bf16.gmra.mxu0 %v5637
    %v5772 = vpop.f32.mrf.mxu0
    %v5773 = vadd.f32 0.0, %v5772
    %v5774 = vpop.f32.mrf.mxu0
    %v5775 = vadd.f32 0.0, %v5774
    %5776 = vmatmul.bf16.gmra.mxu0 %v5640
    %v5777 = vpop.f32.mrf.mxu0
    %v5778 = vadd.f32 0.0, %v5777
    %v5779 = vpop.f32.mrf.mxu0
    %v5780 = vadd.f32 0.0, %v5779
    %5781 = vmatmul.bf16.gmra.mxu0 %v5643
    %v5782 = vpop.f32.mrf.mxu0
    %v5783 = vadd.f32 0.0, %v5782
    %v5784 = vpop.f32.mrf.mxu0
    %v5785 = vadd.f32 0.0, %v5784
    %5786 = vmatmul.bf16.gmra.mxu0 %v5646
    %v5787 = vpop.f32.mrf.mxu0
    %v5788 = vadd.f32 0.0, %v5787
    %v5789 = vpop.f32.mrf.mxu0
    %v5790 = vadd.f32 0.0, %v5789
    %5791 = vmatmul.bf16.gmra.mxu0 %v5649
    %v5792 = vpop.f32.mrf.mxu0
    %v5793 = vadd.f32 0.0, %v5792
    %v5794 = vpop.f32.mrf.mxu0
    %v5795 = vadd.f32 0.0, %v5794
    %5796 = vmatmul.bf16.gmra.mxu0 %v5652
    %v5797 = vpop.f32.mrf.mxu0
    %v5798 = vadd.f32 0.0, %v5797
    %v5799 = vpop.f32.mrf.mxu0
    %v5800 = vadd.f32 0.0, %v5799
    %5801 = vmatmul.bf16.gmra.mxu0 %v5655
    %v5802 = vpop.f32.mrf.mxu0
    %v5803 = vadd.f32 0.0, %v5802
    %v5804 = vpop.f32.mrf.mxu0
    %v5805 = vadd.f32 0.0, %v5804
    %5806 = vmatmul.bf16.gmra.mxu0 %v5658
    %v5807 = vpop.f32.mrf.mxu0
    %v5808 = vadd.f32 0.0, %v5807
    %v5809 = vpop.f32.mrf.mxu0
    %v5810 = vadd.f32 0.0, %v5809
    %5811 = vmatmul.bf16.gmra.mxu0 %v5661
    %v5812 = vpop.f32.mrf.mxu0
    %v5813 = vadd.f32 0.0, %v5812
    %v5814 = vpop.f32.mrf.mxu0
    %v5815 = vadd.f32 0.0, %v5814
    %5816 = vmatmul.bf16.gmra.mxu0 %v5664
    %v5817 = vpop.f32.mrf.mxu0
    %v5818 = vadd.f32 0.0, %v5817
    %v5819 = vpop.f32.mrf.mxu0
    %v5820 = vadd.f32 0.0, %v5819
    %5821 = vmatmul.bf16.gmra.mxu0 %v5667
    %v5822 = vpop.f32.mrf.mxu0
    %v5823 = vadd.f32 0.0, %v5822
    %v5824 = vpop.f32.mrf.mxu0
    %v5825 = vadd.f32 0.0, %v5824
    %5826 = vmatmul.bf16.gmra.mxu0 %v5670
    %v5827 = vpop.f32.mrf.mxu0
    %v5828 = vadd.f32 0.0, %v5827
    %v5829 = vpop.f32.mrf.mxu0
    %v5830 = vadd.f32 0.0, %v5829
    %5831 = vmatmul.bf16.gmra.mxu0 %v5673
    %v5832 = vpop.f32.mrf.mxu0
    %v5833 = vadd.f32 0.0, %v5832
    %v5834 = vpop.f32.mrf.mxu0
    %v5835 = vadd.f32 0.0, %v5834
    %5836 = vmatmul.bf16.gmra.mxu0 %v5676
    %v5837 = vpop.f32.mrf.mxu0
    %v5838 = vadd.f32 0.0, %v5837
    %v5839 = vpop.f32.mrf.mxu0
    %v5840 = vadd.f32 0.0, %v5839
    %5841 = vmatmul.bf16.gmra.mxu0 %v5679
    %v5842 = vpop.f32.mrf.mxu0
    %v5843 = vadd.f32 0.0, %v5842
    %v5844 = vpop.f32.mrf.mxu0
    %v5845 = vadd.f32 0.0, %v5844
    %5846 = vmatmul.bf16.gmra.mxu0 %v5682
    %v5847 = vpop.f32.mrf.mxu0
    %v5848 = vadd.f32 0.0, %v5847
    %v5849 = vpop.f32.mrf.mxu0
    %v5850 = vadd.f32 0.0, %v5849
    %5851 = vmatmul.bf16.gmra.mxu0 %v5685
    %v5852 = vpop.f32.mrf.mxu0
    %v5853 = vadd.f32 0.0, %v5852
    %v5854 = vpop.f32.mrf.mxu0
    %v5855 = vadd.f32 0.0, %v5854
    %5856 = vmatmul.bf16.gmra.mxu0 %v5688
    %v5857 = vpop.f32.mrf.mxu0
    %v5858 = vadd.f32 0.0, %v5857
    %v5859 = vpop.f32.mrf.mxu0
    %v5860 = vadd.f32 0.0, %v5859
    %5861 = vdwg.mxu0
    %v5863 = vperm.slane %v616, 0
    %v5865 = vmul.f32 %v5703, %v5863
    %v5866 = vmul.f32 %v5705, %v5863
    %v5867 = vmul.f32 %v5708, %v5863
    %v5868 = vmul.f32 %v5710, %v5863
    %v5869 = vmul.f32 %v5713, %v5863
    %v5870 = vmul.f32 %v5715, %v5863
    %v5871 = vmul.f32 %v5718, %v5863
    %v5872 = vmul.f32 %v5720, %v5863
    %v5873 = vmul.f32 %v5723, %v5863
    %v5874 = vmul.f32 %v5725, %v5863
    %v5875 = vmul.f32 %v5728, %v5863
    %v5876 = vmul.f32 %v5730, %v5863
    %v5877 = vmul.f32 %v5733, %v5863
    %v5878 = vmul.f32 %v5735, %v5863
    %v5879 = vmul.f32 %v5738, %v5863
    %v5880 = vmul.f32 %v5740, %v5863
    %v5881 = vmul.f32 %v5743, %v5863
    %v5882 = vmul.f32 %v5745, %v5863
    %v5883 = vmul.f32 %v5748, %v5863
    %v5884 = vmul.f32 %v5750, %v5863
    %v5885 = vmul.f32 %v5753, %v5863
    %v5886 = vmul.f32 %v5755, %v5863
    %v5887 = vmul.f32 %v5758, %v5863
    %v5888 = vmul.f32 %v5760, %v5863
    %v5889 = vmul.f32 %v5763, %v5863
    %v5890 = vmul.f32 %v5765, %v5863
    %v5891 = vmul.f32 %v5768, %v5863
    %v5892 = vmul.f32 %v5770, %v5863
    %v5893 = vmul.f32 %v5773, %v5863
    %v5894 = vmul.f32 %v5775, %v5863
    %v5895 = vmul.f32 %v5778, %v5863
    %v5896 = vmul.f32 %v5780, %v5863
    %v5897 = vmul.f32 %v5783, %v5863
    %v5898 = vmul.f32 %v5785, %v5863
    %v5899 = vmul.f32 %v5788, %v5863
    %v5900 = vmul.f32 %v5790, %v5863
    %v5901 = vmul.f32 %v5793, %v5863
    %v5902 = vmul.f32 %v5795, %v5863
    %v5903 = vmul.f32 %v5798, %v5863
    %v5904 = vmul.f32 %v5800, %v5863
    %v5905 = vmul.f32 %v5803, %v5863
    %v5906 = vmul.f32 %v5805, %v5863
    %v5907 = vmul.f32 %v5808, %v5863
    %v5908 = vmul.f32 %v5810, %v5863
    %v5909 = vmul.f32 %v5813, %v5863
    %v5910 = vmul.f32 %v5815, %v5863
    %v5911 = vmul.f32 %v5818, %v5863
    %v5912 = vmul.f32 %v5820, %v5863
    %v5913 = vmul.f32 %v5823, %v5863
    %v5914 = vmul.f32 %v5825, %v5863
    %v5915 = vmul.f32 %v5828, %v5863
    %v5916 = vmul.f32 %v5830, %v5863
    %v5917 = vmul.f32 %v5833, %v5863
    %v5918 = vmul.f32 %v5835, %v5863
    %v5919 = vmul.f32 %v5838, %v5863
    %v5920 = vmul.f32 %v5840, %v5863
    %v5921 = vmul.f32 %v5843, %v5863
    %v5922 = vmul.f32 %v5845, %v5863
    %v5923 = vmul.f32 %v5848, %v5863
    %v5924 = vmul.f32 %v5850, %v5863
    %v5925 = vmul.f32 %v5853, %v5863
    %v5926 = vmul.f32 %v5855, %v5863
    %v5927 = vmul.f32 %v5858, %v5863
    %v5928 = vmul.f32 %v5860, %v5863
    %v5930 = vperm.slane %v615, 0
    %v5932 = vadd.f32 %v5865, %v5930
    %v5933 = vadd.f32 %v5866, %v5930
    %v5934 = vadd.f32 %v5867, %v5930
    %v5935 = vadd.f32 %v5868, %v5930
    %v5936 = vadd.f32 %v5869, %v5930
    %v5937 = vadd.f32 %v5870, %v5930
    %v5938 = vadd.f32 %v5871, %v5930
    %v5939 = vadd.f32 %v5872, %v5930
    %v5940 = vadd.f32 %v5873, %v5930
    %v5941 = vadd.f32 %v5874, %v5930
    %v5942 = vadd.f32 %v5875, %v5930
    %v5943 = vadd.f32 %v5876, %v5930
    %v5944 = vadd.f32 %v5877, %v5930
    %v5945 = vadd.f32 %v5878, %v5930
    %v5946 = vadd.f32 %v5879, %v5930
    %v5947 = vadd.f32 %v5880, %v5930
    %v5948 = vadd.f32 %v5881, %v5930
    %v5949 = vadd.f32 %v5882, %v5930
    %v5950 = vadd.f32 %v5883, %v5930
    %v5951 = vadd.f32 %v5884, %v5930
    %v5952 = vadd.f32 %v5885, %v5930
    %v5953 = vadd.f32 %v5886, %v5930
    %v5954 = vadd.f32 %v5887, %v5930
    %v5955 = vadd.f32 %v5888, %v5930
    %v5956 = vadd.f32 %v5889, %v5930
    %v5957 = vadd.f32 %v5890, %v5930
    %v5958 = vadd.f32 %v5891, %v5930
    %v5959 = vadd.f32 %v5892, %v5930
    %v5960 = vadd.f32 %v5893, %v5930
    %v5961 = vadd.f32 %v5894, %v5930
    %v5962 = vadd.f32 %v5895, %v5930
    %v5963 = vadd.f32 %v5896, %v5930
    %v5964 = vadd.f32 %v5897, %v5930
    %v5965 = vadd.f32 %v5898, %v5930
    %v5966 = vadd.f32 %v5899, %v5930
    %v5967 = vadd.f32 %v5900, %v5930
    %v5968 = vadd.f32 %v5901, %v5930
    %v5969 = vadd.f32 %v5902, %v5930
    %v5970 = vadd.f32 %v5903, %v5930
    %v5971 = vadd.f32 %v5904, %v5930
    %v5972 = vadd.f32 %v5905, %v5930
    %v5973 = vadd.f32 %v5906, %v5930
    %v5974 = vadd.f32 %v5907, %v5930
    %v5975 = vadd.f32 %v5908, %v5930
    %v5976 = vadd.f32 %v5909, %v5930
    %v5977 = vadd.f32 %v5910, %v5930
    %v5978 = vadd.f32 %v5911, %v5930
    %v5979 = vadd.f32 %v5912, %v5930
    %v5980 = vadd.f32 %v5913, %v5930
    %v5981 = vadd.f32 %v5914, %v5930
    %v5982 = vadd.f32 %v5915, %v5930
    %v5983 = vadd.f32 %v5916, %v5930
    %v5984 = vadd.f32 %v5917, %v5930
    %v5985 = vadd.f32 %v5918, %v5930
    %v5986 = vadd.f32 %v5919, %v5930
    %v5987 = vadd.f32 %v5920, %v5930
    %v5988 = vadd.f32 %v5921, %v5930
    %v5989 = vadd.f32 %v5922, %v5930
    %v5990 = vadd.f32 %v5923, %v5930
    %v5991 = vadd.f32 %v5924, %v5930
    %v5992 = vadd.f32 %v5925, %v5930
    %v5993 = vadd.f32 %v5926, %v5930
    %v5994 = vadd.f32 %v5927, %v5930
    %v5995 = vadd.f32 %v5928, %v5930
    %v5996 = vadd.f32 %v5932, 3.0
    %v5997 = vadd.f32 %v5933, 3.0
    %v5998 = vadd.f32 %v5934, 3.0
    %v5999 = vadd.f32 %v5935, 3.0
    %v6000 = vadd.f32 %v5936, 3.0
    %v6001 = vadd.f32 %v5937, 3.0
    %v6002 = vadd.f32 %v5938, 3.0
    %v6003 = vadd.f32 %v5939, 3.0
    %v6004 = vadd.f32 %v5940, 3.0
    %v6005 = vadd.f32 %v5941, 3.0
    %v6006 = vadd.f32 %v5942, 3.0
    %v6007 = vadd.f32 %v5943, 3.0
    %v6008 = vadd.f32 %v5944, 3.0
    %v6009 = vadd.f32 %v5945, 3.0
    %v6010 = vadd.f32 %v5946, 3.0
    %v6011 = vadd.f32 %v5947, 3.0
    %v6012 = vadd.f32 %v5948, 3.0
    %v6013 = vadd.f32 %v5949, 3.0
    %v6014 = vadd.f32 %v5950, 3.0
    %v6015 = vadd.f32 %v5951, 3.0
    %v6016 = vadd.f32 %v5952, 3.0
    %v6017 = vadd.f32 %v5953, 3.0
    %v6018 = vadd.f32 %v5954, 3.0
    %v6019 = vadd.f32 %v5955, 3.0
    %v6020 = vadd.f32 %v5956, 3.0
    %v6021 = vadd.f32 %v5957, 3.0
    %v6022 = vadd.f32 %v5958, 3.0
    %v6023 = vadd.f32 %v5959, 3.0
    %v6024 = vadd.f32 %v5960, 3.0
    %v6025 = vadd.f32 %v5961, 3.0
    %v6026 = vadd.f32 %v5962, 3.0
    %v6027 = vadd.f32 %v5963, 3.0
    %v6028 = vadd.f32 %v5964, 3.0
    %v6029 = vadd.f32 %v5965, 3.0
    %v6030 = vadd.f32 %v5966, 3.0
    %v6031 = vadd.f32 %v5967, 3.0
    %v6032 = vadd.f32 %v5968, 3.0
    %v6033 = vadd.f32 %v5969, 3.0
    %v6034 = vadd.f32 %v5970, 3.0
    %v6035 = vadd.f32 %v5971, 3.0
    %v6036 = vadd.f32 %v5972, 3.0
    %v6037 = vadd.f32 %v5973, 3.0
    %v6038 = vadd.f32 %v5974, 3.0
    %v6039 = vadd.f32 %v5975, 3.0
    %v6040 = vadd.f32 %v5976, 3.0
    %v6041 = vadd.f32 %v5977, 3.0
    %v6042 = vadd.f32 %v5978, 3.0
    %v6043 = vadd.f32 %v5979, 3.0
    %v6044 = vadd.f32 %v5980, 3.0
    %v6045 = vadd.f32 %v5981, 3.0
    %v6046 = vadd.f32 %v5982, 3.0
    %v6047 = vadd.f32 %v5983, 3.0
    %v6048 = vadd.f32 %v5984, 3.0
    %v6049 = vadd.f32 %v5985, 3.0
    %v6050 = vadd.f32 %v5986, 3.0
    %v6051 = vadd.f32 %v5987, 3.0
    %v6052 = vadd.f32 %v5988, 3.0
    %v6053 = vadd.f32 %v5989, 3.0
    %v6054 = vadd.f32 %v5990, 3.0
    %v6055 = vadd.f32 %v5991, 3.0
    %v6056 = vadd.f32 %v5992, 3.0
    %v6057 = vadd.f32 %v5993, 3.0
    %v6058 = vadd.f32 %v5994, 3.0
    %v6059 = vadd.f32 %v5995, 3.0
    %v6060 = vmax.f32 %v5996, 0.0
    %v6061 = vmax.f32 %v5997, 0.0
    %v6062 = vmax.f32 %v5998, 0.0
    %v6063 = vmax.f32 %v5999, 0.0
    %v6064 = vmax.f32 %v6000, 0.0
    %v6065 = vmax.f32 %v6001, 0.0
    %v6066 = vmax.f32 %v6002, 0.0
    %v6067 = vmax.f32 %v6003, 0.0
    %v6068 = vmax.f32 %v6004, 0.0
    %v6069 = vmax.f32 %v6005, 0.0
    %v6070 = vmax.f32 %v6006, 0.0
    %v6071 = vmax.f32 %v6007, 0.0
    %v6072 = vmax.f32 %v6008, 0.0
    %v6073 = vmax.f32 %v6009, 0.0
    %v6074 = vmax.f32 %v6010, 0.0
    %v6075 = vmax.f32 %v6011, 0.0
    %v6076 = vmax.f32 %v6012, 0.0
    %v6077 = vmax.f32 %v6013, 0.0
    %v6078 = vmax.f32 %v6014, 0.0
    %v6079 = vmax.f32 %v6015, 0.0
    %v6080 = vmax.f32 %v6016, 0.0
    %v6081 = vmax.f32 %v6017, 0.0
    %v6082 = vmax.f32 %v6018, 0.0
    %v6083 = vmax.f32 %v6019, 0.0
    %v6084 = vmax.f32 %v6020, 0.0
    %v6085 = vmax.f32 %v6021, 0.0
    %v6086 = vmax.f32 %v6022, 0.0
    %v6087 = vmax.f32 %v6023, 0.0
    %v6088 = vmax.f32 %v6024, 0.0
    %v6089 = vmax.f32 %v6025, 0.0
    %v6090 = vmax.f32 %v6026, 0.0
    %v6091 = vmax.f32 %v6027, 0.0
    %v6092 = vmax.f32 %v6028, 0.0
    %v6093 = vmax.f32 %v6029, 0.0
    %v6094 = vmax.f32 %v6030, 0.0
    %v6095 = vmax.f32 %v6031, 0.0
    %v6096 = vmax.f32 %v6032, 0.0
    %v6097 = vmax.f32 %v6033, 0.0
    %v6098 = vmax.f32 %v6034, 0.0
    %v6099 = vmax.f32 %v6035, 0.0
    %v6100 = vmax.f32 %v6036, 0.0
    %v6101 = vmax.f32 %v6037, 0.0
    %v6102 = vmax.f32 %v6038, 0.0
    %v6103 = vmax.f32 %v6039, 0.0
    %v6104 = vmax.f32 %v6040, 0.0
    %v6105 = vmax.f32 %v6041, 0.0
    %v6106 = vmax.f32 %v6042, 0.0
    %v6107 = vmax.f32 %v6043, 0.0
    %v6108 = vmax.f32 %v6044, 0.0
    %v6109 = vmax.f32 %v6045, 0.0
    %v6110 = vmax.f32 %v6046, 0.0
    %v6111 = vmax.f32 %v6047, 0.0
    %v6112 = vmax.f32 %v6048, 0.0
    %v6113 = vmax.f32 %v6049, 0.0
    %v6114 = vmax.f32 %v6050, 0.0
    %v6115 = vmax.f32 %v6051, 0.0
    %v6116 = vmax.f32 %v6052, 0.0
    %v6117 = vmax.f32 %v6053, 0.0
    %v6118 = vmax.f32 %v6054, 0.0
    %v6119 = vmax.f32 %v6055, 0.0
    %v6120 = vmax.f32 %v6056, 0.0
    %v6121 = vmax.f32 %v6057, 0.0
    %v6122 = vmax.f32 %v6058, 0.0
    %v6123 = vmax.f32 %v6059, 0.0
    %v6124 = vmin.f32 %v6060, 6.0
    %v6125 = vmin.f32 %v6061, 6.0
    %v6126 = vmin.f32 %v6062, 6.0
    %v6127 = vmin.f32 %v6063, 6.0
    %v6128 = vmin.f32 %v6064, 6.0
    %v6129 = vmin.f32 %v6065, 6.0
    %v6130 = vmin.f32 %v6066, 6.0
    %v6131 = vmin.f32 %v6067, 6.0
    %v6132 = vmin.f32 %v6068, 6.0
    %v6133 = vmin.f32 %v6069, 6.0
    %v6134 = vmin.f32 %v6070, 6.0
    %v6135 = vmin.f32 %v6071, 6.0
    %v6136 = vmin.f32 %v6072, 6.0
    %v6137 = vmin.f32 %v6073, 6.0
    %v6138 = vmin.f32 %v6074, 6.0
    %v6139 = vmin.f32 %v6075, 6.0
    %v6140 = vmin.f32 %v6076, 6.0
    %v6141 = vmin.f32 %v6077, 6.0
    %v6142 = vmin.f32 %v6078, 6.0
    %v6143 = vmin.f32 %v6079, 6.0
    %v6144 = vmin.f32 %v6080, 6.0
    %v6145 = vmin.f32 %v6081, 6.0
    %v6146 = vmin.f32 %v6082, 6.0
    %v6147 = vmin.f32 %v6083, 6.0
    %v6148 = vmin.f32 %v6084, 6.0
    %v6149 = vmin.f32 %v6085, 6.0
    %v6150 = vmin.f32 %v6086, 6.0
    %v6151 = vmin.f32 %v6087, 6.0
    %v6152 = vmin.f32 %v6088, 6.0
    %v6153 = vmin.f32 %v6089, 6.0
    %v6154 = vmin.f32 %v6090, 6.0
    %v6155 = vmin.f32 %v6091, 6.0
    %v6156 = vmin.f32 %v6092, 6.0
    %v6157 = vmin.f32 %v6093, 6.0
    %v6158 = vmin.f32 %v6094, 6.0
    %v6159 = vmin.f32 %v6095, 6.0
    %v6160 = vmin.f32 %v6096, 6.0
    %v6161 = vmin.f32 %v6097, 6.0
    %v6162 = vmin.f32 %v6098, 6.0
    %v6163 = vmin.f32 %v6099, 6.0
    %v6164 = vmin.f32 %v6100, 6.0
    %v6165 = vmin.f32 %v6101, 6.0
    %v6166 = vmin.f32 %v6102, 6.0
    %v6167 = vmin.f32 %v6103, 6.0
    %v6168 = vmin.f32 %v6104, 6.0
    %v6169 = vmin.f32 %v6105, 6.0
    %v6170 = vmin.f32 %v6106, 6.0
    %v6171 = vmin.f32 %v6107, 6.0
    %v6172 = vmin.f32 %v6108, 6.0
    %v6173 = vmin.f32 %v6109, 6.0
    %v6174 = vmin.f32 %v6110, 6.0
    %v6175 = vmin.f32 %v6111, 6.0
    %v6176 = vmin.f32 %v6112, 6.0
    %v6177 = vmin.f32 %v6113, 6.0
    %v6178 = vmin.f32 %v6114, 6.0
    %v6179 = vmin.f32 %v6115, 6.0
    %v6180 = vmin.f32 %v6116, 6.0
    %v6181 = vmin.f32 %v6117, 6.0
    %v6182 = vmin.f32 %v6118, 6.0
    %v6183 = vmin.f32 %v6119, 6.0
    %v6184 = vmin.f32 %v6120, 6.0
    %v6185 = vmin.f32 %v6121, 6.0
    %v6186 = vmin.f32 %v6122, 6.0
    %v6187 = vmin.f32 %v6123, 6.0
    %v6188 = vmul.f32 %v5932, %v6124
    %v6189 = vmul.f32 %v5933, %v6125
    %v6190 = vmul.f32 %v5934, %v6126
    %v6191 = vmul.f32 %v5935, %v6127
    %v6192 = vmul.f32 %v5936, %v6128
    %v6193 = vmul.f32 %v5937, %v6129
    %v6194 = vmul.f32 %v5938, %v6130
    %v6195 = vmul.f32 %v5939, %v6131
    %v6196 = vmul.f32 %v5940, %v6132
    %v6197 = vmul.f32 %v5941, %v6133
    %v6198 = vmul.f32 %v5942, %v6134
    %v6199 = vmul.f32 %v5943, %v6135
    %v6200 = vmul.f32 %v5944, %v6136
    %v6201 = vmul.f32 %v5945, %v6137
    %v6202 = vmul.f32 %v5946, %v6138
    %v6203 = vmul.f32 %v5947, %v6139
    %v6204 = vmul.f32 %v5948, %v6140
    %v6205 = vmul.f32 %v5949, %v6141
    %v6206 = vmul.f32 %v5950, %v6142
    %v6207 = vmul.f32 %v5951, %v6143
    %v6208 = vmul.f32 %v5952, %v6144
    %v6209 = vmul.f32 %v5953, %v6145
    %v6210 = vmul.f32 %v5954, %v6146
    %v6211 = vmul.f32 %v5955, %v6147
    %v6212 = vmul.f32 %v5956, %v6148
    %v6213 = vmul.f32 %v5957, %v6149
    %v6214 = vmul.f32 %v5958, %v6150
    %v6215 = vmul.f32 %v5959, %v6151
    %v6216 = vmul.f32 %v5960, %v6152
    %v6217 = vmul.f32 %v5961, %v6153
    %v6218 = vmul.f32 %v5962, %v6154
    %v6219 = vmul.f32 %v5963, %v6155
    %v6220 = vmul.f32 %v5964, %v6156
    %v6221 = vmul.f32 %v5965, %v6157
    %v6222 = vmul.f32 %v5966, %v6158
    %v6223 = vmul.f32 %v5967, %v6159
    %v6224 = vmul.f32 %v5968, %v6160
    %v6225 = vmul.f32 %v5969, %v6161
    %v6226 = vmul.f32 %v5970, %v6162
    %v6227 = vmul.f32 %v5971, %v6163
    %v6228 = vmul.f32 %v5972, %v6164
    %v6229 = vmul.f32 %v5973, %v6165
    %v6230 = vmul.f32 %v5974, %v6166
    %v6231 = vmul.f32 %v5975, %v6167
    %v6232 = vmul.f32 %v5976, %v6168
    %v6233 = vmul.f32 %v5977, %v6169
    %v6234 = vmul.f32 %v5978, %v6170
    %v6235 = vmul.f32 %v5979, %v6171
    %v6236 = vmul.f32 %v5980, %v6172
    %v6237 = vmul.f32 %v5981, %v6173
    %v6238 = vmul.f32 %v5982, %v6174
    %v6239 = vmul.f32 %v5983, %v6175
    %v6240 = vmul.f32 %v5984, %v6176
    %v6241 = vmul.f32 %v5985, %v6177
    %v6242 = vmul.f32 %v5986, %v6178
    %v6243 = vmul.f32 %v5987, %v6179
    %v6244 = vmul.f32 %v5988, %v6180
    %v6245 = vmul.f32 %v5989, %v6181
    %v6246 = vmul.f32 %v5990, %v6182
    %v6247 = vmul.f32 %v5991, %v6183
    %v6248 = vmul.f32 %v5992, %v6184
    %v6249 = vmul.f32 %v5993, %v6185
    %v6250 = vmul.f32 %v5994, %v6186
    %v6251 = vmul.f32 %v5995, %v6187
    %v6252 = vmul.f32 %v6188, 0.16666667
    %v6253 = vmul.f32 %v6189, 0.16666667
    %v6254 = vmul.f32 %v6190, 0.16666667
    %v6255 = vmul.f32 %v6191, 0.16666667
    %v6256 = vmul.f32 %v6192, 0.16666667
    %v6257 = vmul.f32 %v6193, 0.16666667
    %v6258 = vmul.f32 %v6194, 0.16666667
    %v6259 = vmul.f32 %v6195, 0.16666667
    %v6260 = vmul.f32 %v6196, 0.16666667
    %v6261 = vmul.f32 %v6197, 0.16666667
    %v6262 = vmul.f32 %v6198, 0.16666667
    %v6263 = vmul.f32 %v6199, 0.16666667
    %v6264 = vmul.f32 %v6200, 0.16666667
    %v6265 = vmul.f32 %v6201, 0.16666667
    %v6266 = vmul.f32 %v6202, 0.16666667
    %v6267 = vmul.f32 %v6203, 0.16666667
    %v6268 = vmul.f32 %v6204, 0.16666667
    %v6269 = vmul.f32 %v6205, 0.16666667
    %v6270 = vmul.f32 %v6206, 0.16666667
    %v6271 = vmul.f32 %v6207, 0.16666667
    %v6272 = vmul.f32 %v6208, 0.16666667
    %v6273 = vmul.f32 %v6209, 0.16666667
    %v6274 = vmul.f32 %v6210, 0.16666667
    %v6275 = vmul.f32 %v6211, 0.16666667
    %v6276 = vmul.f32 %v6212, 0.16666667
    %v6277 = vmul.f32 %v6213, 0.16666667
    %v6278 = vmul.f32 %v6214, 0.16666667
    %v6279 = vmul.f32 %v6215, 0.16666667
    %v6280 = vmul.f32 %v6216, 0.16666667
    %v6281 = vmul.f32 %v6217, 0.16666667
    %v6282 = vmul.f32 %v6218, 0.16666667
    %v6283 = vmul.f32 %v6219, 0.16666667
    %v6284 = vmul.f32 %v6220, 0.16666667
    %v6285 = vmul.f32 %v6221, 0.16666667
    %v6286 = vmul.f32 %v6222, 0.16666667
    %v6287 = vmul.f32 %v6223, 0.16666667
    %v6288 = vmul.f32 %v6224, 0.16666667
    %v6289 = vmul.f32 %v6225, 0.16666667
    %v6290 = vmul.f32 %v6226, 0.16666667
    %v6291 = vmul.f32 %v6227, 0.16666667
    %v6292 = vmul.f32 %v6228, 0.16666667
    %v6293 = vmul.f32 %v6229, 0.16666667
    %v6294 = vmul.f32 %v6230, 0.16666667
    %v6295 = vmul.f32 %v6231, 0.16666667
    %v6296 = vmul.f32 %v6232, 0.16666667
    %v6297 = vmul.f32 %v6233, 0.16666667
    %v6298 = vmul.f32 %v6234, 0.16666667
    %v6299 = vmul.f32 %v6235, 0.16666667
    %v6300 = vmul.f32 %v6236, 0.16666667
    %v6301 = vmul.f32 %v6237, 0.16666667
    %v6302 = vmul.f32 %v6238, 0.16666667
    %v6303 = vmul.f32 %v6239, 0.16666667
    %v6304 = vmul.f32 %v6240, 0.16666667
    %v6305 = vmul.f32 %v6241, 0.16666667
    %v6306 = vmul.f32 %v6242, 0.16666667
    %v6307 = vmul.f32 %v6243, 0.16666667
    %v6308 = vmul.f32 %v6244, 0.16666667
    %v6309 = vmul.f32 %v6245, 0.16666667
    %v6310 = vmul.f32 %v6246, 0.16666667
    %v6311 = vmul.f32 %v6247, 0.16666667
    %v6312 = vmul.f32 %v6248, 0.16666667
    %v6313 = vmul.f32 %v6249, 0.16666667
    %v6314 = vmul.f32 %v6250, 0.16666667
    %v6315 = vmul.f32 %v6251, 0.16666667
    %v6316 = vpack.c.bf16 %v6253, %v6252
    %v6317 = vpack.c.bf16 %v6255, %v6254
    %v6318 = vpack.c.bf16 %v6257, %v6256
    %v6319 = vpack.c.bf16 %v6259, %v6258
    %v6320 = vpack.c.bf16 %v6261, %v6260
    %v6321 = vpack.c.bf16 %v6263, %v6262
    %v6322 = vpack.c.bf16 %v6265, %v6264
    %v6323 = vpack.c.bf16 %v6267, %v6266
    %v6324 = vpack.c.bf16 %v6269, %v6268
    %v6325 = vpack.c.bf16 %v6271, %v6270
    %v6326 = vpack.c.bf16 %v6273, %v6272
    %v6327 = vpack.c.bf16 %v6275, %v6274
    %v6328 = vpack.c.bf16 %v6277, %v6276
    %v6329 = vpack.c.bf16 %v6279, %v6278
    %v6330 = vpack.c.bf16 %v6281, %v6280
    %v6331 = vpack.c.bf16 %v6283, %v6282
    %v6332 = vpack.c.bf16 %v6285, %v6284
    %v6333 = vpack.c.bf16 %v6287, %v6286
    %v6334 = vpack.c.bf16 %v6289, %v6288
    %v6335 = vpack.c.bf16 %v6291, %v6290
    %v6336 = vpack.c.bf16 %v6293, %v6292
    %v6337 = vpack.c.bf16 %v6295, %v6294
    %v6338 = vpack.c.bf16 %v6297, %v6296
    %v6339 = vpack.c.bf16 %v6299, %v6298
    %v6340 = vpack.c.bf16 %v6301, %v6300
    %v6341 = vpack.c.bf16 %v6303, %v6302
    %v6342 = vpack.c.bf16 %v6305, %v6304
    %v6343 = vpack.c.bf16 %v6307, %v6306
    %v6344 = vpack.c.bf16 %v6309, %v6308
    %v6345 = vpack.c.bf16 %v6311, %v6310
    %v6346 = vpack.c.bf16 %v6313, %v6312
    %v6347 = vpack.c.bf16 %v6315, %v6314
    %vm6348 = vcmask 31744
    %v6350 = vsel %vm6348, %v6316, 0
    %v6353 = vsel %vm6348, %v6317, 0
    %v6356 = vsel %vm6348, %v6318, 0
    %v6359 = vsel %vm6348, %v6319, 0
    %v6362 = vsel %vm6348, %v6320, 0
    %v6365 = vsel %vm6348, %v6321, 0
    %v6368 = vsel %vm6348, %v6322, 0
    %v6371 = vsel %vm6348, %v6323, 0
    %v6374 = vsel %vm6348, %v6324, 0
    %v6377 = vsel %vm6348, %v6325, 0
    %v6380 = vsel %vm6348, %v6326, 0
    %v6383 = vsel %vm6348, %v6327, 0
    %v6386 = vsel %vm6348, %v6328, 0
    %v6389 = vsel %vm6348, %v6329, 0
    %v6392 = vsel %vm6348, %v6330, 0
    %v6395 = vsel %vm6348, %v6331, 0
    %v6398 = vsel %vm6348, %v6332, 0
    %v6401 = vsel %vm6348, %v6333, 0
    %v6404 = vsel %vm6348, %v6334, 0
    %v6407 = vsel %vm6348, %v6335, 0
    %v6410 = vsel %vm6348, %v6336, 0
    %v6413 = vsel %vm6348, %v6337, 0
    %v6416 = vsel %vm6348, %v6338, 0
    %v6419 = vsel %vm6348, %v6339, 0
    %v6422 = vsel %vm6348, %v6340, 0
    %v6425 = vsel %vm6348, %v6341, 0
    %v6428 = vsel %vm6348, %v6342, 0
    %v6431 = vsel %vm6348, %v6343, 0
    %v6434 = vsel %vm6348, %v6344, 0
    %v6437 = vsel %vm6348, %v6345, 0
    %v6440 = vsel %vm6348, %v6346, 0
    %v6443 = vsel %vm6348, %v6347, 0
    %v6446 = vsel %vm894, %v625, 0
    %6448 = vmatpush.bf16.msra.mxu0 0
    %6449 = vmatpush.bf16.msra.mxu0 0
    %6450 = vmatpush.bf16.msra.mxu0 0
    %6451 = vmatpush.bf16.msra.mxu0 0
    %6452 = vmatpush.bf16.msra.mxu0 0
    %6453 = vmatpush.bf16.msra.mxu0 0
    %6454 = vmatpush.bf16.msra.mxu0 0
    %6455 = vmatpush.bf16.msra.mxu0 %v6446
    %6456 = vmatmul.bf16.gmra.mxu0 %v6350
    %v6457 = vpop.f32.mrf.mxu0
    %v6458 = vadd.f32 0.0, %v6457
    %v6459 = vpop.f32.mrf.mxu0
    %v6460 = vadd.f32 0.0, %v6459
    %6461 = vmatmul.bf16.gmra.mxu0 %v6353
    %v6462 = vpop.f32.mrf.mxu0
    %v6463 = vadd.f32 0.0, %v6462
    %v6464 = vpop.f32.mrf.mxu0
    %v6465 = vadd.f32 0.0, %v6464
    %6466 = vmatmul.bf16.gmra.mxu0 %v6356
    %v6467 = vpop.f32.mrf.mxu0
    %v6468 = vadd.f32 0.0, %v6467
    %v6469 = vpop.f32.mrf.mxu0
    %v6470 = vadd.f32 0.0, %v6469
    %6471 = vmatmul.bf16.gmra.mxu0 %v6359
    %v6472 = vpop.f32.mrf.mxu0
    %v6473 = vadd.f32 0.0, %v6472
    %v6474 = vpop.f32.mrf.mxu0
    %v6475 = vadd.f32 0.0, %v6474
    %6476 = vmatmul.bf16.gmra.mxu0 %v6362
    %v6477 = vpop.f32.mrf.mxu0
    %v6478 = vadd.f32 0.0, %v6477
    %v6479 = vpop.f32.mrf.mxu0
    %v6480 = vadd.f32 0.0, %v6479
    %6481 = vmatmul.bf16.gmra.mxu0 %v6365
    %v6482 = vpop.f32.mrf.mxu0
    %v6483 = vadd.f32 0.0, %v6482
    %v6484 = vpop.f32.mrf.mxu0
    %v6485 = vadd.f32 0.0, %v6484
    %6486 = vmatmul.bf16.gmra.mxu0 %v6368
    %v6487 = vpop.f32.mrf.mxu0
    %v6488 = vadd.f32 0.0, %v6487
    %v6489 = vpop.f32.mrf.mxu0
    %v6490 = vadd.f32 0.0, %v6489
    %6491 = vmatmul.bf16.gmra.mxu0 %v6371
    %v6492 = vpop.f32.mrf.mxu0
    %v6493 = vadd.f32 0.0, %v6492
    %v6494 = vpop.f32.mrf.mxu0
    %v6495 = vadd.f32 0.0, %v6494
    %6496 = vmatmul.bf16.gmra.mxu0 %v6374
    %v6497 = vpop.f32.mrf.mxu0
    %v6498 = vadd.f32 0.0, %v6497
    %v6499 = vpop.f32.mrf.mxu0
    %v6500 = vadd.f32 0.0, %v6499
    %6501 = vmatmul.bf16.gmra.mxu0 %v6377
    %v6502 = vpop.f32.mrf.mxu0
    %v6503 = vadd.f32 0.0, %v6502
    %v6504 = vpop.f32.mrf.mxu0
    %v6505 = vadd.f32 0.0, %v6504
    %6506 = vmatmul.bf16.gmra.mxu0 %v6380
    %v6507 = vpop.f32.mrf.mxu0
    %v6508 = vadd.f32 0.0, %v6507
    %v6509 = vpop.f32.mrf.mxu0
    %v6510 = vadd.f32 0.0, %v6509
    %6511 = vmatmul.bf16.gmra.mxu0 %v6383
    %v6512 = vpop.f32.mrf.mxu0
    %v6513 = vadd.f32 0.0, %v6512
    %v6514 = vpop.f32.mrf.mxu0
    %v6515 = vadd.f32 0.0, %v6514
    %6516 = vmatmul.bf16.gmra.mxu0 %v6386
    %v6517 = vpop.f32.mrf.mxu0
    %v6518 = vadd.f32 0.0, %v6517
    %v6519 = vpop.f32.mrf.mxu0
    %v6520 = vadd.f32 0.0, %v6519
    %6521 = vmatmul.bf16.gmra.mxu0 %v6389
    %v6522 = vpop.f32.mrf.mxu0
    %v6523 = vadd.f32 0.0, %v6522
    %v6524 = vpop.f32.mrf.mxu0
    %v6525 = vadd.f32 0.0, %v6524
    %6526 = vmatmul.bf16.gmra.mxu0 %v6392
    %v6527 = vpop.f32.mrf.mxu0
    %v6528 = vadd.f32 0.0, %v6527
    %v6529 = vpop.f32.mrf.mxu0
    %v6530 = vadd.f32 0.0, %v6529
    %6531 = vmatmul.bf16.gmra.mxu0 %v6395
    %v6532 = vpop.f32.mrf.mxu0
    %v6533 = vadd.f32 0.0, %v6532
    %v6534 = vpop.f32.mrf.mxu0
    %v6535 = vadd.f32 0.0, %v6534
    %6536 = vmatmul.bf16.gmra.mxu0 %v6398
    %v6537 = vpop.f32.mrf.mxu0
    %v6538 = vadd.f32 0.0, %v6537
    %v6539 = vpop.f32.mrf.mxu0
    %v6540 = vadd.f32 0.0, %v6539
    %6541 = vmatmul.bf16.gmra.mxu0 %v6401
    %v6542 = vpop.f32.mrf.mxu0
    %v6543 = vadd.f32 0.0, %v6542
    %v6544 = vpop.f32.mrf.mxu0
    %v6545 = vadd.f32 0.0, %v6544
    %6546 = vmatmul.bf16.gmra.mxu0 %v6404
    %v6547 = vpop.f32.mrf.mxu0
    %v6548 = vadd.f32 0.0, %v6547
    %v6549 = vpop.f32.mrf.mxu0
    %v6550 = vadd.f32 0.0, %v6549
    %6551 = vmatmul.bf16.gmra.mxu0 %v6407
    %v6552 = vpop.f32.mrf.mxu0
    %v6553 = vadd.f32 0.0, %v6552
    %v6554 = vpop.f32.mrf.mxu0
    %v6555 = vadd.f32 0.0, %v6554
    %6556 = vmatmul.bf16.gmra.mxu0 %v6410
    %v6557 = vpop.f32.mrf.mxu0
    %v6558 = vadd.f32 0.0, %v6557
    %v6559 = vpop.f32.mrf.mxu0
    %v6560 = vadd.f32 0.0, %v6559
    %6561 = vmatmul.bf16.gmra.mxu0 %v6413
    %v6562 = vpop.f32.mrf.mxu0
    %v6563 = vadd.f32 0.0, %v6562
    %v6564 = vpop.f32.mrf.mxu0
    %v6565 = vadd.f32 0.0, %v6564
    %6566 = vmatmul.bf16.gmra.mxu0 %v6416
    %v6567 = vpop.f32.mrf.mxu0
    %v6568 = vadd.f32 0.0, %v6567
    %v6569 = vpop.f32.mrf.mxu0
    %v6570 = vadd.f32 0.0, %v6569
    %6571 = vmatmul.bf16.gmra.mxu0 %v6419
    %v6572 = vpop.f32.mrf.mxu0
    %v6573 = vadd.f32 0.0, %v6572
    %v6574 = vpop.f32.mrf.mxu0
    %v6575 = vadd.f32 0.0, %v6574
    %6576 = vmatmul.bf16.gmra.mxu0 %v6422
    %v6577 = vpop.f32.mrf.mxu0
    %v6578 = vadd.f32 0.0, %v6577
    %v6579 = vpop.f32.mrf.mxu0
    %v6580 = vadd.f32 0.0, %v6579
    %6581 = vmatmul.bf16.gmra.mxu0 %v6425
    %v6582 = vpop.f32.mrf.mxu0
    %v6583 = vadd.f32 0.0, %v6582
    %v6584 = vpop.f32.mrf.mxu0
    %v6585 = vadd.f32 0.0, %v6584
    %6586 = vmatmul.bf16.gmra.mxu0 %v6428
    %v6587 = vpop.f32.mrf.mxu0
    %v6588 = vadd.f32 0.0, %v6587
    %v6589 = vpop.f32.mrf.mxu0
    %v6590 = vadd.f32 0.0, %v6589
    %6591 = vmatmul.bf16.gmra.mxu0 %v6431
    %v6592 = vpop.f32.mrf.mxu0
    %v6593 = vadd.f32 0.0, %v6592
    %v6594 = vpop.f32.mrf.mxu0
    %v6595 = vadd.f32 0.0, %v6594
    %6596 = vmatmul.bf16.gmra.mxu0 %v6434
    %v6597 = vpop.f32.mrf.mxu0
    %v6598 = vadd.f32 0.0, %v6597
    %v6599 = vpop.f32.mrf.mxu0
    %v6600 = vadd.f32 0.0, %v6599
    %6601 = vmatmul.bf16.gmra.mxu0 %v6437
    %v6602 = vpop.f32.mrf.mxu0
    %v6603 = vadd.f32 0.0, %v6602
    %v6604 = vpop.f32.mrf.mxu0
    %v6605 = vadd.f32 0.0, %v6604
    %6606 = vmatmul.bf16.gmra.mxu0 %v6440
    %v6607 = vpop.f32.mrf.mxu0
    %v6608 = vadd.f32 0.0, %v6607
    %v6609 = vpop.f32.mrf.mxu0
    %v6610 = vadd.f32 0.0, %v6609
    %6611 = vmatmul.bf16.gmra.mxu0 %v6443
    %v6612 = vpop.f32.mrf.mxu0
    %v6613 = vadd.f32 0.0, %v6612
    %v6614 = vpop.f32.mrf.mxu0
    %v6615 = vadd.f32 0.0, %v6614
    %6616 = vdwg.mxu0
    %v6618 = vperm.slane %v624, 0
    %v6620 = vmul.f32 %v6458, %v6618
    %v6621 = vmul.f32 %v6460, %v6618
    %v6622 = vmul.f32 %v6463, %v6618
    %v6623 = vmul.f32 %v6465, %v6618
    %v6624 = vmul.f32 %v6468, %v6618
    %v6625 = vmul.f32 %v6470, %v6618
    %v6626 = vmul.f32 %v6473, %v6618
    %v6627 = vmul.f32 %v6475, %v6618
    %v6628 = vmul.f32 %v6478, %v6618
    %v6629 = vmul.f32 %v6480, %v6618
    %v6630 = vmul.f32 %v6483, %v6618
    %v6631 = vmul.f32 %v6485, %v6618
    %v6632 = vmul.f32 %v6488, %v6618
    %v6633 = vmul.f32 %v6490, %v6618
    %v6634 = vmul.f32 %v6493, %v6618
    %v6635 = vmul.f32 %v6495, %v6618
    %v6636 = vmul.f32 %v6498, %v6618
    %v6637 = vmul.f32 %v6500, %v6618
    %v6638 = vmul.f32 %v6503, %v6618
    %v6639 = vmul.f32 %v6505, %v6618
    %v6640 = vmul.f32 %v6508, %v6618
    %v6641 = vmul.f32 %v6510, %v6618
    %v6642 = vmul.f32 %v6513, %v6618
    %v6643 = vmul.f32 %v6515, %v6618
    %v6644 = vmul.f32 %v6518, %v6618
    %v6645 = vmul.f32 %v6520, %v6618
    %v6646 = vmul.f32 %v6523, %v6618
    %v6647 = vmul.f32 %v6525, %v6618
    %v6648 = vmul.f32 %v6528, %v6618
    %v6649 = vmul.f32 %v6530, %v6618
    %v6650 = vmul.f32 %v6533, %v6618
    %v6651 = vmul.f32 %v6535, %v6618
    %v6652 = vmul.f32 %v6538, %v6618
    %v6653 = vmul.f32 %v6540, %v6618
    %v6654 = vmul.f32 %v6543, %v6618
    %v6655 = vmul.f32 %v6545, %v6618
    %v6656 = vmul.f32 %v6548, %v6618
    %v6657 = vmul.f32 %v6550, %v6618
    %v6658 = vmul.f32 %v6553, %v6618
    %v6659 = vmul.f32 %v6555, %v6618
    %v6660 = vmul.f32 %v6558, %v6618
    %v6661 = vmul.f32 %v6560, %v6618
    %v6662 = vmul.f32 %v6563, %v6618
    %v6663 = vmul.f32 %v6565, %v6618
    %v6664 = vmul.f32 %v6568, %v6618
    %v6665 = vmul.f32 %v6570, %v6618
    %v6666 = vmul.f32 %v6573, %v6618
    %v6667 = vmul.f32 %v6575, %v6618
    %v6668 = vmul.f32 %v6578, %v6618
    %v6669 = vmul.f32 %v6580, %v6618
    %v6670 = vmul.f32 %v6583, %v6618
    %v6671 = vmul.f32 %v6585, %v6618
    %v6672 = vmul.f32 %v6588, %v6618
    %v6673 = vmul.f32 %v6590, %v6618
    %v6674 = vmul.f32 %v6593, %v6618
    %v6675 = vmul.f32 %v6595, %v6618
    %v6676 = vmul.f32 %v6598, %v6618
    %v6677 = vmul.f32 %v6600, %v6618
    %v6678 = vmul.f32 %v6603, %v6618
    %v6679 = vmul.f32 %v6605, %v6618
    %v6680 = vmul.f32 %v6608, %v6618
    %v6681 = vmul.f32 %v6610, %v6618
    %v6682 = vmul.f32 %v6613, %v6618
    %v6683 = vmul.f32 %v6615, %v6618
    %v6685 = vperm.slane %v623, 0
    %v6687 = vadd.f32 %v6620, %v6685
    %v6688 = vadd.f32 %v6621, %v6685
    %v6689 = vadd.f32 %v6622, %v6685
    %v6690 = vadd.f32 %v6623, %v6685
    %v6691 = vadd.f32 %v6624, %v6685
    %v6692 = vadd.f32 %v6625, %v6685
    %v6693 = vadd.f32 %v6626, %v6685
    %v6694 = vadd.f32 %v6627, %v6685
    %v6695 = vadd.f32 %v6628, %v6685
    %v6696 = vadd.f32 %v6629, %v6685
    %v6697 = vadd.f32 %v6630, %v6685
    %v6698 = vadd.f32 %v6631, %v6685
    %v6699 = vadd.f32 %v6632, %v6685
    %v6700 = vadd.f32 %v6633, %v6685
    %v6701 = vadd.f32 %v6634, %v6685
    %v6702 = vadd.f32 %v6635, %v6685
    %v6703 = vadd.f32 %v6636, %v6685
    %v6704 = vadd.f32 %v6637, %v6685
    %v6705 = vadd.f32 %v6638, %v6685
    %v6706 = vadd.f32 %v6639, %v6685
    %v6707 = vadd.f32 %v6640, %v6685
    %v6708 = vadd.f32 %v6641, %v6685
    %v6709 = vadd.f32 %v6642, %v6685
    %v6710 = vadd.f32 %v6643, %v6685
    %v6711 = vadd.f32 %v6644, %v6685
    %v6712 = vadd.f32 %v6645, %v6685
    %v6713 = vadd.f32 %v6646, %v6685
    %v6714 = vadd.f32 %v6647, %v6685
    %v6715 = vadd.f32 %v6648, %v6685
    %v6716 = vadd.f32 %v6649, %v6685
    %v6717 = vadd.f32 %v6650, %v6685
    %v6718 = vadd.f32 %v6651, %v6685
    %v6719 = vadd.f32 %v6652, %v6685
    %v6720 = vadd.f32 %v6653, %v6685
    %v6721 = vadd.f32 %v6654, %v6685
    %v6722 = vadd.f32 %v6655, %v6685
    %v6723 = vadd.f32 %v6656, %v6685
    %v6724 = vadd.f32 %v6657, %v6685
    %v6725 = vadd.f32 %v6658, %v6685
    %v6726 = vadd.f32 %v6659, %v6685
    %v6727 = vadd.f32 %v6660, %v6685
    %v6728 = vadd.f32 %v6661, %v6685
    %v6729 = vadd.f32 %v6662, %v6685
    %v6730 = vadd.f32 %v6663, %v6685
    %v6731 = vadd.f32 %v6664, %v6685
    %v6732 = vadd.f32 %v6665, %v6685
    %v6733 = vadd.f32 %v6666, %v6685
    %v6734 = vadd.f32 %v6667, %v6685
    %v6735 = vadd.f32 %v6668, %v6685
    %v6736 = vadd.f32 %v6669, %v6685
    %v6737 = vadd.f32 %v6670, %v6685
    %v6738 = vadd.f32 %v6671, %v6685
    %v6739 = vadd.f32 %v6672, %v6685
    %v6740 = vadd.f32 %v6673, %v6685
    %v6741 = vadd.f32 %v6674, %v6685
    %v6742 = vadd.f32 %v6675, %v6685
    %v6743 = vadd.f32 %v6676, %v6685
    %v6744 = vadd.f32 %v6677, %v6685
    %v6745 = vadd.f32 %v6678, %v6685
    %v6746 = vadd.f32 %v6679, %v6685
    %v6747 = vadd.f32 %v6680, %v6685
    %v6748 = vadd.f32 %v6681, %v6685
    %v6749 = vadd.f32 %v6682, %v6685
    %v6750 = vadd.f32 %v6683, %v6685
    %v6751 = vadd.f32 %v6687, 3.0
    %v6752 = vadd.f32 %v6688, 3.0
    %v6753 = vadd.f32 %v6689, 3.0
    %v6754 = vadd.f32 %v6690, 3.0
    %v6755 = vadd.f32 %v6691, 3.0
    %v6756 = vadd.f32 %v6692, 3.0
    %v6757 = vadd.f32 %v6693, 3.0
    %v6758 = vadd.f32 %v6694, 3.0
    %v6759 = vadd.f32 %v6695, 3.0
    %v6760 = vadd.f32 %v6696, 3.0
    %v6761 = vadd.f32 %v6697, 3.0
    %v6762 = vadd.f32 %v6698, 3.0
    %v6763 = vadd.f32 %v6699, 3.0
    %v6764 = vadd.f32 %v6700, 3.0
    %v6765 = vadd.f32 %v6701, 3.0
    %v6766 = vadd.f32 %v6702, 3.0
    %v6767 = vadd.f32 %v6703, 3.0
    %v6768 = vadd.f32 %v6704, 3.0
    %v6769 = vadd.f32 %v6705, 3.0
    %v6770 = vadd.f32 %v6706, 3.0
    %v6771 = vadd.f32 %v6707, 3.0
    %v6772 = vadd.f32 %v6708, 3.0
    %v6773 = vadd.f32 %v6709, 3.0
    %v6774 = vadd.f32 %v6710, 3.0
    %v6775 = vadd.f32 %v6711, 3.0
    %v6776 = vadd.f32 %v6712, 3.0
    %v6777 = vadd.f32 %v6713, 3.0
    %v6778 = vadd.f32 %v6714, 3.0
    %v6779 = vadd.f32 %v6715, 3.0
    %v6780 = vadd.f32 %v6716, 3.0
    %v6781 = vadd.f32 %v6717, 3.0
    %v6782 = vadd.f32 %v6718, 3.0
    %v6783 = vadd.f32 %v6719, 3.0
    %v6784 = vadd.f32 %v6720, 3.0
    %v6785 = vadd.f32 %v6721, 3.0
    %v6786 = vadd.f32 %v6722, 3.0
    %v6787 = vadd.f32 %v6723, 3.0
    %v6788 = vadd.f32 %v6724, 3.0
    %v6789 = vadd.f32 %v6725, 3.0
    %v6790 = vadd.f32 %v6726, 3.0
    %v6791 = vadd.f32 %v6727, 3.0
    %v6792 = vadd.f32 %v6728, 3.0
    %v6793 = vadd.f32 %v6729, 3.0
    %v6794 = vadd.f32 %v6730, 3.0
    %v6795 = vadd.f32 %v6731, 3.0
    %v6796 = vadd.f32 %v6732, 3.0
    %v6797 = vadd.f32 %v6733, 3.0
    %v6798 = vadd.f32 %v6734, 3.0
    %v6799 = vadd.f32 %v6735, 3.0
    %v6800 = vadd.f32 %v6736, 3.0
    %v6801 = vadd.f32 %v6737, 3.0
    %v6802 = vadd.f32 %v6738, 3.0
    %v6803 = vadd.f32 %v6739, 3.0
    %v6804 = vadd.f32 %v6740, 3.0
    %v6805 = vadd.f32 %v6741, 3.0
    %v6806 = vadd.f32 %v6742, 3.0
    %v6807 = vadd.f32 %v6743, 3.0
    %v6808 = vadd.f32 %v6744, 3.0
    %v6809 = vadd.f32 %v6745, 3.0
    %v6810 = vadd.f32 %v6746, 3.0
    %v6811 = vadd.f32 %v6747, 3.0
    %v6812 = vadd.f32 %v6748, 3.0
    %v6813 = vadd.f32 %v6749, 3.0
    %v6814 = vadd.f32 %v6750, 3.0
    %v6815 = vmax.f32 %v6751, 0.0
    %v6816 = vmax.f32 %v6752, 0.0
    %v6817 = vmax.f32 %v6753, 0.0
    %v6818 = vmax.f32 %v6754, 0.0
    %v6819 = vmax.f32 %v6755, 0.0
    %v6820 = vmax.f32 %v6756, 0.0
    %v6821 = vmax.f32 %v6757, 0.0
    %v6822 = vmax.f32 %v6758, 0.0
    %v6823 = vmax.f32 %v6759, 0.0
    %v6824 = vmax.f32 %v6760, 0.0
    %v6825 = vmax.f32 %v6761, 0.0
    %v6826 = vmax.f32 %v6762, 0.0
    %v6827 = vmax.f32 %v6763, 0.0
    %v6828 = vmax.f32 %v6764, 0.0
    %v6829 = vmax.f32 %v6765, 0.0
    %v6830 = vmax.f32 %v6766, 0.0
    %v6831 = vmax.f32 %v6767, 0.0
    %v6832 = vmax.f32 %v6768, 0.0
    %v6833 = vmax.f32 %v6769, 0.0
    %v6834 = vmax.f32 %v6770, 0.0
    %v6835 = vmax.f32 %v6771, 0.0
    %v6836 = vmax.f32 %v6772, 0.0
    %v6837 = vmax.f32 %v6773, 0.0
    %v6838 = vmax.f32 %v6774, 0.0
    %v6839 = vmax.f32 %v6775, 0.0
    %v6840 = vmax.f32 %v6776, 0.0
    %v6841 = vmax.f32 %v6777, 0.0
    %v6842 = vmax.f32 %v6778, 0.0
    %v6843 = vmax.f32 %v6779, 0.0
    %v6844 = vmax.f32 %v6780, 0.0
    %v6845 = vmax.f32 %v6781, 0.0
    %v6846 = vmax.f32 %v6782, 0.0
    %v6847 = vmax.f32 %v6783, 0.0
    %v6848 = vmax.f32 %v6784, 0.0
    %v6849 = vmax.f32 %v6785, 0.0
    %v6850 = vmax.f32 %v6786, 0.0
    %v6851 = vmax.f32 %v6787, 0.0
    %v6852 = vmax.f32 %v6788, 0.0
    %v6853 = vmax.f32 %v6789, 0.0
    %v6854 = vmax.f32 %v6790, 0.0
    %v6855 = vmax.f32 %v6791, 0.0
    %v6856 = vmax.f32 %v6792, 0.0
    %v6857 = vmax.f32 %v6793, 0.0
    %v6858 = vmax.f32 %v6794, 0.0
    %v6859 = vmax.f32 %v6795, 0.0
    %v6860 = vmax.f32 %v6796, 0.0
    %v6861 = vmax.f32 %v6797, 0.0
    %v6862 = vmax.f32 %v6798, 0.0
    %v6863 = vmax.f32 %v6799, 0.0
    %v6864 = vmax.f32 %v6800, 0.0
    %v6865 = vmax.f32 %v6801, 0.0
    %v6866 = vmax.f32 %v6802, 0.0
    %v6867 = vmax.f32 %v6803, 0.0
    %v6868 = vmax.f32 %v6804, 0.0
    %v6869 = vmax.f32 %v6805, 0.0
    %v6870 = vmax.f32 %v6806, 0.0
    %v6871 = vmax.f32 %v6807, 0.0
    %v6872 = vmax.f32 %v6808, 0.0
    %v6873 = vmax.f32 %v6809, 0.0
    %v6874 = vmax.f32 %v6810, 0.0
    %v6875 = vmax.f32 %v6811, 0.0
    %v6876 = vmax.f32 %v6812, 0.0
    %v6877 = vmax.f32 %v6813, 0.0
    %v6878 = vmax.f32 %v6814, 0.0
    %v6879 = vmin.f32 %v6815, 6.0
    %v6880 = vmin.f32 %v6816, 6.0
    %v6881 = vmin.f32 %v6817, 6.0
    %v6882 = vmin.f32 %v6818, 6.0
    %v6883 = vmin.f32 %v6819, 6.0
    %v6884 = vmin.f32 %v6820, 6.0
    %v6885 = vmin.f32 %v6821, 6.0
    %v6886 = vmin.f32 %v6822, 6.0
    %v6887 = vmin.f32 %v6823, 6.0
    %v6888 = vmin.f32 %v6824, 6.0
    %v6889 = vmin.f32 %v6825, 6.0
    %v6890 = vmin.f32 %v6826, 6.0
    %v6891 = vmin.f32 %v6827, 6.0
    %v6892 = vmin.f32 %v6828, 6.0
    %v6893 = vmin.f32 %v6829, 6.0
    %v6894 = vmin.f32 %v6830, 6.0
    %v6895 = vmin.f32 %v6831, 6.0
    %v6896 = vmin.f32 %v6832, 6.0
    %v6897 = vmin.f32 %v6833, 6.0
    %v6898 = vmin.f32 %v6834, 6.0
    %v6899 = vmin.f32 %v6835, 6.0
    %v6900 = vmin.f32 %v6836, 6.0
    %v6901 = vmin.f32 %v6837, 6.0
    %v6902 = vmin.f32 %v6838, 6.0
    %v6903 = vmin.f32 %v6839, 6.0
    %v6904 = vmin.f32 %v6840, 6.0
    %v6905 = vmin.f32 %v6841, 6.0
    %v6906 = vmin.f32 %v6842, 6.0
    %v6907 = vmin.f32 %v6843, 6.0
    %v6908 = vmin.f32 %v6844, 6.0
    %v6909 = vmin.f32 %v6845, 6.0
    %v6910 = vmin.f32 %v6846, 6.0
    %v6911 = vmin.f32 %v6847, 6.0
    %v6912 = vmin.f32 %v6848, 6.0
    %v6913 = vmin.f32 %v6849, 6.0
    %v6914 = vmin.f32 %v6850, 6.0
    %v6915 = vmin.f32 %v6851, 6.0
    %v6916 = vmin.f32 %v6852, 6.0
    %v6917 = vmin.f32 %v6853, 6.0
    %v6918 = vmin.f32 %v6854, 6.0
    %v6919 = vmin.f32 %v6855, 6.0
    %v6920 = vmin.f32 %v6856, 6.0
    %v6921 = vmin.f32 %v6857, 6.0
    %v6922 = vmin.f32 %v6858, 6.0
    %v6923 = vmin.f32 %v6859, 6.0
    %v6924 = vmin.f32 %v6860, 6.0
    %v6925 = vmin.f32 %v6861, 6.0
    %v6926 = vmin.f32 %v6862, 6.0
    %v6927 = vmin.f32 %v6863, 6.0
    %v6928 = vmin.f32 %v6864, 6.0
    %v6929 = vmin.f32 %v6865, 6.0
    %v6930 = vmin.f32 %v6866, 6.0
    %v6931 = vmin.f32 %v6867, 6.0
    %v6932 = vmin.f32 %v6868, 6.0
    %v6933 = vmin.f32 %v6869, 6.0
    %v6934 = vmin.f32 %v6870, 6.0
    %v6935 = vmin.f32 %v6871, 6.0
    %v6936 = vmin.f32 %v6872, 6.0
    %v6937 = vmin.f32 %v6873, 6.0
    %v6938 = vmin.f32 %v6874, 6.0
    %v6939 = vmin.f32 %v6875, 6.0
    %v6940 = vmin.f32 %v6876, 6.0
    %v6941 = vmin.f32 %v6877, 6.0
    %v6942 = vmin.f32 %v6878, 6.0
    %v6943 = vmul.f32 %v6687, %v6879
    %v6944 = vmul.f32 %v6688, %v6880
    %v6945 = vmul.f32 %v6689, %v6881
    %v6946 = vmul.f32 %v6690, %v6882
    %v6947 = vmul.f32 %v6691, %v6883
    %v6948 = vmul.f32 %v6692, %v6884
    %v6949 = vmul.f32 %v6693, %v6885
    %v6950 = vmul.f32 %v6694, %v6886
    %v6951 = vmul.f32 %v6695, %v6887
    %v6952 = vmul.f32 %v6696, %v6888
    %v6953 = vmul.f32 %v6697, %v6889
    %v6954 = vmul.f32 %v6698, %v6890
    %v6955 = vmul.f32 %v6699, %v6891
    %v6956 = vmul.f32 %v6700, %v6892
    %v6957 = vmul.f32 %v6701, %v6893
    %v6958 = vmul.f32 %v6702, %v6894
    %v6959 = vmul.f32 %v6703, %v6895
    %v6960 = vmul.f32 %v6704, %v6896
    %v6961 = vmul.f32 %v6705, %v6897
    %v6962 = vmul.f32 %v6706, %v6898
    %v6963 = vmul.f32 %v6707, %v6899
    %v6964 = vmul.f32 %v6708, %v6900
    %v6965 = vmul.f32 %v6709, %v6901
    %v6966 = vmul.f32 %v6710, %v6902
    %v6967 = vmul.f32 %v6711, %v6903
    %v6968 = vmul.f32 %v6712, %v6904
    %v6969 = vmul.f32 %v6713, %v6905
    %v6970 = vmul.f32 %v6714, %v6906
    %v6971 = vmul.f32 %v6715, %v6907
    %v6972 = vmul.f32 %v6716, %v6908
    %v6973 = vmul.f32 %v6717, %v6909
    %v6974 = vmul.f32 %v6718, %v6910
    %v6975 = vmul.f32 %v6719, %v6911
    %v6976 = vmul.f32 %v6720, %v6912
    %v6977 = vmul.f32 %v6721, %v6913
    %v6978 = vmul.f32 %v6722, %v6914
    %v6979 = vmul.f32 %v6723, %v6915
    %v6980 = vmul.f32 %v6724, %v6916
    %v6981 = vmul.f32 %v6725, %v6917
    %v6982 = vmul.f32 %v6726, %v6918
    %v6983 = vmul.f32 %v6727, %v6919
    %v6984 = vmul.f32 %v6728, %v6920
    %v6985 = vmul.f32 %v6729, %v6921
    %v6986 = vmul.f32 %v6730, %v6922
    %v6987 = vmul.f32 %v6731, %v6923
    %v6988 = vmul.f32 %v6732, %v6924
    %v6989 = vmul.f32 %v6733, %v6925
    %v6990 = vmul.f32 %v6734, %v6926
    %v6991 = vmul.f32 %v6735, %v6927
    %v6992 = vmul.f32 %v6736, %v6928
    %v6993 = vmul.f32 %v6737, %v6929
    %v6994 = vmul.f32 %v6738, %v6930
    %v6995 = vmul.f32 %v6739, %v6931
    %v6996 = vmul.f32 %v6740, %v6932
    %v6997 = vmul.f32 %v6741, %v6933
    %v6998 = vmul.f32 %v6742, %v6934
    %v6999 = vmul.f32 %v6743, %v6935
    %v7000 = vmul.f32 %v6744, %v6936
    %v7001 = vmul.f32 %v6745, %v6937
    %v7002 = vmul.f32 %v6746, %v6938
    %v7003 = vmul.f32 %v6747, %v6939
    %v7004 = vmul.f32 %v6748, %v6940
    %v7005 = vmul.f32 %v6749, %v6941
    %v7006 = vmul.f32 %v6750, %v6942
    %v7007 = vmul.f32 %v6943, 0.16666667
    %v7008 = vmul.f32 %v6944, 0.16666667
    %v7009 = vmul.f32 %v6945, 0.16666667
    %v7010 = vmul.f32 %v6946, 0.16666667
    %v7011 = vmul.f32 %v6947, 0.16666667
    %v7012 = vmul.f32 %v6948, 0.16666667
    %v7013 = vmul.f32 %v6949, 0.16666667
    %v7014 = vmul.f32 %v6950, 0.16666667
    %v7015 = vmul.f32 %v6951, 0.16666667
    %v7016 = vmul.f32 %v6952, 0.16666667
    %v7017 = vmul.f32 %v6953, 0.16666667
    %v7018 = vmul.f32 %v6954, 0.16666667
    %v7019 = vmul.f32 %v6955, 0.16666667
    %v7020 = vmul.f32 %v6956, 0.16666667
    %v7021 = vmul.f32 %v6957, 0.16666667
    %v7022 = vmul.f32 %v6958, 0.16666667
    %v7023 = vmul.f32 %v6959, 0.16666667
    %v7024 = vmul.f32 %v6960, 0.16666667
    %v7025 = vmul.f32 %v6961, 0.16666667
    %v7026 = vmul.f32 %v6962, 0.16666667
    %v7027 = vmul.f32 %v6963, 0.16666667
    %v7028 = vmul.f32 %v6964, 0.16666667
    %v7029 = vmul.f32 %v6965, 0.16666667
    %v7030 = vmul.f32 %v6966, 0.16666667
    %v7031 = vmul.f32 %v6967, 0.16666667
    %v7032 = vmul.f32 %v6968, 0.16666667
    %v7033 = vmul.f32 %v6969, 0.16666667
    %v7034 = vmul.f32 %v6970, 0.16666667
    %v7035 = vmul.f32 %v6971, 0.16666667
    %v7036 = vmul.f32 %v6972, 0.16666667
    %v7037 = vmul.f32 %v6973, 0.16666667
    %v7038 = vmul.f32 %v6974, 0.16666667
    %v7039 = vmul.f32 %v6975, 0.16666667
    %v7040 = vmul.f32 %v6976, 0.16666667
    %v7041 = vmul.f32 %v6977, 0.16666667
    %v7042 = vmul.f32 %v6978, 0.16666667
    %v7043 = vmul.f32 %v6979, 0.16666667
    %v7044 = vmul.f32 %v6980, 0.16666667
    %v7045 = vmul.f32 %v6981, 0.16666667
    %v7046 = vmul.f32 %v6982, 0.16666667
    %v7047 = vmul.f32 %v6983, 0.16666667
    %v7048 = vmul.f32 %v6984, 0.16666667
    %v7049 = vmul.f32 %v6985, 0.16666667
    %v7050 = vmul.f32 %v6986, 0.16666667
    %v7051 = vmul.f32 %v6987, 0.16666667
    %v7052 = vmul.f32 %v6988, 0.16666667
    %v7053 = vmul.f32 %v6989, 0.16666667
    %v7054 = vmul.f32 %v6990, 0.16666667
    %v7055 = vmul.f32 %v6991, 0.16666667
    %v7056 = vmul.f32 %v6992, 0.16666667
    %v7057 = vmul.f32 %v6993, 0.16666667
    %v7058 = vmul.f32 %v6994, 0.16666667
    %v7059 = vmul.f32 %v6995, 0.16666667
    %v7060 = vmul.f32 %v6996, 0.16666667
    %v7061 = vmul.f32 %v6997, 0.16666667
    %v7062 = vmul.f32 %v6998, 0.16666667
    %v7063 = vmul.f32 %v6999, 0.16666667
    %v7064 = vmul.f32 %v7000, 0.16666667
    %v7065 = vmul.f32 %v7001, 0.16666667
    %v7066 = vmul.f32 %v7002, 0.16666667
    %v7067 = vmul.f32 %v7003, 0.16666667
    %v7068 = vmul.f32 %v7004, 0.16666667
    %v7069 = vmul.f32 %v7005, 0.16666667
    %v7070 = vmul.f32 %v7006, 0.16666667
    %v7071 = vpack.c.bf16 %v7007, %v7007
    %v7072 = vpack.c.bf16 %v7008, %v7008
    %v7073 = vpack.c.bf16 %v7009, %v7009
    %v7074 = vpack.c.bf16 %v7010, %v7010
    %v7075 = vpack.c.bf16 %v7011, %v7011
    %v7076 = vpack.c.bf16 %v7012, %v7012
    %v7077 = vpack.c.bf16 %v7013, %v7013
    %v7078 = vpack.c.bf16 %v7014, %v7014
    %v7079 = vpack.c.bf16 %v7015, %v7015
    %v7080 = vpack.c.bf16 %v7016, %v7016
    %v7081 = vpack.c.bf16 %v7017, %v7017
    %v7082 = vpack.c.bf16 %v7018, %v7018
    %v7083 = vpack.c.bf16 %v7019, %v7019
    %v7084 = vpack.c.bf16 %v7020, %v7020
    %v7085 = vpack.c.bf16 %v7021, %v7021
    %v7086 = vpack.c.bf16 %v7022, %v7022
    %v7087 = vpack.c.bf16 %v7023, %v7023
    %v7088 = vpack.c.bf16 %v7024, %v7024
    %v7089 = vpack.c.bf16 %v7025, %v7025
    %v7090 = vpack.c.bf16 %v7026, %v7026
    %v7091 = vpack.c.bf16 %v7027, %v7027
    %v7092 = vpack.c.bf16 %v7028, %v7028
    %v7093 = vpack.c.bf16 %v7029, %v7029
    %v7094 = vpack.c.bf16 %v7030, %v7030
    %v7095 = vpack.c.bf16 %v7031, %v7031
    %v7096 = vpack.c.bf16 %v7032, %v7032
    %v7097 = vpack.c.bf16 %v7033, %v7033
    %v7098 = vpack.c.bf16 %v7034, %v7034
    %v7099 = vpack.c.bf16 %v7035, %v7035
    %v7100 = vpack.c.bf16 %v7036, %v7036
    %v7101 = vpack.c.bf16 %v7037, %v7037
    %v7102 = vpack.c.bf16 %v7038, %v7038
    %v7103 = vpack.c.bf16 %v7039, %v7039
    %v7104 = vpack.c.bf16 %v7040, %v7040
    %v7105 = vpack.c.bf16 %v7041, %v7041
    %v7106 = vpack.c.bf16 %v7042, %v7042
    %v7107 = vpack.c.bf16 %v7043, %v7043
    %v7108 = vpack.c.bf16 %v7044, %v7044
    %v7109 = vpack.c.bf16 %v7045, %v7045
    %v7110 = vpack.c.bf16 %v7046, %v7046
    %v7111 = vpack.c.bf16 %v7047, %v7047
    %v7112 = vpack.c.bf16 %v7048, %v7048
    %v7113 = vpack.c.bf16 %v7049, %v7049
    %v7114 = vpack.c.bf16 %v7050, %v7050
    %v7115 = vpack.c.bf16 %v7051, %v7051
    %v7116 = vpack.c.bf16 %v7052, %v7052
    %v7117 = vpack.c.bf16 %v7053, %v7053
    %v7118 = vpack.c.bf16 %v7054, %v7054
    %v7119 = vpack.c.bf16 %v7055, %v7055
    %v7120 = vpack.c.bf16 %v7056, %v7056
    %v7121 = vpack.c.bf16 %v7057, %v7057
    %v7122 = vpack.c.bf16 %v7058, %v7058
    %v7123 = vpack.c.bf16 %v7059, %v7059
    %v7124 = vpack.c.bf16 %v7060, %v7060
    %v7125 = vpack.c.bf16 %v7061, %v7061
    %v7126 = vpack.c.bf16 %v7062, %v7062
    %v7127 = vpack.c.bf16 %v7063, %v7063
    %v7128 = vpack.c.bf16 %v7064, %v7064
    %v7129 = vpack.c.bf16 %v7065, %v7065
    %v7130 = vpack.c.bf16 %v7066, %v7066
    %v7131 = vpack.c.bf16 %v7067, %v7067
    %v7132 = vpack.c.bf16 %v7068, %v7068
    %v7133 = vpack.c.bf16 %v7069, %v7069
    %v7134 = vpack.c.bf16 %v7070, %v7070
    %v7199 = vunpack.c.l.b16 %v7071
    %v7200 = vunpack.c.l.b16 %v7072
    %v7201 = vunpack.c.l.b16 %v7073
    %v7202 = vunpack.c.l.b16 %v7074
    %v7203 = vunpack.c.l.b16 %v7075
    %v7204 = vunpack.c.l.b16 %v7076
    %v7205 = vunpack.c.l.b16 %v7077
    %v7206 = vunpack.c.l.b16 %v7078
    %v7207 = vunpack.c.l.b16 %v7079
    %v7208 = vunpack.c.l.b16 %v7080
    %v7209 = vunpack.c.l.b16 %v7081
    %v7210 = vunpack.c.l.b16 %v7082
    %v7211 = vunpack.c.l.b16 %v7083
    %v7212 = vunpack.c.l.b16 %v7084
    %v7213 = vunpack.c.l.b16 %v7085
    %v7214 = vunpack.c.l.b16 %v7086
    %v7215 = vunpack.c.l.b16 %v7087
    %v7216 = vunpack.c.l.b16 %v7088
    %v7217 = vunpack.c.l.b16 %v7089
    %v7218 = vunpack.c.l.b16 %v7090
    %v7219 = vunpack.c.l.b16 %v7091
    %v7220 = vunpack.c.l.b16 %v7092
    %v7221 = vunpack.c.l.b16 %v7093
    %v7222 = vunpack.c.l.b16 %v7094
    %v7223 = vunpack.c.l.b16 %v7095
    %v7224 = vunpack.c.l.b16 %v7096
    %v7225 = vunpack.c.l.b16 %v7097
    %v7226 = vunpack.c.l.b16 %v7098
    %v7227 = vunpack.c.l.b16 %v7099
    %v7228 = vunpack.c.l.b16 %v7100
    %v7229 = vunpack.c.l.b16 %v7101
    %v7230 = vunpack.c.l.b16 %v7102
    %v7231 = vunpack.c.l.b16 %v7103
    %v7232 = vunpack.c.l.b16 %v7104
    %v7233 = vunpack.c.l.b16 %v7105
    %v7234 = vunpack.c.l.b16 %v7106
    %v7235 = vunpack.c.l.b16 %v7107
    %v7236 = vunpack.c.l.b16 %v7108
    %v7237 = vunpack.c.l.b16 %v7109
    %v7238 = vunpack.c.l.b16 %v7110
    %v7239 = vunpack.c.l.b16 %v7111
    %v7240 = vunpack.c.l.b16 %v7112
    %v7241 = vunpack.c.l.b16 %v7113
    %v7242 = vunpack.c.l.b16 %v7114
    %v7243 = vunpack.c.l.b16 %v7115
    %v7244 = vunpack.c.l.b16 %v7116
    %v7245 = vunpack.c.l.b16 %v7117
    %v7246 = vunpack.c.l.b16 %v7118
    %v7247 = vunpack.c.l.b16 %v7119
    %v7248 = vunpack.c.l.b16 %v7120
    %v7249 = vunpack.c.l.b16 %v7121
    %v7250 = vunpack.c.l.b16 %v7122
    %v7251 = vunpack.c.l.b16 %v7123
    %v7252 = vunpack.c.l.b16 %v7124
    %v7253 = vunpack.c.l.b16 %v7125
    %v7254 = vunpack.c.l.b16 %v7126
    %v7255 = vunpack.c.l.b16 %v7127
    %v7256 = vunpack.c.l.b16 %v7128
    %v7257 = vunpack.c.l.b16 %v7129
    %v7258 = vunpack.c.l.b16 %v7130
    %v7259 = vunpack.c.l.b16 %v7131
    %v7260 = vunpack.c.l.b16 %v7132
    %v7261 = vunpack.c.l.b16 %v7133
    %v7262 = vunpack.c.l.b16 %v7134
    %v7263 = vpack.c.b16 %v7200, %v7199
    %v7264 = vpack.c.b16 %v7202, %v7201
    %v7265 = vpack.c.b16 %v7204, %v7203
    %v7266 = vpack.c.b16 %v7206, %v7205
    %v7267 = vpack.c.b16 %v7208, %v7207
    %v7268 = vpack.c.b16 %v7210, %v7209
    %v7269 = vpack.c.b16 %v7212, %v7211
    %v7270 = vpack.c.b16 %v7214, %v7213
    %v7271 = vpack.c.b16 %v7216, %v7215
    %v7272 = vpack.c.b16 %v7218, %v7217
    %v7273 = vpack.c.b16 %v7220, %v7219
    %v7274 = vpack.c.b16 %v7222, %v7221
    %v7275 = vpack.c.b16 %v7224, %v7223
    %v7276 = vpack.c.b16 %v7226, %v7225
    %v7277 = vpack.c.b16 %v7228, %v7227
    %v7278 = vpack.c.b16 %v7230, %v7229
    %v7279 = vpack.c.b16 %v7232, %v7231
    %v7280 = vpack.c.b16 %v7234, %v7233
    %v7281 = vpack.c.b16 %v7236, %v7235
    %v7282 = vpack.c.b16 %v7238, %v7237
    %v7283 = vpack.c.b16 %v7240, %v7239
    %v7284 = vpack.c.b16 %v7242, %v7241
    %v7285 = vpack.c.b16 %v7244, %v7243
    %v7286 = vpack.c.b16 %v7246, %v7245
    %v7287 = vpack.c.b16 %v7248, %v7247
    %v7288 = vpack.c.b16 %v7250, %v7249
    %v7289 = vpack.c.b16 %v7252, %v7251
    %v7290 = vpack.c.b16 %v7254, %v7253
    %v7291 = vpack.c.b16 %v7256, %v7255
    %v7292 = vpack.c.b16 %v7258, %v7257
    %v7293 = vpack.c.b16 %v7260, %v7259
    %v7294 = vpack.c.b16 %v7262, %v7261
    %v7296 = vshrl.u32 %v7263, 16
    %v7298 = vrot.slane %v7296, 7
    %v7299 = vshll.u32 %v7263, 16
    %v7301 = vor.u32 %v7298, %v7299
    %v7303 = vshrl.u32 %v7264, 16
    %v7305 = vrot.slane %v7303, 7
    %v7306 = vshll.u32 %v7264, 16
    %v7308 = vor.u32 %v7305, %v7306
    %v7310 = vshrl.u32 %v7265, 16
    %v7312 = vrot.slane %v7310, 7
    %v7313 = vshll.u32 %v7265, 16
    %v7315 = vor.u32 %v7312, %v7313
    %v7317 = vshrl.u32 %v7266, 16
    %v7319 = vrot.slane %v7317, 7
    %v7320 = vshll.u32 %v7266, 16
    %v7322 = vor.u32 %v7319, %v7320
    %v7324 = vshrl.u32 %v7267, 16
    %v7326 = vrot.slane %v7324, 7
    %v7327 = vshll.u32 %v7267, 16
    %v7329 = vor.u32 %v7326, %v7327
    %v7331 = vshrl.u32 %v7268, 16
    %v7333 = vrot.slane %v7331, 7
    %v7334 = vshll.u32 %v7268, 16
    %v7336 = vor.u32 %v7333, %v7334
    %v7338 = vshrl.u32 %v7269, 16
    %v7340 = vrot.slane %v7338, 7
    %v7341 = vshll.u32 %v7269, 16
    %v7343 = vor.u32 %v7340, %v7341
    %v7345 = vshrl.u32 %v7270, 16
    %v7347 = vrot.slane %v7345, 7
    %v7348 = vshll.u32 %v7270, 16
    %v7350 = vor.u32 %v7347, %v7348
    %v7352 = vshrl.u32 %v7271, 16
    %v7354 = vrot.slane %v7352, 7
    %v7355 = vshll.u32 %v7271, 16
    %v7357 = vor.u32 %v7354, %v7355
    %v7359 = vshrl.u32 %v7272, 16
    %v7361 = vrot.slane %v7359, 7
    %v7362 = vshll.u32 %v7272, 16
    %v7364 = vor.u32 %v7361, %v7362
    %v7366 = vshrl.u32 %v7273, 16
    %v7368 = vrot.slane %v7366, 7
    %v7369 = vshll.u32 %v7273, 16
    %v7371 = vor.u32 %v7368, %v7369
    %v7373 = vshrl.u32 %v7274, 16
    %v7375 = vrot.slane %v7373, 7
    %v7376 = vshll.u32 %v7274, 16
    %v7378 = vor.u32 %v7375, %v7376
    %v7380 = vshrl.u32 %v7275, 16
    %v7382 = vrot.slane %v7380, 7
    %v7383 = vshll.u32 %v7275, 16
    %v7385 = vor.u32 %v7382, %v7383
    %v7387 = vshrl.u32 %v7276, 16
    %v7389 = vrot.slane %v7387, 7
    %v7390 = vshll.u32 %v7276, 16
    %v7392 = vor.u32 %v7389, %v7390
    %v7394 = vshrl.u32 %v7277, 16
    %v7396 = vrot.slane %v7394, 7
    %v7397 = vshll.u32 %v7277, 16
    %v7399 = vor.u32 %v7396, %v7397
    %v7401 = vshrl.u32 %v7278, 16
    %v7403 = vrot.slane %v7401, 7
    %v7404 = vshll.u32 %v7278, 16
    %v7406 = vor.u32 %v7403, %v7404
    %v7408 = vshrl.u32 %v7279, 16
    %v7410 = vrot.slane %v7408, 7
    %v7411 = vshll.u32 %v7279, 16
    %v7413 = vor.u32 %v7410, %v7411
    %v7415 = vshrl.u32 %v7280, 16
    %v7417 = vrot.slane %v7415, 7
    %v7418 = vshll.u32 %v7280, 16
    %v7420 = vor.u32 %v7417, %v7418
    %v7422 = vshrl.u32 %v7281, 16
    %v7424 = vrot.slane %v7422, 7
    %v7425 = vshll.u32 %v7281, 16
    %v7427 = vor.u32 %v7424, %v7425
    %v7429 = vshrl.u32 %v7282, 16
    %v7431 = vrot.slane %v7429, 7
    %v7432 = vshll.u32 %v7282, 16
    %v7434 = vor.u32 %v7431, %v7432
    %v7436 = vshrl.u32 %v7283, 16
    %v7438 = vrot.slane %v7436, 7
    %v7439 = vshll.u32 %v7283, 16
    %v7441 = vor.u32 %v7438, %v7439
    %v7443 = vshrl.u32 %v7284, 16
    %v7445 = vrot.slane %v7443, 7
    %v7446 = vshll.u32 %v7284, 16
    %v7448 = vor.u32 %v7445, %v7446
    %v7450 = vshrl.u32 %v7285, 16
    %v7452 = vrot.slane %v7450, 7
    %v7453 = vshll.u32 %v7285, 16
    %v7455 = vor.u32 %v7452, %v7453
    %v7457 = vshrl.u32 %v7286, 16
    %v7459 = vrot.slane %v7457, 7
    %v7460 = vshll.u32 %v7286, 16
    %v7462 = vor.u32 %v7459, %v7460
    %v7464 = vshrl.u32 %v7287, 16
    %v7466 = vrot.slane %v7464, 7
    %v7467 = vshll.u32 %v7287, 16
    %v7469 = vor.u32 %v7466, %v7467
    %v7471 = vshrl.u32 %v7288, 16
    %v7473 = vrot.slane %v7471, 7
    %v7474 = vshll.u32 %v7288, 16
    %v7476 = vor.u32 %v7473, %v7474
    %v7478 = vshrl.u32 %v7289, 16
    %v7480 = vrot.slane %v7478, 7
    %v7481 = vshll.u32 %v7289, 16
    %v7483 = vor.u32 %v7480, %v7481
    %v7485 = vshrl.u32 %v7290, 16
    %v7487 = vrot.slane %v7485, 7
    %v7488 = vshll.u32 %v7290, 16
    %v7490 = vor.u32 %v7487, %v7488
    %v7492 = vshrl.u32 %v7291, 16
    %v7494 = vrot.slane %v7492, 7
    %v7495 = vshll.u32 %v7291, 16
    %v7497 = vor.u32 %v7494, %v7495
    %v7499 = vshrl.u32 %v7292, 16
    %v7501 = vrot.slane %v7499, 7
    %v7502 = vshll.u32 %v7292, 16
    %v7504 = vor.u32 %v7501, %v7502
    %v7506 = vshrl.u32 %v7293, 16
    %v7508 = vrot.slane %v7506, 7
    %v7509 = vshll.u32 %v7293, 16
    %v7511 = vor.u32 %v7508, %v7509
    %v7513 = vshrl.u32 %v7294, 16
    %v7515 = vrot.slane %v7513, 7
    %v7516 = vshll.u32 %v7294, 16
    %v7518 = vor.u32 %v7515, %v7516
    %v7583 = vsel %vm999, 0, %v7301
    %v7584 = vsel %vm999, 0, %v7308
    %v7585 = vsel %vm999, 0, %v7315
    %v7586 = vsel %vm999, 0, %v7322
    %v7587 = vsel %vm999, 0, %v7329
    %v7588 = vsel %vm999, 0, %v7336
    %v7589 = vsel %vm999, 0, %v7343
    %v7590 = vsel %vm999, 0, %v7350
    %v7591 = vsel %vm999, 0, %v7357
    %v7592 = vsel %vm999, 0, %v7364
    %v7593 = vsel %vm999, 0, %v7371
    %v7594 = vsel %vm999, 0, %v7378
    %v7595 = vsel %vm999, 0, %v7385
    %v7596 = vsel %vm999, 0, %v7392
    %v7597 = vsel %vm999, 0, %v7399
    %v7598 = vsel %vm999, 0, %v7406
    %v7599 = vsel %vm999, 0, %v7413
    %v7600 = vsel %vm999, 0, %v7420
    %v7601 = vsel %vm999, 0, %v7427
    %v7602 = vsel %vm999, 0, %v7434
    %v7603 = vsel %vm999, 0, %v7441
    %v7604 = vsel %vm999, 0, %v7448
    %v7605 = vsel %vm999, 0, %v7455
    %v7606 = vsel %vm999, 0, %v7462
    %v7607 = vsel %vm999, 0, %v7469
    %v7608 = vsel %vm999, 0, %v7476
    %v7609 = vsel %vm999, 0, %v7483
    %v7610 = vsel %vm999, 0, %v7490
    %v7611 = vsel %vm999, 0, %v7497
    %v7612 = vsel %vm999, 0, %v7504
    %v7613 = vsel %vm999, 0, %v7511
    %v7614 = vsel %vm999, 0, %v7518
    %v7615 = vsel %vm999, %v7298, 0
    %v7616 = vsel %vm999, %v7305, 0
    %v7617 = vsel %vm999, %v7312, 0
    %v7618 = vsel %vm999, %v7319, 0
    %v7619 = vsel %vm999, %v7326, 0
    %v7620 = vsel %vm999, %v7333, 0
    %v7621 = vsel %vm999, %v7340, 0
    %v7622 = vsel %vm999, %v7347, 0
    %v7623 = vsel %vm999, %v7354, 0
    %v7624 = vsel %vm999, %v7361, 0
    %v7625 = vsel %vm999, %v7368, 0
    %v7626 = vsel %vm999, %v7375, 0
    %v7627 = vsel %vm999, %v7382, 0
    %v7628 = vsel %vm999, %v7389, 0
    %v7629 = vsel %vm999, %v7396, 0
    %v7630 = vsel %vm999, %v7403, 0
    %v7631 = vsel %vm999, %v7410, 0
    %v7632 = vsel %vm999, %v7417, 0
    %v7633 = vsel %vm999, %v7424, 0
    %v7634 = vsel %vm999, %v7431, 0
    %v7635 = vsel %vm999, %v7438, 0
    %v7636 = vsel %vm999, %v7445, 0
    %v7637 = vsel %vm999, %v7452, 0
    %v7638 = vsel %vm999, %v7459, 0
    %v7639 = vsel %vm999, %v7466, 0
    %v7640 = vsel %vm999, %v7473, 0
    %v7641 = vsel %vm999, %v7480, 0
    %v7642 = vsel %vm999, %v7487, 0
    %v7643 = vsel %vm999, %v7494, 0
    %v7644 = vsel %vm999, %v7501, 0
    %v7645 = vsel %vm999, %v7508, 0
    %v7646 = vsel %vm999, %v7515, 0
    %vm7647 = vsmask.f32 7424
    %v7648 = vsel %vm7647, %v1025, %v1024
    %v7650 = vshrl.u32 %v7583, 16
    %v7652 = vshll.u32 %v7583, 16
    %v7654 = vrot.slane %v7652, 1
    %v7655 = vor.u32 %v7650, %v7654
    %v7657 = vshll.u32 %v7615, 16
    %v7659 = vrot.slane %v7657, 1
    %v7660 = vsel %vm7647, %v7655, %v7659
    %v7662 = vshrl.u32 %v7584, 16
    %v7664 = vshll.u32 %v7584, 16
    %v7666 = vrot.slane %v7664, 1
    %v7667 = vor.u32 %v7662, %v7666
    %v7669 = vshll.u32 %v7616, 16
    %v7671 = vrot.slane %v7669, 1
    %v7672 = vsel %vm7647, %v7667, %v7671
    %v7674 = vshrl.u32 %v7585, 16
    %v7676 = vshll.u32 %v7585, 16
    %v7678 = vrot.slane %v7676, 1
    %v7679 = vor.u32 %v7674, %v7678
    %v7681 = vshll.u32 %v7617, 16
    %v7683 = vrot.slane %v7681, 1
    %v7684 = vsel %vm7647, %v7679, %v7683
    %v7686 = vshrl.u32 %v7586, 16
    %v7688 = vshll.u32 %v7586, 16
    %v7690 = vrot.slane %v7688, 1
    %v7691 = vor.u32 %v7686, %v7690
    %v7693 = vshll.u32 %v7618, 16
    %v7695 = vrot.slane %v7693, 1
    %v7696 = vsel %vm7647, %v7691, %v7695
    %v7698 = vshrl.u32 %v7587, 16
    %v7700 = vshll.u32 %v7587, 16
    %v7702 = vrot.slane %v7700, 1
    %v7703 = vor.u32 %v7698, %v7702
    %v7705 = vshll.u32 %v7619, 16
    %v7707 = vrot.slane %v7705, 1
    %v7708 = vsel %vm7647, %v7703, %v7707
    %v7710 = vshrl.u32 %v7588, 16
    %v7712 = vshll.u32 %v7588, 16
    %v7714 = vrot.slane %v7712, 1
    %v7715 = vor.u32 %v7710, %v7714
    %v7717 = vshll.u32 %v7620, 16
    %v7719 = vrot.slane %v7717, 1
    %v7720 = vsel %vm7647, %v7715, %v7719
    %v7722 = vshrl.u32 %v7589, 16
    %v7724 = vshll.u32 %v7589, 16
    %v7726 = vrot.slane %v7724, 1
    %v7727 = vor.u32 %v7722, %v7726
    %v7729 = vshll.u32 %v7621, 16
    %v7731 = vrot.slane %v7729, 1
    %v7732 = vsel %vm7647, %v7727, %v7731
    %v7734 = vshrl.u32 %v7590, 16
    %v7736 = vshll.u32 %v7590, 16
    %v7738 = vrot.slane %v7736, 1
    %v7739 = vor.u32 %v7734, %v7738
    %v7741 = vshll.u32 %v7622, 16
    %v7743 = vrot.slane %v7741, 1
    %v7744 = vsel %vm7647, %v7739, %v7743
    %v7746 = vshrl.u32 %v7591, 16
    %v7748 = vshll.u32 %v7591, 16
    %v7750 = vrot.slane %v7748, 1
    %v7751 = vor.u32 %v7746, %v7750
    %v7753 = vshll.u32 %v7623, 16
    %v7755 = vrot.slane %v7753, 1
    %v7756 = vsel %vm7647, %v7751, %v7755
    %v7758 = vshrl.u32 %v7592, 16
    %v7760 = vshll.u32 %v7592, 16
    %v7762 = vrot.slane %v7760, 1
    %v7763 = vor.u32 %v7758, %v7762
    %v7765 = vshll.u32 %v7624, 16
    %v7767 = vrot.slane %v7765, 1
    %v7768 = vsel %vm7647, %v7763, %v7767
    %v7770 = vshrl.u32 %v7593, 16
    %v7772 = vshll.u32 %v7593, 16
    %v7774 = vrot.slane %v7772, 1
    %v7775 = vor.u32 %v7770, %v7774
    %v7777 = vshll.u32 %v7625, 16
    %v7779 = vrot.slane %v7777, 1
    %v7780 = vsel %vm7647, %v7775, %v7779
    %v7782 = vshrl.u32 %v7594, 16
    %v7784 = vshll.u32 %v7594, 16
    %v7786 = vrot.slane %v7784, 1
    %v7787 = vor.u32 %v7782, %v7786
    %v7789 = vshll.u32 %v7626, 16
    %v7791 = vrot.slane %v7789, 1
    %v7792 = vsel %vm7647, %v7787, %v7791
    %v7794 = vshrl.u32 %v7595, 16
    %v7796 = vshll.u32 %v7595, 16
    %v7798 = vrot.slane %v7796, 1
    %v7799 = vor.u32 %v7794, %v7798
    %v7801 = vshll.u32 %v7627, 16
    %v7803 = vrot.slane %v7801, 1
    %v7804 = vsel %vm7647, %v7799, %v7803
    %v7806 = vshrl.u32 %v7596, 16
    %v7808 = vshll.u32 %v7596, 16
    %v7810 = vrot.slane %v7808, 1
    %v7811 = vor.u32 %v7806, %v7810
    %v7813 = vshll.u32 %v7628, 16
    %v7815 = vrot.slane %v7813, 1
    %v7816 = vsel %vm7647, %v7811, %v7815
    %v7818 = vshrl.u32 %v7597, 16
    %v7820 = vshll.u32 %v7597, 16
    %v7822 = vrot.slane %v7820, 1
    %v7823 = vor.u32 %v7818, %v7822
    %v7825 = vshll.u32 %v7629, 16
    %v7827 = vrot.slane %v7825, 1
    %v7828 = vsel %vm7647, %v7823, %v7827
    %v7830 = vshrl.u32 %v7599, 16
    %v7832 = vshll.u32 %v7599, 16
    %v7834 = vrot.slane %v7832, 1
    %v7835 = vor.u32 %v7830, %v7834
    %v7837 = vshll.u32 %v7631, 16
    %v7839 = vrot.slane %v7837, 1
    %v7840 = vsel %vm7647, %v7835, %v7839
    %v7842 = vshrl.u32 %v7600, 16
    %v7844 = vshll.u32 %v7600, 16
    %v7846 = vrot.slane %v7844, 1
    %v7847 = vor.u32 %v7842, %v7846
    %v7849 = vshll.u32 %v7632, 16
    %v7851 = vrot.slane %v7849, 1
    %v7852 = vsel %vm7647, %v7847, %v7851
    %v7854 = vshrl.u32 %v7601, 16
    %v7856 = vshll.u32 %v7601, 16
    %v7858 = vrot.slane %v7856, 1
    %v7859 = vor.u32 %v7854, %v7858
    %v7861 = vshll.u32 %v7633, 16
    %v7863 = vrot.slane %v7861, 1
    %v7864 = vsel %vm7647, %v7859, %v7863
    %v7866 = vshrl.u32 %v7602, 16
    %v7868 = vshll.u32 %v7602, 16
    %v7870 = vrot.slane %v7868, 1
    %v7871 = vor.u32 %v7866, %v7870
    %v7873 = vshll.u32 %v7634, 16
    %v7875 = vrot.slane %v7873, 1
    %v7876 = vsel %vm7647, %v7871, %v7875
    %v7878 = vshrl.u32 %v7603, 16
    %v7880 = vshll.u32 %v7603, 16
    %v7882 = vrot.slane %v7880, 1
    %v7883 = vor.u32 %v7878, %v7882
    %v7885 = vshll.u32 %v7635, 16
    %v7887 = vrot.slane %v7885, 1
    %v7888 = vsel %vm7647, %v7883, %v7887
    %v7890 = vshrl.u32 %v7604, 16
    %v7892 = vshll.u32 %v7604, 16
    %v7894 = vrot.slane %v7892, 1
    %v7895 = vor.u32 %v7890, %v7894
    %v7897 = vshll.u32 %v7636, 16
    %v7899 = vrot.slane %v7897, 1
    %v7900 = vsel %vm7647, %v7895, %v7899
    %v7902 = vshrl.u32 %v7605, 16
    %v7904 = vshll.u32 %v7605, 16
    %v7906 = vrot.slane %v7904, 1
    %v7907 = vor.u32 %v7902, %v7906
    %v7909 = vshll.u32 %v7637, 16
    %v7911 = vrot.slane %v7909, 1
    %v7912 = vsel %vm7647, %v7907, %v7911
    %v7914 = vshrl.u32 %v7606, 16
    %v7916 = vshll.u32 %v7606, 16
    %v7918 = vrot.slane %v7916, 1
    %v7919 = vor.u32 %v7914, %v7918
    %v7921 = vshll.u32 %v7638, 16
    %v7923 = vrot.slane %v7921, 1
    %v7924 = vsel %vm7647, %v7919, %v7923
    %v7926 = vshrl.u32 %v7607, 16
    %v7928 = vshll.u32 %v7607, 16
    %v7930 = vrot.slane %v7928, 1
    %v7931 = vor.u32 %v7926, %v7930
    %v7933 = vshll.u32 %v7639, 16
    %v7935 = vrot.slane %v7933, 1
    %v7936 = vsel %vm7647, %v7931, %v7935
    %v7938 = vshrl.u32 %v7608, 16
    %v7940 = vshll.u32 %v7608, 16
    %v7942 = vrot.slane %v7940, 1
    %v7943 = vor.u32 %v7938, %v7942
    %v7945 = vshll.u32 %v7640, 16
    %v7947 = vrot.slane %v7945, 1
    %v7948 = vsel %vm7647, %v7943, %v7947
    %v7950 = vshrl.u32 %v7609, 16
    %v7952 = vshll.u32 %v7609, 16
    %v7954 = vrot.slane %v7952, 1
    %v7955 = vor.u32 %v7950, %v7954
    %v7957 = vshll.u32 %v7641, 16
    %v7959 = vrot.slane %v7957, 1
    %v7960 = vsel %vm7647, %v7955, %v7959
    %v7962 = vshrl.u32 %v7610, 16
    %v7964 = vshll.u32 %v7610, 16
    %v7966 = vrot.slane %v7964, 1
    %v7967 = vor.u32 %v7962, %v7966
    %v7969 = vshll.u32 %v7642, 16
    %v7971 = vrot.slane %v7969, 1
    %v7972 = vsel %vm7647, %v7967, %v7971
    %v7974 = vshrl.u32 %v7611, 16
    %v7976 = vshll.u32 %v7611, 16
    %v7978 = vrot.slane %v7976, 1
    %v7979 = vor.u32 %v7974, %v7978
    %v7981 = vshll.u32 %v7643, 16
    %v7983 = vrot.slane %v7981, 1
    %v7984 = vsel %vm7647, %v7979, %v7983
    %v7986 = vshrl.u32 %v7612, 16
    %v7988 = vshll.u32 %v7612, 16
    %v7990 = vrot.slane %v7988, 1
    %v7991 = vor.u32 %v7986, %v7990
    %v7993 = vshll.u32 %v7644, 16
    %v7995 = vrot.slane %v7993, 1
    %v7996 = vsel %vm7647, %v7991, %v7995
    %v7998 = vshrl.u32 %v7613, 16
    %v8000 = vshll.u32 %v7613, 16
    %v8002 = vrot.slane %v8000, 1
    %v8003 = vor.u32 %v7998, %v8002
    %v8005 = vshll.u32 %v7645, 16
    %v8007 = vrot.slane %v8005, 1
    %v8008 = vsel %vm7647, %v8003, %v8007
    %8009 = vrot.lane.b32.xlu0 %v7648, 4
    %v8010 = vpop.permute.xlu0 %8009
    %8011 = vrot.lane.b32.xlu0 %v7660, 4
    %v8012 = vpop.permute.xlu0 %8011
    %8013 = vrot.lane.b32.xlu0 %v7672, 4
    %v8014 = vpop.permute.xlu0 %8013
    %8015 = vrot.lane.b32.xlu0 %v7684, 4
    %v8016 = vpop.permute.xlu0 %8015
    %8017 = vrot.lane.b32.xlu0 %v7696, 4
    %v8018 = vpop.permute.xlu0 %8017
    %8019 = vrot.lane.b32.xlu0 %v7708, 4
    %v8020 = vpop.permute.xlu0 %8019
    %8021 = vrot.lane.b32.xlu0 %v7720, 4
    %v8022 = vpop.permute.xlu0 %8021
    %8023 = vrot.lane.b32.xlu0 %v7732, 4
    %v8024 = vpop.permute.xlu0 %8023
    %8025 = vrot.lane.b32.xlu0 %v7744, 4
    %v8026 = vpop.permute.xlu0 %8025
    %8027 = vrot.lane.b32.xlu0 %v7756, 4
    %v8028 = vpop.permute.xlu0 %8027
    %8029 = vrot.lane.b32.xlu0 %v7768, 4
    %v8030 = vpop.permute.xlu0 %8029
    %8031 = vrot.lane.b32.xlu0 %v7780, 4
    %v8032 = vpop.permute.xlu0 %8031
    %8033 = vrot.lane.b32.xlu0 %v7792, 4
    %v8034 = vpop.permute.xlu0 %8033
    %8035 = vrot.lane.b32.xlu0 %v7804, 4
    %v8036 = vpop.permute.xlu0 %8035
    %8037 = vrot.lane.b32.xlu0 %v7816, 4
    %v8038 = vpop.permute.xlu0 %8037
    %8039 = vrot.lane.b32.xlu0 %v7828, 4
    %v8040 = vpop.permute.xlu0 %8039
    %8041 = vrot.lane.b32.xlu0 %v7840, 4
    %v8042 = vpop.permute.xlu0 %8041
    %8043 = vrot.lane.b32.xlu0 %v7852, 4
    %v8044 = vpop.permute.xlu0 %8043
    %8045 = vrot.lane.b32.xlu0 %v7864, 4
    %v8046 = vpop.permute.xlu0 %8045
    %8047 = vrot.lane.b32.xlu0 %v7876, 4
    %v8048 = vpop.permute.xlu0 %8047
    %8049 = vrot.lane.b32.xlu0 %v7888, 4
    %v8050 = vpop.permute.xlu0 %8049
    %8051 = vrot.lane.b32.xlu0 %v7900, 4
    %v8052 = vpop.permute.xlu0 %8051
    %8053 = vrot.lane.b32.xlu0 %v7912, 4
    %v8054 = vpop.permute.xlu0 %8053
    %8055 = vrot.lane.b32.xlu0 %v7924, 4
    %v8056 = vpop.permute.xlu0 %8055
    %8057 = vrot.lane.b32.xlu0 %v7936, 4
    %v8058 = vpop.permute.xlu0 %8057
    %8059 = vrot.lane.b32.xlu0 %v7948, 4
    %v8060 = vpop.permute.xlu0 %8059
    %8061 = vrot.lane.b32.xlu0 %v7960, 4
    %v8062 = vpop.permute.xlu0 %8061
    %8063 = vrot.lane.b32.xlu0 %v7972, 4
    %v8064 = vpop.permute.xlu0 %8063
    %8065 = vrot.lane.b32.xlu0 %v7984, 4
    %v8066 = vpop.permute.xlu0 %8065
    %8067 = vrot.lane.b32.xlu0 %v7996, 4
    %v8068 = vpop.permute.xlu0 %8067
    %8069 = vrot.lane.b32.xlu0 %v8008, 4
    %v8070 = vpop.permute.xlu0 %8069
    %vm8131 = vcmask 1046528
    %v8132 = vsel %vm8131, %v1089, %v1089
    %v8133 = vrot.slane %v7583, 1
    %v8134 = vrot.slane %v7615, 1
    %v8135 = vsel %vm8131, %v8133, %v8134
    %v8136 = vrot.slane %v7584, 1
    %v8137 = vrot.slane %v7616, 1
    %v8138 = vsel %vm8131, %v8136, %v8137
    %v8139 = vrot.slane %v7585, 1
    %v8140 = vrot.slane %v7617, 1
    %v8141 = vsel %vm8131, %v8139, %v8140
    %v8142 = vrot.slane %v7586, 1
    %v8143 = vrot.slane %v7618, 1
    %v8144 = vsel %vm8131, %v8142, %v8143
    %v8145 = vrot.slane %v7587, 1
    %v8146 = vrot.slane %v7619, 1
    %v8147 = vsel %vm8131, %v8145, %v8146
    %v8148 = vrot.slane %v7588, 1
    %v8149 = vrot.slane %v7620, 1
    %v8150 = vsel %vm8131, %v8148, %v8149
    %v8151 = vrot.slane %v7589, 1
    %v8152 = vrot.slane %v7621, 1
    %v8153 = vsel %vm8131, %v8151, %v8152
    %v8154 = vrot.slane %v7590, 1
    %v8155 = vrot.slane %v7622, 1
    %v8156 = vsel %vm8131, %v8154, %v8155
    %v8157 = vrot.slane %v7591, 1
    %v8158 = vrot.slane %v7623, 1
    %v8159 = vsel %vm8131, %v8157, %v8158
    %v8160 = vrot.slane %v7592, 1
    %v8161 = vrot.slane %v7624, 1
    %v8162 = vsel %vm8131, %v8160, %v8161
    %v8163 = vrot.slane %v7593, 1
    %v8164 = vrot.slane %v7625, 1
    %v8165 = vsel %vm8131, %v8163, %v8164
    %v8166 = vrot.slane %v7594, 1
    %v8167 = vrot.slane %v7626, 1
    %v8168 = vsel %vm8131, %v8166, %v8167
    %v8169 = vrot.slane %v7595, 1
    %v8170 = vrot.slane %v7627, 1
    %v8171 = vsel %vm8131, %v8169, %v8170
    %v8172 = vrot.slane %v7596, 1
    %v8173 = vrot.slane %v7628, 1
    %v8174 = vsel %vm8131, %v8172, %v8173
    %v8175 = vrot.slane %v7597, 1
    %v8176 = vrot.slane %v7629, 1
    %v8177 = vsel %vm8131, %v8175, %v8176
    %v8178 = vrot.slane %v7599, 1
    %v8179 = vrot.slane %v7631, 1
    %v8180 = vsel %vm8131, %v8178, %v8179
    %v8181 = vrot.slane %v7600, 1
    %v8182 = vrot.slane %v7632, 1
    %v8183 = vsel %vm8131, %v8181, %v8182
    %v8184 = vrot.slane %v7601, 1
    %v8185 = vrot.slane %v7633, 1
    %v8186 = vsel %vm8131, %v8184, %v8185
    %v8187 = vrot.slane %v7602, 1
    %v8188 = vrot.slane %v7634, 1
    %v8189 = vsel %vm8131, %v8187, %v8188
    %v8190 = vrot.slane %v7603, 1
    %v8191 = vrot.slane %v7635, 1
    %v8192 = vsel %vm8131, %v8190, %v8191
    %v8193 = vrot.slane %v7604, 1
    %v8194 = vrot.slane %v7636, 1
    %v8195 = vsel %vm8131, %v8193, %v8194
    %v8196 = vrot.slane %v7605, 1
    %v8197 = vrot.slane %v7637, 1
    %v8198 = vsel %vm8131, %v8196, %v8197
    %v8199 = vrot.slane %v7606, 1
    %v8200 = vrot.slane %v7638, 1
    %v8201 = vsel %vm8131, %v8199, %v8200
    %v8202 = vrot.slane %v7607, 1
    %v8203 = vrot.slane %v7639, 1
    %v8204 = vsel %vm8131, %v8202, %v8203
    %v8205 = vrot.slane %v7608, 1
    %v8206 = vrot.slane %v7640, 1
    %v8207 = vsel %vm8131, %v8205, %v8206
    %v8208 = vrot.slane %v7609, 1
    %v8209 = vrot.slane %v7641, 1
    %v8210 = vsel %vm8131, %v8208, %v8209
    %v8211 = vrot.slane %v7610, 1
    %v8212 = vrot.slane %v7642, 1
    %v8213 = vsel %vm8131, %v8211, %v8212
    %v8214 = vrot.slane %v7611, 1
    %v8215 = vrot.slane %v7643, 1
    %v8216 = vsel %vm8131, %v8214, %v8215
    %v8217 = vrot.slane %v7612, 1
    %v8218 = vrot.slane %v7644, 1
    %v8219 = vsel %vm8131, %v8217, %v8218
    %v8220 = vrot.slane %v7613, 1
    %v8221 = vrot.slane %v7645, 1
    %v8222 = vsel %vm8131, %v8220, %v8221
    %8223 = vrot.lane.b32.xlu0 %v8132, 8
    %v8224 = vpop.permute.xlu0 %8223
    %8225 = vrot.lane.b32.xlu0 %v8135, 8
    %v8226 = vpop.permute.xlu0 %8225
    %8227 = vrot.lane.b32.xlu0 %v8138, 8
    %v8228 = vpop.permute.xlu0 %8227
    %8229 = vrot.lane.b32.xlu0 %v8141, 8
    %v8230 = vpop.permute.xlu0 %8229
    %8231 = vrot.lane.b32.xlu0 %v8144, 8
    %v8232 = vpop.permute.xlu0 %8231
    %8233 = vrot.lane.b32.xlu0 %v8147, 8
    %v8234 = vpop.permute.xlu0 %8233
    %8235 = vrot.lane.b32.xlu0 %v8150, 8
    %v8236 = vpop.permute.xlu0 %8235
    %8237 = vrot.lane.b32.xlu0 %v8153, 8
    %v8238 = vpop.permute.xlu0 %8237
    %8239 = vrot.lane.b32.xlu0 %v8156, 8
    %v8240 = vpop.permute.xlu0 %8239
    %8241 = vrot.lane.b32.xlu0 %v8159, 8
    %v8242 = vpop.permute.xlu0 %8241
    %8243 = vrot.lane.b32.xlu0 %v8162, 8
    %v8244 = vpop.permute.xlu0 %8243
    %8245 = vrot.lane.b32.xlu0 %v8165, 8
    %v8246 = vpop.permute.xlu0 %8245
    %8247 = vrot.lane.b32.xlu0 %v8168, 8
    %v8248 = vpop.permute.xlu0 %8247
    %8249 = vrot.lane.b32.xlu0 %v8171, 8
    %v8250 = vpop.permute.xlu0 %8249
    %8251 = vrot.lane.b32.xlu0 %v8174, 8
    %v8252 = vpop.permute.xlu0 %8251
    %8253 = vrot.lane.b32.xlu0 %v8177, 8
    %v8254 = vpop.permute.xlu0 %8253
    %8255 = vrot.lane.b32.xlu0 %v8180, 8
    %v8256 = vpop.permute.xlu0 %8255
    %8257 = vrot.lane.b32.xlu0 %v8183, 8
    %v8258 = vpop.permute.xlu0 %8257
    %8259 = vrot.lane.b32.xlu0 %v8186, 8
    %v8260 = vpop.permute.xlu0 %8259
    %8261 = vrot.lane.b32.xlu0 %v8189, 8
    %v8262 = vpop.permute.xlu0 %8261
    %8263 = vrot.lane.b32.xlu0 %v8192, 8
    %v8264 = vpop.permute.xlu0 %8263
    %8265 = vrot.lane.b32.xlu0 %v8195, 8
    %v8266 = vpop.permute.xlu0 %8265
    %8267 = vrot.lane.b32.xlu0 %v8198, 8
    %v8268 = vpop.permute.xlu0 %8267
    %8269 = vrot.lane.b32.xlu0 %v8201, 8
    %v8270 = vpop.permute.xlu0 %8269
    %8271 = vrot.lane.b32.xlu0 %v8204, 8
    %v8272 = vpop.permute.xlu0 %8271
    %8273 = vrot.lane.b32.xlu0 %v8207, 8
    %v8274 = vpop.permute.xlu0 %8273
    %8275 = vrot.lane.b32.xlu0 %v8210, 8
    %v8276 = vpop.permute.xlu0 %8275
    %8277 = vrot.lane.b32.xlu0 %v8213, 8
    %v8278 = vpop.permute.xlu0 %8277
    %8279 = vrot.lane.b32.xlu0 %v8216, 8
    %v8280 = vpop.permute.xlu0 %8279
    %8281 = vrot.lane.b32.xlu0 %v8219, 8
    %v8282 = vpop.permute.xlu0 %8281
    %8283 = vrot.lane.b32.xlu0 %v8222, 8
    %v8284 = vpop.permute.xlu0 %8283
    %8287 = vrot.lane.b32.xlu0 %v7583, 12
    %v8288 = vpop.permute.xlu0 %8287
    %8289 = vrot.lane.b32.xlu0 %v7584, 12
    %v8290 = vpop.permute.xlu0 %8289
    %8291 = vrot.lane.b32.xlu0 %v7585, 12
    %v8292 = vpop.permute.xlu0 %8291
    %8293 = vrot.lane.b32.xlu0 %v7586, 12
    %v8294 = vpop.permute.xlu0 %8293
    %8295 = vrot.lane.b32.xlu0 %v7587, 12
    %v8296 = vpop.permute.xlu0 %8295
    %8297 = vrot.lane.b32.xlu0 %v7588, 12
    %v8298 = vpop.permute.xlu0 %8297
    %8299 = vrot.lane.b32.xlu0 %v7589, 12
    %v8300 = vpop.permute.xlu0 %8299
    %8301 = vrot.lane.b32.xlu0 %v7590, 12
    %v8302 = vpop.permute.xlu0 %8301
    %8303 = vrot.lane.b32.xlu0 %v7591, 12
    %v8304 = vpop.permute.xlu0 %8303
    %8305 = vrot.lane.b32.xlu0 %v7592, 12
    %v8306 = vpop.permute.xlu0 %8305
    %8307 = vrot.lane.b32.xlu0 %v7593, 12
    %v8308 = vpop.permute.xlu0 %8307
    %8309 = vrot.lane.b32.xlu0 %v7594, 12
    %v8310 = vpop.permute.xlu0 %8309
    %8311 = vrot.lane.b32.xlu0 %v7595, 12
    %v8312 = vpop.permute.xlu0 %8311
    %8313 = vrot.lane.b32.xlu0 %v7596, 12
    %v8314 = vpop.permute.xlu0 %8313
    %8315 = vrot.lane.b32.xlu0 %v7597, 12
    %v8316 = vpop.permute.xlu0 %8315
    %8317 = vrot.lane.b32.xlu0 %v7598, 12
    %v8318 = vpop.permute.xlu0 %8317
    %8319 = vrot.lane.b32.xlu0 %v7599, 12
    %v8320 = vpop.permute.xlu0 %8319
    %8321 = vrot.lane.b32.xlu0 %v7600, 12
    %v8322 = vpop.permute.xlu0 %8321
    %8323 = vrot.lane.b32.xlu0 %v7601, 12
    %v8324 = vpop.permute.xlu0 %8323
    %8325 = vrot.lane.b32.xlu0 %v7602, 12
    %v8326 = vpop.permute.xlu0 %8325
    %8327 = vrot.lane.b32.xlu0 %v7603, 12
    %v8328 = vpop.permute.xlu0 %8327
    %8329 = vrot.lane.b32.xlu0 %v7604, 12
    %v8330 = vpop.permute.xlu0 %8329
    %8331 = vrot.lane.b32.xlu0 %v7605, 12
    %v8332 = vpop.permute.xlu0 %8331
    %8333 = vrot.lane.b32.xlu0 %v7606, 12
    %v8334 = vpop.permute.xlu0 %8333
    %8335 = vrot.lane.b32.xlu0 %v7607, 12
    %v8336 = vpop.permute.xlu0 %8335
    %8337 = vrot.lane.b32.xlu0 %v7608, 12
    %v8338 = vpop.permute.xlu0 %8337
    %8339 = vrot.lane.b32.xlu0 %v7609, 12
    %v8340 = vpop.permute.xlu0 %8339
    %8341 = vrot.lane.b32.xlu0 %v7610, 12
    %v8342 = vpop.permute.xlu0 %8341
    %8343 = vrot.lane.b32.xlu0 %v7611, 12
    %v8344 = vpop.permute.xlu0 %8343
    %8345 = vrot.lane.b32.xlu0 %v7612, 12
    %v8346 = vpop.permute.xlu0 %8345
    %8347 = vrot.lane.b32.xlu0 %v7613, 12
    %v8348 = vpop.permute.xlu0 %8347
    %8349 = vrot.lane.b32.xlu0 %v7614, 12
    %v8350 = vpop.permute.xlu0 %8349
    %v8352 = vshrl.u32 %v7598, 16
    %v8354 = vshll.u32 %v7598, 16
    %v8356 = vrot.slane %v8354, 1
    %v8357 = vor.u32 %v8352, %v8356
    %v8359 = vshll.u32 %v7630, 16
    %v8361 = vrot.slane %v8359, 1
    %v8362 = vsel %vm7647, %v8357, %v8361
    %v8364 = vshrl.u32 %v7614, 16
    %v8366 = vshll.u32 %v7614, 16
    %v8368 = vrot.slane %v8366, 1
    %v8369 = vor.u32 %v8364, %v8368
    %v8371 = vshll.u32 %v7646, 16
    %v8373 = vrot.slane %v8371, 1
    %v8374 = vsel %vm7647, %v8369, %v8373
    %8375 = vrot.lane.b32.xlu0 %v7660, 16
    %v8376 = vpop.permute.xlu0 %8375
    %8377 = vrot.lane.b32.xlu0 %v7672, 16
    %v8378 = vpop.permute.xlu0 %8377
    %8379 = vrot.lane.b32.xlu0 %v7684, 16
    %v8380 = vpop.permute.xlu0 %8379
    %8381 = vrot.lane.b32.xlu0 %v7696, 16
    %v8382 = vpop.permute.xlu0 %8381
    %8383 = vrot.lane.b32.xlu0 %v7708, 16
    %v8384 = vpop.permute.xlu0 %8383
    %8385 = vrot.lane.b32.xlu0 %v7720, 16
    %v8386 = vpop.permute.xlu0 %8385
    %8387 = vrot.lane.b32.xlu0 %v7732, 16
    %v8388 = vpop.permute.xlu0 %8387
    %8389 = vrot.lane.b32.xlu0 %v7744, 16
    %v8390 = vpop.permute.xlu0 %8389
    %8391 = vrot.lane.b32.xlu0 %v7756, 16
    %v8392 = vpop.permute.xlu0 %8391
    %8393 = vrot.lane.b32.xlu0 %v7768, 16
    %v8394 = vpop.permute.xlu0 %8393
    %8395 = vrot.lane.b32.xlu0 %v7780, 16
    %v8396 = vpop.permute.xlu0 %8395
    %8397 = vrot.lane.b32.xlu0 %v7792, 16
    %v8398 = vpop.permute.xlu0 %8397
    %8399 = vrot.lane.b32.xlu0 %v7804, 16
    %v8400 = vpop.permute.xlu0 %8399
    %8401 = vrot.lane.b32.xlu0 %v7816, 16
    %v8402 = vpop.permute.xlu0 %8401
    %8403 = vrot.lane.b32.xlu0 %v7828, 16
    %v8404 = vpop.permute.xlu0 %8403
    %8405 = vrot.lane.b32.xlu0 %v8362, 16
    %v8406 = vpop.permute.xlu0 %8405
    %8407 = vrot.lane.b32.xlu0 %v7840, 16
    %v8408 = vpop.permute.xlu0 %8407
    %8409 = vrot.lane.b32.xlu0 %v7852, 16
    %v8410 = vpop.permute.xlu0 %8409
    %8411 = vrot.lane.b32.xlu0 %v7864, 16
    %v8412 = vpop.permute.xlu0 %8411
    %8413 = vrot.lane.b32.xlu0 %v7876, 16
    %v8414 = vpop.permute.xlu0 %8413
    %8415 = vrot.lane.b32.xlu0 %v7888, 16
    %v8416 = vpop.permute.xlu0 %8415
    %8417 = vrot.lane.b32.xlu0 %v7900, 16
    %v8418 = vpop.permute.xlu0 %8417
    %8419 = vrot.lane.b32.xlu0 %v7912, 16
    %v8420 = vpop.permute.xlu0 %8419
    %8421 = vrot.lane.b32.xlu0 %v7924, 16
    %v8422 = vpop.permute.xlu0 %8421
    %8423 = vrot.lane.b32.xlu0 %v7936, 16
    %v8424 = vpop.permute.xlu0 %8423
    %8425 = vrot.lane.b32.xlu0 %v7948, 16
    %v8426 = vpop.permute.xlu0 %8425
    %8427 = vrot.lane.b32.xlu0 %v7960, 16
    %v8428 = vpop.permute.xlu0 %8427
    %8429 = vrot.lane.b32.xlu0 %v7972, 16
    %v8430 = vpop.permute.xlu0 %8429
    %8431 = vrot.lane.b32.xlu0 %v7984, 16
    %v8432 = vpop.permute.xlu0 %8431
    %8433 = vrot.lane.b32.xlu0 %v7996, 16
    %v8434 = vpop.permute.xlu0 %8433
    %8435 = vrot.lane.b32.xlu0 %v8008, 16
    %v8436 = vpop.permute.xlu0 %8435
    %8437 = vrot.lane.b32.xlu0 %v8374, 16
    %v8438 = vpop.permute.xlu0 %8437
    %v8441 = vrot.slane %v7598, 1
    %v8442 = vrot.slane %v7630, 1
    %v8443 = vsel %vm8131, %v8441, %v8442
    %v8444 = vrot.slane %v7614, 1
    %v8445 = vrot.slane %v7646, 1
    %v8446 = vsel %vm8131, %v8444, %v8445
    %8447 = vrot.lane.b32.xlu0 %v8135, 20
    %v8448 = vpop.permute.xlu0 %8447
    %8449 = vrot.lane.b32.xlu0 %v8138, 20
    %v8450 = vpop.permute.xlu0 %8449
    %8451 = vrot.lane.b32.xlu0 %v8141, 20
    %v8452 = vpop.permute.xlu0 %8451
    %8453 = vrot.lane.b32.xlu0 %v8144, 20
    %v8454 = vpop.permute.xlu0 %8453
    %8455 = vrot.lane.b32.xlu0 %v8147, 20
    %v8456 = vpop.permute.xlu0 %8455
    %8457 = vrot.lane.b32.xlu0 %v8150, 20
    %v8458 = vpop.permute.xlu0 %8457
    %8459 = vrot.lane.b32.xlu0 %v8153, 20
    %v8460 = vpop.permute.xlu0 %8459
    %8461 = vrot.lane.b32.xlu0 %v8156, 20
    %v8462 = vpop.permute.xlu0 %8461
    %8463 = vrot.lane.b32.xlu0 %v8159, 20
    %v8464 = vpop.permute.xlu0 %8463
    %8465 = vrot.lane.b32.xlu0 %v8162, 20
    %v8466 = vpop.permute.xlu0 %8465
    %8467 = vrot.lane.b32.xlu0 %v8165, 20
    %v8468 = vpop.permute.xlu0 %8467
    %8469 = vrot.lane.b32.xlu0 %v8168, 20
    %v8470 = vpop.permute.xlu0 %8469
    %8471 = vrot.lane.b32.xlu0 %v8171, 20
    %v8472 = vpop.permute.xlu0 %8471
    %8473 = vrot.lane.b32.xlu0 %v8174, 20
    %v8474 = vpop.permute.xlu0 %8473
    %8475 = vrot.lane.b32.xlu0 %v8177, 20
    %v8476 = vpop.permute.xlu0 %8475
    %8477 = vrot.lane.b32.xlu0 %v8443, 20
    %v8478 = vpop.permute.xlu0 %8477
    %8479 = vrot.lane.b32.xlu0 %v8180, 20
    %v8480 = vpop.permute.xlu0 %8479
    %8481 = vrot.lane.b32.xlu0 %v8183, 20
    %v8482 = vpop.permute.xlu0 %8481
    %8483 = vrot.lane.b32.xlu0 %v8186, 20
    %v8484 = vpop.permute.xlu0 %8483
    %8485 = vrot.lane.b32.xlu0 %v8189, 20
    %v8486 = vpop.permute.xlu0 %8485
    %8487 = vrot.lane.b32.xlu0 %v8192, 20
    %v8488 = vpop.permute.xlu0 %8487
    %8489 = vrot.lane.b32.xlu0 %v8195, 20
    %v8490 = vpop.permute.xlu0 %8489
    %8491 = vrot.lane.b32.xlu0 %v8198, 20
    %v8492 = vpop.permute.xlu0 %8491
    %8493 = vrot.lane.b32.xlu0 %v8201, 20
    %v8494 = vpop.permute.xlu0 %8493
    %8495 = vrot.lane.b32.xlu0 %v8204, 20
    %v8496 = vpop.permute.xlu0 %8495
    %8497 = vrot.lane.b32.xlu0 %v8207, 20
    %v8498 = vpop.permute.xlu0 %8497
    %8499 = vrot.lane.b32.xlu0 %v8210, 20
    %v8500 = vpop.permute.xlu0 %8499
    %8501 = vrot.lane.b32.xlu0 %v8213, 20
    %v8502 = vpop.permute.xlu0 %8501
    %8503 = vrot.lane.b32.xlu0 %v8216, 20
    %v8504 = vpop.permute.xlu0 %8503
    %8505 = vrot.lane.b32.xlu0 %v8219, 20
    %v8506 = vpop.permute.xlu0 %8505
    %8507 = vrot.lane.b32.xlu0 %v8222, 20
    %v8508 = vpop.permute.xlu0 %8507
    %8509 = vrot.lane.b32.xlu0 %v8446, 20
    %v8510 = vpop.permute.xlu0 %8509
    %8511 = vrot.lane.b32.xlu0 %v7584, 24
    %v8512 = vpop.permute.xlu0 %8511
    %8513 = vrot.lane.b32.xlu0 %v7585, 24
    %v8514 = vpop.permute.xlu0 %8513
    %8515 = vrot.lane.b32.xlu0 %v7586, 24
    %v8516 = vpop.permute.xlu0 %8515
    %8517 = vrot.lane.b32.xlu0 %v7587, 24
    %v8518 = vpop.permute.xlu0 %8517
    %8519 = vrot.lane.b32.xlu0 %v7588, 24
    %v8520 = vpop.permute.xlu0 %8519
    %8521 = vrot.lane.b32.xlu0 %v7589, 24
    %v8522 = vpop.permute.xlu0 %8521
    %8523 = vrot.lane.b32.xlu0 %v7590, 24
    %v8524 = vpop.permute.xlu0 %8523
    %8525 = vrot.lane.b32.xlu0 %v7591, 24
    %v8526 = vpop.permute.xlu0 %8525
    %8527 = vrot.lane.b32.xlu0 %v7592, 24
    %v8528 = vpop.permute.xlu0 %8527
    %8529 = vrot.lane.b32.xlu0 %v7593, 24
    %v8530 = vpop.permute.xlu0 %8529
    %8531 = vrot.lane.b32.xlu0 %v7594, 24
    %v8532 = vpop.permute.xlu0 %8531
    %8533 = vrot.lane.b32.xlu0 %v7595, 24
    %v8534 = vpop.permute.xlu0 %8533
    %8535 = vrot.lane.b32.xlu0 %v7596, 24
    %v8536 = vpop.permute.xlu0 %8535
    %8537 = vrot.lane.b32.xlu0 %v7597, 24
    %v8538 = vpop.permute.xlu0 %8537
    %8539 = vrot.lane.b32.xlu0 %v7598, 24
    %v8540 = vpop.permute.xlu0 %8539
    %8541 = vrot.lane.b32.xlu0 0, 24
    %v8542 = vpop.permute.xlu0 %8541
    %8543 = vrot.lane.b32.xlu0 %v7600, 24
    %v8544 = vpop.permute.xlu0 %8543
    %8545 = vrot.lane.b32.xlu0 %v7601, 24
    %v8546 = vpop.permute.xlu0 %8545
    %8547 = vrot.lane.b32.xlu0 %v7602, 24
    %v8548 = vpop.permute.xlu0 %8547
    %8549 = vrot.lane.b32.xlu0 %v7603, 24
    %v8550 = vpop.permute.xlu0 %8549
    %8551 = vrot.lane.b32.xlu0 %v7604, 24
    %v8552 = vpop.permute.xlu0 %8551
    %8553 = vrot.lane.b32.xlu0 %v7605, 24
    %v8554 = vpop.permute.xlu0 %8553
    %8555 = vrot.lane.b32.xlu0 %v7606, 24
    %v8556 = vpop.permute.xlu0 %8555
    %8557 = vrot.lane.b32.xlu0 %v7607, 24
    %v8558 = vpop.permute.xlu0 %8557
    %8559 = vrot.lane.b32.xlu0 %v7608, 24
    %v8560 = vpop.permute.xlu0 %8559
    %8561 = vrot.lane.b32.xlu0 %v7609, 24
    %v8562 = vpop.permute.xlu0 %8561
    %8563 = vrot.lane.b32.xlu0 %v7610, 24
    %v8564 = vpop.permute.xlu0 %8563
    %8565 = vrot.lane.b32.xlu0 %v7611, 24
    %v8566 = vpop.permute.xlu0 %8565
    %8567 = vrot.lane.b32.xlu0 %v7612, 24
    %v8568 = vpop.permute.xlu0 %8567
    %8569 = vrot.lane.b32.xlu0 %v7613, 24
    %v8570 = vpop.permute.xlu0 %8569
    %8571 = vrot.lane.b32.xlu0 %v7614, 24
    %v8572 = vpop.permute.xlu0 %8571
    %8573 = vrot.lane.b32.xlu0 %v7672, 28
    %v8574 = vpop.permute.xlu0 %8573
    %8575 = vrot.lane.b32.xlu0 %v7684, 28
    %v8576 = vpop.permute.xlu0 %8575
    %8577 = vrot.lane.b32.xlu0 %v7696, 28
    %v8578 = vpop.permute.xlu0 %8577
    %8579 = vrot.lane.b32.xlu0 %v7708, 28
    %v8580 = vpop.permute.xlu0 %8579
    %8581 = vrot.lane.b32.xlu0 %v7720, 28
    %v8582 = vpop.permute.xlu0 %8581
    %8583 = vrot.lane.b32.xlu0 %v7732, 28
    %v8584 = vpop.permute.xlu0 %8583
    %8585 = vrot.lane.b32.xlu0 %v7744, 28
    %v8586 = vpop.permute.xlu0 %8585
    %8587 = vrot.lane.b32.xlu0 %v7756, 28
    %v8588 = vpop.permute.xlu0 %8587
    %8589 = vrot.lane.b32.xlu0 %v7768, 28
    %v8590 = vpop.permute.xlu0 %8589
    %8591 = vrot.lane.b32.xlu0 %v7780, 28
    %v8592 = vpop.permute.xlu0 %8591
    %8593 = vrot.lane.b32.xlu0 %v7792, 28
    %v8594 = vpop.permute.xlu0 %8593
    %8595 = vrot.lane.b32.xlu0 %v7804, 28
    %v8596 = vpop.permute.xlu0 %8595
    %8597 = vrot.lane.b32.xlu0 %v7816, 28
    %v8598 = vpop.permute.xlu0 %8597
    %8599 = vrot.lane.b32.xlu0 %v7828, 28
    %v8600 = vpop.permute.xlu0 %8599
    %8601 = vrot.lane.b32.xlu0 %v8362, 28
    %v8602 = vpop.permute.xlu0 %8601
    %8603 = vrot.lane.b32.xlu0 %v7648, 28
    %v8604 = vpop.permute.xlu0 %8603
    %8605 = vrot.lane.b32.xlu0 %v7852, 28
    %v8606 = vpop.permute.xlu0 %8605
    %8607 = vrot.lane.b32.xlu0 %v7864, 28
    %v8608 = vpop.permute.xlu0 %8607
    %8609 = vrot.lane.b32.xlu0 %v7876, 28
    %v8610 = vpop.permute.xlu0 %8609
    %8611 = vrot.lane.b32.xlu0 %v7888, 28
    %v8612 = vpop.permute.xlu0 %8611
    %8613 = vrot.lane.b32.xlu0 %v7900, 28
    %v8614 = vpop.permute.xlu0 %8613
    %8615 = vrot.lane.b32.xlu0 %v7912, 28
    %v8616 = vpop.permute.xlu0 %8615
    %8617 = vrot.lane.b32.xlu0 %v7924, 28
    %v8618 = vpop.permute.xlu0 %8617
    %8619 = vrot.lane.b32.xlu0 %v7936, 28
    %v8620 = vpop.permute.xlu0 %8619
    %8621 = vrot.lane.b32.xlu0 %v7948, 28
    %v8622 = vpop.permute.xlu0 %8621
    %8623 = vrot.lane.b32.xlu0 %v7960, 28
    %v8624 = vpop.permute.xlu0 %8623
    %8625 = vrot.lane.b32.xlu0 %v7972, 28
    %v8626 = vpop.permute.xlu0 %8625
    %8627 = vrot.lane.b32.xlu0 %v7984, 28
    %v8628 = vpop.permute.xlu0 %8627
    %8629 = vrot.lane.b32.xlu0 %v7996, 28
    %v8630 = vpop.permute.xlu0 %8629
    %8631 = vrot.lane.b32.xlu0 %v8008, 28
    %v8632 = vpop.permute.xlu0 %8631
    %8633 = vrot.lane.b32.xlu0 %v8374, 28
    %v8634 = vpop.permute.xlu0 %8633
    %8635 = vrot.lane.b32.xlu0 %v8138, 32
    %v8636 = vpop.permute.xlu0 %8635
    %8637 = vrot.lane.b32.xlu0 %v8141, 32
    %v8638 = vpop.permute.xlu0 %8637
    %8639 = vrot.lane.b32.xlu0 %v8144, 32
    %v8640 = vpop.permute.xlu0 %8639
    %8641 = vrot.lane.b32.xlu0 %v8147, 32
    %v8642 = vpop.permute.xlu0 %8641
    %8643 = vrot.lane.b32.xlu0 %v8150, 32
    %v8644 = vpop.permute.xlu0 %8643
    %8645 = vrot.lane.b32.xlu0 %v8153, 32
    %v8646 = vpop.permute.xlu0 %8645
    %8647 = vrot.lane.b32.xlu0 %v8156, 32
    %v8648 = vpop.permute.xlu0 %8647
    %8649 = vrot.lane.b32.xlu0 %v8159, 32
    %v8650 = vpop.permute.xlu0 %8649
    %8651 = vrot.lane.b32.xlu0 %v8162, 32
    %v8652 = vpop.permute.xlu0 %8651
    %8653 = vrot.lane.b32.xlu0 %v8165, 32
    %v8654 = vpop.permute.xlu0 %8653
    %8655 = vrot.lane.b32.xlu0 %v8168, 32
    %v8656 = vpop.permute.xlu0 %8655
    %8657 = vrot.lane.b32.xlu0 %v8171, 32
    %v8658 = vpop.permute.xlu0 %8657
    %8659 = vrot.lane.b32.xlu0 %v8174, 32
    %v8660 = vpop.permute.xlu0 %8659
    %8661 = vrot.lane.b32.xlu0 %v8177, 32
    %v8662 = vpop.permute.xlu0 %8661
    %8663 = vrot.lane.b32.xlu0 %v8443, 32
    %v8664 = vpop.permute.xlu0 %8663
    %8665 = vrot.lane.b32.xlu0 %v8132, 32
    %v8666 = vpop.permute.xlu0 %8665
    %8667 = vrot.lane.b32.xlu0 %v8183, 32
    %v8668 = vpop.permute.xlu0 %8667
    %8669 = vrot.lane.b32.xlu0 %v8186, 32
    %v8670 = vpop.permute.xlu0 %8669
    %8671 = vrot.lane.b32.xlu0 %v8189, 32
    %v8672 = vpop.permute.xlu0 %8671
    %8673 = vrot.lane.b32.xlu0 %v8192, 32
    %v8674 = vpop.permute.xlu0 %8673
    %8675 = vrot.lane.b32.xlu0 %v8195, 32
    %v8676 = vpop.permute.xlu0 %8675
    %8677 = vrot.lane.b32.xlu0 %v8198, 32
    %v8678 = vpop.permute.xlu0 %8677
    %8679 = vrot.lane.b32.xlu0 %v8201, 32
    %v8680 = vpop.permute.xlu0 %8679
    %8681 = vrot.lane.b32.xlu0 %v8204, 32
    %v8682 = vpop.permute.xlu0 %8681
    %8683 = vrot.lane.b32.xlu0 %v8207, 32
    %v8684 = vpop.permute.xlu0 %8683
    %8685 = vrot.lane.b32.xlu0 %v8210, 32
    %v8686 = vpop.permute.xlu0 %8685
    %8687 = vrot.lane.b32.xlu0 %v8213, 32
    %v8688 = vpop.permute.xlu0 %8687
    %8689 = vrot.lane.b32.xlu0 %v8216, 32
    %v8690 = vpop.permute.xlu0 %8689
    %8691 = vrot.lane.b32.xlu0 %v8219, 32
    %v8692 = vpop.permute.xlu0 %8691
    %8693 = vrot.lane.b32.xlu0 %v8222, 32
    %v8694 = vpop.permute.xlu0 %8693
    %8695 = vrot.lane.b32.xlu0 %v8446, 32
    %v8696 = vpop.permute.xlu0 %8695
    %v8698 = vsel %vm6348, 0, %v8010
    %v8700 = vsel %vm6348, %v7583, %v8012
    %v8702 = vsel %vm6348, %v7584, %v8014
    %v8704 = vsel %vm6348, %v7585, %v8016
    %v8706 = vsel %vm6348, %v7586, %v8018
    %v8708 = vsel %vm6348, %v7587, %v8020
    %v8710 = vsel %vm6348, %v7588, %v8022
    %v8712 = vsel %vm6348, %v7589, %v8024
    %v8714 = vsel %vm6348, %v7590, %v8026
    %v8716 = vsel %vm6348, %v7591, %v8028
    %v8718 = vsel %vm6348, %v7592, %v8030
    %v8720 = vsel %vm6348, %v7593, %v8032
    %v8722 = vsel %vm6348, %v7594, %v8034
    %v8724 = vsel %vm6348, %v7595, %v8036
    %v8726 = vsel %vm6348, %v7596, %v8038
    %v8728 = vsel %vm6348, %v7597, %v8040
    %v8730 = vsel %vm6348, %v7599, %v8042
    %v8732 = vsel %vm6348, %v7600, %v8044
    %v8734 = vsel %vm6348, %v7601, %v8046
    %v8736 = vsel %vm6348, %v7602, %v8048
    %v8738 = vsel %vm6348, %v7603, %v8050
    %v8740 = vsel %vm6348, %v7604, %v8052
    %v8742 = vsel %vm6348, %v7605, %v8054
    %v8744 = vsel %vm6348, %v7606, %v8056
    %v8746 = vsel %vm6348, %v7607, %v8058
    %v8748 = vsel %vm6348, %v7608, %v8060
    %v8750 = vsel %vm6348, %v7609, %v8062
    %v8752 = vsel %vm6348, %v7610, %v8064
    %v8754 = vsel %vm6348, %v7611, %v8066
    %v8756 = vsel %vm6348, %v7612, %v8068
    %v8758 = vsel %vm6348, %v7613, %v8070
    %v8760 = vsel %vm2301, %v8698, %v8224
    %v8762 = vsel %vm2301, %v8700, %v8226
    %v8764 = vsel %vm2301, %v8702, %v8228
    %v8766 = vsel %vm2301, %v8704, %v8230
    %v8768 = vsel %vm2301, %v8706, %v8232
    %v8770 = vsel %vm2301, %v8708, %v8234
    %v8772 = vsel %vm2301, %v8710, %v8236
    %v8774 = vsel %vm2301, %v8712, %v8238
    %v8776 = vsel %vm2301, %v8714, %v8240
    %v8778 = vsel %vm2301, %v8716, %v8242
    %v8780 = vsel %vm2301, %v8718, %v8244
    %v8782 = vsel %vm2301, %v8720, %v8246
    %v8784 = vsel %vm2301, %v8722, %v8248
    %v8786 = vsel %vm2301, %v8724, %v8250
    %v8788 = vsel %vm2301, %v8726, %v8252
    %v8790 = vsel %vm2301, %v8728, %v8254
    %v8792 = vsel %vm2301, %v8730, %v8256
    %v8794 = vsel %vm2301, %v8732, %v8258
    %v8796 = vsel %vm2301, %v8734, %v8260
    %v8798 = vsel %vm2301, %v8736, %v8262
    %v8800 = vsel %vm2301, %v8738, %v8264
    %v8802 = vsel %vm2301, %v8740, %v8266
    %v8804 = vsel %vm2301, %v8742, %v8268
    %v8806 = vsel %vm2301, %v8744, %v8270
    %v8808 = vsel %vm2301, %v8746, %v8272
    %v8810 = vsel %vm2301, %v8748, %v8274
    %v8812 = vsel %vm2301, %v8750, %v8276
    %v8814 = vsel %vm2301, %v8752, %v8278
    %v8816 = vsel %vm2301, %v8754, %v8280
    %v8818 = vsel %vm2301, %v8756, %v8282
    %v8820 = vsel %vm2301, %v8758, %v8284
    %vm8821 = vcmask 97280
    %v8823 = vsel %vm8821, %v8760, %v8288
    %v8825 = vsel %vm8821, %v8762, %v8290
    %v8827 = vsel %vm8821, %v8764, %v8292
    %v8829 = vsel %vm8821, %v8766, %v8294
    %v8831 = vsel %vm8821, %v8768, %v8296
    %v8833 = vsel %vm8821, %v8770, %v8298
    %v8835 = vsel %vm8821, %v8772, %v8300
    %v8837 = vsel %vm8821, %v8774, %v8302
    %v8839 = vsel %vm8821, %v8776, %v8304
    %v8841 = vsel %vm8821, %v8778, %v8306
    %v8843 = vsel %vm8821, %v8780, %v8308
    %v8845 = vsel %vm8821, %v8782, %v8310
    %v8847 = vsel %vm8821, %v8784, %v8312
    %v8849 = vsel %vm8821, %v8786, %v8314
    %v8851 = vsel %vm8821, %v8788, %v8316
    %v8853 = vsel %vm8821, %v8790, %v8318
    %v8855 = vsel %vm8821, %v8760, %v8320
    %v8857 = vsel %vm8821, %v8792, %v8322
    %v8859 = vsel %vm8821, %v8794, %v8324
    %v8861 = vsel %vm8821, %v8796, %v8326
    %v8863 = vsel %vm8821, %v8798, %v8328
    %v8865 = vsel %vm8821, %v8800, %v8330
    %v8867 = vsel %vm8821, %v8802, %v8332
    %v8869 = vsel %vm8821, %v8804, %v8334
    %v8871 = vsel %vm8821, %v8806, %v8336
    %v8873 = vsel %vm8821, %v8808, %v8338
    %v8875 = vsel %vm8821, %v8810, %v8340
    %v8877 = vsel %vm8821, %v8812, %v8342
    %v8879 = vsel %vm8821, %v8814, %v8344
    %v8881 = vsel %vm8821, %v8816, %v8346
    %v8883 = vsel %vm8821, %v8818, %v8348
    %v8885 = vsel %vm8821, %v8820, %v8350
    %v8887 = vsel %vm822, %v8823, %v8376
    %v8889 = vsel %vm822, %v8825, %v8378
    %v8891 = vsel %vm822, %v8827, %v8380
    %v8893 = vsel %vm822, %v8829, %v8382
    %v8895 = vsel %vm822, %v8831, %v8384
    %v8897 = vsel %vm822, %v8833, %v8386
    %v8899 = vsel %vm822, %v8835, %v8388
    %v8901 = vsel %vm822, %v8837, %v8390
    %v8903 = vsel %vm822, %v8839, %v8392
    %v8905 = vsel %vm822, %v8841, %v8394
    %v8907 = vsel %vm822, %v8843, %v8396
    %v8909 = vsel %vm822, %v8845, %v8398
    %v8911 = vsel %vm822, %v8847, %v8400
    %v8913 = vsel %vm822, %v8849, %v8402
    %v8915 = vsel %vm822, %v8851, %v8404
    %v8917 = vsel %vm822, %v8853, %v8406
    %v8919 = vsel %vm822, %v8855, %v8408
    %v8921 = vsel %vm822, %v8857, %v8410
    %v8923 = vsel %vm822, %v8859, %v8412
    %v8925 = vsel %vm822, %v8861, %v8414
    %v8927 = vsel %vm822, %v8863, %v8416
    %v8929 = vsel %vm822, %v8865, %v8418
    %v8931 = vsel %vm822, %v8867, %v8420
    %v8933 = vsel %vm822, %v8869, %v8422
    %v8935 = vsel %vm822, %v8871, %v8424
    %v8937 = vsel %vm822, %v8873, %v8426
    %v8939 = vsel %vm822, %v8875, %v8428
    %v8941 = vsel %vm822, %v8877, %v8430
    %v8943 = vsel %vm822, %v8879, %v8432
    %v8945 = vsel %vm822, %v8881, %v8434
    %v8947 = vsel %vm822, %v8883, %v8436
    %v8949 = vsel %vm822, %v8885, %v8438
    %vm8950 = vcmask 162816
    %v8952 = vsel %vm8950, %v8887, %v8448
    %v8954 = vsel %vm8950, %v8889, %v8450
    %v8956 = vsel %vm8950, %v8891, %v8452
    %v8958 = vsel %vm8950, %v8893, %v8454
    %v8960 = vsel %vm8950, %v8895, %v8456
    %v8962 = vsel %vm8950, %v8897, %v8458
    %v8964 = vsel %vm8950, %v8899, %v8460
    %v8966 = vsel %vm8950, %v8901, %v8462
    %v8968 = vsel %vm8950, %v8903, %v8464
    %v8970 = vsel %vm8950, %v8905, %v8466
    %v8972 = vsel %vm8950, %v8907, %v8468
    %v8974 = vsel %vm8950, %v8909, %v8470
    %v8976 = vsel %vm8950, %v8911, %v8472
    %v8978 = vsel %vm8950, %v8913, %v8474
    %v8980 = vsel %vm8950, %v8915, %v8476
    %v8982 = vsel %vm8950, %v8917, %v8478
    %v8984 = vsel %vm8950, %v8919, %v8480
    %v8986 = vsel %vm8950, %v8921, %v8482
    %v8988 = vsel %vm8950, %v8923, %v8484
    %v8990 = vsel %vm8950, %v8925, %v8486
    %v8992 = vsel %vm8950, %v8927, %v8488
    %v8994 = vsel %vm8950, %v8929, %v8490
    %v8996 = vsel %vm8950, %v8931, %v8492
    %v8998 = vsel %vm8950, %v8933, %v8494
    %v9000 = vsel %vm8950, %v8935, %v8496
    %v9002 = vsel %vm8950, %v8937, %v8498
    %v9004 = vsel %vm8950, %v8939, %v8500
    %v9006 = vsel %vm8950, %v8941, %v8502
    %v9008 = vsel %vm8950, %v8943, %v8504
    %v9010 = vsel %vm8950, %v8945, %v8506
    %v9012 = vsel %vm8950, %v8947, %v8508
    %v9014 = vsel %vm8950, %v8949, %v8510
    %v9016 = vsel %vm3174, %v8952, %v8512
    %v9018 = vsel %vm3174, %v8954, %v8514
    %v9020 = vsel %vm3174, %v8956, %v8516
    %v9022 = vsel %vm3174, %v8958, %v8518
    %v9024 = vsel %vm3174, %v8960, %v8520
    %v9026 = vsel %vm3174, %v8962, %v8522
    %v9028 = vsel %vm3174, %v8964, %v8524
    %v9030 = vsel %vm3174, %v8966, %v8526
    %v9032 = vsel %vm3174, %v8968, %v8528
    %v9034 = vsel %vm3174, %v8970, %v8530
    %v9036 = vsel %vm3174, %v8972, %v8532
    %v9038 = vsel %vm3174, %v8974, %v8534
    %v9040 = vsel %vm3174, %v8976, %v8536
    %v9042 = vsel %vm3174, %v8978, %v8538
    %v9044 = vsel %vm3174, %v8980, %v8540
    %v9046 = vsel %vm3174, %v8982, %v8542
    %v9048 = vsel %vm3174, %v8984, %v8544
    %v9050 = vsel %vm3174, %v8986, %v8546
    %v9052 = vsel %vm3174, %v8988, %v8548
    %v9054 = vsel %vm3174, %v8990, %v8550
    %v9056 = vsel %vm3174, %v8992, %v8552
    %v9058 = vsel %vm3174, %v8994, %v8554
    %v9060 = vsel %vm3174, %v8996, %v8556
    %v9062 = vsel %vm3174, %v8998, %v8558
    %v9064 = vsel %vm3174, %v9000, %v8560
    %v9066 = vsel %vm3174, %v9002, %v8562
    %v9068 = vsel %vm3174, %v9004, %v8564
    %v9070 = vsel %vm3174, %v9006, %v8566
    %v9072 = vsel %vm3174, %v9008, %v8568
    %v9074 = vsel %vm3174, %v9010, %v8570
    %v9076 = vsel %vm3174, %v9012, %v8572
    %v9077 = vsel %vm3174, %v9014, %v8542
    %vm9078 = vcmask 228352
    %v9080 = vsel %vm9078, %v9016, %v8574
    %v9082 = vsel %vm9078, %v9018, %v8576
    %v9084 = vsel %vm9078, %v9020, %v8578
    %v9086 = vsel %vm9078, %v9022, %v8580
    %v9088 = vsel %vm9078, %v9024, %v8582
    %v9090 = vsel %vm9078, %v9026, %v8584
    %v9092 = vsel %vm9078, %v9028, %v8586
    %v9094 = vsel %vm9078, %v9030, %v8588
    %v9096 = vsel %vm9078, %v9032, %v8590
    %v9098 = vsel %vm9078, %v9034, %v8592
    %v9100 = vsel %vm9078, %v9036, %v8594
    %v9102 = vsel %vm9078, %v9038, %v8596
    %v9104 = vsel %vm9078, %v9040, %v8598
    %v9106 = vsel %vm9078, %v9042, %v8600
    %v9108 = vsel %vm9078, %v9044, %v8602
    %v9110 = vsel %vm9078, %v9046, %v8604
    %v9112 = vsel %vm9078, %v9048, %v8606
    %v9114 = vsel %vm9078, %v9050, %v8608
    %v9116 = vsel %vm9078, %v9052, %v8610
    %v9118 = vsel %vm9078, %v9054, %v8612
    %v9120 = vsel %vm9078, %v9056, %v8614
    %v9122 = vsel %vm9078, %v9058, %v8616
    %v9124 = vsel %vm9078, %v9060, %v8618
    %v9126 = vsel %vm9078, %v9062, %v8620
    %v9128 = vsel %vm9078, %v9064, %v8622
    %v9130 = vsel %vm9078, %v9066, %v8624
    %v9132 = vsel %vm9078, %v9068, %v8626
    %v9134 = vsel %vm9078, %v9070, %v8628
    %v9136 = vsel %vm9078, %v9072, %v8630
    %v9138 = vsel %vm9078, %v9074, %v8632
    %v9140 = vsel %vm9078, %v9076, %v8634
    %v9141 = vsel %vm9078, %v9077, %v8604
    %v9143 = vsel %vm754, %v9080, %v8636
    %v9145 = vsel %vm754, %v9082, %v8638
    %v9147 = vsel %vm754, %v9084, %v8640
    %v9149 = vsel %vm754, %v9086, %v8642
    %v9151 = vsel %vm754, %v9088, %v8644
    %v9153 = vsel %vm754, %v9090, %v8646
    %v9155 = vsel %vm754, %v9092, %v8648
    %v9157 = vsel %vm754, %v9094, %v8650
    %v9159 = vsel %vm754, %v9096, %v8652
    %v9161 = vsel %vm754, %v9098, %v8654
    %v9163 = vsel %vm754, %v9100, %v8656
    %v9165 = vsel %vm754, %v9102, %v8658
    %v9167 = vsel %vm754, %v9104, %v8660
    %v9169 = vsel %vm754, %v9106, %v8662
    %v9171 = vsel %vm754, %v9108, %v8664
    %v9173 = vsel %vm754, %v9110, %v8666
    %v9175 = vsel %vm754, %v9112, %v8668
    %v9177 = vsel %vm754, %v9114, %v8670
    %v9179 = vsel %vm754, %v9116, %v8672
    %v9181 = vsel %vm754, %v9118, %v8674
    %v9183 = vsel %vm754, %v9120, %v8676
    %v9185 = vsel %vm754, %v9122, %v8678
    %v9187 = vsel %vm754, %v9124, %v8680
    %v9189 = vsel %vm754, %v9126, %v8682
    %v9191 = vsel %vm754, %v9128, %v8684
    %v9193 = vsel %vm754, %v9130, %v8686
    %v9195 = vsel %vm754, %v9132, %v8688
    %v9197 = vsel %vm754, %v9134, %v8690
    %v9199 = vsel %vm754, %v9136, %v8692
    %v9201 = vsel %vm754, %v9138, %v8694
    %v9203 = vsel %vm754, %v9140, %v8696
    %v9204 = vsel %vm754, %v9141, %v8666
    %v9210 = vunpack.c.l.b16 %v628
    %v9211 = vunpack.c.l.b16 %v629
    %v9212 = vunpack.c.l.b16 %v630
    %v9213 = vunpack.c.l.b16 %v631
    %v9214 = vunpack.c.l.b16 %v632
    %v9215 = vpack.c.b16 %v9211, %v9210
    %v9216 = vpack.c.b16 %v9213, %v9212
    %v9217 = vpack.c.b16 %v9214, %v9214
    %vm9220 = vcmask 293888
    %v9221 = vsel %vm9220, %v9143, 0
    %v9223 = vsel %vm9220, %v9145, 0
    %v9225 = vsel %vm9220, %v9147, 0
    %v9227 = vsel %vm9220, %v9149, 0
    %v9229 = vsel %vm9220, %v9151, 0
    %v9231 = vsel %vm9220, %v9153, 0
    %v9233 = vsel %vm9220, %v9155, 0
    %v9235 = vsel %vm9220, %v9157, 0
    %v9237 = vsel %vm9220, %v9159, 0
    %v9239 = vsel %vm9220, %v9161, 0
    %v9241 = vsel %vm9220, %v9163, 0
    %v9243 = vsel %vm9220, %v9165, 0
    %v9245 = vsel %vm9220, %v9167, 0
    %v9247 = vsel %vm9220, %v9169, 0
    %v9249 = vsel %vm9220, %v9171, 0
    %v9251 = vsel %vm9220, %v9173, 0
    %v9253 = vsel %vm9220, %v9175, 0
    %v9255 = vsel %vm9220, %v9177, 0
    %v9257 = vsel %vm9220, %v9179, 0
    %v9259 = vsel %vm9220, %v9181, 0
    %v9261 = vsel %vm9220, %v9183, 0
    %v9263 = vsel %vm9220, %v9185, 0
    %v9265 = vsel %vm9220, %v9187, 0
    %v9267 = vsel %vm9220, %v9189, 0
    %v9269 = vsel %vm9220, %v9191, 0
    %v9271 = vsel %vm9220, %v9193, 0
    %v9273 = vsel %vm9220, %v9195, 0
    %v9275 = vsel %vm9220, %v9197, 0
    %v9277 = vsel %vm9220, %v9199, 0
    %v9279 = vsel %vm9220, %v9201, 0
    %v9281 = vsel %vm9220, %v9203, 0
    %v9283 = vsel %vm9220, %v9204, 0
    %v9286 = vsel %vm894, %v9217, 0
    %9288 = vmatpush.bf16.msra.mxu0 0
    %9289 = vmatpush.bf16.msra.mxu0 0
    %9290 = vmatpush.bf16.msra.mxu0 0
    %9291 = vmatpush.bf16.msra.mxu0 0
    %9292 = vmatpush.bf16.msra.mxu0 0
    %9293 = vmatpush.bf16.msra.mxu0 %v9286
    %9294 = vmatpush.bf16.msra.mxu0 %v9216
    %9295 = vmatpush.bf16.msra.mxu0 %v9215
    %9296 = vmatmul.bf16.gmra.mxu0 %v9221
    %v9297 = vpop.f32.mrf.mxu0
    %v9298 = vadd.f32 0.0, %v9297
    %v9299 = vpop.f32.mrf.mxu0
    %v9300 = vadd.f32 0.0, %v9299
    %9301 = vmatmul.bf16.gmra.mxu0 %v9223
    %v9302 = vpop.f32.mrf.mxu0
    %v9303 = vadd.f32 0.0, %v9302
    %v9304 = vpop.f32.mrf.mxu0
    %v9305 = vadd.f32 0.0, %v9304
    %9306 = vmatmul.bf16.gmra.mxu0 %v9225
    %v9307 = vpop.f32.mrf.mxu0
    %v9308 = vadd.f32 0.0, %v9307
    %v9309 = vpop.f32.mrf.mxu0
    %v9310 = vadd.f32 0.0, %v9309
    %9311 = vmatmul.bf16.gmra.mxu0 %v9227
    %v9312 = vpop.f32.mrf.mxu0
    %v9313 = vadd.f32 0.0, %v9312
    %v9314 = vpop.f32.mrf.mxu0
    %v9315 = vadd.f32 0.0, %v9314
    %9316 = vmatmul.bf16.gmra.mxu0 %v9229
    %v9317 = vpop.f32.mrf.mxu0
    %v9318 = vadd.f32 0.0, %v9317
    %v9319 = vpop.f32.mrf.mxu0
    %v9320 = vadd.f32 0.0, %v9319
    %9321 = vmatmul.bf16.gmra.mxu0 %v9231
    %v9322 = vpop.f32.mrf.mxu0
    %v9323 = vadd.f32 0.0, %v9322
    %v9324 = vpop.f32.mrf.mxu0
    %v9325 = vadd.f32 0.0, %v9324
    %9326 = vmatmul.bf16.gmra.mxu0 %v9233
    %v9327 = vpop.f32.mrf.mxu0
    %v9328 = vadd.f32 0.0, %v9327
    %v9329 = vpop.f32.mrf.mxu0
    %v9330 = vadd.f32 0.0, %v9329
    %9331 = vmatmul.bf16.gmra.mxu0 %v9235
    %v9332 = vpop.f32.mrf.mxu0
    %v9333 = vadd.f32 0.0, %v9332
    %v9334 = vpop.f32.mrf.mxu0
    %v9335 = vadd.f32 0.0, %v9334
    %9336 = vmatmul.bf16.gmra.mxu0 %v9237
    %v9337 = vpop.f32.mrf.mxu0
    %v9338 = vadd.f32 0.0, %v9337
    %v9339 = vpop.f32.mrf.mxu0
    %v9340 = vadd.f32 0.0, %v9339
    %9341 = vmatmul.bf16.gmra.mxu0 %v9239
    %v9342 = vpop.f32.mrf.mxu0
    %v9343 = vadd.f32 0.0, %v9342
    %v9344 = vpop.f32.mrf.mxu0
    %v9345 = vadd.f32 0.0, %v9344
    %9346 = vmatmul.bf16.gmra.mxu0 %v9241
    %v9347 = vpop.f32.mrf.mxu0
    %v9348 = vadd.f32 0.0, %v9347
    %v9349 = vpop.f32.mrf.mxu0
    %v9350 = vadd.f32 0.0, %v9349
    %9351 = vmatmul.bf16.gmra.mxu0 %v9243
    %v9352 = vpop.f32.mrf.mxu0
    %v9353 = vadd.f32 0.0, %v9352
    %v9354 = vpop.f32.mrf.mxu0
    %v9355 = vadd.f32 0.0, %v9354
    %9356 = vmatmul.bf16.gmra.mxu0 %v9245
    %v9357 = vpop.f32.mrf.mxu0
    %v9358 = vadd.f32 0.0, %v9357
    %v9359 = vpop.f32.mrf.mxu0
    %v9360 = vadd.f32 0.0, %v9359
    %9361 = vmatmul.bf16.gmra.mxu0 %v9247
    %v9362 = vpop.f32.mrf.mxu0
    %v9363 = vadd.f32 0.0, %v9362
    %v9364 = vpop.f32.mrf.mxu0
    %v9365 = vadd.f32 0.0, %v9364
    %9366 = vmatmul.bf16.gmra.mxu0 %v9249
    %v9367 = vpop.f32.mrf.mxu0
    %v9368 = vadd.f32 0.0, %v9367
    %v9369 = vpop.f32.mrf.mxu0
    %v9370 = vadd.f32 0.0, %v9369
    %9371 = vmatmul.bf16.gmra.mxu0 %v9251
    %v9372 = vpop.f32.mrf.mxu0
    %v9373 = vadd.f32 0.0, %v9372
    %v9374 = vpop.f32.mrf.mxu0
    %v9375 = vadd.f32 0.0, %v9374
    %9376 = vmatmul.bf16.gmra.mxu0 %v9253
    %v9377 = vpop.f32.mrf.mxu0
    %v9378 = vadd.f32 0.0, %v9377
    %v9379 = vpop.f32.mrf.mxu0
    %v9380 = vadd.f32 0.0, %v9379
    %9381 = vmatmul.bf16.gmra.mxu0 %v9255
    %v9382 = vpop.f32.mrf.mxu0
    %v9383 = vadd.f32 0.0, %v9382
    %v9384 = vpop.f32.mrf.mxu0
    %v9385 = vadd.f32 0.0, %v9384
    %9386 = vmatmul.bf16.gmra.mxu0 %v9257
    %v9387 = vpop.f32.mrf.mxu0
    %v9388 = vadd.f32 0.0, %v9387
    %v9389 = vpop.f32.mrf.mxu0
    %v9390 = vadd.f32 0.0, %v9389
    %9391 = vmatmul.bf16.gmra.mxu0 %v9259
    %v9392 = vpop.f32.mrf.mxu0
    %v9393 = vadd.f32 0.0, %v9392
    %v9394 = vpop.f32.mrf.mxu0
    %v9395 = vadd.f32 0.0, %v9394
    %9396 = vmatmul.bf16.gmra.mxu0 %v9261
    %v9397 = vpop.f32.mrf.mxu0
    %v9398 = vadd.f32 0.0, %v9397
    %v9399 = vpop.f32.mrf.mxu0
    %v9400 = vadd.f32 0.0, %v9399
    %9401 = vmatmul.bf16.gmra.mxu0 %v9263
    %v9402 = vpop.f32.mrf.mxu0
    %v9403 = vadd.f32 0.0, %v9402
    %v9404 = vpop.f32.mrf.mxu0
    %v9405 = vadd.f32 0.0, %v9404
    %9406 = vmatmul.bf16.gmra.mxu0 %v9265
    %v9407 = vpop.f32.mrf.mxu0
    %v9408 = vadd.f32 0.0, %v9407
    %v9409 = vpop.f32.mrf.mxu0
    %v9410 = vadd.f32 0.0, %v9409
    %9411 = vmatmul.bf16.gmra.mxu0 %v9267
    %v9412 = vpop.f32.mrf.mxu0
    %v9413 = vadd.f32 0.0, %v9412
    %v9414 = vpop.f32.mrf.mxu0
    %v9415 = vadd.f32 0.0, %v9414
    %9416 = vmatmul.bf16.gmra.mxu0 %v9269
    %v9417 = vpop.f32.mrf.mxu0
    %v9418 = vadd.f32 0.0, %v9417
    %v9419 = vpop.f32.mrf.mxu0
    %v9420 = vadd.f32 0.0, %v9419
    %9421 = vmatmul.bf16.gmra.mxu0 %v9271
    %v9422 = vpop.f32.mrf.mxu0
    %v9423 = vadd.f32 0.0, %v9422
    %v9424 = vpop.f32.mrf.mxu0
    %v9425 = vadd.f32 0.0, %v9424
    %9426 = vmatmul.bf16.gmra.mxu0 %v9273
    %v9427 = vpop.f32.mrf.mxu0
    %v9428 = vadd.f32 0.0, %v9427
    %v9429 = vpop.f32.mrf.mxu0
    %v9430 = vadd.f32 0.0, %v9429
    %9431 = vmatmul.bf16.gmra.mxu0 %v9275
    %v9432 = vpop.f32.mrf.mxu0
    %v9433 = vadd.f32 0.0, %v9432
    %v9434 = vpop.f32.mrf.mxu0
    %v9435 = vadd.f32 0.0, %v9434
    %9436 = vmatmul.bf16.gmra.mxu0 %v9277
    %v9437 = vpop.f32.mrf.mxu0
    %v9438 = vadd.f32 0.0, %v9437
    %v9439 = vpop.f32.mrf.mxu0
    %v9440 = vadd.f32 0.0, %v9439
    %9441 = vmatmul.bf16.gmra.mxu0 %v9279
    %v9442 = vpop.f32.mrf.mxu0
    %v9443 = vadd.f32 0.0, %v9442
    %v9444 = vpop.f32.mrf.mxu0
    %v9445 = vadd.f32 0.0, %v9444
    %9446 = vmatmul.bf16.gmra.mxu0 %v9281
    %v9447 = vpop.f32.mrf.mxu0
    %v9448 = vadd.f32 0.0, %v9447
    %v9449 = vpop.f32.mrf.mxu0
    %v9450 = vadd.f32 0.0, %v9449
    %9451 = vmatmul.bf16.gmra.mxu0 %v9283
    %v9452 = vpop.f32.mrf.mxu0
    %v9453 = vadd.f32 0.0, %v9452
    %v9454 = vpop.f32.mrf.mxu0
    %v9455 = vadd.f32 0.0, %v9454
    %9456 = vdwg.mxu0
    %v9458 = vperm.slane %v627, 0
    %v9460 = vmul.f32 %v9298, %v9458
    %v9461 = vmul.f32 %v9300, %v9458
    %v9462 = vmul.f32 %v9303, %v9458
    %v9463 = vmul.f32 %v9305, %v9458
    %v9464 = vmul.f32 %v9308, %v9458
    %v9465 = vmul.f32 %v9310, %v9458
    %v9466 = vmul.f32 %v9313, %v9458
    %v9467 = vmul.f32 %v9315, %v9458
    %v9468 = vmul.f32 %v9318, %v9458
    %v9469 = vmul.f32 %v9320, %v9458
    %v9470 = vmul.f32 %v9323, %v9458
    %v9471 = vmul.f32 %v9325, %v9458
    %v9472 = vmul.f32 %v9328, %v9458
    %v9473 = vmul.f32 %v9330, %v9458
    %v9474 = vmul.f32 %v9333, %v9458
    %v9475 = vmul.f32 %v9335, %v9458
    %v9476 = vmul.f32 %v9338, %v9458
    %v9477 = vmul.f32 %v9340, %v9458
    %v9478 = vmul.f32 %v9343, %v9458
    %v9479 = vmul.f32 %v9345, %v9458
    %v9480 = vmul.f32 %v9348, %v9458
    %v9481 = vmul.f32 %v9350, %v9458
    %v9482 = vmul.f32 %v9353, %v9458
    %v9483 = vmul.f32 %v9355, %v9458
    %v9484 = vmul.f32 %v9358, %v9458
    %v9485 = vmul.f32 %v9360, %v9458
    %v9486 = vmul.f32 %v9363, %v9458
    %v9487 = vmul.f32 %v9365, %v9458
    %v9488 = vmul.f32 %v9368, %v9458
    %v9489 = vmul.f32 %v9370, %v9458
    %v9490 = vmul.f32 %v9373, %v9458
    %v9491 = vmul.f32 %v9375, %v9458
    %v9492 = vmul.f32 %v9378, %v9458
    %v9493 = vmul.f32 %v9380, %v9458
    %v9494 = vmul.f32 %v9383, %v9458
    %v9495 = vmul.f32 %v9385, %v9458
    %v9496 = vmul.f32 %v9388, %v9458
    %v9497 = vmul.f32 %v9390, %v9458
    %v9498 = vmul.f32 %v9393, %v9458
    %v9499 = vmul.f32 %v9395, %v9458
    %v9500 = vmul.f32 %v9398, %v9458
    %v9501 = vmul.f32 %v9400, %v9458
    %v9502 = vmul.f32 %v9403, %v9458
    %v9503 = vmul.f32 %v9405, %v9458
    %v9504 = vmul.f32 %v9408, %v9458
    %v9505 = vmul.f32 %v9410, %v9458
    %v9506 = vmul.f32 %v9413, %v9458
    %v9507 = vmul.f32 %v9415, %v9458
    %v9508 = vmul.f32 %v9418, %v9458
    %v9509 = vmul.f32 %v9420, %v9458
    %v9510 = vmul.f32 %v9423, %v9458
    %v9511 = vmul.f32 %v9425, %v9458
    %v9512 = vmul.f32 %v9428, %v9458
    %v9513 = vmul.f32 %v9430, %v9458
    %v9514 = vmul.f32 %v9433, %v9458
    %v9515 = vmul.f32 %v9435, %v9458
    %v9516 = vmul.f32 %v9438, %v9458
    %v9517 = vmul.f32 %v9440, %v9458
    %v9518 = vmul.f32 %v9443, %v9458
    %v9519 = vmul.f32 %v9445, %v9458
    %v9520 = vmul.f32 %v9448, %v9458
    %v9521 = vmul.f32 %v9450, %v9458
    %v9522 = vmul.f32 %v9453, %v9458
    %v9523 = vmul.f32 %v9455, %v9458
    %v9525 = vperm.slane %v626, 0
    %v9527 = vadd.f32 %v9460, %v9525
    %v9528 = vadd.f32 %v9461, %v9525
    %v9529 = vadd.f32 %v9462, %v9525
    %v9530 = vadd.f32 %v9463, %v9525
    %v9531 = vadd.f32 %v9464, %v9525
    %v9532 = vadd.f32 %v9465, %v9525
    %v9533 = vadd.f32 %v9466, %v9525
    %v9534 = vadd.f32 %v9467, %v9525
    %v9535 = vadd.f32 %v9468, %v9525
    %v9536 = vadd.f32 %v9469, %v9525
    %v9537 = vadd.f32 %v9470, %v9525
    %v9538 = vadd.f32 %v9471, %v9525
    %v9539 = vadd.f32 %v9472, %v9525
    %v9540 = vadd.f32 %v9473, %v9525
    %v9541 = vadd.f32 %v9474, %v9525
    %v9542 = vadd.f32 %v9475, %v9525
    %v9543 = vadd.f32 %v9476, %v9525
    %v9544 = vadd.f32 %v9477, %v9525
    %v9545 = vadd.f32 %v9478, %v9525
    %v9546 = vadd.f32 %v9479, %v9525
    %v9547 = vadd.f32 %v9480, %v9525
    %v9548 = vadd.f32 %v9481, %v9525
    %v9549 = vadd.f32 %v9482, %v9525
    %v9550 = vadd.f32 %v9483, %v9525
    %v9551 = vadd.f32 %v9484, %v9525
    %v9552 = vadd.f32 %v9485, %v9525
    %v9553 = vadd.f32 %v9486, %v9525
    %v9554 = vadd.f32 %v9487, %v9525
    %v9555 = vadd.f32 %v9488, %v9525
    %v9556 = vadd.f32 %v9489, %v9525
    %v9557 = vadd.f32 %v9490, %v9525
    %v9558 = vadd.f32 %v9491, %v9525
    %v9559 = vadd.f32 %v9492, %v9525
    %v9560 = vadd.f32 %v9493, %v9525
    %v9561 = vadd.f32 %v9494, %v9525
    %v9562 = vadd.f32 %v9495, %v9525
    %v9563 = vadd.f32 %v9496, %v9525
    %v9564 = vadd.f32 %v9497, %v9525
    %v9565 = vadd.f32 %v9498, %v9525
    %v9566 = vadd.f32 %v9499, %v9525
    %v9567 = vadd.f32 %v9500, %v9525
    %v9568 = vadd.f32 %v9501, %v9525
    %v9569 = vadd.f32 %v9502, %v9525
    %v9570 = vadd.f32 %v9503, %v9525
    %v9571 = vadd.f32 %v9504, %v9525
    %v9572 = vadd.f32 %v9505, %v9525
    %v9573 = vadd.f32 %v9506, %v9525
    %v9574 = vadd.f32 %v9507, %v9525
    %v9575 = vadd.f32 %v9508, %v9525
    %v9576 = vadd.f32 %v9509, %v9525
    %v9577 = vadd.f32 %v9510, %v9525
    %v9578 = vadd.f32 %v9511, %v9525
    %v9579 = vadd.f32 %v9512, %v9525
    %v9580 = vadd.f32 %v9513, %v9525
    %v9581 = vadd.f32 %v9514, %v9525
    %v9582 = vadd.f32 %v9515, %v9525
    %v9583 = vadd.f32 %v9516, %v9525
    %v9584 = vadd.f32 %v9517, %v9525
    %v9585 = vadd.f32 %v9518, %v9525
    %v9586 = vadd.f32 %v9519, %v9525
    %v9587 = vadd.f32 %v9520, %v9525
    %v9588 = vadd.f32 %v9521, %v9525
    %v9589 = vadd.f32 %v9522, %v9525
    %v9590 = vadd.f32 %v9523, %v9525
    %v9591 = vadd.f32 %v9527, 3.0
    %v9592 = vadd.f32 %v9528, 3.0
    %v9593 = vadd.f32 %v9529, 3.0
    %v9594 = vadd.f32 %v9530, 3.0
    %v9595 = vadd.f32 %v9531, 3.0
    %v9596 = vadd.f32 %v9532, 3.0
    %v9597 = vadd.f32 %v9533, 3.0
    %v9598 = vadd.f32 %v9534, 3.0
    %v9599 = vadd.f32 %v9535, 3.0
    %v9600 = vadd.f32 %v9536, 3.0
    %v9601 = vadd.f32 %v9537, 3.0
    %v9602 = vadd.f32 %v9538, 3.0
    %v9603 = vadd.f32 %v9539, 3.0
    %v9604 = vadd.f32 %v9540, 3.0
    %v9605 = vadd.f32 %v9541, 3.0
    %v9606 = vadd.f32 %v9542, 3.0
    %v9607 = vadd.f32 %v9543, 3.0
    %v9608 = vadd.f32 %v9544, 3.0
    %v9609 = vadd.f32 %v9545, 3.0
    %v9610 = vadd.f32 %v9546, 3.0
    %v9611 = vadd.f32 %v9547, 3.0
    %v9612 = vadd.f32 %v9548, 3.0
    %v9613 = vadd.f32 %v9549, 3.0
    %v9614 = vadd.f32 %v9550, 3.0
    %v9615 = vadd.f32 %v9551, 3.0
    %v9616 = vadd.f32 %v9552, 3.0
    %v9617 = vadd.f32 %v9553, 3.0
    %v9618 = vadd.f32 %v9554, 3.0
    %v9619 = vadd.f32 %v9555, 3.0
    %v9620 = vadd.f32 %v9556, 3.0
    %v9621 = vadd.f32 %v9557, 3.0
    %v9622 = vadd.f32 %v9558, 3.0
    %v9623 = vadd.f32 %v9559, 3.0
    %v9624 = vadd.f32 %v9560, 3.0
    %v9625 = vadd.f32 %v9561, 3.0
    %v9626 = vadd.f32 %v9562, 3.0
    %v9627 = vadd.f32 %v9563, 3.0
    %v9628 = vadd.f32 %v9564, 3.0
    %v9629 = vadd.f32 %v9565, 3.0
    %v9630 = vadd.f32 %v9566, 3.0
    %v9631 = vadd.f32 %v9567, 3.0
    %v9632 = vadd.f32 %v9568, 3.0
    %v9633 = vadd.f32 %v9569, 3.0
    %v9634 = vadd.f32 %v9570, 3.0
    %v9635 = vadd.f32 %v9571, 3.0
    %v9636 = vadd.f32 %v9572, 3.0
    %v9637 = vadd.f32 %v9573, 3.0
    %v9638 = vadd.f32 %v9574, 3.0
    %v9639 = vadd.f32 %v9575, 3.0
    %v9640 = vadd.f32 %v9576, 3.0
    %v9641 = vadd.f32 %v9577, 3.0
    %v9642 = vadd.f32 %v9578, 3.0
    %v9643 = vadd.f32 %v9579, 3.0
    %v9644 = vadd.f32 %v9580, 3.0
    %v9645 = vadd.f32 %v9581, 3.0
    %v9646 = vadd.f32 %v9582, 3.0
    %v9647 = vadd.f32 %v9583, 3.0
    %v9648 = vadd.f32 %v9584, 3.0
    %v9649 = vadd.f32 %v9585, 3.0
    %v9650 = vadd.f32 %v9586, 3.0
    %v9651 = vadd.f32 %v9587, 3.0
    %v9652 = vadd.f32 %v9588, 3.0
    %v9653 = vadd.f32 %v9589, 3.0
    %v9654 = vadd.f32 %v9590, 3.0
    %v9655 = vmax.f32 %v9591, 0.0
    %v9656 = vmax.f32 %v9592, 0.0
    %v9657 = vmax.f32 %v9593, 0.0
    %v9658 = vmax.f32 %v9594, 0.0
    %v9659 = vmax.f32 %v9595, 0.0
    %v9660 = vmax.f32 %v9596, 0.0
    %v9661 = vmax.f32 %v9597, 0.0
    %v9662 = vmax.f32 %v9598, 0.0
    %v9663 = vmax.f32 %v9599, 0.0
    %v9664 = vmax.f32 %v9600, 0.0
    %v9665 = vmax.f32 %v9601, 0.0
    %v9666 = vmax.f32 %v9602, 0.0
    %v9667 = vmax.f32 %v9603, 0.0
    %v9668 = vmax.f32 %v9604, 0.0
    %v9669 = vmax.f32 %v9605, 0.0
    %v9670 = vmax.f32 %v9606, 0.0
    %v9671 = vmax.f32 %v9607, 0.0
    %v9672 = vmax.f32 %v9608, 0.0
    %v9673 = vmax.f32 %v9609, 0.0
    %v9674 = vmax.f32 %v9610, 0.0
    %v9675 = vmax.f32 %v9611, 0.0
    %v9676 = vmax.f32 %v9612, 0.0
    %v9677 = vmax.f32 %v9613, 0.0
    %v9678 = vmax.f32 %v9614, 0.0
    %v9679 = vmax.f32 %v9615, 0.0
    %v9680 = vmax.f32 %v9616, 0.0
    %v9681 = vmax.f32 %v9617, 0.0
    %v9682 = vmax.f32 %v9618, 0.0
    %v9683 = vmax.f32 %v9619, 0.0
    %v9684 = vmax.f32 %v9620, 0.0
    %v9685 = vmax.f32 %v9621, 0.0
    %v9686 = vmax.f32 %v9622, 0.0
    %v9687 = vmax.f32 %v9623, 0.0
    %v9688 = vmax.f32 %v9624, 0.0
    %v9689 = vmax.f32 %v9625, 0.0
    %v9690 = vmax.f32 %v9626, 0.0
    %v9691 = vmax.f32 %v9627, 0.0
    %v9692 = vmax.f32 %v9628, 0.0
    %v9693 = vmax.f32 %v9629, 0.0
    %v9694 = vmax.f32 %v9630, 0.0
    %v9695 = vmax.f32 %v9631, 0.0
    %v9696 = vmax.f32 %v9632, 0.0
    %v9697 = vmax.f32 %v9633, 0.0
    %v9698 = vmax.f32 %v9634, 0.0
    %v9699 = vmax.f32 %v9635, 0.0
    %v9700 = vmax.f32 %v9636, 0.0
    %v9701 = vmax.f32 %v9637, 0.0
    %v9702 = vmax.f32 %v9638, 0.0
    %v9703 = vmax.f32 %v9639, 0.0
    %v9704 = vmax.f32 %v9640, 0.0
    %v9705 = vmax.f32 %v9641, 0.0
    %v9706 = vmax.f32 %v9642, 0.0
    %v9707 = vmax.f32 %v9643, 0.0
    %v9708 = vmax.f32 %v9644, 0.0
    %v9709 = vmax.f32 %v9645, 0.0
    %v9710 = vmax.f32 %v9646, 0.0
    %v9711 = vmax.f32 %v9647, 0.0
    %v9712 = vmax.f32 %v9648, 0.0
    %v9713 = vmax.f32 %v9649, 0.0
    %v9714 = vmax.f32 %v9650, 0.0
    %v9715 = vmax.f32 %v9651, 0.0
    %v9716 = vmax.f32 %v9652, 0.0
    %v9717 = vmax.f32 %v9653, 0.0
    %v9718 = vmax.f32 %v9654, 0.0
    %v9719 = vmin.f32 %v9655, 6.0
    %v9720 = vmin.f32 %v9656, 6.0
    %v9721 = vmin.f32 %v9657, 6.0
    %v9722 = vmin.f32 %v9658, 6.0
    %v9723 = vmin.f32 %v9659, 6.0
    %v9724 = vmin.f32 %v9660, 6.0
    %v9725 = vmin.f32 %v9661, 6.0
    %v9726 = vmin.f32 %v9662, 6.0
    %v9727 = vmin.f32 %v9663, 6.0
    %v9728 = vmin.f32 %v9664, 6.0
    %v9729 = vmin.f32 %v9665, 6.0
    %v9730 = vmin.f32 %v9666, 6.0
    %v9731 = vmin.f32 %v9667, 6.0
    %v9732 = vmin.f32 %v9668, 6.0
    %v9733 = vmin.f32 %v9669, 6.0
    %v9734 = vmin.f32 %v9670, 6.0
    %v9735 = vmin.f32 %v9671, 6.0
    %v9736 = vmin.f32 %v9672, 6.0
    %v9737 = vmin.f32 %v9673, 6.0
    %v9738 = vmin.f32 %v9674, 6.0
    %v9739 = vmin.f32 %v9675, 6.0
    %v9740 = vmin.f32 %v9676, 6.0
    %v9741 = vmin.f32 %v9677, 6.0
    %v9742 = vmin.f32 %v9678, 6.0
    %v9743 = vmin.f32 %v9679, 6.0
    %v9744 = vmin.f32 %v9680, 6.0
    %v9745 = vmin.f32 %v9681, 6.0
    %v9746 = vmin.f32 %v9682, 6.0
    %v9747 = vmin.f32 %v9683, 6.0
    %v9748 = vmin.f32 %v9684, 6.0
    %v9749 = vmin.f32 %v9685, 6.0
    %v9750 = vmin.f32 %v9686, 6.0
    %v9751 = vmin.f32 %v9687, 6.0
    %v9752 = vmin.f32 %v9688, 6.0
    %v9753 = vmin.f32 %v9689, 6.0
    %v9754 = vmin.f32 %v9690, 6.0
    %v9755 = vmin.f32 %v9691, 6.0
    %v9756 = vmin.f32 %v9692, 6.0
    %v9757 = vmin.f32 %v9693, 6.0
    %v9758 = vmin.f32 %v9694, 6.0
    %v9759 = vmin.f32 %v9695, 6.0
    %v9760 = vmin.f32 %v9696, 6.0
    %v9761 = vmin.f32 %v9697, 6.0
    %v9762 = vmin.f32 %v9698, 6.0
    %v9763 = vmin.f32 %v9699, 6.0
    %v9764 = vmin.f32 %v9700, 6.0
    %v9765 = vmin.f32 %v9701, 6.0
    %v9766 = vmin.f32 %v9702, 6.0
    %v9767 = vmin.f32 %v9703, 6.0
    %v9768 = vmin.f32 %v9704, 6.0
    %v9769 = vmin.f32 %v9705, 6.0
    %v9770 = vmin.f32 %v9706, 6.0
    %v9771 = vmin.f32 %v9707, 6.0
    %v9772 = vmin.f32 %v9708, 6.0
    %v9773 = vmin.f32 %v9709, 6.0
    %v9774 = vmin.f32 %v9710, 6.0
    %v9775 = vmin.f32 %v9711, 6.0
    %v9776 = vmin.f32 %v9712, 6.0
    %v9777 = vmin.f32 %v9713, 6.0
    %v9778 = vmin.f32 %v9714, 6.0
    %v9779 = vmin.f32 %v9715, 6.0
    %v9780 = vmin.f32 %v9716, 6.0
    %v9781 = vmin.f32 %v9717, 6.0
    %v9782 = vmin.f32 %v9718, 6.0
    %v9783 = vmul.f32 %v9527, %v9719
    %v9784 = vmul.f32 %v9528, %v9720
    %v9785 = vmul.f32 %v9529, %v9721
    %v9786 = vmul.f32 %v9530, %v9722
    %v9787 = vmul.f32 %v9531, %v9723
    %v9788 = vmul.f32 %v9532, %v9724
    %v9789 = vmul.f32 %v9533, %v9725
    %v9790 = vmul.f32 %v9534, %v9726
    %v9791 = vmul.f32 %v9535, %v9727
    %v9792 = vmul.f32 %v9536, %v9728
    %v9793 = vmul.f32 %v9537, %v9729
    %v9794 = vmul.f32 %v9538, %v9730
    %v9795 = vmul.f32 %v9539, %v9731
    %v9796 = vmul.f32 %v9540, %v9732
    %v9797 = vmul.f32 %v9541, %v9733
    %v9798 = vmul.f32 %v9542, %v9734
    %v9799 = vmul.f32 %v9543, %v9735
    %v9800 = vmul.f32 %v9544, %v9736
    %v9801 = vmul.f32 %v9545, %v9737
    %v9802 = vmul.f32 %v9546, %v9738
    %v9803 = vmul.f32 %v9547, %v9739
    %v9804 = vmul.f32 %v9548, %v9740
    %v9805 = vmul.f32 %v9549, %v9741
    %v9806 = vmul.f32 %v9550, %v9742
    %v9807 = vmul.f32 %v9551, %v9743
    %v9808 = vmul.f32 %v9552, %v9744
    %v9809 = vmul.f32 %v9553, %v9745
    %v9810 = vmul.f32 %v9554, %v9746
    %v9811 = vmul.f32 %v9555, %v9747
    %v9812 = vmul.f32 %v9556, %v9748
    %v9813 = vmul.f32 %v9557, %v9749
    %v9814 = vmul.f32 %v9558, %v9750
    %v9815 = vmul.f32 %v9559, %v9751
    %v9816 = vmul.f32 %v9560, %v9752
    %v9817 = vmul.f32 %v9561, %v9753
    %v9818 = vmul.f32 %v9562, %v9754
    %v9819 = vmul.f32 %v9563, %v9755
    %v9820 = vmul.f32 %v9564, %v9756
    %v9821 = vmul.f32 %v9565, %v9757
    %v9822 = vmul.f32 %v9566, %v9758
    %v9823 = vmul.f32 %v9567, %v9759
    %v9824 = vmul.f32 %v9568, %v9760
    %v9825 = vmul.f32 %v9569, %v9761
    %v9826 = vmul.f32 %v9570, %v9762
    %v9827 = vmul.f32 %v9571, %v9763
    %v9828 = vmul.f32 %v9572, %v9764
    %v9829 = vmul.f32 %v9573, %v9765
    %v9830 = vmul.f32 %v9574, %v9766
    %v9831 = vmul.f32 %v9575, %v9767
    %v9832 = vmul.f32 %v9576, %v9768
    %v9833 = vmul.f32 %v9577, %v9769
    %v9834 = vmul.f32 %v9578, %v9770
    %v9835 = vmul.f32 %v9579, %v9771
    %v9836 = vmul.f32 %v9580, %v9772
    %v9837 = vmul.f32 %v9581, %v9773
    %v9838 = vmul.f32 %v9582, %v9774
    %v9839 = vmul.f32 %v9583, %v9775
    %v9840 = vmul.f32 %v9584, %v9776
    %v9841 = vmul.f32 %v9585, %v9777
    %v9842 = vmul.f32 %v9586, %v9778
    %v9843 = vmul.f32 %v9587, %v9779
    %v9844 = vmul.f32 %v9588, %v9780
    %v9845 = vmul.f32 %v9589, %v9781
    %v9846 = vmul.f32 %v9590, %v9782
    %v9847 = vmul.f32 %v9783, 0.16666667
    %v9848 = vmul.f32 %v9784, 0.16666667
    %v9849 = vmul.f32 %v9785, 0.16666667
    %v9850 = vmul.f32 %v9786, 0.16666667
    %v9851 = vmul.f32 %v9787, 0.16666667
    %v9852 = vmul.f32 %v9788, 0.16666667
    %v9853 = vmul.f32 %v9789, 0.16666667
    %v9854 = vmul.f32 %v9790, 0.16666667
    %v9855 = vmul.f32 %v9791, 0.16666667
    %v9856 = vmul.f32 %v9792, 0.16666667
    %v9857 = vmul.f32 %v9793, 0.16666667
    %v9858 = vmul.f32 %v9794, 0.16666667
    %v9859 = vmul.f32 %v9795, 0.16666667
    %v9860 = vmul.f32 %v9796, 0.16666667
    %v9861 = vmul.f32 %v9797, 0.16666667
    %v9862 = vmul.f32 %v9798, 0.16666667
    %v9863 = vmul.f32 %v9799, 0.16666667
    %v9864 = vmul.f32 %v9800, 0.16666667
    %v9865 = vmul.f32 %v9801, 0.16666667
    %v9866 = vmul.f32 %v9802, 0.16666667
    %v9867 = vmul.f32 %v9803, 0.16666667
    %v9868 = vmul.f32 %v9804, 0.16666667
    %v9869 = vmul.f32 %v9805, 0.16666667
    %v9870 = vmul.f32 %v9806, 0.16666667
    %v9871 = vmul.f32 %v9807, 0.16666667
    %v9872 = vmul.f32 %v9808, 0.16666667
    %v9873 = vmul.f32 %v9809, 0.16666667
    %v9874 = vmul.f32 %v9810, 0.16666667
    %v9875 = vmul.f32 %v9811, 0.16666667
    %v9876 = vmul.f32 %v9812, 0.16666667
    %v9877 = vmul.f32 %v9813, 0.16666667
    %v9878 = vmul.f32 %v9814, 0.16666667
    %v9879 = vmul.f32 %v9815, 0.16666667
    %v9880 = vmul.f32 %v9816, 0.16666667
    %v9881 = vmul.f32 %v9817, 0.16666667
    %v9882 = vmul.f32 %v9818, 0.16666667
    %v9883 = vmul.f32 %v9819, 0.16666667
    %v9884 = vmul.f32 %v9820, 0.16666667
    %v9885 = vmul.f32 %v9821, 0.16666667
    %v9886 = vmul.f32 %v9822, 0.16666667
    %v9887 = vmul.f32 %v9823, 0.16666667
    %v9888 = vmul.f32 %v9824, 0.16666667
    %v9889 = vmul.f32 %v9825, 0.16666667
    %v9890 = vmul.f32 %v9826, 0.16666667
    %v9891 = vmul.f32 %v9827, 0.16666667
    %v9892 = vmul.f32 %v9828, 0.16666667
    %v9893 = vmul.f32 %v9829, 0.16666667
    %v9894 = vmul.f32 %v9830, 0.16666667
    %v9895 = vmul.f32 %v9831, 0.16666667
    %v9896 = vmul.f32 %v9832, 0.16666667
    %v9897 = vmul.f32 %v9833, 0.16666667
    %v9898 = vmul.f32 %v9834, 0.16666667
    %v9899 = vmul.f32 %v9835, 0.16666667
    %v9900 = vmul.f32 %v9836, 0.16666667
    %v9901 = vmul.f32 %v9837, 0.16666667
    %v9902 = vmul.f32 %v9838, 0.16666667
    %v9903 = vmul.f32 %v9839, 0.16666667
    %v9904 = vmul.f32 %v9840, 0.16666667
    %v9905 = vmul.f32 %v9841, 0.16666667
    %v9906 = vmul.f32 %v9842, 0.16666667
    %v9907 = vmul.f32 %v9843, 0.16666667
    %v9908 = vmul.f32 %v9844, 0.16666667
    %v9909 = vmul.f32 %v9845, 0.16666667
    %v9910 = vmul.f32 %v9846, 0.16666667
    %v9911 = vpack.c.bf16 %v9848, %v9847
    %v9912 = vpack.c.bf16 %v9850, %v9849
    %v9913 = vpack.c.bf16 %v9852, %v9851
    %v9914 = vpack.c.bf16 %v9854, %v9853
    %v9915 = vpack.c.bf16 %v9856, %v9855
    %v9916 = vpack.c.bf16 %v9858, %v9857
    %v9917 = vpack.c.bf16 %v9860, %v9859
    %v9918 = vpack.c.bf16 %v9862, %v9861
    %v9919 = vpack.c.bf16 %v9864, %v9863
    %v9920 = vpack.c.bf16 %v9866, %v9865
    %v9921 = vpack.c.bf16 %v9868, %v9867
    %v9922 = vpack.c.bf16 %v9870, %v9869
    %v9923 = vpack.c.bf16 %v9872, %v9871
    %v9924 = vpack.c.bf16 %v9874, %v9873
    %v9925 = vpack.c.bf16 %v9876, %v9875
    %v9926 = vpack.c.bf16 %v9878, %v9877
    %v9927 = vpack.c.bf16 %v9880, %v9879
    %v9928 = vpack.c.bf16 %v9882, %v9881
    %v9929 = vpack.c.bf16 %v9884, %v9883
    %v9930 = vpack.c.bf16 %v9886, %v9885
    %v9931 = vpack.c.bf16 %v9888, %v9887
    %v9932 = vpack.c.bf16 %v9890, %v9889
    %v9933 = vpack.c.bf16 %v9892, %v9891
    %v9934 = vpack.c.bf16 %v9894, %v9893
    %v9935 = vpack.c.bf16 %v9896, %v9895
    %v9936 = vpack.c.bf16 %v9898, %v9897
    %v9937 = vpack.c.bf16 %v9900, %v9899
    %v9938 = vpack.c.bf16 %v9902, %v9901
    %v9939 = vpack.c.bf16 %v9904, %v9903
    %v9940 = vpack.c.bf16 %v9906, %v9905
    %v9941 = vpack.c.bf16 %v9908, %v9907
    %v9942 = vpack.c.bf16 %v9910, %v9909
    %v9944 = vsel %vm6348, %v9911, 0
    %v9947 = vsel %vm6348, %v9912, 0
    %v9950 = vsel %vm6348, %v9913, 0
    %v9953 = vsel %vm6348, %v9914, 0
    %v9956 = vsel %vm6348, %v9915, 0
    %v9959 = vsel %vm6348, %v9916, 0
    %v9962 = vsel %vm6348, %v9917, 0
    %v9965 = vsel %vm6348, %v9918, 0
    %v9968 = vsel %vm6348, %v9919, 0
    %v9971 = vsel %vm6348, %v9920, 0
    %v9974 = vsel %vm6348, %v9921, 0
    %v9977 = vsel %vm6348, %v9922, 0
    %v9980 = vsel %vm6348, %v9923, 0
    %v9983 = vsel %vm6348, %v9924, 0
    %v9986 = vsel %vm6348, %v9925, 0
    %v9989 = vsel %vm6348, %v9926, 0
    %v9992 = vsel %vm6348, %v9927, 0
    %v9995 = vsel %vm6348, %v9928, 0
    %v9998 = vsel %vm6348, %v9929, 0
    %v10001 = vsel %vm6348, %v9930, 0
    %v10004 = vsel %vm6348, %v9931, 0
    %v10007 = vsel %vm6348, %v9932, 0
    %v10010 = vsel %vm6348, %v9933, 0
    %v10013 = vsel %vm6348, %v9934, 0
    %v10016 = vsel %vm6348, %v9935, 0
    %v10019 = vsel %vm6348, %v9936, 0
    %v10022 = vsel %vm6348, %v9937, 0
    %v10025 = vsel %vm6348, %v9938, 0
    %v10028 = vsel %vm6348, %v9939, 0
    %v10031 = vsel %vm6348, %v9940, 0
    %v10034 = vsel %vm6348, %v9941, 0
    %v10037 = vsel %vm6348, %v9942, 0
    %v10040 = vsel %vm894, %v619, 0
    %10042 = vmatpush.bf16.msra.mxu0 0
    %10043 = vmatpush.bf16.msra.mxu0 0
    %10044 = vmatpush.bf16.msra.mxu0 0
    %10045 = vmatpush.bf16.msra.mxu0 0
    %10046 = vmatpush.bf16.msra.mxu0 0
    %10047 = vmatpush.bf16.msra.mxu0 0
    %10048 = vmatpush.bf16.msra.mxu0 0
    %10049 = vmatpush.bf16.msra.mxu0 %v10040
    %10050 = vmatmul.bf16.gmra.mxu0 %v9944
    %v10051 = vpop.f32.mrf.mxu0
    %v10052 = vadd.f32 0.0, %v10051
    %v10053 = vpop.f32.mrf.mxu0
    %v10054 = vadd.f32 0.0, %v10053
    %10055 = vmatmul.bf16.gmra.mxu0 %v9947
    %v10056 = vpop.f32.mrf.mxu0
    %v10057 = vadd.f32 0.0, %v10056
    %v10058 = vpop.f32.mrf.mxu0
    %v10059 = vadd.f32 0.0, %v10058
    %10060 = vmatmul.bf16.gmra.mxu0 %v9950
    %v10061 = vpop.f32.mrf.mxu0
    %v10062 = vadd.f32 0.0, %v10061
    %v10063 = vpop.f32.mrf.mxu0
    %v10064 = vadd.f32 0.0, %v10063
    %10065 = vmatmul.bf16.gmra.mxu0 %v9953
    %v10066 = vpop.f32.mrf.mxu0
    %v10067 = vadd.f32 0.0, %v10066
    %v10068 = vpop.f32.mrf.mxu0
    %v10069 = vadd.f32 0.0, %v10068
    %10070 = vmatmul.bf16.gmra.mxu0 %v9956
    %v10071 = vpop.f32.mrf.mxu0
    %v10072 = vadd.f32 0.0, %v10071
    %v10073 = vpop.f32.mrf.mxu0
    %v10074 = vadd.f32 0.0, %v10073
    %10075 = vmatmul.bf16.gmra.mxu0 %v9959
    %v10076 = vpop.f32.mrf.mxu0
    %v10077 = vadd.f32 0.0, %v10076
    %v10078 = vpop.f32.mrf.mxu0
    %v10079 = vadd.f32 0.0, %v10078
    %10080 = vmatmul.bf16.gmra.mxu0 %v9962
    %v10081 = vpop.f32.mrf.mxu0
    %v10082 = vadd.f32 0.0, %v10081
    %v10083 = vpop.f32.mrf.mxu0
    %v10084 = vadd.f32 0.0, %v10083
    %10085 = vmatmul.bf16.gmra.mxu0 %v9965
    %v10086 = vpop.f32.mrf.mxu0
    %v10087 = vadd.f32 0.0, %v10086
    %v10088 = vpop.f32.mrf.mxu0
    %v10089 = vadd.f32 0.0, %v10088
    %10090 = vmatmul.bf16.gmra.mxu0 %v9968
    %v10091 = vpop.f32.mrf.mxu0
    %v10092 = vadd.f32 0.0, %v10091
    %v10093 = vpop.f32.mrf.mxu0
    %v10094 = vadd.f32 0.0, %v10093
    %10095 = vmatmul.bf16.gmra.mxu0 %v9971
    %v10096 = vpop.f32.mrf.mxu0
    %v10097 = vadd.f32 0.0, %v10096
    %v10098 = vpop.f32.mrf.mxu0
    %v10099 = vadd.f32 0.0, %v10098
    %10100 = vmatmul.bf16.gmra.mxu0 %v9974
    %v10101 = vpop.f32.mrf.mxu0
    %v10102 = vadd.f32 0.0, %v10101
    %v10103 = vpop.f32.mrf.mxu0
    %v10104 = vadd.f32 0.0, %v10103
    %10105 = vmatmul.bf16.gmra.mxu0 %v9977
    %v10106 = vpop.f32.mrf.mxu0
    %v10107 = vadd.f32 0.0, %v10106
    %v10108 = vpop.f32.mrf.mxu0
    %v10109 = vadd.f32 0.0, %v10108
    %10110 = vmatmul.bf16.gmra.mxu0 %v9980
    %v10111 = vpop.f32.mrf.mxu0
    %v10112 = vadd.f32 0.0, %v10111
    %v10113 = vpop.f32.mrf.mxu0
    %v10114 = vadd.f32 0.0, %v10113
    %10115 = vmatmul.bf16.gmra.mxu0 %v9983
    %v10116 = vpop.f32.mrf.mxu0
    %v10117 = vadd.f32 0.0, %v10116
    %v10118 = vpop.f32.mrf.mxu0
    %v10119 = vadd.f32 0.0, %v10118
    %10120 = vmatmul.bf16.gmra.mxu0 %v9986
    %v10121 = vpop.f32.mrf.mxu0
    %v10122 = vadd.f32 0.0, %v10121
    %v10123 = vpop.f32.mrf.mxu0
    %v10124 = vadd.f32 0.0, %v10123
    %10125 = vmatmul.bf16.gmra.mxu0 %v9989
    %v10126 = vpop.f32.mrf.mxu0
    %v10127 = vadd.f32 0.0, %v10126
    %v10128 = vpop.f32.mrf.mxu0
    %v10129 = vadd.f32 0.0, %v10128
    %10130 = vmatmul.bf16.gmra.mxu0 %v9992
    %v10131 = vpop.f32.mrf.mxu0
    %v10132 = vadd.f32 0.0, %v10131
    %v10133 = vpop.f32.mrf.mxu0
    %v10134 = vadd.f32 0.0, %v10133
    %10135 = vmatmul.bf16.gmra.mxu0 %v9995
    %v10136 = vpop.f32.mrf.mxu0
    %v10137 = vadd.f32 0.0, %v10136
    %v10138 = vpop.f32.mrf.mxu0
    %v10139 = vadd.f32 0.0, %v10138
    %10140 = vmatmul.bf16.gmra.mxu0 %v9998
    %v10141 = vpop.f32.mrf.mxu0
    %v10142 = vadd.f32 0.0, %v10141
    %v10143 = vpop.f32.mrf.mxu0
    %v10144 = vadd.f32 0.0, %v10143
    %10145 = vmatmul.bf16.gmra.mxu0 %v10001
    %v10146 = vpop.f32.mrf.mxu0
    %v10147 = vadd.f32 0.0, %v10146
    %v10148 = vpop.f32.mrf.mxu0
    %v10149 = vadd.f32 0.0, %v10148
    %10150 = vmatmul.bf16.gmra.mxu0 %v10004
    %v10151 = vpop.f32.mrf.mxu0
    %v10152 = vadd.f32 0.0, %v10151
    %v10153 = vpop.f32.mrf.mxu0
    %v10154 = vadd.f32 0.0, %v10153
    %10155 = vmatmul.bf16.gmra.mxu0 %v10007
    %v10156 = vpop.f32.mrf.mxu0
    %v10157 = vadd.f32 0.0, %v10156
    %v10158 = vpop.f32.mrf.mxu0
    %v10159 = vadd.f32 0.0, %v10158
    %10160 = vmatmul.bf16.gmra.mxu0 %v10010
    %v10161 = vpop.f32.mrf.mxu0
    %v10162 = vadd.f32 0.0, %v10161
    %v10163 = vpop.f32.mrf.mxu0
    %v10164 = vadd.f32 0.0, %v10163
    %10165 = vmatmul.bf16.gmra.mxu0 %v10013
    %v10166 = vpop.f32.mrf.mxu0
    %v10167 = vadd.f32 0.0, %v10166
    %v10168 = vpop.f32.mrf.mxu0
    %v10169 = vadd.f32 0.0, %v10168
    %10170 = vmatmul.bf16.gmra.mxu0 %v10016
    %v10171 = vpop.f32.mrf.mxu0
    %v10172 = vadd.f32 0.0, %v10171
    %v10173 = vpop.f32.mrf.mxu0
    %v10174 = vadd.f32 0.0, %v10173
    %10175 = vmatmul.bf16.gmra.mxu0 %v10019
    %v10176 = vpop.f32.mrf.mxu0
    %v10177 = vadd.f32 0.0, %v10176
    %v10178 = vpop.f32.mrf.mxu0
    %v10179 = vadd.f32 0.0, %v10178
    %10180 = vmatmul.bf16.gmra.mxu0 %v10022
    %v10181 = vpop.f32.mrf.mxu0
    %v10182 = vadd.f32 0.0, %v10181
    %v10183 = vpop.f32.mrf.mxu0
    %v10184 = vadd.f32 0.0, %v10183
    %10185 = vmatmul.bf16.gmra.mxu0 %v10025
    %v10186 = vpop.f32.mrf.mxu0
    %v10187 = vadd.f32 0.0, %v10186
    %v10188 = vpop.f32.mrf.mxu0
    %v10189 = vadd.f32 0.0, %v10188
    %10190 = vmatmul.bf16.gmra.mxu0 %v10028
    %v10191 = vpop.f32.mrf.mxu0
    %v10192 = vadd.f32 0.0, %v10191
    %v10193 = vpop.f32.mrf.mxu0
    %v10194 = vadd.f32 0.0, %v10193
    %10195 = vmatmul.bf16.gmra.mxu0 %v10031
    %v10196 = vpop.f32.mrf.mxu0
    %v10197 = vadd.f32 0.0, %v10196
    %v10198 = vpop.f32.mrf.mxu0
    %v10199 = vadd.f32 0.0, %v10198
    %10200 = vmatmul.bf16.gmra.mxu0 %v10034
    %v10201 = vpop.f32.mrf.mxu0
    %v10202 = vadd.f32 0.0, %v10201
    %v10203 = vpop.f32.mrf.mxu0
    %v10204 = vadd.f32 0.0, %v10203
    %10205 = vmatmul.bf16.gmra.mxu0 %v10037
    %v10206 = vpop.f32.mrf.mxu0
    %v10207 = vadd.f32 0.0, %v10206
    %v10208 = vpop.f32.mrf.mxu0
    %v10209 = vadd.f32 0.0, %v10208
    %10210 = vdwg.mxu0
    %v10212 = vperm.slane %v613, 0
    %v10214 = vmul.f32 %v10052, %v10212
    %v10215 = vmul.f32 %v10054, %v10212
    %v10216 = vmul.f32 %v10057, %v10212
    %v10217 = vmul.f32 %v10059, %v10212
    %v10218 = vmul.f32 %v10062, %v10212
    %v10219 = vmul.f32 %v10064, %v10212
    %v10220 = vmul.f32 %v10067, %v10212
    %v10221 = vmul.f32 %v10069, %v10212
    %v10222 = vmul.f32 %v10072, %v10212
    %v10223 = vmul.f32 %v10074, %v10212
    %v10224 = vmul.f32 %v10077, %v10212
    %v10225 = vmul.f32 %v10079, %v10212
    %v10226 = vmul.f32 %v10082, %v10212
    %v10227 = vmul.f32 %v10084, %v10212
    %v10228 = vmul.f32 %v10087, %v10212
    %v10229 = vmul.f32 %v10089, %v10212
    %v10230 = vmul.f32 %v10092, %v10212
    %v10231 = vmul.f32 %v10094, %v10212
    %v10232 = vmul.f32 %v10097, %v10212
    %v10233 = vmul.f32 %v10099, %v10212
    %v10234 = vmul.f32 %v10102, %v10212
    %v10235 = vmul.f32 %v10104, %v10212
    %v10236 = vmul.f32 %v10107, %v10212
    %v10237 = vmul.f32 %v10109, %v10212
    %v10238 = vmul.f32 %v10112, %v10212
    %v10239 = vmul.f32 %v10114, %v10212
    %v10240 = vmul.f32 %v10117, %v10212
    %v10241 = vmul.f32 %v10119, %v10212
    %v10242 = vmul.f32 %v10122, %v10212
    %v10243 = vmul.f32 %v10124, %v10212
    %v10244 = vmul.f32 %v10127, %v10212
    %v10245 = vmul.f32 %v10129, %v10212
    %v10246 = vmul.f32 %v10132, %v10212
    %v10247 = vmul.f32 %v10134, %v10212
    %v10248 = vmul.f32 %v10137, %v10212
    %v10249 = vmul.f32 %v10139, %v10212
    %v10250 = vmul.f32 %v10142, %v10212
    %v10251 = vmul.f32 %v10144, %v10212
    %v10252 = vmul.f32 %v10147, %v10212
    %v10253 = vmul.f32 %v10149, %v10212
    %v10254 = vmul.f32 %v10152, %v10212
    %v10255 = vmul.f32 %v10154, %v10212
    %v10256 = vmul.f32 %v10157, %v10212
    %v10257 = vmul.f32 %v10159, %v10212
    %v10258 = vmul.f32 %v10162, %v10212
    %v10259 = vmul.f32 %v10164, %v10212
    %v10260 = vmul.f32 %v10167, %v10212
    %v10261 = vmul.f32 %v10169, %v10212
    %v10262 = vmul.f32 %v10172, %v10212
    %v10263 = vmul.f32 %v10174, %v10212
    %v10264 = vmul.f32 %v10177, %v10212
    %v10265 = vmul.f32 %v10179, %v10212
    %v10266 = vmul.f32 %v10182, %v10212
    %v10267 = vmul.f32 %v10184, %v10212
    %v10268 = vmul.f32 %v10187, %v10212
    %v10269 = vmul.f32 %v10189, %v10212
    %v10270 = vmul.f32 %v10192, %v10212
    %v10271 = vmul.f32 %v10194, %v10212
    %v10272 = vmul.f32 %v10197, %v10212
    %v10273 = vmul.f32 %v10199, %v10212
    %v10274 = vmul.f32 %v10202, %v10212
    %v10275 = vmul.f32 %v10204, %v10212
    %v10276 = vmul.f32 %v10207, %v10212
    %v10277 = vmul.f32 %v10209, %v10212
    %v10279 = vperm.slane %v611, 0
    %v10281 = vadd.f32 %v10214, %v10279
    %v10282 = vadd.f32 %v10215, %v10279
    %v10283 = vadd.f32 %v10216, %v10279
    %v10284 = vadd.f32 %v10217, %v10279
    %v10285 = vadd.f32 %v10218, %v10279
    %v10286 = vadd.f32 %v10219, %v10279
    %v10287 = vadd.f32 %v10220, %v10279
    %v10288 = vadd.f32 %v10221, %v10279
    %v10289 = vadd.f32 %v10222, %v10279
    %v10290 = vadd.f32 %v10223, %v10279
    %v10291 = vadd.f32 %v10224, %v10279
    %v10292 = vadd.f32 %v10225, %v10279
    %v10293 = vadd.f32 %v10226, %v10279
    %v10294 = vadd.f32 %v10227, %v10279
    %v10295 = vadd.f32 %v10228, %v10279
    %v10296 = vadd.f32 %v10229, %v10279
    %v10297 = vadd.f32 %v10230, %v10279
    %v10298 = vadd.f32 %v10231, %v10279
    %v10299 = vadd.f32 %v10232, %v10279
    %v10300 = vadd.f32 %v10233, %v10279
    %v10301 = vadd.f32 %v10234, %v10279
    %v10302 = vadd.f32 %v10235, %v10279
    %v10303 = vadd.f32 %v10236, %v10279
    %v10304 = vadd.f32 %v10237, %v10279
    %v10305 = vadd.f32 %v10238, %v10279
    %v10306 = vadd.f32 %v10239, %v10279
    %v10307 = vadd.f32 %v10240, %v10279
    %v10308 = vadd.f32 %v10241, %v10279
    %v10309 = vadd.f32 %v10242, %v10279
    %v10310 = vadd.f32 %v10243, %v10279
    %v10311 = vadd.f32 %v10244, %v10279
    %v10312 = vadd.f32 %v10245, %v10279
    %v10313 = vadd.f32 %v10246, %v10279
    %v10314 = vadd.f32 %v10247, %v10279
    %v10315 = vadd.f32 %v10248, %v10279
    %v10316 = vadd.f32 %v10249, %v10279
    %v10317 = vadd.f32 %v10250, %v10279
    %v10318 = vadd.f32 %v10251, %v10279
    %v10319 = vadd.f32 %v10252, %v10279
    %v10320 = vadd.f32 %v10253, %v10279
    %v10321 = vadd.f32 %v10254, %v10279
    %v10322 = vadd.f32 %v10255, %v10279
    %v10323 = vadd.f32 %v10256, %v10279
    %v10324 = vadd.f32 %v10257, %v10279
    %v10325 = vadd.f32 %v10258, %v10279
    %v10326 = vadd.f32 %v10259, %v10279
    %v10327 = vadd.f32 %v10260, %v10279
    %v10328 = vadd.f32 %v10261, %v10279
    %v10329 = vadd.f32 %v10262, %v10279
    %v10330 = vadd.f32 %v10263, %v10279
    %v10331 = vadd.f32 %v10264, %v10279
    %v10332 = vadd.f32 %v10265, %v10279
    %v10333 = vadd.f32 %v10266, %v10279
    %v10334 = vadd.f32 %v10267, %v10279
    %v10335 = vadd.f32 %v10268, %v10279
    %v10336 = vadd.f32 %v10269, %v10279
    %v10337 = vadd.f32 %v10270, %v10279
    %v10338 = vadd.f32 %v10271, %v10279
    %v10339 = vadd.f32 %v10272, %v10279
    %v10340 = vadd.f32 %v10273, %v10279
    %v10341 = vadd.f32 %v10274, %v10279
    %v10342 = vadd.f32 %v10275, %v10279
    %v10343 = vadd.f32 %v10276, %v10279
    %v10344 = vadd.f32 %v10277, %v10279
    %vm10345 = vcmp.gt.f32.partialorder %v10281, 0.0
    %vm10346 = vcmp.gt.f32.partialorder %v10282, 0.0
    %vm10347 = vcmp.gt.f32.partialorder %v10283, 0.0
    %vm10348 = vcmp.gt.f32.partialorder %v10284, 0.0
    %vm10349 = vcmp.gt.f32.partialorder %v10285, 0.0
    %vm10350 = vcmp.gt.f32.partialorder %v10286, 0.0
    %vm10351 = vcmp.gt.f32.partialorder %v10287, 0.0
    %vm10352 = vcmp.gt.f32.partialorder %v10288, 0.0
    %vm10353 = vcmp.gt.f32.partialorder %v10289, 0.0
    %vm10354 = vcmp.gt.f32.partialorder %v10290, 0.0
    %vm10355 = vcmp.gt.f32.partialorder %v10291, 0.0
    %vm10356 = vcmp.gt.f32.partialorder %v10292, 0.0
    %vm10357 = vcmp.gt.f32.partialorder %v10293, 0.0
    %vm10358 = vcmp.gt.f32.partialorder %v10294, 0.0
    %vm10359 = vcmp.gt.f32.partialorder %v10295, 0.0
    %vm10360 = vcmp.gt.f32.partialorder %v10296, 0.0
    %vm10361 = vcmp.gt.f32.partialorder %v10297, 0.0
    %vm10362 = vcmp.gt.f32.partialorder %v10298, 0.0
    %vm10363 = vcmp.gt.f32.partialorder %v10299, 0.0
    %vm10364 = vcmp.gt.f32.partialorder %v10300, 0.0
    %vm10365 = vcmp.gt.f32.partialorder %v10301, 0.0
    %vm10366 = vcmp.gt.f32.partialorder %v10302, 0.0
    %vm10367 = vcmp.gt.f32.partialorder %v10303, 0.0
    %vm10368 = vcmp.gt.f32.partialorder %v10304, 0.0
    %vm10369 = vcmp.gt.f32.partialorder %v10305, 0.0
    %vm10370 = vcmp.gt.f32.partialorder %v10306, 0.0
    %vm10371 = vcmp.gt.f32.partialorder %v10307, 0.0
    %vm10372 = vcmp.gt.f32.partialorder %v10308, 0.0
    %vm10373 = vcmp.gt.f32.partialorder %v10309, 0.0
    %vm10374 = vcmp.gt.f32.partialorder %v10310, 0.0
    %vm10375 = vcmp.gt.f32.partialorder %v10311, 0.0
    %vm10376 = vcmp.gt.f32.partialorder %v10312, 0.0
    %vm10377 = vcmp.gt.f32.partialorder %v10313, 0.0
    %vm10378 = vcmp.gt.f32.partialorder %v10314, 0.0
    %vm10379 = vcmp.gt.f32.partialorder %v10315, 0.0
    %vm10380 = vcmp.gt.f32.partialorder %v10316, 0.0
    %vm10381 = vcmp.gt.f32.partialorder %v10317, 0.0
    %vm10382 = vcmp.gt.f32.partialorder %v10318, 0.0
    %vm10383 = vcmp.gt.f32.partialorder %v10319, 0.0
    %vm10384 = vcmp.gt.f32.partialorder %v10320, 0.0
    %vm10385 = vcmp.gt.f32.partialorder %v10321, 0.0
    %vm10386 = vcmp.gt.f32.partialorder %v10322, 0.0
    %vm10387 = vcmp.gt.f32.partialorder %v10323, 0.0
    %vm10388 = vcmp.gt.f32.partialorder %v10324, 0.0
    %vm10389 = vcmp.gt.f32.partialorder %v10325, 0.0
    %vm10390 = vcmp.gt.f32.partialorder %v10326, 0.0
    %vm10391 = vcmp.gt.f32.partialorder %v10327, 0.0
    %vm10392 = vcmp.gt.f32.partialorder %v10328, 0.0
    %vm10393 = vcmp.gt.f32.partialorder %v10329, 0.0
    %vm10394 = vcmp.gt.f32.partialorder %v10330, 0.0
    %vm10395 = vcmp.gt.f32.partialorder %v10331, 0.0
    %vm10396 = vcmp.gt.f32.partialorder %v10332, 0.0
    %vm10397 = vcmp.gt.f32.partialorder %v10333, 0.0
    %vm10398 = vcmp.gt.f32.partialorder %v10334, 0.0
    %vm10399 = vcmp.gt.f32.partialorder %v10335, 0.0
    %vm10400 = vcmp.gt.f32.partialorder %v10336, 0.0
    %vm10401 = vcmp.gt.f32.partialorder %v10337, 0.0
    %vm10402 = vcmp.gt.f32.partialorder %v10338, 0.0
    %vm10403 = vcmp.gt.f32.partialorder %v10339, 0.0
    %vm10404 = vcmp.gt.f32.partialorder %v10340, 0.0
    %vm10405 = vcmp.gt.f32.partialorder %v10341, 0.0
    %vm10406 = vcmp.gt.f32.partialorder %v10342, 0.0
    %vm10407 = vcmp.gt.f32.partialorder %v10343, 0.0
    %vm10408 = vcmp.gt.f32.partialorder %v10344, 0.0
    %v10409 = vmul.f32 %v10281, 0.1
    %v10410 = vmul.f32 %v10282, 0.1
    %v10411 = vmul.f32 %v10283, 0.1
    %v10412 = vmul.f32 %v10284, 0.1
    %v10413 = vmul.f32 %v10285, 0.1
    %v10414 = vmul.f32 %v10286, 0.1
    %v10415 = vmul.f32 %v10287, 0.1
    %v10416 = vmul.f32 %v10288, 0.1
    %v10417 = vmul.f32 %v10289, 0.1
    %v10418 = vmul.f32 %v10290, 0.1
    %v10419 = vmul.f32 %v10291, 0.1
    %v10420 = vmul.f32 %v10292, 0.1
    %v10421 = vmul.f32 %v10293, 0.1
    %v10422 = vmul.f32 %v10294, 0.1
    %v10423 = vmul.f32 %v10295, 0.1
    %v10424 = vmul.f32 %v10296, 0.1
    %v10425 = vmul.f32 %v10297, 0.1
    %v10426 = vmul.f32 %v10298, 0.1
    %v10427 = vmul.f32 %v10299, 0.1
    %v10428 = vmul.f32 %v10300, 0.1
    %v10429 = vmul.f32 %v10301, 0.1
    %v10430 = vmul.f32 %v10302, 0.1
    %v10431 = vmul.f32 %v10303, 0.1
    %v10432 = vmul.f32 %v10304, 0.1
    %v10433 = vmul.f32 %v10305, 0.1
    %v10434 = vmul.f32 %v10306, 0.1
    %v10435 = vmul.f32 %v10307, 0.1
    %v10436 = vmul.f32 %v10308, 0.1
    %v10437 = vmul.f32 %v10309, 0.1
    %v10438 = vmul.f32 %v10310, 0.1
    %v10439 = vmul.f32 %v10311, 0.1
    %v10440 = vmul.f32 %v10312, 0.1
    %v10441 = vmul.f32 %v10313, 0.1
    %v10442 = vmul.f32 %v10314, 0.1
    %v10443 = vmul.f32 %v10315, 0.1
    %v10444 = vmul.f32 %v10316, 0.1
    %v10445 = vmul.f32 %v10317, 0.1
    %v10446 = vmul.f32 %v10318, 0.1
    %v10447 = vmul.f32 %v10319, 0.1
    %v10448 = vmul.f32 %v10320, 0.1
    %v10449 = vmul.f32 %v10321, 0.1
    %v10450 = vmul.f32 %v10322, 0.1
    %v10451 = vmul.f32 %v10323, 0.1
    %v10452 = vmul.f32 %v10324, 0.1
    %v10453 = vmul.f32 %v10325, 0.1
    %v10454 = vmul.f32 %v10326, 0.1
    %v10455 = vmul.f32 %v10327, 0.1
    %v10456 = vmul.f32 %v10328, 0.1
    %v10457 = vmul.f32 %v10329, 0.1
    %v10458 = vmul.f32 %v10330, 0.1
    %v10459 = vmul.f32 %v10331, 0.1
    %v10460 = vmul.f32 %v10332, 0.1
    %v10461 = vmul.f32 %v10333, 0.1
    %v10462 = vmul.f32 %v10334, 0.1
    %v10463 = vmul.f32 %v10335, 0.1
    %v10464 = vmul.f32 %v10336, 0.1
    %v10465 = vmul.f32 %v10337, 0.1
    %v10466 = vmul.f32 %v10338, 0.1
    %v10467 = vmul.f32 %v10339, 0.1
    %v10468 = vmul.f32 %v10340, 0.1
    %v10469 = vmul.f32 %v10341, 0.1
    %v10470 = vmul.f32 %v10342, 0.1
    %v10471 = vmul.f32 %v10343, 0.1
    %v10472 = vmul.f32 %v10344, 0.1
    %v10473 = vsel %vm10345, %v10281, %v10409
    %v10474 = vsel %vm10346, %v10282, %v10410
    %v10475 = vsel %vm10347, %v10283, %v10411
    %v10476 = vsel %vm10348, %v10284, %v10412
    %v10477 = vsel %vm10349, %v10285, %v10413
    %v10478 = vsel %vm10350, %v10286, %v10414
    %v10479 = vsel %vm10351, %v10287, %v10415
    %v10480 = vsel %vm10352, %v10288, %v10416
    %v10481 = vsel %vm10353, %v10289, %v10417
    %v10482 = vsel %vm10354, %v10290, %v10418
    %v10483 = vsel %vm10355, %v10291, %v10419
    %v10484 = vsel %vm10356, %v10292, %v10420
    %v10485 = vsel %vm10357, %v10293, %v10421
    %v10486 = vsel %vm10358, %v10294, %v10422
    %v10487 = vsel %vm10359, %v10295, %v10423
    %v10488 = vsel %vm10360, %v10296, %v10424
    %v10489 = vsel %vm10361, %v10297, %v10425
    %v10490 = vsel %vm10362, %v10298, %v10426
    %v10491 = vsel %vm10363, %v10299, %v10427
    %v10492 = vsel %vm10364, %v10300, %v10428
    %v10493 = vsel %vm10365, %v10301, %v10429
    %v10494 = vsel %vm10366, %v10302, %v10430
    %v10495 = vsel %vm10367, %v10303, %v10431
    %v10496 = vsel %vm10368, %v10304, %v10432
    %v10497 = vsel %vm10369, %v10305, %v10433
    %v10498 = vsel %vm10370, %v10306, %v10434
    %v10499 = vsel %vm10371, %v10307, %v10435
    %v10500 = vsel %vm10372, %v10308, %v10436
    %v10501 = vsel %vm10373, %v10309, %v10437
    %v10502 = vsel %vm10374, %v10310, %v10438
    %v10503 = vsel %vm10375, %v10311, %v10439
    %v10504 = vsel %vm10376, %v10312, %v10440
    %v10505 = vsel %vm10377, %v10313, %v10441
    %v10506 = vsel %vm10378, %v10314, %v10442
    %v10507 = vsel %vm10379, %v10315, %v10443
    %v10508 = vsel %vm10380, %v10316, %v10444
    %v10509 = vsel %vm10381, %v10317, %v10445
    %v10510 = vsel %vm10382, %v10318, %v10446
    %v10511 = vsel %vm10383, %v10319, %v10447
    %v10512 = vsel %vm10384, %v10320, %v10448
    %v10513 = vsel %vm10385, %v10321, %v10449
    %v10514 = vsel %vm10386, %v10322, %v10450
    %v10515 = vsel %vm10387, %v10323, %v10451
    %v10516 = vsel %vm10388, %v10324, %v10452
    %v10517 = vsel %vm10389, %v10325, %v10453
    %v10518 = vsel %vm10390, %v10326, %v10454
    %v10519 = vsel %vm10391, %v10327, %v10455
    %v10520 = vsel %vm10392, %v10328, %v10456
    %v10521 = vsel %vm10393, %v10329, %v10457
    %v10522 = vsel %vm10394, %v10330, %v10458
    %v10523 = vsel %vm10395, %v10331, %v10459
    %v10524 = vsel %vm10396, %v10332, %v10460
    %v10525 = vsel %vm10397, %v10333, %v10461
    %v10526 = vsel %vm10398, %v10334, %v10462
    %v10527 = vsel %vm10399, %v10335, %v10463
    %v10528 = vsel %vm10400, %v10336, %v10464
    %v10529 = vsel %vm10401, %v10337, %v10465
    %v10530 = vsel %vm10402, %v10338, %v10466
    %v10531 = vsel %vm10403, %v10339, %v10467
    %v10532 = vsel %vm10404, %v10340, %v10468
    %v10533 = vsel %vm10405, %v10341, %v10469
    %v10534 = vsel %vm10406, %v10342, %v10470
    %v10535 = vsel %vm10407, %v10343, %v10471
    %v10536 = vsel %vm10408, %v10344, %v10472
    %v10538 = vsel %vm2326, %v618, 0
    %10540 = vmatpush.bf16.msra.mxu0 0
    %10541 = vmatpush.bf16.msra.mxu0 0
    %10542 = vmatpush.bf16.msra.mxu0 0
    %10543 = vmatpush.bf16.msra.mxu0 0
    %10544 = vmatpush.bf16.msra.mxu0 0
    %10545 = vmatpush.bf16.msra.mxu0 0
    %10546 = vmatpush.bf16.msra.mxu0 0
    %10547 = vmatpush.bf16.msra.mxu0 %v10538
    %10548 = vmatmul.bf16.gmra.mxu0 %v5595
    %v10549 = vpop.f32.mrf.mxu0
    %v10550 = vadd.f32 0.0, %v10549
    %v10551 = vpop.f32.mrf.mxu0
    %v10552 = vadd.f32 0.0, %v10551
    %10553 = vmatmul.bf16.gmra.mxu0 %v5598
    %v10554 = vpop.f32.mrf.mxu0
    %v10555 = vadd.f32 0.0, %v10554
    %v10556 = vpop.f32.mrf.mxu0
    %v10557 = vadd.f32 0.0, %v10556
    %10558 = vmatmul.bf16.gmra.mxu0 %v5601
    %v10559 = vpop.f32.mrf.mxu0
    %v10560 = vadd.f32 0.0, %v10559
    %v10561 = vpop.f32.mrf.mxu0
    %v10562 = vadd.f32 0.0, %v10561
    %10563 = vmatmul.bf16.gmra.mxu0 %v5604
    %v10564 = vpop.f32.mrf.mxu0
    %v10565 = vadd.f32 0.0, %v10564
    %v10566 = vpop.f32.mrf.mxu0
    %v10567 = vadd.f32 0.0, %v10566
    %10568 = vmatmul.bf16.gmra.mxu0 %v5607
    %v10569 = vpop.f32.mrf.mxu0
    %v10570 = vadd.f32 0.0, %v10569
    %v10571 = vpop.f32.mrf.mxu0
    %v10572 = vadd.f32 0.0, %v10571
    %10573 = vmatmul.bf16.gmra.mxu0 %v5610
    %v10574 = vpop.f32.mrf.mxu0
    %v10575 = vadd.f32 0.0, %v10574
    %v10576 = vpop.f32.mrf.mxu0
    %v10577 = vadd.f32 0.0, %v10576
    %10578 = vmatmul.bf16.gmra.mxu0 %v5613
    %v10579 = vpop.f32.mrf.mxu0
    %v10580 = vadd.f32 0.0, %v10579
    %v10581 = vpop.f32.mrf.mxu0
    %v10582 = vadd.f32 0.0, %v10581
    %10583 = vmatmul.bf16.gmra.mxu0 %v5616
    %v10584 = vpop.f32.mrf.mxu0
    %v10585 = vadd.f32 0.0, %v10584
    %v10586 = vpop.f32.mrf.mxu0
    %v10587 = vadd.f32 0.0, %v10586
    %10588 = vmatmul.bf16.gmra.mxu0 %v5619
    %v10589 = vpop.f32.mrf.mxu0
    %v10590 = vadd.f32 0.0, %v10589
    %v10591 = vpop.f32.mrf.mxu0
    %v10592 = vadd.f32 0.0, %v10591
    %10593 = vmatmul.bf16.gmra.mxu0 %v5622
    %v10594 = vpop.f32.mrf.mxu0
    %v10595 = vadd.f32 0.0, %v10594
    %v10596 = vpop.f32.mrf.mxu0
    %v10597 = vadd.f32 0.0, %v10596
    %10598 = vmatmul.bf16.gmra.mxu0 %v5625
    %v10599 = vpop.f32.mrf.mxu0
    %v10600 = vadd.f32 0.0, %v10599
    %v10601 = vpop.f32.mrf.mxu0
    %v10602 = vadd.f32 0.0, %v10601
    %10603 = vmatmul.bf16.gmra.mxu0 %v5628
    %v10604 = vpop.f32.mrf.mxu0
    %v10605 = vadd.f32 0.0, %v10604
    %v10606 = vpop.f32.mrf.mxu0
    %v10607 = vadd.f32 0.0, %v10606
    %10608 = vmatmul.bf16.gmra.mxu0 %v5631
    %v10609 = vpop.f32.mrf.mxu0
    %v10610 = vadd.f32 0.0, %v10609
    %v10611 = vpop.f32.mrf.mxu0
    %v10612 = vadd.f32 0.0, %v10611
    %10613 = vmatmul.bf16.gmra.mxu0 %v5634
    %v10614 = vpop.f32.mrf.mxu0
    %v10615 = vadd.f32 0.0, %v10614
    %v10616 = vpop.f32.mrf.mxu0
    %v10617 = vadd.f32 0.0, %v10616
    %10618 = vmatmul.bf16.gmra.mxu0 %v5637
    %v10619 = vpop.f32.mrf.mxu0
    %v10620 = vadd.f32 0.0, %v10619
    %v10621 = vpop.f32.mrf.mxu0
    %v10622 = vadd.f32 0.0, %v10621
    %10623 = vmatmul.bf16.gmra.mxu0 %v5640
    %v10624 = vpop.f32.mrf.mxu0
    %v10625 = vadd.f32 0.0, %v10624
    %v10626 = vpop.f32.mrf.mxu0
    %v10627 = vadd.f32 0.0, %v10626
    %10628 = vmatmul.bf16.gmra.mxu0 %v5643
    %v10629 = vpop.f32.mrf.mxu0
    %v10630 = vadd.f32 0.0, %v10629
    %v10631 = vpop.f32.mrf.mxu0
    %v10632 = vadd.f32 0.0, %v10631
    %10633 = vmatmul.bf16.gmra.mxu0 %v5646
    %v10634 = vpop.f32.mrf.mxu0
    %v10635 = vadd.f32 0.0, %v10634
    %v10636 = vpop.f32.mrf.mxu0
    %v10637 = vadd.f32 0.0, %v10636
    %10638 = vmatmul.bf16.gmra.mxu0 %v5649
    %v10639 = vpop.f32.mrf.mxu0
    %v10640 = vadd.f32 0.0, %v10639
    %v10641 = vpop.f32.mrf.mxu0
    %v10642 = vadd.f32 0.0, %v10641
    %10643 = vmatmul.bf16.gmra.mxu0 %v5652
    %v10644 = vpop.f32.mrf.mxu0
    %v10645 = vadd.f32 0.0, %v10644
    %v10646 = vpop.f32.mrf.mxu0
    %v10647 = vadd.f32 0.0, %v10646
    %10648 = vmatmul.bf16.gmra.mxu0 %v5655
    %v10649 = vpop.f32.mrf.mxu0
    %v10650 = vadd.f32 0.0, %v10649
    %v10651 = vpop.f32.mrf.mxu0
    %v10652 = vadd.f32 0.0, %v10651
    %10653 = vmatmul.bf16.gmra.mxu0 %v5658
    %v10654 = vpop.f32.mrf.mxu0
    %v10655 = vadd.f32 0.0, %v10654
    %v10656 = vpop.f32.mrf.mxu0
    %v10657 = vadd.f32 0.0, %v10656
    %10658 = vmatmul.bf16.gmra.mxu0 %v5661
    %v10659 = vpop.f32.mrf.mxu0
    %v10660 = vadd.f32 0.0, %v10659
    %v10661 = vpop.f32.mrf.mxu0
    %v10662 = vadd.f32 0.0, %v10661
    %10663 = vmatmul.bf16.gmra.mxu0 %v5664
    %v10664 = vpop.f32.mrf.mxu0
    %v10665 = vadd.f32 0.0, %v10664
    %v10666 = vpop.f32.mrf.mxu0
    %v10667 = vadd.f32 0.0, %v10666
    %10668 = vmatmul.bf16.gmra.mxu0 %v5667
    %v10669 = vpop.f32.mrf.mxu0
    %v10670 = vadd.f32 0.0, %v10669
    %v10671 = vpop.f32.mrf.mxu0
    %v10672 = vadd.f32 0.0, %v10671
    %10673 = vmatmul.bf16.gmra.mxu0 %v5670
    %v10674 = vpop.f32.mrf.mxu0
    %v10675 = vadd.f32 0.0, %v10674
    %v10676 = vpop.f32.mrf.mxu0
    %v10677 = vadd.f32 0.0, %v10676
    %10678 = vmatmul.bf16.gmra.mxu0 %v5673
    %v10679 = vpop.f32.mrf.mxu0
    %v10680 = vadd.f32 0.0, %v10679
    %v10681 = vpop.f32.mrf.mxu0
    %v10682 = vadd.f32 0.0, %v10681
    %10683 = vmatmul.bf16.gmra.mxu0 %v5676
    %v10684 = vpop.f32.mrf.mxu0
    %v10685 = vadd.f32 0.0, %v10684
    %v10686 = vpop.f32.mrf.mxu0
    %v10687 = vadd.f32 0.0, %v10686
    %10688 = vmatmul.bf16.gmra.mxu0 %v5679
    %v10689 = vpop.f32.mrf.mxu0
    %v10690 = vadd.f32 0.0, %v10689
    %v10691 = vpop.f32.mrf.mxu0
    %v10692 = vadd.f32 0.0, %v10691
    %10693 = vmatmul.bf16.gmra.mxu0 %v5682
    %v10694 = vpop.f32.mrf.mxu0
    %v10695 = vadd.f32 0.0, %v10694
    %v10696 = vpop.f32.mrf.mxu0
    %v10697 = vadd.f32 0.0, %v10696
    %10698 = vmatmul.bf16.gmra.mxu0 %v5685
    %v10699 = vpop.f32.mrf.mxu0
    %v10700 = vadd.f32 0.0, %v10699
    %v10701 = vpop.f32.mrf.mxu0
    %v10702 = vadd.f32 0.0, %v10701
    %10703 = vmatmul.bf16.gmra.mxu0 %v5688
    %v10704 = vpop.f32.mrf.mxu0
    %v10705 = vadd.f32 0.0, %v10704
    %v10706 = vpop.f32.mrf.mxu0
    %v10707 = vadd.f32 0.0, %v10706
    %10708 = vdwg.mxu0
    %v10710 = vperm.slane %v614, 0
    %v10712 = vmul.f32 %v10550, %v10710
    %v10713 = vmul.f32 %v10552, %v10710
    %v10714 = vmul.f32 %v10555, %v10710
    %v10715 = vmul.f32 %v10557, %v10710
    %v10716 = vmul.f32 %v10560, %v10710
    %v10717 = vmul.f32 %v10562, %v10710
    %v10718 = vmul.f32 %v10565, %v10710
    %v10719 = vmul.f32 %v10567, %v10710
    %v10720 = vmul.f32 %v10570, %v10710
    %v10721 = vmul.f32 %v10572, %v10710
    %v10722 = vmul.f32 %v10575, %v10710
    %v10723 = vmul.f32 %v10577, %v10710
    %v10724 = vmul.f32 %v10580, %v10710
    %v10725 = vmul.f32 %v10582, %v10710
    %v10726 = vmul.f32 %v10585, %v10710
    %v10727 = vmul.f32 %v10587, %v10710
    %v10728 = vmul.f32 %v10590, %v10710
    %v10729 = vmul.f32 %v10592, %v10710
    %v10730 = vmul.f32 %v10595, %v10710
    %v10731 = vmul.f32 %v10597, %v10710
    %v10732 = vmul.f32 %v10600, %v10710
    %v10733 = vmul.f32 %v10602, %v10710
    %v10734 = vmul.f32 %v10605, %v10710
    %v10735 = vmul.f32 %v10607, %v10710
    %v10736 = vmul.f32 %v10610, %v10710
    %v10737 = vmul.f32 %v10612, %v10710
    %v10738 = vmul.f32 %v10615, %v10710
    %v10739 = vmul.f32 %v10617, %v10710
    %v10740 = vmul.f32 %v10620, %v10710
    %v10741 = vmul.f32 %v10622, %v10710
    %v10742 = vmul.f32 %v10625, %v10710
    %v10743 = vmul.f32 %v10627, %v10710
    %v10744 = vmul.f32 %v10630, %v10710
    %v10745 = vmul.f32 %v10632, %v10710
    %v10746 = vmul.f32 %v10635, %v10710
    %v10747 = vmul.f32 %v10637, %v10710
    %v10748 = vmul.f32 %v10640, %v10710
    %v10749 = vmul.f32 %v10642, %v10710
    %v10750 = vmul.f32 %v10645, %v10710
    %v10751 = vmul.f32 %v10647, %v10710
    %v10752 = vmul.f32 %v10650, %v10710
    %v10753 = vmul.f32 %v10652, %v10710
    %v10754 = vmul.f32 %v10655, %v10710
    %v10755 = vmul.f32 %v10657, %v10710
    %v10756 = vmul.f32 %v10660, %v10710
    %v10757 = vmul.f32 %v10662, %v10710
    %v10758 = vmul.f32 %v10665, %v10710
    %v10759 = vmul.f32 %v10667, %v10710
    %v10760 = vmul.f32 %v10670, %v10710
    %v10761 = vmul.f32 %v10672, %v10710
    %v10762 = vmul.f32 %v10675, %v10710
    %v10763 = vmul.f32 %v10677, %v10710
    %v10764 = vmul.f32 %v10680, %v10710
    %v10765 = vmul.f32 %v10682, %v10710
    %v10766 = vmul.f32 %v10685, %v10710
    %v10767 = vmul.f32 %v10687, %v10710
    %v10768 = vmul.f32 %v10690, %v10710
    %v10769 = vmul.f32 %v10692, %v10710
    %v10770 = vmul.f32 %v10695, %v10710
    %v10771 = vmul.f32 %v10697, %v10710
    %v10772 = vmul.f32 %v10700, %v10710
    %v10773 = vmul.f32 %v10702, %v10710
    %v10774 = vmul.f32 %v10705, %v10710
    %v10775 = vmul.f32 %v10707, %v10710
    %v10777 = vperm.slane %v612, 0
    %v10779 = vadd.f32 %v10712, %v10777
    %v10780 = vadd.f32 %v10713, %v10777
    %v10781 = vadd.f32 %v10714, %v10777
    %v10782 = vadd.f32 %v10715, %v10777
    %v10783 = vadd.f32 %v10716, %v10777
    %v10784 = vadd.f32 %v10717, %v10777
    %v10785 = vadd.f32 %v10718, %v10777
    %v10786 = vadd.f32 %v10719, %v10777
    %v10787 = vadd.f32 %v10720, %v10777
    %v10788 = vadd.f32 %v10721, %v10777
    %v10789 = vadd.f32 %v10722, %v10777
    %v10790 = vadd.f32 %v10723, %v10777
    %v10791 = vadd.f32 %v10724, %v10777
    %v10792 = vadd.f32 %v10725, %v10777
    %v10793 = vadd.f32 %v10726, %v10777
    %v10794 = vadd.f32 %v10727, %v10777
    %v10795 = vadd.f32 %v10728, %v10777
    %v10796 = vadd.f32 %v10729, %v10777
    %v10797 = vadd.f32 %v10730, %v10777
    %v10798 = vadd.f32 %v10731, %v10777
    %v10799 = vadd.f32 %v10732, %v10777
    %v10800 = vadd.f32 %v10733, %v10777
    %v10801 = vadd.f32 %v10734, %v10777
    %v10802 = vadd.f32 %v10735, %v10777
    %v10803 = vadd.f32 %v10736, %v10777
    %v10804 = vadd.f32 %v10737, %v10777
    %v10805 = vadd.f32 %v10738, %v10777
    %v10806 = vadd.f32 %v10739, %v10777
    %v10807 = vadd.f32 %v10740, %v10777
    %v10808 = vadd.f32 %v10741, %v10777
    %v10809 = vadd.f32 %v10742, %v10777
    %v10810 = vadd.f32 %v10743, %v10777
    %v10811 = vadd.f32 %v10744, %v10777
    %v10812 = vadd.f32 %v10745, %v10777
    %v10813 = vadd.f32 %v10746, %v10777
    %v10814 = vadd.f32 %v10747, %v10777
    %v10815 = vadd.f32 %v10748, %v10777
    %v10816 = vadd.f32 %v10749, %v10777
    %v10817 = vadd.f32 %v10750, %v10777
    %v10818 = vadd.f32 %v10751, %v10777
    %v10819 = vadd.f32 %v10752, %v10777
    %v10820 = vadd.f32 %v10753, %v10777
    %v10821 = vadd.f32 %v10754, %v10777
    %v10822 = vadd.f32 %v10755, %v10777
    %v10823 = vadd.f32 %v10756, %v10777
    %v10824 = vadd.f32 %v10757, %v10777
    %v10825 = vadd.f32 %v10758, %v10777
    %v10826 = vadd.f32 %v10759, %v10777
    %v10827 = vadd.f32 %v10760, %v10777
    %v10828 = vadd.f32 %v10761, %v10777
    %v10829 = vadd.f32 %v10762, %v10777
    %v10830 = vadd.f32 %v10763, %v10777
    %v10831 = vadd.f32 %v10764, %v10777
    %v10832 = vadd.f32 %v10765, %v10777
    %v10833 = vadd.f32 %v10766, %v10777
    %v10834 = vadd.f32 %v10767, %v10777
    %v10835 = vadd.f32 %v10768, %v10777
    %v10836 = vadd.f32 %v10769, %v10777
    %v10837 = vadd.f32 %v10770, %v10777
    %v10838 = vadd.f32 %v10771, %v10777
    %v10839 = vadd.f32 %v10772, %v10777
    %v10840 = vadd.f32 %v10773, %v10777
    %v10841 = vadd.f32 %v10774, %v10777
    %v10842 = vadd.f32 %v10775, %v10777
    %vm10843 = vcmp.gt.f32.partialorder %v10779, 0.0
    %vm10844 = vcmp.gt.f32.partialorder %v10780, 0.0
    %vm10845 = vcmp.gt.f32.partialorder %v10781, 0.0
    %vm10846 = vcmp.gt.f32.partialorder %v10782, 0.0
    %vm10847 = vcmp.gt.f32.partialorder %v10783, 0.0
    %vm10848 = vcmp.gt.f32.partialorder %v10784, 0.0
    %vm10849 = vcmp.gt.f32.partialorder %v10785, 0.0
    %vm10850 = vcmp.gt.f32.partialorder %v10786, 0.0
    %vm10851 = vcmp.gt.f32.partialorder %v10787, 0.0
    %vm10852 = vcmp.gt.f32.partialorder %v10788, 0.0
    %vm10853 = vcmp.gt.f32.partialorder %v10789, 0.0
    %vm10854 = vcmp.gt.f32.partialorder %v10790, 0.0
    %vm10855 = vcmp.gt.f32.partialorder %v10791, 0.0
    %vm10856 = vcmp.gt.f32.partialorder %v10792, 0.0
    %vm10857 = vcmp.gt.f32.partialorder %v10793, 0.0
    %vm10858 = vcmp.gt.f32.partialorder %v10794, 0.0
    %vm10859 = vcmp.gt.f32.partialorder %v10795, 0.0
    %vm10860 = vcmp.gt.f32.partialorder %v10796, 0.0
    %vm10861 = vcmp.gt.f32.partialorder %v10797, 0.0
    %vm10862 = vcmp.gt.f32.partialorder %v10798, 0.0
    %vm10863 = vcmp.gt.f32.partialorder %v10799, 0.0
    %vm10864 = vcmp.gt.f32.partialorder %v10800, 0.0
    %vm10865 = vcmp.gt.f32.partialorder %v10801, 0.0
    %vm10866 = vcmp.gt.f32.partialorder %v10802, 0.0
    %vm10867 = vcmp.gt.f32.partialorder %v10803, 0.0
    %vm10868 = vcmp.gt.f32.partialorder %v10804, 0.0
    %vm10869 = vcmp.gt.f32.partialorder %v10805, 0.0
    %vm10870 = vcmp.gt.f32.partialorder %v10806, 0.0
    %vm10871 = vcmp.gt.f32.partialorder %v10807, 0.0
    %vm10872 = vcmp.gt.f32.partialorder %v10808, 0.0
    %vm10873 = vcmp.gt.f32.partialorder %v10809, 0.0
    %vm10874 = vcmp.gt.f32.partialorder %v10810, 0.0
    %vm10875 = vcmp.gt.f32.partialorder %v10811, 0.0
    %vm10876 = vcmp.gt.f32.partialorder %v10812, 0.0
    %vm10877 = vcmp.gt.f32.partialorder %v10813, 0.0
    %vm10878 = vcmp.gt.f32.partialorder %v10814, 0.0
    %vm10879 = vcmp.gt.f32.partialorder %v10815, 0.0
    %vm10880 = vcmp.gt.f32.partialorder %v10816, 0.0
    %vm10881 = vcmp.gt.f32.partialorder %v10817, 0.0
    %vm10882 = vcmp.gt.f32.partialorder %v10818, 0.0
    %vm10883 = vcmp.gt.f32.partialorder %v10819, 0.0
    %vm10884 = vcmp.gt.f32.partialorder %v10820, 0.0
    %vm10885 = vcmp.gt.f32.partialorder %v10821, 0.0
    %vm10886 = vcmp.gt.f32.partialorder %v10822, 0.0
    %vm10887 = vcmp.gt.f32.partialorder %v10823, 0.0
    %vm10888 = vcmp.gt.f32.partialorder %v10824, 0.0
    %vm10889 = vcmp.gt.f32.partialorder %v10825, 0.0
    %vm10890 = vcmp.gt.f32.partialorder %v10826, 0.0
    %vm10891 = vcmp.gt.f32.partialorder %v10827, 0.0
    %vm10892 = vcmp.gt.f32.partialorder %v10828, 0.0
    %vm10893 = vcmp.gt.f32.partialorder %v10829, 0.0
    %vm10894 = vcmp.gt.f32.partialorder %v10830, 0.0
    %vm10895 = vcmp.gt.f32.partialorder %v10831, 0.0
    %vm10896 = vcmp.gt.f32.partialorder %v10832, 0.0
    %vm10897 = vcmp.gt.f32.partialorder %v10833, 0.0
    %vm10898 = vcmp.gt.f32.partialorder %v10834, 0.0
    %vm10899 = vcmp.gt.f32.partialorder %v10835, 0.0
    %vm10900 = vcmp.gt.f32.partialorder %v10836, 0.0
    %vm10901 = vcmp.gt.f32.partialorder %v10837, 0.0
    %vm10902 = vcmp.gt.f32.partialorder %v10838, 0.0
    %vm10903 = vcmp.gt.f32.partialorder %v10839, 0.0
    %vm10904 = vcmp.gt.f32.partialorder %v10840, 0.0
    %vm10905 = vcmp.gt.f32.partialorder %v10841, 0.0
    %vm10906 = vcmp.gt.f32.partialorder %v10842, 0.0
    %v10907 = vmul.f32 %v10779, 0.1
    %v10908 = vmul.f32 %v10780, 0.1
    %v10909 = vmul.f32 %v10781, 0.1
    %v10910 = vmul.f32 %v10782, 0.1
    %v10911 = vmul.f32 %v10783, 0.1
    %v10912 = vmul.f32 %v10784, 0.1
    %v10913 = vmul.f32 %v10785, 0.1
    %v10914 = vmul.f32 %v10786, 0.1
    %v10915 = vmul.f32 %v10787, 0.1
    %v10916 = vmul.f32 %v10788, 0.1
    %v10917 = vmul.f32 %v10789, 0.1
    %v10918 = vmul.f32 %v10790, 0.1
    %v10919 = vmul.f32 %v10791, 0.1
    %v10920 = vmul.f32 %v10792, 0.1
    %v10921 = vmul.f32 %v10793, 0.1
    %v10922 = vmul.f32 %v10794, 0.1
    %v10923 = vmul.f32 %v10795, 0.1
    %v10924 = vmul.f32 %v10796, 0.1
    %v10925 = vmul.f32 %v10797, 0.1
    %v10926 = vmul.f32 %v10798, 0.1
    %v10927 = vmul.f32 %v10799, 0.1
    %v10928 = vmul.f32 %v10800, 0.1
    %v10929 = vmul.f32 %v10801, 0.1
    %v10930 = vmul.f32 %v10802, 0.1
    %v10931 = vmul.f32 %v10803, 0.1
    %v10932 = vmul.f32 %v10804, 0.1
    %v10933 = vmul.f32 %v10805, 0.1
    %v10934 = vmul.f32 %v10806, 0.1
    %v10935 = vmul.f32 %v10807, 0.1
    %v10936 = vmul.f32 %v10808, 0.1
    %v10937 = vmul.f32 %v10809, 0.1
    %v10938 = vmul.f32 %v10810, 0.1
    %v10939 = vmul.f32 %v10811, 0.1
    %v10940 = vmul.f32 %v10812, 0.1
    %v10941 = vmul.f32 %v10813, 0.1
    %v10942 = vmul.f32 %v10814, 0.1
    %v10943 = vmul.f32 %v10815, 0.1
    %v10944 = vmul.f32 %v10816, 0.1
    %v10945 = vmul.f32 %v10817, 0.1
    %v10946 = vmul.f32 %v10818, 0.1
    %v10947 = vmul.f32 %v10819, 0.1
    %v10948 = vmul.f32 %v10820, 0.1
    %v10949 = vmul.f32 %v10821, 0.1
    %v10950 = vmul.f32 %v10822, 0.1
    %v10951 = vmul.f32 %v10823, 0.1
    %v10952 = vmul.f32 %v10824, 0.1
    %v10953 = vmul.f32 %v10825, 0.1
    %v10954 = vmul.f32 %v10826, 0.1
    %v10955 = vmul.f32 %v10827, 0.1
    %v10956 = vmul.f32 %v10828, 0.1
    %v10957 = vmul.f32 %v10829, 0.1
    %v10958 = vmul.f32 %v10830, 0.1
    %v10959 = vmul.f32 %v10831, 0.1
    %v10960 = vmul.f32 %v10832, 0.1
    %v10961 = vmul.f32 %v10833, 0.1
    %v10962 = vmul.f32 %v10834, 0.1
    %v10963 = vmul.f32 %v10835, 0.1
    %v10964 = vmul.f32 %v10836, 0.1
    %v10965 = vmul.f32 %v10837, 0.1
    %v10966 = vmul.f32 %v10838, 0.1
    %v10967 = vmul.f32 %v10839, 0.1
    %v10968 = vmul.f32 %v10840, 0.1
    %v10969 = vmul.f32 %v10841, 0.1
    %v10970 = vmul.f32 %v10842, 0.1
    %v10971 = vsel %vm10843, %v10779, %v10907
    %v10972 = vsel %vm10844, %v10780, %v10908
    %v10973 = vsel %vm10845, %v10781, %v10909
    %v10974 = vsel %vm10846, %v10782, %v10910
    %v10975 = vsel %vm10847, %v10783, %v10911
    %v10976 = vsel %vm10848, %v10784, %v10912
    %v10977 = vsel %vm10849, %v10785, %v10913
    %v10978 = vsel %vm10850, %v10786, %v10914
    %v10979 = vsel %vm10851, %v10787, %v10915
    %v10980 = vsel %vm10852, %v10788, %v10916
    %v10981 = vsel %vm10853, %v10789, %v10917
    %v10982 = vsel %vm10854, %v10790, %v10918
    %v10983 = vsel %vm10855, %v10791, %v10919
    %v10984 = vsel %vm10856, %v10792, %v10920
    %v10985 = vsel %vm10857, %v10793, %v10921
    %v10986 = vsel %vm10858, %v10794, %v10922
    %v10987 = vsel %vm10859, %v10795, %v10923
    %v10988 = vsel %vm10860, %v10796, %v10924
    %v10989 = vsel %vm10861, %v10797, %v10925
    %v10990 = vsel %vm10862, %v10798, %v10926
    %v10991 = vsel %vm10863, %v10799, %v10927
    %v10992 = vsel %vm10864, %v10800, %v10928
    %v10993 = vsel %vm10865, %v10801, %v10929
    %v10994 = vsel %vm10866, %v10802, %v10930
    %v10995 = vsel %vm10867, %v10803, %v10931
    %v10996 = vsel %vm10868, %v10804, %v10932
    %v10997 = vsel %vm10869, %v10805, %v10933
    %v10998 = vsel %vm10870, %v10806, %v10934
    %v10999 = vsel %vm10871, %v10807, %v10935
    %v11000 = vsel %vm10872, %v10808, %v10936
    %v11001 = vsel %vm10873, %v10809, %v10937
    %v11002 = vsel %vm10874, %v10810, %v10938
    %v11003 = vsel %vm10875, %v10811, %v10939
    %v11004 = vsel %vm10876, %v10812, %v10940
    %v11005 = vsel %vm10877, %v10813, %v10941
    %v11006 = vsel %vm10878, %v10814, %v10942
    %v11007 = vsel %vm10879, %v10815, %v10943
    %v11008 = vsel %vm10880, %v10816, %v10944
    %v11009 = vsel %vm10881, %v10817, %v10945
    %v11010 = vsel %vm10882, %v10818, %v10946
    %v11011 = vsel %vm10883, %v10819, %v10947
    %v11012 = vsel %vm10884, %v10820, %v10948
    %v11013 = vsel %vm10885, %v10821, %v10949
    %v11014 = vsel %vm10886, %v10822, %v10950
    %v11015 = vsel %vm10887, %v10823, %v10951
    %v11016 = vsel %vm10888, %v10824, %v10952
    %v11017 = vsel %vm10889, %v10825, %v10953
    %v11018 = vsel %vm10890, %v10826, %v10954
    %v11019 = vsel %vm10891, %v10827, %v10955
    %v11020 = vsel %vm10892, %v10828, %v10956
    %v11021 = vsel %vm10893, %v10829, %v10957
    %v11022 = vsel %vm10894, %v10830, %v10958
    %v11023 = vsel %vm10895, %v10831, %v10959
    %v11024 = vsel %vm10896, %v10832, %v10960
    %v11025 = vsel %vm10897, %v10833, %v10961
    %v11026 = vsel %vm10898, %v10834, %v10962
    %v11027 = vsel %vm10899, %v10835, %v10963
    %v11028 = vsel %vm10900, %v10836, %v10964
    %v11029 = vsel %vm10901, %v10837, %v10965
    %v11030 = vsel %vm10902, %v10838, %v10966
    %v11031 = vsel %vm10903, %v10839, %v10967
    %v11032 = vsel %vm10904, %v10840, %v10968
    %v11033 = vsel %vm10905, %v10841, %v10969
    %v11034 = vsel %vm10906, %v10842, %v10970
    %11099 = vrot.lane.b32.xlu0 %v10971, 4
    %v11100 = vpop.permute.xlu0 %11099
    %11101 = vrot.lane.b32.xlu0 %v10972, 4
    %v11102 = vpop.permute.xlu0 %11101
    %11103 = vrot.lane.b32.xlu0 %v10973, 4
    %v11104 = vpop.permute.xlu0 %11103
    %11105 = vrot.lane.b32.xlu0 %v10974, 4
    %v11106 = vpop.permute.xlu0 %11105
    %11107 = vrot.lane.b32.xlu0 %v10975, 4
    %v11108 = vpop.permute.xlu0 %11107
    %11109 = vrot.lane.b32.xlu0 %v10976, 4
    %v11110 = vpop.permute.xlu0 %11109
    %11111 = vrot.lane.b32.xlu0 %v10977, 4
    %v11112 = vpop.permute.xlu0 %11111
    %11113 = vrot.lane.b32.xlu0 %v10978, 4
    %v11114 = vpop.permute.xlu0 %11113
    %11115 = vrot.lane.b32.xlu0 %v10979, 4
    %v11116 = vpop.permute.xlu0 %11115
    %11117 = vrot.lane.b32.xlu0 %v10980, 4
    %v11118 = vpop.permute.xlu0 %11117
    %11119 = vrot.lane.b32.xlu0 %v10981, 4
    %v11120 = vpop.permute.xlu0 %11119
    %11121 = vrot.lane.b32.xlu0 %v10982, 4
    %v11122 = vpop.permute.xlu0 %11121
    %11123 = vrot.lane.b32.xlu0 %v10983, 4
    %v11124 = vpop.permute.xlu0 %11123
    %11125 = vrot.lane.b32.xlu0 %v10984, 4
    %v11126 = vpop.permute.xlu0 %11125
    %11127 = vrot.lane.b32.xlu0 %v10985, 4
    %v11128 = vpop.permute.xlu0 %11127
    %11129 = vrot.lane.b32.xlu0 %v10986, 4
    %v11130 = vpop.permute.xlu0 %11129
    %11131 = vrot.lane.b32.xlu0 %v10987, 4
    %v11132 = vpop.permute.xlu0 %11131
    %11133 = vrot.lane.b32.xlu0 %v10988, 4
    %v11134 = vpop.permute.xlu0 %11133
    %11135 = vrot.lane.b32.xlu0 %v10989, 4
    %v11136 = vpop.permute.xlu0 %11135
    %11137 = vrot.lane.b32.xlu0 %v10990, 4
    %v11138 = vpop.permute.xlu0 %11137
    %11139 = vrot.lane.b32.xlu0 %v10991, 4
    %v11140 = vpop.permute.xlu0 %11139
    %11141 = vrot.lane.b32.xlu0 %v10992, 4
    %v11142 = vpop.permute.xlu0 %11141
    %11143 = vrot.lane.b32.xlu0 %v10993, 4
    %v11144 = vpop.permute.xlu0 %11143
    %11145 = vrot.lane.b32.xlu0 %v10994, 4
    %v11146 = vpop.permute.xlu0 %11145
    %11147 = vrot.lane.b32.xlu0 %v10995, 4
    %v11148 = vpop.permute.xlu0 %11147
    %11149 = vrot.lane.b32.xlu0 %v10996, 4
    %v11150 = vpop.permute.xlu0 %11149
    %11151 = vrot.lane.b32.xlu0 %v10997, 4
    %v11152 = vpop.permute.xlu0 %11151
    %11153 = vrot.lane.b32.xlu0 %v10998, 4
    %v11154 = vpop.permute.xlu0 %11153
    %11155 = vrot.lane.b32.xlu0 %v10999, 4
    %v11156 = vpop.permute.xlu0 %11155
    %11157 = vrot.lane.b32.xlu0 %v11000, 4
    %v11158 = vpop.permute.xlu0 %11157
    %11159 = vrot.lane.b32.xlu0 %v11001, 4
    %v11160 = vpop.permute.xlu0 %11159
    %11161 = vrot.lane.b32.xlu0 %v11002, 4
    %v11162 = vpop.permute.xlu0 %11161
    %11163 = vrot.lane.b32.xlu0 %v11003, 4
    %v11164 = vpop.permute.xlu0 %11163
    %11165 = vrot.lane.b32.xlu0 %v11004, 4
    %v11166 = vpop.permute.xlu0 %11165
    %11167 = vrot.lane.b32.xlu0 %v11005, 4
    %v11168 = vpop.permute.xlu0 %11167
    %11169 = vrot.lane.b32.xlu0 %v11006, 4
    %v11170 = vpop.permute.xlu0 %11169
    %11171 = vrot.lane.b32.xlu0 %v11007, 4
    %v11172 = vpop.permute.xlu0 %11171
    %11173 = vrot.lane.b32.xlu0 %v11008, 4
    %v11174 = vpop.permute.xlu0 %11173
    %11175 = vrot.lane.b32.xlu0 %v11009, 4
    %v11176 = vpop.permute.xlu0 %11175
    %11177 = vrot.lane.b32.xlu0 %v11010, 4
    %v11178 = vpop.permute.xlu0 %11177
    %11179 = vrot.lane.b32.xlu0 %v11011, 4
    %v11180 = vpop.permute.xlu0 %11179
    %11181 = vrot.lane.b32.xlu0 %v11012, 4
    %v11182 = vpop.permute.xlu0 %11181
    %11183 = vrot.lane.b32.xlu0 %v11013, 4
    %v11184 = vpop.permute.xlu0 %11183
    %11185 = vrot.lane.b32.xlu0 %v11014, 4
    %v11186 = vpop.permute.xlu0 %11185
    %11187 = vrot.lane.b32.xlu0 %v11015, 4
    %v11188 = vpop.permute.xlu0 %11187
    %11189 = vrot.lane.b32.xlu0 %v11016, 4
    %v11190 = vpop.permute.xlu0 %11189
    %11191 = vrot.lane.b32.xlu0 %v11017, 4
    %v11192 = vpop.permute.xlu0 %11191
    %11193 = vrot.lane.b32.xlu0 %v11018, 4
    %v11194 = vpop.permute.xlu0 %11193
    %11195 = vrot.lane.b32.xlu0 %v11019, 4
    %v11196 = vpop.permute.xlu0 %11195
    %11197 = vrot.lane.b32.xlu0 %v11020, 4
    %v11198 = vpop.permute.xlu0 %11197
    %11199 = vrot.lane.b32.xlu0 %v11021, 4
    %v11200 = vpop.permute.xlu0 %11199
    %11201 = vrot.lane.b32.xlu0 %v11022, 4
    %v11202 = vpop.permute.xlu0 %11201
    %11203 = vrot.lane.b32.xlu0 %v11023, 4
    %v11204 = vpop.permute.xlu0 %11203
    %11205 = vrot.lane.b32.xlu0 %v11024, 4
    %v11206 = vpop.permute.xlu0 %11205
    %11207 = vrot.lane.b32.xlu0 %v11025, 4
    %v11208 = vpop.permute.xlu0 %11207
    %11209 = vrot.lane.b32.xlu0 %v11026, 4
    %v11210 = vpop.permute.xlu0 %11209
    %11211 = vrot.lane.b32.xlu0 %v11027, 4
    %v11212 = vpop.permute.xlu0 %11211
    %11213 = vrot.lane.b32.xlu0 %v11028, 4
    %v11214 = vpop.permute.xlu0 %11213
    %11215 = vrot.lane.b32.xlu0 %v11029, 4
    %v11216 = vpop.permute.xlu0 %11215
    %11217 = vrot.lane.b32.xlu0 %v11030, 4
    %v11218 = vpop.permute.xlu0 %11217
    %11219 = vrot.lane.b32.xlu0 %v11031, 4
    %v11220 = vpop.permute.xlu0 %11219
    %11221 = vrot.lane.b32.xlu0 %v11032, 4
    %v11222 = vpop.permute.xlu0 %11221
    %11223 = vrot.lane.b32.xlu0 %v11033, 4
    %v11224 = vpop.permute.xlu0 %11223
    %11225 = vrot.lane.b32.xlu0 %v11034, 4
    %v11226 = vpop.permute.xlu0 %11225
    %v11291 = vsel %vm6348, %v10473, %v11100
    %v11292 = vsel %vm6348, %v10474, %v11102
    %v11293 = vsel %vm6348, %v10475, %v11104
    %v11294 = vsel %vm6348, %v10476, %v11106
    %v11295 = vsel %vm6348, %v10477, %v11108
    %v11296 = vsel %vm6348, %v10478, %v11110
    %v11297 = vsel %vm6348, %v10479, %v11112
    %v11298 = vsel %vm6348, %v10480, %v11114
    %v11299 = vsel %vm6348, %v10481, %v11116
    %v11300 = vsel %vm6348, %v10482, %v11118
    %v11301 = vsel %vm6348, %v10483, %v11120
    %v11302 = vsel %vm6348, %v10484, %v11122
    %v11303 = vsel %vm6348, %v10485, %v11124
    %v11304 = vsel %vm6348, %v10486, %v11126
    %v11305 = vsel %vm6348, %v10487, %v11128
    %v11306 = vsel %vm6348, %v10488, %v11130
    %v11307 = vsel %vm6348, %v10489, %v11132
    %v11308 = vsel %vm6348, %v10490, %v11134
    %v11309 = vsel %vm6348, %v10491, %v11136
    %v11310 = vsel %vm6348, %v10492, %v11138
    %v11311 = vsel %vm6348, %v10493, %v11140
    %v11312 = vsel %vm6348, %v10494, %v11142
    %v11313 = vsel %vm6348, %v10495, %v11144
    %v11314 = vsel %vm6348, %v10496, %v11146
    %v11315 = vsel %vm6348, %v10497, %v11148
    %v11316 = vsel %vm6348, %v10498, %v11150
    %v11317 = vsel %vm6348, %v10499, %v11152
    %v11318 = vsel %vm6348, %v10500, %v11154
    %v11319 = vsel %vm6348, %v10501, %v11156
    %v11320 = vsel %vm6348, %v10502, %v11158
    %v11321 = vsel %vm6348, %v10503, %v11160
    %v11322 = vsel %vm6348, %v10504, %v11162
    %v11323 = vsel %vm6348, %v10505, %v11164
    %v11324 = vsel %vm6348, %v10506, %v11166
    %v11325 = vsel %vm6348, %v10507, %v11168
    %v11326 = vsel %vm6348, %v10508, %v11170
    %v11327 = vsel %vm6348, %v10509, %v11172
    %v11328 = vsel %vm6348, %v10510, %v11174
    %v11329 = vsel %vm6348, %v10511, %v11176
    %v11330 = vsel %vm6348, %v10512, %v11178
    %v11331 = vsel %vm6348, %v10513, %v11180
    %v11332 = vsel %vm6348, %v10514, %v11182
    %v11333 = vsel %vm6348, %v10515, %v11184
    %v11334 = vsel %vm6348, %v10516, %v11186
    %v11335 = vsel %vm6348, %v10517, %v11188
    %v11336 = vsel %vm6348, %v10518, %v11190
    %v11337 = vsel %vm6348, %v10519, %v11192
    %v11338 = vsel %vm6348, %v10520, %v11194
    %v11339 = vsel %vm6348, %v10521, %v11196
    %v11340 = vsel %vm6348, %v10522, %v11198
    %v11341 = vsel %vm6348, %v10523, %v11200
    %v11342 = vsel %vm6348, %v10524, %v11202
    %v11343 = vsel %vm6348, %v10525, %v11204
    %v11344 = vsel %vm6348, %v10526, %v11206
    %v11345 = vsel %vm6348, %v10527, %v11208
    %v11346 = vsel %vm6348, %v10528, %v11210
    %v11347 = vsel %vm6348, %v10529, %v11212
    %v11348 = vsel %vm6348, %v10530, %v11214
    %v11349 = vsel %vm6348, %v10531, %v11216
    %v11350 = vsel %vm6348, %v10532, %v11218
    %v11351 = vsel %vm6348, %v10533, %v11220
    %v11352 = vsel %vm6348, %v10534, %v11222
    %v11353 = vsel %vm6348, %v10535, %v11224
    %v11354 = vsel %vm6348, %v10536, %v11226
    %v11355 = vpack.c.bf16 %v11292, %v11291
    %v11356 = vpack.c.bf16 %v11294, %v11293
    %v11357 = vpack.c.bf16 %v11296, %v11295
    %v11358 = vpack.c.bf16 %v11298, %v11297
    %v11359 = vpack.c.bf16 %v11300, %v11299
    %v11360 = vpack.c.bf16 %v11302, %v11301
    %v11361 = vpack.c.bf16 %v11304, %v11303
    %v11362 = vpack.c.bf16 %v11306, %v11305
    %v11363 = vpack.c.bf16 %v11308, %v11307
    %v11364 = vpack.c.bf16 %v11310, %v11309
    %v11365 = vpack.c.bf16 %v11312, %v11311
    %v11366 = vpack.c.bf16 %v11314, %v11313
    %v11367 = vpack.c.bf16 %v11316, %v11315
    %v11368 = vpack.c.bf16 %v11318, %v11317
    %v11369 = vpack.c.bf16 %v11320, %v11319
    %v11370 = vpack.c.bf16 %v11322, %v11321
    %v11371 = vpack.c.bf16 %v11324, %v11323
    %v11372 = vpack.c.bf16 %v11326, %v11325
    %v11373 = vpack.c.bf16 %v11328, %v11327
    %v11374 = vpack.c.bf16 %v11330, %v11329
    %v11375 = vpack.c.bf16 %v11332, %v11331
    %v11376 = vpack.c.bf16 %v11334, %v11333
    %v11377 = vpack.c.bf16 %v11336, %v11335
    %v11378 = vpack.c.bf16 %v11338, %v11337
    %v11379 = vpack.c.bf16 %v11340, %v11339
    %v11380 = vpack.c.bf16 %v11342, %v11341
    %v11381 = vpack.c.bf16 %v11344, %v11343
    %v11382 = vpack.c.bf16 %v11346, %v11345
    %v11383 = vpack.c.bf16 %v11348, %v11347
    %v11384 = vpack.c.bf16 %v11350, %v11349
    %v11385 = vpack.c.bf16 %v11352, %v11351
    %v11386 = vpack.c.bf16 %v11354, %v11353
    %v11388 = vsel %vm2301, %v11355, 0
    %v11391 = vsel %vm2301, %v11356, 0
    %v11394 = vsel %vm2301, %v11357, 0
    %v11397 = vsel %vm2301, %v11358, 0
    %v11400 = vsel %vm2301, %v11359, 0
    %v11403 = vsel %vm2301, %v11360, 0
    %v11406 = vsel %vm2301, %v11361, 0
    %v11409 = vsel %vm2301, %v11362, 0
    %v11412 = vsel %vm2301, %v11363, 0
    %v11415 = vsel %vm2301, %v11364, 0
    %v11418 = vsel %vm2301, %v11365, 0
    %v11421 = vsel %vm2301, %v11366, 0
    %v11424 = vsel %vm2301, %v11367, 0
    %v11427 = vsel %vm2301, %v11368, 0
    %v11430 = vsel %vm2301, %v11369, 0
    %v11433 = vsel %vm2301, %v11370, 0
    %v11436 = vsel %vm2301, %v11371, 0
    %v11439 = vsel %vm2301, %v11372, 0
    %v11442 = vsel %vm2301, %v11373, 0
    %v11445 = vsel %vm2301, %v11374, 0
    %v11448 = vsel %vm2301, %v11375, 0
    %v11451 = vsel %vm2301, %v11376, 0
    %v11454 = vsel %vm2301, %v11377, 0
    %v11457 = vsel %vm2301, %v11378, 0
    %v11460 = vsel %vm2301, %v11379, 0
    %v11463 = vsel %vm2301, %v11380, 0
    %v11466 = vsel %vm2301, %v11381, 0
    %v11469 = vsel %vm2301, %v11382, 0
    %v11472 = vsel %vm2301, %v11383, 0
    %v11475 = vsel %vm2301, %v11384, 0
    %v11478 = vsel %vm2301, %v11385, 0
    %v11481 = vsel %vm2301, %v11386, 0
    %v11484 = vsel %vm2326, %v622, 0
    %11486 = vmatpush.bf16.msra.mxu0 0
    %11487 = vmatpush.bf16.msra.mxu0 0
    %11488 = vmatpush.bf16.msra.mxu0 0
    %11489 = vmatpush.bf16.msra.mxu0 0
    %11490 = vmatpush.bf16.msra.mxu0 0
    %11491 = vmatpush.bf16.msra.mxu0 0
    %11492 = vmatpush.bf16.msra.mxu0 0
    %11493 = vmatpush.bf16.msra.mxu0 %v11484
    %11494 = vmatmul.bf16.gmra.mxu0 %v11388
    %v11495 = vpop.f32.mrf.mxu0
    %v11496 = vadd.f32 0.0, %v11495
    %v11497 = vpop.f32.mrf.mxu0
    %v11498 = vadd.f32 0.0, %v11497
    %11499 = vmatmul.bf16.gmra.mxu0 %v11391
    %v11500 = vpop.f32.mrf.mxu0
    %v11501 = vadd.f32 0.0, %v11500
    %v11502 = vpop.f32.mrf.mxu0
    %v11503 = vadd.f32 0.0, %v11502
    %11504 = vmatmul.bf16.gmra.mxu0 %v11394
    %v11505 = vpop.f32.mrf.mxu0
    %v11506 = vadd.f32 0.0, %v11505
    %v11507 = vpop.f32.mrf.mxu0
    %v11508 = vadd.f32 0.0, %v11507
    %11509 = vmatmul.bf16.gmra.mxu0 %v11397
    %v11510 = vpop.f32.mrf.mxu0
    %v11511 = vadd.f32 0.0, %v11510
    %v11512 = vpop.f32.mrf.mxu0
    %v11513 = vadd.f32 0.0, %v11512
    %11514 = vmatmul.bf16.gmra.mxu0 %v11400
    %v11515 = vpop.f32.mrf.mxu0
    %v11516 = vadd.f32 0.0, %v11515
    %v11517 = vpop.f32.mrf.mxu0
    %v11518 = vadd.f32 0.0, %v11517
    %11519 = vmatmul.bf16.gmra.mxu0 %v11403
    %v11520 = vpop.f32.mrf.mxu0
    %v11521 = vadd.f32 0.0, %v11520
    %v11522 = vpop.f32.mrf.mxu0
    %v11523 = vadd.f32 0.0, %v11522
    %11524 = vmatmul.bf16.gmra.mxu0 %v11406
    %v11525 = vpop.f32.mrf.mxu0
    %v11526 = vadd.f32 0.0, %v11525
    %v11527 = vpop.f32.mrf.mxu0
    %v11528 = vadd.f32 0.0, %v11527
    %11529 = vmatmul.bf16.gmra.mxu0 %v11409
    %v11530 = vpop.f32.mrf.mxu0
    %v11531 = vadd.f32 0.0, %v11530
    %v11532 = vpop.f32.mrf.mxu0
    %v11533 = vadd.f32 0.0, %v11532
    %11534 = vmatmul.bf16.gmra.mxu0 %v11412
    %v11535 = vpop.f32.mrf.mxu0
    %v11536 = vadd.f32 0.0, %v11535
    %v11537 = vpop.f32.mrf.mxu0
    %v11538 = vadd.f32 0.0, %v11537
    %11539 = vmatmul.bf16.gmra.mxu0 %v11415
    %v11540 = vpop.f32.mrf.mxu0
    %v11541 = vadd.f32 0.0, %v11540
    %v11542 = vpop.f32.mrf.mxu0
    %v11543 = vadd.f32 0.0, %v11542
    %11544 = vmatmul.bf16.gmra.mxu0 %v11418
    %v11545 = vpop.f32.mrf.mxu0
    %v11546 = vadd.f32 0.0, %v11545
    %v11547 = vpop.f32.mrf.mxu0
    %v11548 = vadd.f32 0.0, %v11547
    %11549 = vmatmul.bf16.gmra.mxu0 %v11421
    %v11550 = vpop.f32.mrf.mxu0
    %v11551 = vadd.f32 0.0, %v11550
    %v11552 = vpop.f32.mrf.mxu0
    %v11553 = vadd.f32 0.0, %v11552
    %11554 = vmatmul.bf16.gmra.mxu0 %v11424
    %v11555 = vpop.f32.mrf.mxu0
    %v11556 = vadd.f32 0.0, %v11555
    %v11557 = vpop.f32.mrf.mxu0
    %v11558 = vadd.f32 0.0, %v11557
    %11559 = vmatmul.bf16.gmra.mxu0 %v11427
    %v11560 = vpop.f32.mrf.mxu0
    %v11561 = vadd.f32 0.0, %v11560
    %v11562 = vpop.f32.mrf.mxu0
    %v11563 = vadd.f32 0.0, %v11562
    %11564 = vmatmul.bf16.gmra.mxu0 %v11430
    %v11565 = vpop.f32.mrf.mxu0
    %v11566 = vadd.f32 0.0, %v11565
    %v11567 = vpop.f32.mrf.mxu0
    %v11568 = vadd.f32 0.0, %v11567
    %11569 = vmatmul.bf16.gmra.mxu0 %v11433
    %v11570 = vpop.f32.mrf.mxu0
    %v11571 = vadd.f32 0.0, %v11570
    %v11572 = vpop.f32.mrf.mxu0
    %v11573 = vadd.f32 0.0, %v11572
    %11574 = vmatmul.bf16.gmra.mxu0 %v11436
    %v11575 = vpop.f32.mrf.mxu0
    %v11576 = vadd.f32 0.0, %v11575
    %v11577 = vpop.f32.mrf.mxu0
    %v11578 = vadd.f32 0.0, %v11577
    %11579 = vmatmul.bf16.gmra.mxu0 %v11439
    %v11580 = vpop.f32.mrf.mxu0
    %v11581 = vadd.f32 0.0, %v11580
    %v11582 = vpop.f32.mrf.mxu0
    %v11583 = vadd.f32 0.0, %v11582
    %11584 = vmatmul.bf16.gmra.mxu0 %v11442
    %v11585 = vpop.f32.mrf.mxu0
    %v11586 = vadd.f32 0.0, %v11585
    %v11587 = vpop.f32.mrf.mxu0
    %v11588 = vadd.f32 0.0, %v11587
    %11589 = vmatmul.bf16.gmra.mxu0 %v11445
    %v11590 = vpop.f32.mrf.mxu0
    %v11591 = vadd.f32 0.0, %v11590
    %v11592 = vpop.f32.mrf.mxu0
    %v11593 = vadd.f32 0.0, %v11592
    %11594 = vmatmul.bf16.gmra.mxu0 %v11448
    %v11595 = vpop.f32.mrf.mxu0
    %v11596 = vadd.f32 0.0, %v11595
    %v11597 = vpop.f32.mrf.mxu0
    %v11598 = vadd.f32 0.0, %v11597
    %11599 = vmatmul.bf16.gmra.mxu0 %v11451
    %v11600 = vpop.f32.mrf.mxu0
    %v11601 = vadd.f32 0.0, %v11600
    %v11602 = vpop.f32.mrf.mxu0
    %v11603 = vadd.f32 0.0, %v11602
    %11604 = vmatmul.bf16.gmra.mxu0 %v11454
    %v11605 = vpop.f32.mrf.mxu0
    %v11606 = vadd.f32 0.0, %v11605
    %v11607 = vpop.f32.mrf.mxu0
    %v11608 = vadd.f32 0.0, %v11607
    %11609 = vmatmul.bf16.gmra.mxu0 %v11457
    %v11610 = vpop.f32.mrf.mxu0
    %v11611 = vadd.f32 0.0, %v11610
    %v11612 = vpop.f32.mrf.mxu0
    %v11613 = vadd.f32 0.0, %v11612
    %11614 = vmatmul.bf16.gmra.mxu0 %v11460
    %v11615 = vpop.f32.mrf.mxu0
    %v11616 = vadd.f32 0.0, %v11615
    %v11617 = vpop.f32.mrf.mxu0
    %v11618 = vadd.f32 0.0, %v11617
    %11619 = vmatmul.bf16.gmra.mxu0 %v11463
    %v11620 = vpop.f32.mrf.mxu0
    %v11621 = vadd.f32 0.0, %v11620
    %v11622 = vpop.f32.mrf.mxu0
    %v11623 = vadd.f32 0.0, %v11622
    %11624 = vmatmul.bf16.gmra.mxu0 %v11466
    %v11625 = vpop.f32.mrf.mxu0
    %v11626 = vadd.f32 0.0, %v11625
    %v11627 = vpop.f32.mrf.mxu0
    %v11628 = vadd.f32 0.0, %v11627
    %11629 = vmatmul.bf16.gmra.mxu0 %v11469
    %v11630 = vpop.f32.mrf.mxu0
    %v11631 = vadd.f32 0.0, %v11630
    %v11632 = vpop.f32.mrf.mxu0
    %v11633 = vadd.f32 0.0, %v11632
    %11634 = vmatmul.bf16.gmra.mxu0 %v11472
    %v11635 = vpop.f32.mrf.mxu0
    %v11636 = vadd.f32 0.0, %v11635
    %v11637 = vpop.f32.mrf.mxu0
    %v11638 = vadd.f32 0.0, %v11637
    %11639 = vmatmul.bf16.gmra.mxu0 %v11475
    %v11640 = vpop.f32.mrf.mxu0
    %v11641 = vadd.f32 0.0, %v11640
    %v11642 = vpop.f32.mrf.mxu0
    %v11643 = vadd.f32 0.0, %v11642
    %11644 = vmatmul.bf16.gmra.mxu0 %v11478
    %v11645 = vpop.f32.mrf.mxu0
    %v11646 = vadd.f32 0.0, %v11645
    %v11647 = vpop.f32.mrf.mxu0
    %v11648 = vadd.f32 0.0, %v11647
    %11649 = vmatmul.bf16.gmra.mxu0 %v11481
    %v11650 = vpop.f32.mrf.mxu0
    %v11651 = vadd.f32 0.0, %v11650
    %v11652 = vpop.f32.mrf.mxu0
    %v11653 = vadd.f32 0.0, %v11652
    %11654 = vdwg.mxu0
    %v11656 = vperm.slane %v621, 0
    %v11658 = vmul.f32 %v11496, %v11656
    %v11659 = vmul.f32 %v11498, %v11656
    %v11660 = vmul.f32 %v11501, %v11656
    %v11661 = vmul.f32 %v11503, %v11656
    %v11662 = vmul.f32 %v11506, %v11656
    %v11663 = vmul.f32 %v11508, %v11656
    %v11664 = vmul.f32 %v11511, %v11656
    %v11665 = vmul.f32 %v11513, %v11656
    %v11666 = vmul.f32 %v11516, %v11656
    %v11667 = vmul.f32 %v11518, %v11656
    %v11668 = vmul.f32 %v11521, %v11656
    %v11669 = vmul.f32 %v11523, %v11656
    %v11670 = vmul.f32 %v11526, %v11656
    %v11671 = vmul.f32 %v11528, %v11656
    %v11672 = vmul.f32 %v11531, %v11656
    %v11673 = vmul.f32 %v11533, %v11656
    %v11674 = vmul.f32 %v11536, %v11656
    %v11675 = vmul.f32 %v11538, %v11656
    %v11676 = vmul.f32 %v11541, %v11656
    %v11677 = vmul.f32 %v11543, %v11656
    %v11678 = vmul.f32 %v11546, %v11656
    %v11679 = vmul.f32 %v11548, %v11656
    %v11680 = vmul.f32 %v11551, %v11656
    %v11681 = vmul.f32 %v11553, %v11656
    %v11682 = vmul.f32 %v11556, %v11656
    %v11683 = vmul.f32 %v11558, %v11656
    %v11684 = vmul.f32 %v11561, %v11656
    %v11685 = vmul.f32 %v11563, %v11656
    %v11686 = vmul.f32 %v11566, %v11656
    %v11687 = vmul.f32 %v11568, %v11656
    %v11688 = vmul.f32 %v11571, %v11656
    %v11689 = vmul.f32 %v11573, %v11656
    %v11690 = vmul.f32 %v11576, %v11656
    %v11691 = vmul.f32 %v11578, %v11656
    %v11692 = vmul.f32 %v11581, %v11656
    %v11693 = vmul.f32 %v11583, %v11656
    %v11694 = vmul.f32 %v11586, %v11656
    %v11695 = vmul.f32 %v11588, %v11656
    %v11696 = vmul.f32 %v11591, %v11656
    %v11697 = vmul.f32 %v11593, %v11656
    %v11698 = vmul.f32 %v11596, %v11656
    %v11699 = vmul.f32 %v11598, %v11656
    %v11700 = vmul.f32 %v11601, %v11656
    %v11701 = vmul.f32 %v11603, %v11656
    %v11702 = vmul.f32 %v11606, %v11656
    %v11703 = vmul.f32 %v11608, %v11656
    %v11704 = vmul.f32 %v11611, %v11656
    %v11705 = vmul.f32 %v11613, %v11656
    %v11706 = vmul.f32 %v11616, %v11656
    %v11707 = vmul.f32 %v11618, %v11656
    %v11708 = vmul.f32 %v11621, %v11656
    %v11709 = vmul.f32 %v11623, %v11656
    %v11710 = vmul.f32 %v11626, %v11656
    %v11711 = vmul.f32 %v11628, %v11656
    %v11712 = vmul.f32 %v11631, %v11656
    %v11713 = vmul.f32 %v11633, %v11656
    %v11714 = vmul.f32 %v11636, %v11656
    %v11715 = vmul.f32 %v11638, %v11656
    %v11716 = vmul.f32 %v11641, %v11656
    %v11717 = vmul.f32 %v11643, %v11656
    %v11718 = vmul.f32 %v11646, %v11656
    %v11719 = vmul.f32 %v11648, %v11656
    %v11720 = vmul.f32 %v11651, %v11656
    %v11721 = vmul.f32 %v11653, %v11656
    %v11723 = vperm.slane %v620, 0
    %v11725 = vadd.f32 %v11658, %v11723
    %v11726 = vadd.f32 %v11659, %v11723
    %v11727 = vadd.f32 %v11660, %v11723
    %v11728 = vadd.f32 %v11661, %v11723
    %v11729 = vadd.f32 %v11662, %v11723
    %v11730 = vadd.f32 %v11663, %v11723
    %v11731 = vadd.f32 %v11664, %v11723
    %v11732 = vadd.f32 %v11665, %v11723
    %v11733 = vadd.f32 %v11666, %v11723
    %v11734 = vadd.f32 %v11667, %v11723
    %v11735 = vadd.f32 %v11668, %v11723
    %v11736 = vadd.f32 %v11669, %v11723
    %v11737 = vadd.f32 %v11670, %v11723
    %v11738 = vadd.f32 %v11671, %v11723
    %v11739 = vadd.f32 %v11672, %v11723
    %v11740 = vadd.f32 %v11673, %v11723
    %v11741 = vadd.f32 %v11674, %v11723
    %v11742 = vadd.f32 %v11675, %v11723
    %v11743 = vadd.f32 %v11676, %v11723
    %v11744 = vadd.f32 %v11677, %v11723
    %v11745 = vadd.f32 %v11678, %v11723
    %v11746 = vadd.f32 %v11679, %v11723
    %v11747 = vadd.f32 %v11680, %v11723
    %v11748 = vadd.f32 %v11681, %v11723
    %v11749 = vadd.f32 %v11682, %v11723
    %v11750 = vadd.f32 %v11683, %v11723
    %v11751 = vadd.f32 %v11684, %v11723
    %v11752 = vadd.f32 %v11685, %v11723
    %v11753 = vadd.f32 %v11686, %v11723
    %v11754 = vadd.f32 %v11687, %v11723
    %v11755 = vadd.f32 %v11688, %v11723
    %v11756 = vadd.f32 %v11689, %v11723
    %v11757 = vadd.f32 %v11690, %v11723
    %v11758 = vadd.f32 %v11691, %v11723
    %v11759 = vadd.f32 %v11692, %v11723
    %v11760 = vadd.f32 %v11693, %v11723
    %v11761 = vadd.f32 %v11694, %v11723
    %v11762 = vadd.f32 %v11695, %v11723
    %v11763 = vadd.f32 %v11696, %v11723
    %v11764 = vadd.f32 %v11697, %v11723
    %v11765 = vadd.f32 %v11698, %v11723
    %v11766 = vadd.f32 %v11699, %v11723
    %v11767 = vadd.f32 %v11700, %v11723
    %v11768 = vadd.f32 %v11701, %v11723
    %v11769 = vadd.f32 %v11702, %v11723
    %v11770 = vadd.f32 %v11703, %v11723
    %v11771 = vadd.f32 %v11704, %v11723
    %v11772 = vadd.f32 %v11705, %v11723
    %v11773 = vadd.f32 %v11706, %v11723
    %v11774 = vadd.f32 %v11707, %v11723
    %v11775 = vadd.f32 %v11708, %v11723
    %v11776 = vadd.f32 %v11709, %v11723
    %v11777 = vadd.f32 %v11710, %v11723
    %v11778 = vadd.f32 %v11711, %v11723
    %v11779 = vadd.f32 %v11712, %v11723
    %v11780 = vadd.f32 %v11713, %v11723
    %v11781 = vadd.f32 %v11714, %v11723
    %v11782 = vadd.f32 %v11715, %v11723
    %v11783 = vadd.f32 %v11716, %v11723
    %v11784 = vadd.f32 %v11717, %v11723
    %v11785 = vadd.f32 %v11718, %v11723
    %v11786 = vadd.f32 %v11719, %v11723
    %v11787 = vadd.f32 %v11720, %v11723
    %v11788 = vadd.f32 %v11721, %v11723
    %v11789 = vadd.f32 %v11725, 3.0
    %v11790 = vadd.f32 %v11726, 3.0
    %v11791 = vadd.f32 %v11727, 3.0
    %v11792 = vadd.f32 %v11728, 3.0
    %v11793 = vadd.f32 %v11729, 3.0
    %v11794 = vadd.f32 %v11730, 3.0
    %v11795 = vadd.f32 %v11731, 3.0
    %v11796 = vadd.f32 %v11732, 3.0
    %v11797 = vadd.f32 %v11733, 3.0
    %v11798 = vadd.f32 %v11734, 3.0
    %v11799 = vadd.f32 %v11735, 3.0
    %v11800 = vadd.f32 %v11736, 3.0
    %v11801 = vadd.f32 %v11737, 3.0
    %v11802 = vadd.f32 %v11738, 3.0
    %v11803 = vadd.f32 %v11739, 3.0
    %v11804 = vadd.f32 %v11740, 3.0
    %v11805 = vadd.f32 %v11741, 3.0
    %v11806 = vadd.f32 %v11742, 3.0
    %v11807 = vadd.f32 %v11743, 3.0
    %v11808 = vadd.f32 %v11744, 3.0
    %v11809 = vadd.f32 %v11745, 3.0
    %v11810 = vadd.f32 %v11746, 3.0
    %v11811 = vadd.f32 %v11747, 3.0
    %v11812 = vadd.f32 %v11748, 3.0
    %v11813 = vadd.f32 %v11749, 3.0
    %v11814 = vadd.f32 %v11750, 3.0
    %v11815 = vadd.f32 %v11751, 3.0
    %v11816 = vadd.f32 %v11752, 3.0
    %v11817 = vadd.f32 %v11753, 3.0
    %v11818 = vadd.f32 %v11754, 3.0
    %v11819 = vadd.f32 %v11755, 3.0
    %v11820 = vadd.f32 %v11756, 3.0
    %v11821 = vadd.f32 %v11757, 3.0
    %v11822 = vadd.f32 %v11758, 3.0
    %v11823 = vadd.f32 %v11759, 3.0
    %v11824 = vadd.f32 %v11760, 3.0
    %v11825 = vadd.f32 %v11761, 3.0
    %v11826 = vadd.f32 %v11762, 3.0
    %v11827 = vadd.f32 %v11763, 3.0
    %v11828 = vadd.f32 %v11764, 3.0
    %v11829 = vadd.f32 %v11765, 3.0
    %v11830 = vadd.f32 %v11766, 3.0
    %v11831 = vadd.f32 %v11767, 3.0
    %v11832 = vadd.f32 %v11768, 3.0
    %v11833 = vadd.f32 %v11769, 3.0
    %v11834 = vadd.f32 %v11770, 3.0
    %v11835 = vadd.f32 %v11771, 3.0
    %v11836 = vadd.f32 %v11772, 3.0
    %v11837 = vadd.f32 %v11773, 3.0
    %v11838 = vadd.f32 %v11774, 3.0
    %v11839 = vadd.f32 %v11775, 3.0
    %v11840 = vadd.f32 %v11776, 3.0
    %v11841 = vadd.f32 %v11777, 3.0
    %v11842 = vadd.f32 %v11778, 3.0
    %v11843 = vadd.f32 %v11779, 3.0
    %v11844 = vadd.f32 %v11780, 3.0
    %v11845 = vadd.f32 %v11781, 3.0
    %v11846 = vadd.f32 %v11782, 3.0
    %v11847 = vadd.f32 %v11783, 3.0
    %v11848 = vadd.f32 %v11784, 3.0
    %v11849 = vadd.f32 %v11785, 3.0
    %v11850 = vadd.f32 %v11786, 3.0
    %v11851 = vadd.f32 %v11787, 3.0
    %v11852 = vadd.f32 %v11788, 3.0
    %v11853 = vmax.f32 %v11789, 0.0
    %v11854 = vmax.f32 %v11790, 0.0
    %v11855 = vmax.f32 %v11791, 0.0
    %v11856 = vmax.f32 %v11792, 0.0
    %v11857 = vmax.f32 %v11793, 0.0
    %v11858 = vmax.f32 %v11794, 0.0
    %v11859 = vmax.f32 %v11795, 0.0
    %v11860 = vmax.f32 %v11796, 0.0
    %v11861 = vmax.f32 %v11797, 0.0
    %v11862 = vmax.f32 %v11798, 0.0
    %v11863 = vmax.f32 %v11799, 0.0
    %v11864 = vmax.f32 %v11800, 0.0
    %v11865 = vmax.f32 %v11801, 0.0
    %v11866 = vmax.f32 %v11802, 0.0
    %v11867 = vmax.f32 %v11803, 0.0
    %v11868 = vmax.f32 %v11804, 0.0
    %v11869 = vmax.f32 %v11805, 0.0
    %v11870 = vmax.f32 %v11806, 0.0
    %v11871 = vmax.f32 %v11807, 0.0
    %v11872 = vmax.f32 %v11808, 0.0
    %v11873 = vmax.f32 %v11809, 0.0
    %v11874 = vmax.f32 %v11810, 0.0
    %v11875 = vmax.f32 %v11811, 0.0
    %v11876 = vmax.f32 %v11812, 0.0
    %v11877 = vmax.f32 %v11813, 0.0
    %v11878 = vmax.f32 %v11814, 0.0
    %v11879 = vmax.f32 %v11815, 0.0
    %v11880 = vmax.f32 %v11816, 0.0
    %v11881 = vmax.f32 %v11817, 0.0
    %v11882 = vmax.f32 %v11818, 0.0
    %v11883 = vmax.f32 %v11819, 0.0
    %v11884 = vmax.f32 %v11820, 0.0
    %v11885 = vmax.f32 %v11821, 0.0
    %v11886 = vmax.f32 %v11822, 0.0
    %v11887 = vmax.f32 %v11823, 0.0
    %v11888 = vmax.f32 %v11824, 0.0
    %v11889 = vmax.f32 %v11825, 0.0
    %v11890 = vmax.f32 %v11826, 0.0
    %v11891 = vmax.f32 %v11827, 0.0
    %v11892 = vmax.f32 %v11828, 0.0
    %v11893 = vmax.f32 %v11829, 0.0
    %v11894 = vmax.f32 %v11830, 0.0
    %v11895 = vmax.f32 %v11831, 0.0
    %v11896 = vmax.f32 %v11832, 0.0
    %v11897 = vmax.f32 %v11833, 0.0
    %v11898 = vmax.f32 %v11834, 0.0
    %v11899 = vmax.f32 %v11835, 0.0
    %v11900 = vmax.f32 %v11836, 0.0
    %v11901 = vmax.f32 %v11837, 0.0
    %v11902 = vmax.f32 %v11838, 0.0
    %v11903 = vmax.f32 %v11839, 0.0
    %v11904 = vmax.f32 %v11840, 0.0
    %v11905 = vmax.f32 %v11841, 0.0
    %v11906 = vmax.f32 %v11842, 0.0
    %v11907 = vmax.f32 %v11843, 0.0
    %v11908 = vmax.f32 %v11844, 0.0
    %v11909 = vmax.f32 %v11845, 0.0
    %v11910 = vmax.f32 %v11846, 0.0
    %v11911 = vmax.f32 %v11847, 0.0
    %v11912 = vmax.f32 %v11848, 0.0
    %v11913 = vmax.f32 %v11849, 0.0
    %v11914 = vmax.f32 %v11850, 0.0
    %v11915 = vmax.f32 %v11851, 0.0
    %v11916 = vmax.f32 %v11852, 0.0
    %v11917 = vmin.f32 %v11853, 6.0
    %v11918 = vmin.f32 %v11854, 6.0
    %v11919 = vmin.f32 %v11855, 6.0
    %v11920 = vmin.f32 %v11856, 6.0
    %v11921 = vmin.f32 %v11857, 6.0
    %v11922 = vmin.f32 %v11858, 6.0
    %v11923 = vmin.f32 %v11859, 6.0
    %v11924 = vmin.f32 %v11860, 6.0
    %v11925 = vmin.f32 %v11861, 6.0
    %v11926 = vmin.f32 %v11862, 6.0
    %v11927 = vmin.f32 %v11863, 6.0
    %v11928 = vmin.f32 %v11864, 6.0
    %v11929 = vmin.f32 %v11865, 6.0
    %v11930 = vmin.f32 %v11866, 6.0
    %v11931 = vmin.f32 %v11867, 6.0
    %v11932 = vmin.f32 %v11868, 6.0
    %v11933 = vmin.f32 %v11869, 6.0
    %v11934 = vmin.f32 %v11870, 6.0
    %v11935 = vmin.f32 %v11871, 6.0
    %v11936 = vmin.f32 %v11872, 6.0
    %v11937 = vmin.f32 %v11873, 6.0
    %v11938 = vmin.f32 %v11874, 6.0
    %v11939 = vmin.f32 %v11875, 6.0
    %v11940 = vmin.f32 %v11876, 6.0
    %v11941 = vmin.f32 %v11877, 6.0
    %v11942 = vmin.f32 %v11878, 6.0
    %v11943 = vmin.f32 %v11879, 6.0
    %v11944 = vmin.f32 %v11880, 6.0
    %v11945 = vmin.f32 %v11881, 6.0
    %v11946 = vmin.f32 %v11882, 6.0
    %v11947 = vmin.f32 %v11883, 6.0
    %v11948 = vmin.f32 %v11884, 6.0
    %v11949 = vmin.f32 %v11885, 6.0
    %v11950 = vmin.f32 %v11886, 6.0
    %v11951 = vmin.f32 %v11887, 6.0
    %v11952 = vmin.f32 %v11888, 6.0
    %v11953 = vmin.f32 %v11889, 6.0
    %v11954 = vmin.f32 %v11890, 6.0
    %v11955 = vmin.f32 %v11891, 6.0
    %v11956 = vmin.f32 %v11892, 6.0
    %v11957 = vmin.f32 %v11893, 6.0
    %v11958 = vmin.f32 %v11894, 6.0
    %v11959 = vmin.f32 %v11895, 6.0
    %v11960 = vmin.f32 %v11896, 6.0
    %v11961 = vmin.f32 %v11897, 6.0
    %v11962 = vmin.f32 %v11898, 6.0
    %v11963 = vmin.f32 %v11899, 6.0
    %v11964 = vmin.f32 %v11900, 6.0
    %v11965 = vmin.f32 %v11901, 6.0
    %v11966 = vmin.f32 %v11902, 6.0
    %v11967 = vmin.f32 %v11903, 6.0
    %v11968 = vmin.f32 %v11904, 6.0
    %v11969 = vmin.f32 %v11905, 6.0
    %v11970 = vmin.f32 %v11906, 6.0
    %v11971 = vmin.f32 %v11907, 6.0
    %v11972 = vmin.f32 %v11908, 6.0
    %v11973 = vmin.f32 %v11909, 6.0
    %v11974 = vmin.f32 %v11910, 6.0
    %v11975 = vmin.f32 %v11911, 6.0
    %v11976 = vmin.f32 %v11912, 6.0
    %v11977 = vmin.f32 %v11913, 6.0
    %v11978 = vmin.f32 %v11914, 6.0
    %v11979 = vmin.f32 %v11915, 6.0
    %v11980 = vmin.f32 %v11916, 6.0
    %v11981 = vmul.f32 %v11725, %v11917
    %v11982 = vmul.f32 %v11726, %v11918
    %v11983 = vmul.f32 %v11727, %v11919
    %v11984 = vmul.f32 %v11728, %v11920
    %v11985 = vmul.f32 %v11729, %v11921
    %v11986 = vmul.f32 %v11730, %v11922
    %v11987 = vmul.f32 %v11731, %v11923
    %v11988 = vmul.f32 %v11732, %v11924
    %v11989 = vmul.f32 %v11733, %v11925
    %v11990 = vmul.f32 %v11734, %v11926
    %v11991 = vmul.f32 %v11735, %v11927
    %v11992 = vmul.f32 %v11736, %v11928
    %v11993 = vmul.f32 %v11737, %v11929
    %v11994 = vmul.f32 %v11738, %v11930
    %v11995 = vmul.f32 %v11739, %v11931
    %v11996 = vmul.f32 %v11740, %v11932
    %v11997 = vmul.f32 %v11741, %v11933
    %v11998 = vmul.f32 %v11742, %v11934
    %v11999 = vmul.f32 %v11743, %v11935
    %v12000 = vmul.f32 %v11744, %v11936
    %v12001 = vmul.f32 %v11745, %v11937
    %v12002 = vmul.f32 %v11746, %v11938
    %v12003 = vmul.f32 %v11747, %v11939
    %v12004 = vmul.f32 %v11748, %v11940
    %v12005 = vmul.f32 %v11749, %v11941
    %v12006 = vmul.f32 %v11750, %v11942
    %v12007 = vmul.f32 %v11751, %v11943
    %v12008 = vmul.f32 %v11752, %v11944
    %v12009 = vmul.f32 %v11753, %v11945
    %v12010 = vmul.f32 %v11754, %v11946
    %v12011 = vmul.f32 %v11755, %v11947
    %v12012 = vmul.f32 %v11756, %v11948
    %v12013 = vmul.f32 %v11757, %v11949
    %v12014 = vmul.f32 %v11758, %v11950
    %v12015 = vmul.f32 %v11759, %v11951
    %v12016 = vmul.f32 %v11760, %v11952
    %v12017 = vmul.f32 %v11761, %v11953
    %v12018 = vmul.f32 %v11762, %v11954
    %v12019 = vmul.f32 %v11763, %v11955
    %v12020 = vmul.f32 %v11764, %v11956
    %v12021 = vmul.f32 %v11765, %v11957
    %v12022 = vmul.f32 %v11766, %v11958
    %v12023 = vmul.f32 %v11767, %v11959
    %v12024 = vmul.f32 %v11768, %v11960
    %v12025 = vmul.f32 %v11769, %v11961
    %v12026 = vmul.f32 %v11770, %v11962
    %v12027 = vmul.f32 %v11771, %v11963
    %v12028 = vmul.f32 %v11772, %v11964
    %v12029 = vmul.f32 %v11773, %v11965
    %v12030 = vmul.f32 %v11774, %v11966
    %v12031 = vmul.f32 %v11775, %v11967
    %v12032 = vmul.f32 %v11776, %v11968
    %v12033 = vmul.f32 %v11777, %v11969
    %v12034 = vmul.f32 %v11778, %v11970
    %v12035 = vmul.f32 %v11779, %v11971
    %v12036 = vmul.f32 %v11780, %v11972
    %v12037 = vmul.f32 %v11781, %v11973
    %v12038 = vmul.f32 %v11782, %v11974
    %v12039 = vmul.f32 %v11783, %v11975
    %v12040 = vmul.f32 %v11784, %v11976
    %v12041 = vmul.f32 %v11785, %v11977
    %v12042 = vmul.f32 %v11786, %v11978
    %v12043 = vmul.f32 %v11787, %v11979
    %v12044 = vmul.f32 %v11788, %v11980
    %v12045 = vmul.f32 %v11981, 0.16666667
    %v12046 = vmul.f32 %v11982, 0.16666667
    %v12047 = vmul.f32 %v11983, 0.16666667
    %v12048 = vmul.f32 %v11984, 0.16666667
    %v12049 = vmul.f32 %v11985, 0.16666667
    %v12050 = vmul.f32 %v11986, 0.16666667
    %v12051 = vmul.f32 %v11987, 0.16666667
    %v12052 = vmul.f32 %v11988, 0.16666667
    %v12053 = vmul.f32 %v11989, 0.16666667
    %v12054 = vmul.f32 %v11990, 0.16666667
    %v12055 = vmul.f32 %v11991, 0.16666667
    %v12056 = vmul.f32 %v11992, 0.16666667
    %v12057 = vmul.f32 %v11993, 0.16666667
    %v12058 = vmul.f32 %v11994, 0.16666667
    %v12059 = vmul.f32 %v11995, 0.16666667
    %v12060 = vmul.f32 %v11996, 0.16666667
    %v12061 = vmul.f32 %v11997, 0.16666667
    %v12062 = vmul.f32 %v11998, 0.16666667
    %v12063 = vmul.f32 %v11999, 0.16666667
    %v12064 = vmul.f32 %v12000, 0.16666667
    %v12065 = vmul.f32 %v12001, 0.16666667
    %v12066 = vmul.f32 %v12002, 0.16666667
    %v12067 = vmul.f32 %v12003, 0.16666667
    %v12068 = vmul.f32 %v12004, 0.16666667
    %v12069 = vmul.f32 %v12005, 0.16666667
    %v12070 = vmul.f32 %v12006, 0.16666667
    %v12071 = vmul.f32 %v12007, 0.16666667
    %v12072 = vmul.f32 %v12008, 0.16666667
    %v12073 = vmul.f32 %v12009, 0.16666667
    %v12074 = vmul.f32 %v12010, 0.16666667
    %v12075 = vmul.f32 %v12011, 0.16666667
    %v12076 = vmul.f32 %v12012, 0.16666667
    %v12077 = vmul.f32 %v12013, 0.16666667
    %v12078 = vmul.f32 %v12014, 0.16666667
    %v12079 = vmul.f32 %v12015, 0.16666667
    %v12080 = vmul.f32 %v12016, 0.16666667
    %v12081 = vmul.f32 %v12017, 0.16666667
    %v12082 = vmul.f32 %v12018, 0.16666667
    %v12083 = vmul.f32 %v12019, 0.16666667
    %v12084 = vmul.f32 %v12020, 0.16666667
    %v12085 = vmul.f32 %v12021, 0.16666667
    %v12086 = vmul.f32 %v12022, 0.16666667
    %v12087 = vmul.f32 %v12023, 0.16666667
    %v12088 = vmul.f32 %v12024, 0.16666667
    %v12089 = vmul.f32 %v12025, 0.16666667
    %v12090 = vmul.f32 %v12026, 0.16666667
    %v12091 = vmul.f32 %v12027, 0.16666667
    %v12092 = vmul.f32 %v12028, 0.16666667
    %v12093 = vmul.f32 %v12029, 0.16666667
    %v12094 = vmul.f32 %v12030, 0.16666667
    %v12095 = vmul.f32 %v12031, 0.16666667
    %v12096 = vmul.f32 %v12032, 0.16666667
    %v12097 = vmul.f32 %v12033, 0.16666667
    %v12098 = vmul.f32 %v12034, 0.16666667
    %v12099 = vmul.f32 %v12035, 0.16666667
    %v12100 = vmul.f32 %v12036, 0.16666667
    %v12101 = vmul.f32 %v12037, 0.16666667
    %v12102 = vmul.f32 %v12038, 0.16666667
    %v12103 = vmul.f32 %v12039, 0.16666667
    %v12104 = vmul.f32 %v12040, 0.16666667
    %v12105 = vmul.f32 %v12041, 0.16666667
    %v12106 = vmul.f32 %v12042, 0.16666667
    %v12107 = vmul.f32 %v12043, 0.16666667
    %v12108 = vmul.f32 %v12044, 0.16666667
    %12109 = vst.msk [vmem:[%s135] sm:$0xff] %vm2301, %v12045
    %12110 = vst.msk [vmem:[%s135 + $0x8] sm:$0xff] %vm2301, %v12046
    %12111 = vst.msk [vmem:[%s135 + $0x10] sm:$0xff] %vm2301, %v12047
    %12112 = vst.msk [vmem:[%s135 + $0x18] sm:$0xff] %vm2301, %v12048
    %12113 = vst.msk [vmem:[%s135 + $0x20] sm:$0xff] %vm2301, %v12049
    %12114 = vst.msk [vmem:[%s135 + $0x28] sm:$0xff] %vm2301, %v12050
    %12115 = vst.msk [vmem:[%s135 + $0x30] sm:$0xff] %vm2301, %v12051
    %12116 = vst.msk [vmem:[%s135 + $0x38] sm:$0xff] %vm2301, %v12052
    %12117 = vst.msk [vmem:[%s135 + $0x40] sm:$0xff] %vm2301, %v12053
    %12118 = vst.msk [vmem:[%s135 + $0x48] sm:$0xff] %vm2301, %v12054
    %12119 = vst.msk [vmem:[%s135 + $0x50] sm:$0xff] %vm2301, %v12055
    %12120 = vst.msk [vmem:[%s135 + $0x58] sm:$0xff] %vm2301, %v12056
    %12121 = vst.msk [vmem:[%s135 + $0x60] sm:$0xff] %vm2301, %v12057
    %12122 = vst.msk [vmem:[%s135 + $0x68] sm:$0xff] %vm2301, %v12058
    %12123 = vst.msk [vmem:[%s135 + $0x70] sm:$0xff] %vm2301, %v12059
    %12124 = vst.msk [vmem:[%s135 + $0x78] sm:$0xff] %vm2301, %v12060
    %12125 = vst.msk [vmem:[%s135 + $0x80] sm:$0xff] %vm2301, %v12061
    %12126 = vst.msk [vmem:[%s135 + $0x88] sm:$0xff] %vm2301, %v12062
    %12127 = vst.msk [vmem:[%s135 + $0x90] sm:$0xff] %vm2301, %v12063
    %12128 = vst.msk [vmem:[%s135 + $0x98] sm:$0xff] %vm2301, %v12064
    %12129 = vst.msk [vmem:[%s135 + $0xa0] sm:$0xff] %vm2301, %v12065
    %12130 = vst.msk [vmem:[%s135 + $0xa8] sm:$0xff] %vm2301, %v12066
    %12131 = vst.msk [vmem:[%s135 + $0xb0] sm:$0xff] %vm2301, %v12067
    %12132 = vst.msk [vmem:[%s135 + $0xb8] sm:$0xff] %vm2301, %v12068
    %12133 = vst.msk [vmem:[%s135 + $0xc0] sm:$0xff] %vm2301, %v12069
    %12134 = vst.msk [vmem:[%s135 + $0xc8] sm:$0xff] %vm2301, %v12070
    %12135 = vst.msk [vmem:[%s135 + $0xd0] sm:$0xff] %vm2301, %v12071
    %12136 = vst.msk [vmem:[%s135 + $0xd8] sm:$0xff] %vm2301, %v12072
    %12137 = vst.msk [vmem:[%s135 + $0xe0] sm:$0xff] %vm2301, %v12073
    %12138 = vst.msk [vmem:[%s135 + $0xe8] sm:$0xff] %vm2301, %v12074
    %12139 = vst.msk [vmem:[%s135 + $0xf0] sm:$0xff] %vm2301, %v12075
    %12140 = vst.msk [vmem:[%s135 + $0xf8] sm:$0xff] %vm2301, %v12076
    %12141 = vst.msk [vmem:[%s135 + $0x100] sm:$0xff] %vm2301, %v12077
    %12142 = vst.msk [vmem:[%s135 + $0x108] sm:$0xff] %vm2301, %v12078
    %12143 = vst.msk [vmem:[%s135 + $0x110] sm:$0xff] %vm2301, %v12079
    %12144 = vst.msk [vmem:[%s135 + $0x118] sm:$0xff] %vm2301, %v12080
    %12145 = vst.msk [vmem:[%s135 + $0x120] sm:$0xff] %vm2301, %v12081
    %12146 = vst.msk [vmem:[%s135 + $0x128] sm:$0xff] %vm2301, %v12082
    %12147 = vst.msk [vmem:[%s135 + $0x130] sm:$0xff] %vm2301, %v12083
    %12148 = vst.msk [vmem:[%s135 + $0x138] sm:$0xff] %vm2301, %v12084
    %12149 = vst.msk [vmem:[%s135 + $0x140] sm:$0xff] %vm2301, %v12085
    %12150 = vst.msk [vmem:[%s135 + $0x148] sm:$0xff] %vm2301, %v12086
    %12151 = vst.msk [vmem:[%s135 + $0x150] sm:$0xff] %vm2301, %v12087
    %12152 = vst.msk [vmem:[%s135 + $0x158] sm:$0xff] %vm2301, %v12088
    %12153 = vst.msk [vmem:[%s135 + $0x160] sm:$0xff] %vm2301, %v12089
    %12154 = vst.msk [vmem:[%s135 + $0x168] sm:$0xff] %vm2301, %v12090
    %12155 = vst.msk [vmem:[%s135 + $0x170] sm:$0xff] %vm2301, %v12091
    %12156 = vst.msk [vmem:[%s135 + $0x178] sm:$0xff] %vm2301, %v12092
    %12157 = vst.msk [vmem:[%s135 + $0x180] sm:$0xff] %vm2301, %v12093
    %12158 = vst.msk [vmem:[%s135 + $0x188] sm:$0xff] %vm2301, %v12094
    %12159 = vst.msk [vmem:[%s135 + $0x190] sm:$0xff] %vm2301, %v12095
    %12160 = vst.msk [vmem:[%s135 + $0x198] sm:$0xff] %vm2301, %v12096
    %12161 = vst.msk [vmem:[%s135 + $0x1a0] sm:$0xff] %vm2301, %v12097
    %12162 = vst.msk [vmem:[%s135 + $0x1a8] sm:$0xff] %vm2301, %v12098
    %12163 = vst.msk [vmem:[%s135 + $0x1b0] sm:$0xff] %vm2301, %v12099
    %12164 = vst.msk [vmem:[%s135 + $0x1b8] sm:$0xff] %vm2301, %v12100
    %12165 = vst.msk [vmem:[%s135 + $0x1c0] sm:$0xff] %vm2301, %v12101
    %12166 = vst.msk [vmem:[%s135 + $0x1c8] sm:$0xff] %vm2301, %v12102
    %12167 = vst.msk [vmem:[%s135 + $0x1d0] sm:$0xff] %vm2301, %v12103
    %12168 = vst.msk [vmem:[%s135 + $0x1d8] sm:$0xff] %vm2301, %v12104
    %12169 = vst.msk [vmem:[%s135 + $0x1e0] sm:$0xff] %vm2301, %v12105
    %12170 = vst.msk [vmem:[%s135 + $0x1e8] sm:$0xff] %vm2301, %v12106
    %12171 = vst.msk [vmem:[%s135 + $0x1f0] sm:$0xff] %vm2301, %v12107
    %12172 = vst.msk [vmem:[%s135 + $0x1f8] sm:$0xff] %vm2301, %v12108
    %12173 = vst.msk [vmem:[#allocation23] sm:$0xff] %vm822, %v4208
    %12174 = vst.msk [vmem:[#allocation23 + $0x8] sm:$0xff] %vm822, %v4209
    %12175 = vst.msk [vmem:[#allocation23 + $0x10] sm:$0xff] %vm822, %v4210
    %12176 = vst.msk [vmem:[#allocation23 + $0x18] sm:$0xff] %vm822, %v4211
    %12177 = vst.msk [vmem:[#allocation23 + $0x20] sm:$0xff] %vm822, %v4212
    %12178 = vst.msk [vmem:[#allocation23 + $0x28] sm:$0xff] %vm822, %v4213
    %12179 = vst.msk [vmem:[#allocation23 + $0x30] sm:$0xff] %vm822, %v4214
    %12180 = vst.msk [vmem:[#allocation23 + $0x38] sm:$0xff] %vm822, %v4215
    %12181 = vst.msk [vmem:[#allocation23 + $0x40] sm:$0xff] %vm822, %v4216
    %12182 = vst.msk [vmem:[#allocation23 + $0x48] sm:$0xff] %vm822, %v4217
    %12183 = vst.msk [vmem:[#allocation23 + $0x50] sm:$0xff] %vm822, %v4218
    %12184 = vst.msk [vmem:[#allocation23 + $0x58] sm:$0xff] %vm822, %v4219
    %12185 = vst.msk [vmem:[#allocation23 + $0x60] sm:$0xff] %vm822, %v4220
    %12186 = vst.msk [vmem:[#allocation23 + $0x68] sm:$0xff] %vm822, %v4221
    %12187 = vst.msk [vmem:[#allocation23 + $0x70] sm:$0xff] %vm822, %v4222
    %12188 = vst.msk [vmem:[#allocation23 + $0x78] sm:$0xff] %vm822, %v4223
    %12189 = vst.msk [vmem:[#allocation24] sm:$0xff] %vm754, %v1693
    %12190 = vst.msk [vmem:[#allocation24 + $0x8] sm:$0xff] %vm754, %v1694
    %12191 = vst.msk [vmem:[#allocation24 + $0x10] sm:$0xff] %vm754, %v1695
    %12192 = vst.msk [vmem:[#allocation24 + $0x18] sm:$0xff] %vm754, %v1696
    // Predicated region
    $region322: #{fpn_forward.1} parent=1 // pred_check
      _
    $region323: #{fpn_forward.1} parent=1 // pred_check_branch
      %12194 = sbr.rel (0) target = $region325
    $region324: #{fpn_forward.1} parent=1 // pred_region
      _
    $region325: #{fpn_forward.1} parent=1 // pred_fallthru
      _
    // Predicated region
    $region326: #{fpn_forward.1} parent=1 // pred_check
      _
    $region327: #{fpn_forward.1} parent=1 // pred_check_branch
      %12196 = sbr.rel (0) target = $region329
    $region328: #{fpn_forward.1} parent=1 // pred_region
      %12198 = vsyncadd [#allocation4], 0
      %s12199 = sshll.u32 [#allocation23], 4
      %s12200 = int_to_ptr.vmem [resolvable:$true] %s12199
      %s12201 = sshll.u32 %s137, 4
      %s12202 = int_to_ptr.hbm [resolvable:$true] %s12201
      %12207 = dma.vmem_to_hbm [thread:$0]  %s12200, 2048, %s12202, [#allocation4], 128, 128, 8
    $region329: #{fpn_forward.1} parent=1 // pred_fallthru
      _
    // Predicated region
    $region330: #{fpn_forward.1} parent=1 // pred_check
      _
    $region331: #{fpn_forward.1} parent=1 // pred_check_branch
      %12209 = sbr.rel (0) target = $region333
    $region332: #{fpn_forward.1} parent=1 // pred_region
      %12211 = vsyncadd [#allocation25], 0
      %s12212 = sshll.u32 [#allocation24], 4
      %s12213 = int_to_ptr.vmem [resolvable:$true] %s12212
      %s12214 = sshll.u32 %s139, 4
      %s12215 = int_to_ptr.hbm [resolvable:$true] %s12214
      %12220 = dma.vmem_to_hbm [thread:$0]  %s12213, 512, %s12215, [#allocation25], 128, 128, 8
    $region333: #{fpn_forward.1} parent=1 // pred_fallthru
      _
    // Predicated region
    $region334: #{fpn_forward.1} parent=1 // pred_check
      _
    $region335: #{fpn_forward.1} parent=1 // pred_check_branch
      %12222 = sbr.rel (0) target = $region337
    $region336: #{fpn_forward.1} parent=1 // pred_region
      _
    $region337: #{fpn_forward.1} parent=1 // pred_fallthru
      _
    // Predicated region
    $region338: #{fpn_forward.1} parent=1 // pred_check
      _
    $region339: #{fpn_forward.1} parent=1 // pred_check_branch
      %12224 = sbr.rel (0) target = $region341
    $region340: #{fpn_forward.1} parent=1 // pred_region
      %12226 = dma.done [#allocation4], 2048
    $region341: #{fpn_forward.1} parent=1 // pred_fallthru
      _
    // Predicated region
    $region342: #{fpn_forward.1} parent=1 // pred_check
      _
    $region343: #{fpn_forward.1} parent=1 // pred_check_branch
      %12228 = sbr.rel (0) target = $region345
    $region344: #{fpn_forward.1} parent=1 // pred_region
      %12230 = dma.done [#allocation25], 512
    $region345: #{fpn_forward.1} parent=1 // pred_fallthru
      _
    %12231 = vsyncpa [#allocation3], 1
    %12232 = vsyncpa [#allocation6], 1
    %12233 = vsyncpa [#allocation9], 1
    %12234 = vsyncpa [#allocation12], 1
    %12235 = vsyncpa [#allocation15], 1
    %12236 = vsyncpa [#allocation18], 1
    %12237 = vsyncpa [#allocation21], 1
    %12238 = vsyncpa [#allocation4], 1
    %12239 = vsyncpa [#allocation25], 1

</llo_original>
